<compile_context>
chip_gen: v7x
topology: tpu7x:2x2x1
jax: 0.10.0
libtpu: 0.0.40
codegen_flags: <defaults>
</compile_context>

<pallas_src>
import functools

import jax
import jax.numpy as jnp
from jax import lax
from jax.experimental import pallas as pl
from jax.experimental.pallas import tpu as pltpu


def _derivative_kernel(phyl_ref, b1l_ref,                 # VMEM per-lane env params
                       w1_ref, w2_ref, b2_ref,            # SMEM flat weights / bias
                       y_ref,                             # VMEM (B, C, H, W)
                       out_ref,                           # VMEM (B, C, H, W)
                       pad_ref,                           # VMEM (C, H+4, SW) scratch
                       hid_ref,                           # VMEM (H+2, SW)    scratch
                       *, B, H, W, C_IN, C_OUT, HID, BW, AW, SW):
    f32 = jnp.float32

    # ---- periodic (wrap) halo, built batch-lane-packed into VMEM scratch ----
    # Band b of channel c occupies lanes [b*BW, (b+1)*BW), BW = W + 4.
    for c in range(C_IN):
        for b in range(B):
            x = y_ref[b, c]                                               # (H, W)
            xw = jnp.concatenate([x[:, W - 2:W], x, x[:, 0:2]], axis=1)   # (H, BW) column wrap
            pad_ref[c, 2:2 + H, b * BW:(b + 1) * BW] = xw
        # spare tail lanes: only ever read into junk accumulator lanes, but
        # keep them deterministic
        pad_ref[c, 2:2 + H, AW:SW] = jnp.zeros((H, SW - AW), f32)
        # row wrap for the whole packed slab at once (all bands)
        pad_ref[c, 0:2, :] = pad_ref[c, H:H + 2, :]          # top halo = rows H-2, H-1
        pad_ref[c, H + 2:H + 4, :] = pad_ref[c, 2:4, :]      # bottom halo = rows 0, 1
    hid_ref[:, AW:SW] = jnp.zeros((H + 2, SW - AW), f32)

    # ---- physics: Gray-Scott, periodic 5-point Laplacian, all batches at
    # once; per-env coefficients arrive as band-matched per-lane rows ---------
    u = pad_ref[0, 2:2 + H, 2:2 + AW]
    v = pad_ref[1, 2:2 + H, 2:2 + AW]

    def lap(c, center):
        return (pad_ref[c, 1:1 + H, 2:2 + AW] + pad_ref[c, 3:3 + H, 2:2 + AW]
                + pad_ref[c, 2:2 + H, 1:1 + AW] + pad_ref[c, 2:2 + H, 3:3 + AW]
                - 4.0 * center)

    Du = phyl_ref[0:1, :]          # (1, AW) rows, broadcast over sublanes
    Dv = phyl_ref[1:2, :]
    F = phyl_ref[2:3, :]
    k = phyl_ref[3:4, :]
    uvv = u * v * v

    # 'additive' augment: out = model_aug(y0) + model_phy(y0). Seed the output
    # accumulators with the physics term plus the conv-2 output bias.
    acc = [Du * lap(0, u) - uvv + F * (1.0 - u) + b2_ref[0],
           Dv * lap(1, v) + uvv - (F + k) * v + b2_ref[1]]

    # ---- layer-1 conv3x3(circ) on the halo domain, loop-interchanged: each
    # shifted tap slice is loaded once and feeds all HID hidden accumulators --
    hacc = [jnp.zeros((H + 2, AW), f32) + b1l_ref[co:co + 1, :] for co in range(HID)]
    for ci in range(C_IN):
        for ky in range(3):
            for kx in range(3):
                tap = pad_ref[ci, ky:ky + H + 2, kx:kx + AW]
                for co in range(HID):
                    wv = w1_ref[((co * C_IN + ci) * 3 + ky) * 3 + kx]
                    hacc[co] = hacc[co] + wv * tap

    # ---- Swish -> layer-2 conv3x3, fused per hidden channel; the activated
    # map is staged in VMEM so layer-2 taps are slice loads, not relayouts ----
    for co in range(HID):
        h = hacc[co]
        # Exact sigmoid kept so the 1e-5/2e-5 agreement with jax.nn.sigmoid in
        # the reference holds; exp lands on the EUP slot.
        hid_ref[:, 0:AW] = h * (1.0 / (1.0 + jnp.exp(-h)))
        for oc in range(C_OUT):
            o = acc[oc]
            for ky in range(3):
                for kx in range(3):
                    wv = w2_ref[((oc * HID + co) * 3 + ky) * 3 + kx]
                    o = o + wv * hid_ref[ky:ky + H, kx:kx + AW]
            acc[oc] = o

    # ---- unpack the band-packed accumulators into the NCHW output -----------
    for oc in range(C_OUT):
        a = acc[oc]
        for b in range(B):
            out_ref[b, oc] = a[:, b * BW:b * BW + W]


def derivative_forward(t, y0, env, params):
    """Derivative.forward(t, y0, env) for type_augment='additive' on Gray-Scott."""
    # t is unused (autonomous dynamics) — kept for interface parity with PyTorch.
    del t
    B, C, H, W = y0.shape
    HID = params["w1"].shape[0]
    C_OUT = params["w2"].shape[0]
    assert C == 2 and C_OUT == 2, "Gray-Scott physics is a 2-channel (u, v) system"

    codes = params["codes"]                                                  # (n_env, code_c)
    phy = params["phy_base"][None, :] + codes[env] @ params["code_to_phy"]   # (B, 4)
    b1 = params["b1"][None, :] + codes[env] @ params["code_to_b1"]           # (B, HID)

    BW = W + 4            # per-band (per-batch) lane stride: W plus 2-wide wrap halo each side
    AW = B * BW           # packed accumulator width (valid + band-local junk lanes)
    SW = AW + 4           # slab width: spare tail keeps all shifted slices in-bounds

    # Per-env scalars become per-lane rows matching the band packing, so one
    # vector op applies the right per-batch coefficient to every band.
    phy_lanes = jnp.repeat(phy.T.astype(jnp.float32), BW, axis=1)    # (4,   AW)
    b1_lanes = jnp.repeat(b1.T.astype(jnp.float32), BW, axis=1)      # (HID, AW)

    kernel = functools.partial(_derivative_kernel, B=B, H=H, W=W, C_IN=C,
                               C_OUT=C_OUT, HID=HID, BW=BW, AW=AW, SW=SW)
    smem = pl.BlockSpec(memory_space=pltpu.MemorySpace.SMEM)
    vmem = pl.BlockSpec(memory_space=pltpu.MemorySpace.VMEM)

    return pl.pallas_call(
        kernel,
        out_shape=jax.ShapeDtypeStruct((B, C_OUT, H, W), jnp.float32),
        in_specs=[vmem, vmem, smem, smem, smem, vmem],
        out_specs=vmem,
        scratch_shapes=[pltpu.VMEM((C, H + 4, SW), jnp.float32),   # packed wrap-padded input
                        pltpu.VMEM((H + 2, SW), jnp.float32)],     # current activated hidden map
    )(phy_lanes, b1_lanes,
      params["w1"].reshape(-1).astype(jnp.float32),   # (HID*C*9,) flat 1-D SMEM
      params["w2"].reshape(-1).astype(jnp.float32),   # (C*HID*9,)
      params["b2"].astype(jnp.float32),               # (C,)
      y0.astype(jnp.float32))


def derivative_reference(t, y0, env, params):
    """Pure-JAX reference (same math, NCHW)."""
    del t
    codes = params["codes"]
    phy = params["phy_base"][None, :] + codes[env] @ params["code_to_phy"]
    b1 = params["b1"][None, :] + codes[env] @ params["code_to_b1"]
    Du, Dv, F, k = [phy[:, i][:, None, None] for i in range(4)]

    u, v = y0[:, 0], y0[:, 1]
    up = jnp.pad(u, ((0, 0), (1, 1), (1, 1)), mode="wrap")
    vp = jnp.pad(v, ((0, 0), (1, 1), (1, 1)), mode="wrap")
    lap_u = up[:, :-2, 1:-1] + up[:, 2:, 1:-1] + up[:, 1:-1, :-2] + up[:, 1:-1, 2:] - 4.0 * u
    lap_v = vp[:, :-2, 1:-1] + vp[:, 2:, 1:-1] + vp[:, 1:-1, :-2] + vp[:, 1:-1, 2:] - 4.0 * v
    uvv = u * v * v
    du = Du * lap_u - uvv + F * (1.0 - u)
    dv = Dv * lap_v + uvv - (F + k) * v
    y_phy = jnp.stack([du, dv], axis=1)

    yp = jnp.pad(y0, ((0, 0), (0, 0), (2, 2), (2, 2)), mode="wrap")
    dn = ("NCHW", "OIHW", "NCHW")
    h = lax.conv_general_dilated(yp, params["w1"], (1, 1), "VALID", dimension_numbers=dn)
    h = h + b1[:, :, None, None]
    h = h * jax.nn.sigmoid(h)
    y_nn = lax.conv_general_dilated(h, params["w2"], (1, 1), "VALID", dimension_numbers=dn)
    y_nn = y_nn + params["b2"][None, :, None, None]
    return y_nn + y_phy


if __name__ == "__main__":
    B, C, H, W = 2, 2, 16, 16            # in_dim = out_dim = 2 (u, v channels)
    HID = 8                              # factor -> hidden width of model_aug
    N_ENV, CODE_C = 3, 4                 # n_env, code_c

    key = jax.random.PRNGKey(0)
    k1, k2, k3, k4, k5 = jax.random.split(key, 5)

    params = dict(
        codes=jnp.zeros((N_ENV, CODE_C), jnp.float32),       # 0 * ones(n_env, code_c)
        code_to_phy=0.01 * jax.random.normal(k1, (CODE_C, 4), jnp.float32),
        code_to_b1=0.01 * jax.random.normal(k2, (CODE_C, HID), jnp.float32),
        phy_base=jnp.array([0.2097, 0.105, 0.03, 0.062], jnp.float32),  # Du, Dv, F, k
        w1=0.2 * jax.random.normal(k3, (HID, C, 3, 3), jnp.float32),
        b1=jnp.zeros((HID,), jnp.float32),
        w2=0.2 * jax.random.normal(k4, (C, HID, 3, 3), jnp.float32),
        b2=jnp.zeros((C,), jnp.float32),
    )

    y0 = jax.random.uniform(k5, (B, C, H, W), jnp.float32)
    env = jnp.array([0, 2], jnp.int32)
    t = jnp.float32(0.0)

    out = derivative_forward(t, y0, env, params)
    out = jax.block_until_ready(out)

    ref = jax.block_until_ready(derivative_reference(t, y0, env, params))
    assert out.shape == (B, C, H, W) and out.dtype == jnp.float32
    assert jnp.allclose(out, ref, rtol=1e-5, atol=2e-5), float(jnp.max(jnp.abs(out - ref)))

    print("KERNEL_OK")
</pallas_src>

<mosaic_0001>
module attributes {stable_mosaic.version = 11 : i64} {
  func.func @_derivative_kernel(%arg0: memref<4x40xf32, #tpu.memory_space<vmem>>, %arg1: memref<8x40xf32, #tpu.memory_space<vmem>>, %arg2: memref<144xf32, #tpu.memory_space<smem>>, %arg3: memref<144xf32, #tpu.memory_space<smem>>, %arg4: memref<2xf32, #tpu.memory_space<smem>>, %arg5: memref<2x2x16x16xf32, #tpu.memory_space<vmem>>, %arg6: memref<2x2x16x16xf32, #tpu.memory_space<vmem>>, %arg7: memref<2x20x44xf32, #tpu.memory_space<vmem>>, %arg8: memref<18x44xf32, #tpu.memory_space<vmem>>) attributes {dimension_semantics = [], scalar_prefetch = 0 : i64, scratch_operands = 2 : i64, tpu.core_type = #tpu.core_type<tc>} {
    %c0 = arith.constant 0 : index
    %c0_0 = arith.constant 0 : index
    %c0_1 = arith.constant 0 : index
    %c0_2 = arith.constant 0 : index
    %0 = vector.load %arg5[%c0, %c0_0, %c0_1, %c0_2] : memref<2x2x16x16xf32, #tpu.memory_space<vmem>>, vector<1x1x16x16xf32>
    %1 = vector.shape_cast %0 : vector<1x1x16x16xf32> to vector<16x16xf32>
    %2 = vector.extract_strided_slice %1 {offsets = [0, 14], sizes = [16, 2], strides = [1, 1]} : vector<16x16xf32> to vector<16x2xf32>
    %3 = vector.extract_strided_slice %1 {offsets = [0, 0], sizes = [16, 2], strides = [1, 1]} : vector<16x16xf32> to vector<16x2xf32>
    %4 = tpu.concatenate %2, %1, %3 in 1 : vector<16x2xf32>, vector<16x16xf32>, vector<16x2xf32> -> vector<16x20xf32>
    %c0_3 = arith.constant 0 : index
    %c2 = arith.constant 2 : index
    %c0_4 = arith.constant 0 : index
    %5 = vector.load %arg7[%c0_3, %c2, %c0_4] : memref<2x20x44xf32, #tpu.memory_space<vmem>>, vector<1x16x20xf32>
    %6 = vector.shape_cast %5 : vector<1x16x20xf32> to vector<16x20xf32>
    %7 = vector.shape_cast %4 : vector<16x20xf32> to vector<1x16x20xf32>
    tpu.vector_store %arg7[%c0_3, %c2, %c0_4], %7 {strides = array<i32>} : memref<2x20x44xf32, #tpu.memory_space<vmem>>, vector<1x16x20xf32>,
    %c1 = arith.constant 1 : index
    %c0_5 = arith.constant 0 : index
    %c0_6 = arith.constant 0 : index
    %c0_7 = arith.constant 0 : index
    %8 = vector.load %arg5[%c1, %c0_5, %c0_6, %c0_7] : memref<2x2x16x16xf32, #tpu.memory_space<vmem>>, vector<1x1x16x16xf32>
    %9 = vector.shape_cast %8 : vector<1x1x16x16xf32> to vector<16x16xf32>
    %10 = vector.extract_strided_slice %9 {offsets = [0, 14], sizes = [16, 2], strides = [1, 1]} : vector<16x16xf32> to vector<16x2xf32>
    %11 = vector.extract_strided_slice %9 {offsets = [0, 0], sizes = [16, 2], strides = [1, 1]} : vector<16x16xf32> to vector<16x2xf32>
    %12 = tpu.concatenate %10, %9, %11 in 1 : vector<16x2xf32>, vector<16x16xf32>, vector<16x2xf32> -> vector<16x20xf32>
    %c0_8 = arith.constant 0 : index
    %c2_9 = arith.constant 2 : index
    %c20 = arith.constant 20 : index
    %13 = vector.load %arg7[%c0_8, %c2_9, %c20] : memref<2x20x44xf32, #tpu.memory_space<vmem>>, vector<1x16x20xf32>
    %14 = vector.shape_cast %13 : vector<1x16x20xf32> to vector<16x20xf32>
    %15 = vector.shape_cast %12 : vector<16x20xf32> to vector<1x16x20xf32>
    tpu.vector_store %arg7[%c0_8, %c2_9, %c20], %15 {strides = array<i32>} : memref<2x20x44xf32, #tpu.memory_space<vmem>>, vector<1x16x20xf32>,
    %cst = arith.constant 0.000000e+00 : f32
    %16 = vector.broadcast %cst : f32 to vector<16x4xf32>
    %c0_10 = arith.constant 0 : index
    %c2_11 = arith.constant 2 : index
    %c40 = arith.constant 40 : index
    %17 = vector.load %arg7[%c0_10, %c2_11, %c40] : memref<2x20x44xf32, #tpu.memory_space<vmem>>, vector<1x16x4xf32>
    %18 = vector.shape_cast %17 : vector<1x16x4xf32> to vector<16x4xf32>
    %19 = vector.shape_cast %16 : vector<16x4xf32> to vector<1x16x4xf32>
    tpu.vector_store %arg7[%c0_10, %c2_11, %c40], %19 {strides = array<i32>} : memref<2x20x44xf32, #tpu.memory_space<vmem>>, vector<1x16x4xf32>,
    %c0_12 = arith.constant 0 : index
    %c16 = arith.constant 16 : index
    %c0_13 = arith.constant 0 : index
    %20 = vector.load %arg7[%c0_12, %c16, %c0_13] : memref<2x20x44xf32, #tpu.memory_space<vmem>>, vector<1x2x44xf32>
    %21 = vector.shape_cast %20 : vector<1x2x44xf32> to vector<2x44xf32>
    %c0_14 = arith.constant 0 : index
    %c0_15 = arith.constant 0 : index
    %c0_16 = arith.constant 0 : index
    %22 = vector.load %arg7[%c0_14, %c0_15, %c0_16] : memref<2x20x44xf32, #tpu.memory_space<vmem>>, vector<1x2x44xf32>
    %23 = vector.shape_cast %22 : vector<1x2x44xf32> to vector<2x44xf32>
    %24 = vector.shape_cast %21 : vector<2x44xf32> to vector<1x2x44xf32>
    tpu.vector_store %arg7[%c0_14, %c0_15, %c0_16], %24 {strides = array<i32>} : memref<2x20x44xf32, #tpu.memory_space<vmem>>, vector<1x2x44xf32>,
    %c0_17 = arith.constant 0 : index
    %c2_18 = arith.constant 2 : index
    %c0_19 = arith.constant 0 : index
    %25 = vector.load %arg7[%c0_17, %c2_18, %c0_19] : memref<2x20x44xf32, #tpu.memory_space<vmem>>, vector<1x2x44xf32>
    %26 = vector.shape_cast %25 : vector<1x2x44xf32> to vector<2x44xf32>
    %c0_20 = arith.constant 0 : index
    %c18 = arith.constant 18 : index
    %c0_21 = arith.constant 0 : index
    %27 = vector.load %arg7[%c0_20, %c18, %c0_21] : memref<2x20x44xf32, #tpu.memory_space<vmem>>, vector<1x2x44xf32>
    %28 = vector.shape_cast %27 : vector<1x2x44xf32> to vector<2x44xf32>
    %29 = vector.shape_cast %26 : vector<2x44xf32> to vector<1x2x44xf32>
    tpu.vector_store %arg7[%c0_20, %c18, %c0_21], %29 {strides = array<i32>} : memref<2x20x44xf32, #tpu.memory_space<vmem>>, vector<1x2x44xf32>,
    %c0_22 = arith.constant 0 : index
    %c1_23 = arith.constant 1 : index
    %c0_24 = arith.constant 0 : index
    %c0_25 = arith.constant 0 : index
    %30 = vector.load %arg5[%c0_22, %c1_23, %c0_24, %c0_25] : memref<2x2x16x16xf32, #tpu.memory_space<vmem>>, vector<1x1x16x16xf32>
    %31 = vector.shape_cast %30 : vector<1x1x16x16xf32> to vector<16x16xf32>
    %32 = vector.extract_strided_slice %31 {offsets = [0, 14], sizes = [16, 2], strides = [1, 1]} : vector<16x16xf32> to vector<16x2xf32>
    %33 = vector.extract_strided_slice %31 {offsets = [0, 0], sizes = [16, 2], strides = [1, 1]} : vector<16x16xf32> to vector<16x2xf32>
    %34 = tpu.concatenate %32, %31, %33 in 1 : vector<16x2xf32>, vector<16x16xf32>, vector<16x2xf32> -> vector<16x20xf32>
    %c1_26 = arith.constant 1 : index
    %c2_27 = arith.constant 2 : index
    %c0_28 = arith.constant 0 : index
    %35 = vector.load %arg7[%c1_26, %c2_27, %c0_28] : memref<2x20x44xf32, #tpu.memory_space<vmem>>, vector<1x16x20xf32>
    %36 = vector.shape_cast %35 : vector<1x16x20xf32> to vector<16x20xf32>
    %37 = vector.shape_cast %34 : vector<16x20xf32> to vector<1x16x20xf32>
    tpu.vector_store %arg7[%c1_26, %c2_27, %c0_28], %37 {strides = array<i32>} : memref<2x20x44xf32, #tpu.memory_space<vmem>>, vector<1x16x20xf32>,
    %c1_29 = arith.constant 1 : index
    %c1_30 = arith.constant 1 : index
    %c0_31 = arith.constant 0 : index
    %c0_32 = arith.constant 0 : index
    %38 = vector.load %arg5[%c1_29, %c1_30, %c0_31, %c0_32] : memref<2x2x16x16xf32, #tpu.memory_space<vmem>>, vector<1x1x16x16xf32>
    %39 = vector.shape_cast %38 : vector<1x1x16x16xf32> to vector<16x16xf32>
    %40 = vector.extract_strided_slice %39 {offsets = [0, 14], sizes = [16, 2], strides = [1, 1]} : vector<16x16xf32> to vector<16x2xf32>
    %41 = vector.extract_strided_slice %39 {offsets = [0, 0], sizes = [16, 2], strides = [1, 1]} : vector<16x16xf32> to vector<16x2xf32>
    %42 = tpu.concatenate %40, %39, %41 in 1 : vector<16x2xf32>, vector<16x16xf32>, vector<16x2xf32> -> vector<16x20xf32>
    %c1_33 = arith.constant 1 : index
    %c2_34 = arith.constant 2 : index
    %c20_35 = arith.constant 20 : index
    %43 = vector.load %arg7[%c1_33, %c2_34, %c20_35] : memref<2x20x44xf32, #tpu.memory_space<vmem>>, vector<1x16x20xf32>
    %44 = vector.shape_cast %43 : vector<1x16x20xf32> to vector<16x20xf32>
    %45 = vector.shape_cast %42 : vector<16x20xf32> to vector<1x16x20xf32>
    tpu.vector_store %arg7[%c1_33, %c2_34, %c20_35], %45 {strides = array<i32>} : memref<2x20x44xf32, #tpu.memory_space<vmem>>, vector<1x16x20xf32>,
    %cst_36 = arith.constant 0.000000e+00 : f32
    %46 = vector.broadcast %cst_36 : f32 to vector<16x4xf32>
    %c1_37 = arith.constant 1 : index
    %c2_38 = arith.constant 2 : index
    %c40_39 = arith.constant 40 : index
    %47 = vector.load %arg7[%c1_37, %c2_38, %c40_39] : memref<2x20x44xf32, #tpu.memory_space<vmem>>, vector<1x16x4xf32>
    %48 = vector.shape_cast %47 : vector<1x16x4xf32> to vector<16x4xf32>
    %49 = vector.shape_cast %46 : vector<16x4xf32> to vector<1x16x4xf32>
    tpu.vector_store %arg7[%c1_37, %c2_38, %c40_39], %49 {strides = array<i32>} : memref<2x20x44xf32, #tpu.memory_space<vmem>>, vector<1x16x4xf32>,
    %c1_40 = arith.constant 1 : index
    %c16_41 = arith.constant 16 : index
    %c0_42 = arith.constant 0 : index
    %50 = vector.load %arg7[%c1_40, %c16_41, %c0_42] : memref<2x20x44xf32, #tpu.memory_space<vmem>>, vector<1x2x44xf32>
    %51 = vector.shape_cast %50 : vector<1x2x44xf32> to vector<2x44xf32>
    %c1_43 = arith.constant 1 : index
    %c0_44 = arith.constant 0 : index
    %c0_45 = arith.constant 0 : index
    %52 = vector.load %arg7[%c1_43, %c0_44, %c0_45] : memref<2x20x44xf32, #tpu.memory_space<vmem>>, vector<1x2x44xf32>
    %53 = vector.shape_cast %52 : vector<1x2x44xf32> to vector<2x44xf32>
    %54 = vector.shape_cast %51 : vector<2x44xf32> to vector<1x2x44xf32>
    tpu.vector_store %arg7[%c1_43, %c0_44, %c0_45], %54 {strides = array<i32>} : memref<2x20x44xf32, #tpu.memory_space<vmem>>, vector<1x2x44xf32>,
    %c1_46 = arith.constant 1 : index
    %c2_47 = arith.constant 2 : index
    %c0_48 = arith.constant 0 : index
    %55 = vector.load %arg7[%c1_46, %c2_47, %c0_48] : memref<2x20x44xf32, #tpu.memory_space<vmem>>, vector<1x2x44xf32>
    %56 = vector.shape_cast %55 : vector<1x2x44xf32> to vector<2x44xf32>
    %c1_49 = arith.constant 1 : index
    %c18_50 = arith.constant 18 : index
    %c0_51 = arith.constant 0 : index
    %57 = vector.load %arg7[%c1_49, %c18_50, %c0_51] : memref<2x20x44xf32, #tpu.memory_space<vmem>>, vector<1x2x44xf32>
    %58 = vector.shape_cast %57 : vector<1x2x44xf32> to vector<2x44xf32>
    %59 = vector.shape_cast %56 : vector<2x44xf32> to vector<1x2x44xf32>
    tpu.vector_store %arg7[%c1_49, %c18_50, %c0_51], %59 {strides = array<i32>} : memref<2x20x44xf32, #tpu.memory_space<vmem>>, vector<1x2x44xf32>,
    %cst_52 = arith.constant 0.000000e+00 : f32
    %60 = vector.broadcast %cst_52 : f32 to vector<18x4xf32>
    %c0_53 = arith.constant 0 : index
    %c40_54 = arith.constant 40 : index
    %61 = vector.load %arg8[%c0_53, %c40_54] : memref<18x44xf32, #tpu.memory_space<vmem>>, vector<18x4xf32>
    tpu.vector_store %arg8[%c0_53, %c40_54], %60 {strides = array<i32>} : memref<18x44xf32, #tpu.memory_space<vmem>>, vector<18x4xf32>,
    %c0_55 = arith.constant 0 : index
    %c2_56 = arith.constant 2 : index
    %c2_57 = arith.constant 2 : index
    %62 = vector.load %arg7[%c0_55, %c2_56, %c2_57] : memref<2x20x44xf32, #tpu.memory_space<vmem>>, vector<1x16x40xf32>
    %63 = vector.shape_cast %62 : vector<1x16x40xf32> to vector<16x40xf32>
    %c1_58 = arith.constant 1 : index
    %c2_59 = arith.constant 2 : index
    %c2_60 = arith.constant 2 : index
    %64 = vector.load %arg7[%c1_58, %c2_59, %c2_60] : memref<2x20x44xf32, #tpu.memory_space<vmem>>, vector<1x16x40xf32>
    %65 = vector.shape_cast %64 : vector<1x16x40xf32> to vector<16x40xf32>
    %c0_61 = arith.constant 0 : index
    %c0_62 = arith.constant 0 : index
    %66 = vector.load %arg0[%c0_61, %c0_62] : memref<4x40xf32, #tpu.memory_space<vmem>>, vector<1x40xf32>
    %c1_63 = arith.constant 1 : index
    %c0_64 = arith.constant 0 : index
    %67 = vector.load %arg0[%c1_63, %c0_64] : memref<4x40xf32, #tpu.memory_space<vmem>>, vector<1x40xf32>
    %c2_65 = arith.constant 2 : index
    %c0_66 = arith.constant 0 : index
    %68 = vector.load %arg0[%c2_65, %c0_66] : memref<4x40xf32, #tpu.memory_space<vmem>>, vector<1x40xf32>
    %c3 = arith.constant 3 : index
    %c0_67 = arith.constant 0 : index
    %69 = vector.load %arg0[%c3, %c0_67] : memref<4x40xf32, #tpu.memory_space<vmem>>, vector<1x40xf32>
    %70 = arith.mulf %63, %65 : vector<16x40xf32>
    %71 = arith.mulf %70, %65 : vector<16x40xf32>
    %c0_68 = arith.constant 0 : index
    %c1_69 = arith.constant 1 : index
    %c2_70 = arith.constant 2 : index
    %72 = vector.load %arg7[%c0_68, %c1_69, %c2_70] : memref<2x20x44xf32, #tpu.memory_space<vmem>>, vector<1x16x40xf32>
    %73 = vector.shape_cast %72 : vector<1x16x40xf32> to vector<16x40xf32>
    %c0_71 = arith.constant 0 : index
    %c3_72 = arith.constant 3 : index
    %c2_73 = arith.constant 2 : index
    %74 = vector.load %arg7[%c0_71, %c3_72, %c2_73] : memref<2x20x44xf32, #tpu.memory_space<vmem>>, vector<1x16x40xf32>
    %75 = vector.shape_cast %74 : vector<1x16x40xf32> to vector<16x40xf32>
    %76 = arith.addf %73, %75 : vector<16x40xf32>
    %c0_74 = arith.constant 0 : index
    %c2_75 = arith.constant 2 : index
    %c1_76 = arith.constant 1 : index
    %77 = vector.load %arg7[%c0_74, %c2_75, %c1_76] : memref<2x20x44xf32, #tpu.memory_space<vmem>>, vector<1x16x40xf32>
    %78 = vector.shape_cast %77 : vector<1x16x40xf32> to vector<16x40xf32>
    %79 = arith.addf %76, %78 : vector<16x40xf32>
    %c0_77 = arith.constant 0 : index
    %c2_78 = arith.constant 2 : index
    %c3_79 = arith.constant 3 : index
    %80 = vector.load %arg7[%c0_77, %c2_78, %c3_79] : memref<2x20x44xf32, #tpu.memory_space<vmem>>, vector<1x16x40xf32>
    %81 = vector.shape_cast %80 : vector<1x16x40xf32> to vector<16x40xf32>
    %82 = arith.addf %79, %81 : vector<16x40xf32>
    %cst_80 = arith.constant 4.000000e+00 : f32
    %83 = vector.broadcast %cst_80 : f32 to vector<16x40xf32>
    %84 = arith.mulf %83, %63 : vector<16x40xf32>
    %85 = arith.subf %82, %84 : vector<16x40xf32>
    %86 = vector.broadcast %66 : vector<1x40xf32> to vector<16x40xf32>
    %87 = arith.mulf %86, %85 : vector<16x40xf32>
    %88 = arith.subf %87, %71 : vector<16x40xf32>
    %cst_81 = arith.constant 1.000000e+00 : f32
    %89 = vector.broadcast %cst_81 : f32 to vector<16x40xf32>
    %90 = arith.subf %89, %63 : vector<16x40xf32>
    %91 = vector.broadcast %68 : vector<1x40xf32> to vector<16x40xf32>
    %92 = arith.mulf %91, %90 : vector<16x40xf32>
    %93 = arith.addf %88, %92 : vector<16x40xf32>
    %c0_82 = arith.constant 0 : index
    %94 = memref.load %arg4[%c0_82] : memref<2xf32, #tpu.memory_space<smem>>
    %95 = vector.broadcast %94 : f32 to vector<16x40xf32>
    %96 = arith.addf %93, %95 : vector<16x40xf32>
    %c1_83 = arith.constant 1 : index
    %c1_84 = arith.constant 1 : index
    %c2_85 = arith.constant 2 : index
    %97 = vector.load %arg7[%c1_83, %c1_84, %c2_85] : memref<2x20x44xf32, #tpu.memory_space<vmem>>, vector<1x16x40xf32>
    %98 = vector.shape_cast %97 : vector<1x16x40xf32> to vector<16x40xf32>
    %c1_86 = arith.constant 1 : index
    %c3_87 = arith.constant 3 : index
    %c2_88 = arith.constant 2 : index
    %99 = vector.load %arg7[%c1_86, %c3_87, %c2_88] : memref<2x20x44xf32, #tpu.memory_space<vmem>>, vector<1x16x40xf32>
    %100 = vector.shape_cast %99 : vector<1x16x40xf32> to vector<16x40xf32>
    %101 = arith.addf %98, %100 : vector<16x40xf32>
    %c1_89 = arith.constant 1 : index
    %c2_90 = arith.constant 2 : index
    %c1_91 = arith.constant 1 : index
    %102 = vector.load %arg7[%c1_89, %c2_90, %c1_91] : memref<2x20x44xf32, #tpu.memory_space<vmem>>, vector<1x16x40xf32>
    %103 = vector.shape_cast %102 : vector<1x16x40xf32> to vector<16x40xf32>
    %104 = arith.addf %101, %103 : vector<16x40xf32>
    %c1_92 = arith.constant 1 : index
    %c2_93 = arith.constant 2 : index
    %c3_94 = arith.constant 3 : index
    %105 = vector.load %arg7[%c1_92, %c2_93, %c3_94] : memref<2x20x44xf32, #tpu.memory_space<vmem>>, vector<1x16x40xf32>
    %106 = vector.shape_cast %105 : vector<1x16x40xf32> to vector<16x40xf32>
    %107 = arith.addf %104, %106 : vector<16x40xf32>
    %cst_95 = arith.constant 4.000000e+00 : f32
    %108 = vector.broadcast %cst_95 : f32 to vector<16x40xf32>
    %109 = arith.mulf %108, %65 : vector<16x40xf32>
    %110 = arith.subf %107, %109 : vector<16x40xf32>
    %111 = vector.broadcast %67 : vector<1x40xf32> to vector<16x40xf32>
    %112 = arith.mulf %111, %110 : vector<16x40xf32>
    %113 = arith.addf %112, %71 : vector<16x40xf32>
    %114 = arith.addf %68, %69 : vector<1x40xf32>
    %115 = vector.broadcast %114 : vector<1x40xf32> to vector<16x40xf32>
    %116 = arith.mulf %115, %65 : vector<16x40xf32>
    %117 = arith.subf %113, %116 : vector<16x40xf32>
    %c1_96 = arith.constant 1 : index
    %118 = memref.load %arg4[%c1_96] : memref<2xf32, #tpu.memory_space<smem>>
    %119 = vector.broadcast %118 : f32 to vector<16x40xf32>
    %120 = arith.addf %117, %119 : vector<16x40xf32>
    %cst_97 = arith.constant 0.000000e+00 : f32
    %121 = vector.broadcast %cst_97 : f32 to vector<18x40xf32>
    %c0_98 = arith.constant 0 : index
    %c0_99 = arith.constant 0 : index
    %122 = vector.load %arg1[%c0_98, %c0_99] : memref<8x40xf32, #tpu.memory_space<vmem>>, vector<1x40xf32>
    %123 = vector.broadcast %122 : vector<1x40xf32> to vector<18x40xf32>
    %124 = arith.addf %121, %123 : vector<18x40xf32>
    %cst_100 = arith.constant 0.000000e+00 : f32
    %125 = vector.broadcast %cst_100 : f32 to vector<18x40xf32>
    %c1_101 = arith.constant 1 : index
    %c0_102 = arith.constant 0 : index
    %126 = vector.load %arg1[%c1_101, %c0_102] : memref<8x40xf32, #tpu.memory_space<vmem>>, vector<1x40xf32>
    %127 = vector.broadcast %126 : vector<1x40xf32> to vector<18x40xf32>
    %128 = arith.addf %125, %127 : vector<18x40xf32>
    %cst_103 = arith.constant 0.000000e+00 : f32
    %129 = vector.broadcast %cst_103 : f32 to vector<18x40xf32>
    %c2_104 = arith.constant 2 : index
    %c0_105 = arith.constant 0 : index
    %130 = vector.load %arg1[%c2_104, %c0_105] : memref<8x40xf32, #tpu.memory_space<vmem>>, vector<1x40xf32>
    %131 = vector.broadcast %130 : vector<1x40xf32> to vector<18x40xf32>
    %132 = arith.addf %129, %131 : vector<18x40xf32>
    %cst_106 = arith.constant 0.000000e+00 : f32
    %133 = vector.broadcast %cst_106 : f32 to vector<18x40xf32>
    %c3_107 = arith.constant 3 : index
    %c0_108 = arith.constant 0 : index
    %134 = vector.load %arg1[%c3_107, %c0_108] : memref<8x40xf32, #tpu.memory_space<vmem>>, vector<1x40xf32>
    %135 = vector.broadcast %134 : vector<1x40xf32> to vector<18x40xf32>
    %136 = arith.addf %133, %135 : vector<18x40xf32>
    %cst_109 = arith.constant 0.000000e+00 : f32
    %137 = vector.broadcast %cst_109 : f32 to vector<18x40xf32>
    %c4 = arith.constant 4 : index
    %c0_110 = arith.constant 0 : index
    %138 = vector.load %arg1[%c4, %c0_110] : memref<8x40xf32, #tpu.memory_space<vmem>>, vector<1x40xf32>
    %139 = vector.broadcast %138 : vector<1x40xf32> to vector<18x40xf32>
    %140 = arith.addf %137, %139 : vector<18x40xf32>
    %cst_111 = arith.constant 0.000000e+00 : f32
    %141 = vector.broadcast %cst_111 : f32 to vector<18x40xf32>
    %c5 = arith.constant 5 : index
    %c0_112 = arith.constant 0 : index
    %142 = vector.load %arg1[%c5, %c0_112] : memref<8x40xf32, #tpu.memory_space<vmem>>, vector<1x40xf32>
    %143 = vector.broadcast %142 : vector<1x40xf32> to vector<18x40xf32>
    %144 = arith.addf %141, %143 : vector<18x40xf32>
    %cst_113 = arith.constant 0.000000e+00 : f32
    %145 = vector.broadcast %cst_113 : f32 to vector<18x40xf32>
    %c6 = arith.constant 6 : index
    %c0_114 = arith.constant 0 : index
    %146 = vector.load %arg1[%c6, %c0_114] : memref<8x40xf32, #tpu.memory_space<vmem>>, vector<1x40xf32>
    %147 = vector.broadcast %146 : vector<1x40xf32> to vector<18x40xf32>
    %148 = arith.addf %145, %147 : vector<18x40xf32>
    %cst_115 = arith.constant 0.000000e+00 : f32
    %149 = vector.broadcast %cst_115 : f32 to vector<18x40xf32>
    %c7 = arith.constant 7 : index
    %c0_116 = arith.constant 0 : index
    %150 = vector.load %arg1[%c7, %c0_116] : memref<8x40xf32, #tpu.memory_space<vmem>>, vector<1x40xf32>
    %151 = vector.broadcast %150 : vector<1x40xf32> to vector<18x40xf32>
    %152 = arith.addf %149, %151 : vector<18x40xf32>
    %c0_117 = arith.constant 0 : index
    %c0_118 = arith.constant 0 : index
    %c0_119 = arith.constant 0 : index
    %153 = vector.load %arg7[%c0_117, %c0_118, %c0_119] : memref<2x20x44xf32, #tpu.memory_space<vmem>>, vector<1x18x40xf32>
    %154 = vector.shape_cast %153 : vector<1x18x40xf32> to vector<18x40xf32>
    %c0_120 = arith.constant 0 : index
    %155 = memref.load %arg2[%c0_120] : memref<144xf32, #tpu.memory_space<smem>>
    %156 = vector.broadcast %155 : f32 to vector<18x40xf32>
    %157 = arith.mulf %156, %154 : vector<18x40xf32>
    %158 = arith.addf %124, %157 : vector<18x40xf32>
    %c18_121 = arith.constant 18 : index
    %159 = memref.load %arg2[%c18_121] : memref<144xf32, #tpu.memory_space<smem>>
    %160 = vector.broadcast %159 : f32 to vector<18x40xf32>
    %161 = arith.mulf %160, %154 : vector<18x40xf32>
    %162 = arith.addf %128, %161 : vector<18x40xf32>
    %c36 = arith.constant 36 : index
    %163 = memref.load %arg2[%c36] : memref<144xf32, #tpu.memory_space<smem>>
    %164 = vector.broadcast %163 : f32 to vector<18x40xf32>
    %165 = arith.mulf %164, %154 : vector<18x40xf32>
    %166 = arith.addf %132, %165 : vector<18x40xf32>
    %c54 = arith.constant 54 : index
    %167 = memref.load %arg2[%c54] : memref<144xf32, #tpu.memory_space<smem>>
    %168 = vector.broadcast %167 : f32 to vector<18x40xf32>
    %169 = arith.mulf %168, %154 : vector<18x40xf32>
    %170 = arith.addf %136, %169 : vector<18x40xf32>
    %c72 = arith.constant 72 : index
    %171 = memref.load %arg2[%c72] : memref<144xf32, #tpu.memory_space<smem>>
    %172 = vector.broadcast %171 : f32 to vector<18x40xf32>
    %173 = arith.mulf %172, %154 : vector<18x40xf32>
    %174 = arith.addf %140, %173 : vector<18x40xf32>
    %c90 = arith.constant 90 : index
    %175 = memref.load %arg2[%c90] : memref<144xf32, #tpu.memory_space<smem>>
    %176 = vector.broadcast %175 : f32 to vector<18x40xf32>
    %177 = arith.mulf %176, %154 : vector<18x40xf32>
    %178 = arith.addf %144, %177 : vector<18x40xf32>
    %c108 = arith.constant 108 : index
    %179 = memref.load %arg2[%c108] : memref<144xf32, #tpu.memory_space<smem>>
    %180 = vector.broadcast %179 : f32 to vector<18x40xf32>
    %181 = arith.mulf %180, %154 : vector<18x40xf32>
    %182 = arith.addf %148, %181 : vector<18x40xf32>
    %c126 = arith.constant 126 : index
    %183 = memref.load %arg2[%c126] : memref<144xf32, #tpu.memory_space<smem>>
    %184 = vector.broadcast %183 : f32 to vector<18x40xf32>
    %185 = arith.mulf %184, %154 : vector<18x40xf32>
    %186 = arith.addf %152, %185 : vector<18x40xf32>
    %c0_122 = arith.constant 0 : index
    %c0_123 = arith.constant 0 : index
    %c1_124 = arith.constant 1 : index
    %187 = vector.load %arg7[%c0_122, %c0_123, %c1_124] : memref<2x20x44xf32, #tpu.memory_space<vmem>>, vector<1x18x40xf32>
    %188 = vector.shape_cast %187 : vector<1x18x40xf32> to vector<18x40xf32>
    %c1_125 = arith.constant 1 : index
    %189 = memref.load %arg2[%c1_125] : memref<144xf32, #tpu.memory_space<smem>>
    %190 = vector.broadcast %189 : f32 to vector<18x40xf32>
    %191 = arith.mulf %190, %188 : vector<18x40xf32>
    %192 = arith.addf %158, %191 : vector<18x40xf32>
    %c19 = arith.constant 19 : index
    %193 = memref.load %arg2[%c19] : memref<144xf32, #tpu.memory_space<smem>>
    %194 = vector.broadcast %193 : f32 to vector<18x40xf32>
    %195 = arith.mulf %194, %188 : vector<18x40xf32>
    %196 = arith.addf %162, %195 : vector<18x40xf32>
    %c37 = arith.constant 37 : index
    %197 = memref.load %arg2[%c37] : memref<144xf32, #tpu.memory_space<smem>>
    %198 = vector.broadcast %197 : f32 to vector<18x40xf32>
    %199 = arith.mulf %198, %188 : vector<18x40xf32>
    %200 = arith.addf %166, %199 : vector<18x40xf32>
    %c55 = arith.constant 55 : index
    %201 = memref.load %arg2[%c55] : memref<144xf32, #tpu.memory_space<smem>>
    %202 = vector.broadcast %201 : f32 to vector<18x40xf32>
    %203 = arith.mulf %202, %188 : vector<18x40xf32>
    %204 = arith.addf %170, %203 : vector<18x40xf32>
    %c73 = arith.constant 73 : index
    %205 = memref.load %arg2[%c73] : memref<144xf32, #tpu.memory_space<smem>>
    %206 = vector.broadcast %205 : f32 to vector<18x40xf32>
    %207 = arith.mulf %206, %188 : vector<18x40xf32>
    %208 = arith.addf %174, %207 : vector<18x40xf32>
    %c91 = arith.constant 91 : index
    %209 = memref.load %arg2[%c91] : memref<144xf32, #tpu.memory_space<smem>>
    %210 = vector.broadcast %209 : f32 to vector<18x40xf32>
    %211 = arith.mulf %210, %188 : vector<18x40xf32>
    %212 = arith.addf %178, %211 : vector<18x40xf32>
    %c109 = arith.constant 109 : index
    %213 = memref.load %arg2[%c109] : memref<144xf32, #tpu.memory_space<smem>>
    %214 = vector.broadcast %213 : f32 to vector<18x40xf32>
    %215 = arith.mulf %214, %188 : vector<18x40xf32>
    %216 = arith.addf %182, %215 : vector<18x40xf32>
    %c127 = arith.constant 127 : index
    %217 = memref.load %arg2[%c127] : memref<144xf32, #tpu.memory_space<smem>>
    %218 = vector.broadcast %217 : f32 to vector<18x40xf32>
    %219 = arith.mulf %218, %188 : vector<18x40xf32>
    %220 = arith.addf %186, %219 : vector<18x40xf32>
    %c0_126 = arith.constant 0 : index
    %c0_127 = arith.constant 0 : index
    %c2_128 = arith.constant 2 : index
    %221 = vector.load %arg7[%c0_126, %c0_127, %c2_128] : memref<2x20x44xf32, #tpu.memory_space<vmem>>, vector<1x18x40xf32>
    %222 = vector.shape_cast %221 : vector<1x18x40xf32> to vector<18x40xf32>
    %c2_129 = arith.constant 2 : index
    %223 = memref.load %arg2[%c2_129] : memref<144xf32, #tpu.memory_space<smem>>
    %224 = vector.broadcast %223 : f32 to vector<18x40xf32>
    %225 = arith.mulf %224, %222 : vector<18x40xf32>
    %226 = arith.addf %192, %225 : vector<18x40xf32>
    %c20_130 = arith.constant 20 : index
    %227 = memref.load %arg2[%c20_130] : memref<144xf32, #tpu.memory_space<smem>>
    %228 = vector.broadcast %227 : f32 to vector<18x40xf32>
    %229 = arith.mulf %228, %222 : vector<18x40xf32>
    %230 = arith.addf %196, %229 : vector<18x40xf32>
    %c38 = arith.constant 38 : index
    %231 = memref.load %arg2[%c38] : memref<144xf32, #tpu.memory_space<smem>>
    %232 = vector.broadcast %231 : f32 to vector<18x40xf32>
    %233 = arith.mulf %232, %222 : vector<18x40xf32>
    %234 = arith.addf %200, %233 : vector<18x40xf32>
    %c56 = arith.constant 56 : index
    %235 = memref.load %arg2[%c56] : memref<144xf32, #tpu.memory_space<smem>>
    %236 = vector.broadcast %235 : f32 to vector<18x40xf32>
    %237 = arith.mulf %236, %222 : vector<18x40xf32>
    %238 = arith.addf %204, %237 : vector<18x40xf32>
    %c74 = arith.constant 74 : index
    %239 = memref.load %arg2[%c74] : memref<144xf32, #tpu.memory_space<smem>>
    %240 = vector.broadcast %239 : f32 to vector<18x40xf32>
    %241 = arith.mulf %240, %222 : vector<18x40xf32>
    %242 = arith.addf %208, %241 : vector<18x40xf32>
    %c92 = arith.constant 92 : index
    %243 = memref.load %arg2[%c92] : memref<144xf32, #tpu.memory_space<smem>>
    %244 = vector.broadcast %243 : f32 to vector<18x40xf32>
    %245 = arith.mulf %244, %222 : vector<18x40xf32>
    %246 = arith.addf %212, %245 : vector<18x40xf32>
    %c110 = arith.constant 110 : index
    %247 = memref.load %arg2[%c110] : memref<144xf32, #tpu.memory_space<smem>>
    %248 = vector.broadcast %247 : f32 to vector<18x40xf32>
    %249 = arith.mulf %248, %222 : vector<18x40xf32>
    %250 = arith.addf %216, %249 : vector<18x40xf32>
    %c128 = arith.constant 128 : index
    %251 = memref.load %arg2[%c128] : memref<144xf32, #tpu.memory_space<smem>>
    %252 = vector.broadcast %251 : f32 to vector<18x40xf32>
    %253 = arith.mulf %252, %222 : vector<18x40xf32>
    %254 = arith.addf %220, %253 : vector<18x40xf32>
    %c0_131 = arith.constant 0 : index
    %c1_132 = arith.constant 1 : index
    %c0_133 = arith.constant 0 : index
    %255 = vector.load %arg7[%c0_131, %c1_132, %c0_133] : memref<2x20x44xf32, #tpu.memory_space<vmem>>, vector<1x18x40xf32>
    %256 = vector.shape_cast %255 : vector<1x18x40xf32> to vector<18x40xf32>
    %c3_134 = arith.constant 3 : index
    %257 = memref.load %arg2[%c3_134] : memref<144xf32, #tpu.memory_space<smem>>
    %258 = vector.broadcast %257 : f32 to vector<18x40xf32>
    %259 = arith.mulf %258, %256 : vector<18x40xf32>
    %260 = arith.addf %226, %259 : vector<18x40xf32>
    %c21 = arith.constant 21 : index
    %261 = memref.load %arg2[%c21] : memref<144xf32, #tpu.memory_space<smem>>
    %262 = vector.broadcast %261 : f32 to vector<18x40xf32>
    %263 = arith.mulf %262, %256 : vector<18x40xf32>
    %264 = arith.addf %230, %263 : vector<18x40xf32>
    %c39 = arith.constant 39 : index
    %265 = memref.load %arg2[%c39] : memref<144xf32, #tpu.memory_space<smem>>
    %266 = vector.broadcast %265 : f32 to vector<18x40xf32>
    %267 = arith.mulf %266, %256 : vector<18x40xf32>
    %268 = arith.addf %234, %267 : vector<18x40xf32>
    %c57 = arith.constant 57 : index
    %269 = memref.load %arg2[%c57] : memref<144xf32, #tpu.memory_space<smem>>
    %270 = vector.broadcast %269 : f32 to vector<18x40xf32>
    %271 = arith.mulf %270, %256 : vector<18x40xf32>
    %272 = arith.addf %238, %271 : vector<18x40xf32>
    %c75 = arith.constant 75 : index
    %273 = memref.load %arg2[%c75] : memref<144xf32, #tpu.memory_space<smem>>
    %274 = vector.broadcast %273 : f32 to vector<18x40xf32>
    %275 = arith.mulf %274, %256 : vector<18x40xf32>
    %276 = arith.addf %242, %275 : vector<18x40xf32>
    %c93 = arith.constant 93 : index
    %277 = memref.load %arg2[%c93] : memref<144xf32, #tpu.memory_space<smem>>
    %278 = vector.broadcast %277 : f32 to vector<18x40xf32>
    %279 = arith.mulf %278, %256 : vector<18x40xf32>
    %280 = arith.addf %246, %279 : vector<18x40xf32>
    %c111 = arith.constant 111 : index
    %281 = memref.load %arg2[%c111] : memref<144xf32, #tpu.memory_space<smem>>
    %282 = vector.broadcast %281 : f32 to vector<18x40xf32>
    %283 = arith.mulf %282, %256 : vector<18x40xf32>
    %284 = arith.addf %250, %283 : vector<18x40xf32>
    %c129 = arith.constant 129 : index
    %285 = memref.load %arg2[%c129] : memref<144xf32, #tpu.memory_space<smem>>
    %286 = vector.broadcast %285 : f32 to vector<18x40xf32>
    %287 = arith.mulf %286, %256 : vector<18x40xf32>
    %288 = arith.addf %254, %287 : vector<18x40xf32>
    %c0_135 = arith.constant 0 : index
    %c1_136 = arith.constant 1 : index
    %c1_137 = arith.constant 1 : index
    %289 = vector.load %arg7[%c0_135, %c1_136, %c1_137] : memref<2x20x44xf32, #tpu.memory_space<vmem>>, vector<1x18x40xf32>
    %290 = vector.shape_cast %289 : vector<1x18x40xf32> to vector<18x40xf32>
    %c4_138 = arith.constant 4 : index
    %291 = memref.load %arg2[%c4_138] : memref<144xf32, #tpu.memory_space<smem>>
    %292 = vector.broadcast %291 : f32 to vector<18x40xf32>
    %293 = arith.mulf %292, %290 : vector<18x40xf32>
    %294 = arith.addf %260, %293 : vector<18x40xf32>
    %c22 = arith.constant 22 : index
    %295 = memref.load %arg2[%c22] : memref<144xf32, #tpu.memory_space<smem>>
    %296 = vector.broadcast %295 : f32 to vector<18x40xf32>
    %297 = arith.mulf %296, %290 : vector<18x40xf32>
    %298 = arith.addf %264, %297 : vector<18x40xf32>
    %c40_139 = arith.constant 40 : index
    %299 = memref.load %arg2[%c40_139] : memref<144xf32, #tpu.memory_space<smem>>
    %300 = vector.broadcast %299 : f32 to vector<18x40xf32>
    %301 = arith.mulf %300, %290 : vector<18x40xf32>
    %302 = arith.addf %268, %301 : vector<18x40xf32>
    %c58 = arith.constant 58 : index
    %303 = memref.load %arg2[%c58] : memref<144xf32, #tpu.memory_space<smem>>
    %304 = vector.broadcast %303 : f32 to vector<18x40xf32>
    %305 = arith.mulf %304, %290 : vector<18x40xf32>
    %306 = arith.addf %272, %305 : vector<18x40xf32>
    %c76 = arith.constant 76 : index
    %307 = memref.load %arg2[%c76] : memref<144xf32, #tpu.memory_space<smem>>
    %308 = vector.broadcast %307 : f32 to vector<18x40xf32>
    %309 = arith.mulf %308, %290 : vector<18x40xf32>
    %310 = arith.addf %276, %309 : vector<18x40xf32>
    %c94 = arith.constant 94 : index
    %311 = memref.load %arg2[%c94] : memref<144xf32, #tpu.memory_space<smem>>
    %312 = vector.broadcast %311 : f32 to vector<18x40xf32>
    %313 = arith.mulf %312, %290 : vector<18x40xf32>
    %314 = arith.addf %280, %313 : vector<18x40xf32>
    %c112 = arith.constant 112 : index
    %315 = memref.load %arg2[%c112] : memref<144xf32, #tpu.memory_space<smem>>
    %316 = vector.broadcast %315 : f32 to vector<18x40xf32>
    %317 = arith.mulf %316, %290 : vector<18x40xf32>
    %318 = arith.addf %284, %317 : vector<18x40xf32>
    %c130 = arith.constant 130 : index
    %319 = memref.load %arg2[%c130] : memref<144xf32, #tpu.memory_space<smem>>
    %320 = vector.broadcast %319 : f32 to vector<18x40xf32>
    %321 = arith.mulf %320, %290 : vector<18x40xf32>
    %322 = arith.addf %288, %321 : vector<18x40xf32>
    %c0_140 = arith.constant 0 : index
    %c1_141 = arith.constant 1 : index
    %c2_142 = arith.constant 2 : index
    %323 = vector.load %arg7[%c0_140, %c1_141, %c2_142] : memref<2x20x44xf32, #tpu.memory_space<vmem>>, vector<1x18x40xf32>
    %324 = vector.shape_cast %323 : vector<1x18x40xf32> to vector<18x40xf32>
    %c5_143 = arith.constant 5 : index
    %325 = memref.load %arg2[%c5_143] : memref<144xf32, #tpu.memory_space<smem>>
    %326 = vector.broadcast %325 : f32 to vector<18x40xf32>
    %327 = arith.mulf %326, %324 : vector<18x40xf32>
    %328 = arith.addf %294, %327 : vector<18x40xf32>
    %c23 = arith.constant 23 : index
    %329 = memref.load %arg2[%c23] : memref<144xf32, #tpu.memory_space<smem>>
    %330 = vector.broadcast %329 : f32 to vector<18x40xf32>
    %331 = arith.mulf %330, %324 : vector<18x40xf32>
    %332 = arith.addf %298, %331 : vector<18x40xf32>
    %c41 = arith.constant 41 : index
    %333 = memref.load %arg2[%c41] : memref<144xf32, #tpu.memory_space<smem>>
    %334 = vector.broadcast %333 : f32 to vector<18x40xf32>
    %335 = arith.mulf %334, %324 : vector<18x40xf32>
    %336 = arith.addf %302, %335 : vector<18x40xf32>
    %c59 = arith.constant 59 : index
    %337 = memref.load %arg2[%c59] : memref<144xf32, #tpu.memory_space<smem>>
    %338 = vector.broadcast %337 : f32 to vector<18x40xf32>
    %339 = arith.mulf %338, %324 : vector<18x40xf32>
    %340 = arith.addf %306, %339 : vector<18x40xf32>
    %c77 = arith.constant 77 : index
    %341 = memref.load %arg2[%c77] : memref<144xf32, #tpu.memory_space<smem>>
    %342 = vector.broadcast %341 : f32 to vector<18x40xf32>
    %343 = arith.mulf %342, %324 : vector<18x40xf32>
    %344 = arith.addf %310, %343 : vector<18x40xf32>
    %c95 = arith.constant 95 : index
    %345 = memref.load %arg2[%c95] : memref<144xf32, #tpu.memory_space<smem>>
    %346 = vector.broadcast %345 : f32 to vector<18x40xf32>
    %347 = arith.mulf %346, %324 : vector<18x40xf32>
    %348 = arith.addf %314, %347 : vector<18x40xf32>
    %c113 = arith.constant 113 : index
    %349 = memref.load %arg2[%c113] : memref<144xf32, #tpu.memory_space<smem>>
    %350 = vector.broadcast %349 : f32 to vector<18x40xf32>
    %351 = arith.mulf %350, %324 : vector<18x40xf32>
    %352 = arith.addf %318, %351 : vector<18x40xf32>
    %c131 = arith.constant 131 : index
    %353 = memref.load %arg2[%c131] : memref<144xf32, #tpu.memory_space<smem>>
    %354 = vector.broadcast %353 : f32 to vector<18x40xf32>
    %355 = arith.mulf %354, %324 : vector<18x40xf32>
    %356 = arith.addf %322, %355 : vector<18x40xf32>
    %c0_144 = arith.constant 0 : index
    %c2_145 = arith.constant 2 : index
    %c0_146 = arith.constant 0 : index
    %357 = vector.load %arg7[%c0_144, %c2_145, %c0_146] : memref<2x20x44xf32, #tpu.memory_space<vmem>>, vector<1x18x40xf32>
    %358 = vector.shape_cast %357 : vector<1x18x40xf32> to vector<18x40xf32>
    %c6_147 = arith.constant 6 : index
    %359 = memref.load %arg2[%c6_147] : memref<144xf32, #tpu.memory_space<smem>>
    %360 = vector.broadcast %359 : f32 to vector<18x40xf32>
    %361 = arith.mulf %360, %358 : vector<18x40xf32>
    %362 = arith.addf %328, %361 : vector<18x40xf32>
    %c24 = arith.constant 24 : index
    %363 = memref.load %arg2[%c24] : memref<144xf32, #tpu.memory_space<smem>>
    %364 = vector.broadcast %363 : f32 to vector<18x40xf32>
    %365 = arith.mulf %364, %358 : vector<18x40xf32>
    %366 = arith.addf %332, %365 : vector<18x40xf32>
    %c42 = arith.constant 42 : index
    %367 = memref.load %arg2[%c42] : memref<144xf32, #tpu.memory_space<smem>>
    %368 = vector.broadcast %367 : f32 to vector<18x40xf32>
    %369 = arith.mulf %368, %358 : vector<18x40xf32>
    %370 = arith.addf %336, %369 : vector<18x40xf32>
    %c60 = arith.constant 60 : index
    %371 = memref.load %arg2[%c60] : memref<144xf32, #tpu.memory_space<smem>>
    %372 = vector.broadcast %371 : f32 to vector<18x40xf32>
    %373 = arith.mulf %372, %358 : vector<18x40xf32>
    %374 = arith.addf %340, %373 : vector<18x40xf32>
    %c78 = arith.constant 78 : index
    %375 = memref.load %arg2[%c78] : memref<144xf32, #tpu.memory_space<smem>>
    %376 = vector.broadcast %375 : f32 to vector<18x40xf32>
    %377 = arith.mulf %376, %358 : vector<18x40xf32>
    %378 = arith.addf %344, %377 : vector<18x40xf32>
    %c96 = arith.constant 96 : index
    %379 = memref.load %arg2[%c96] : memref<144xf32, #tpu.memory_space<smem>>
    %380 = vector.broadcast %379 : f32 to vector<18x40xf32>
    %381 = arith.mulf %380, %358 : vector<18x40xf32>
    %382 = arith.addf %348, %381 : vector<18x40xf32>
    %c114 = arith.constant 114 : index
    %383 = memref.load %arg2[%c114] : memref<144xf32, #tpu.memory_space<smem>>
    %384 = vector.broadcast %383 : f32 to vector<18x40xf32>
    %385 = arith.mulf %384, %358 : vector<18x40xf32>
    %386 = arith.addf %352, %385 : vector<18x40xf32>
    %c132 = arith.constant 132 : index
    %387 = memref.load %arg2[%c132] : memref<144xf32, #tpu.memory_space<smem>>
    %388 = vector.broadcast %387 : f32 to vector<18x40xf32>
    %389 = arith.mulf %388, %358 : vector<18x40xf32>
    %390 = arith.addf %356, %389 : vector<18x40xf32>
    %c0_148 = arith.constant 0 : index
    %c2_149 = arith.constant 2 : index
    %c1_150 = arith.constant 1 : index
    %391 = vector.load %arg7[%c0_148, %c2_149, %c1_150] : memref<2x20x44xf32, #tpu.memory_space<vmem>>, vector<1x18x40xf32>
    %392 = vector.shape_cast %391 : vector<1x18x40xf32> to vector<18x40xf32>
    %c7_151 = arith.constant 7 : index
    %393 = memref.load %arg2[%c7_151] : memref<144xf32, #tpu.memory_space<smem>>
    %394 = vector.broadcast %393 : f32 to vector<18x40xf32>
    %395 = arith.mulf %394, %392 : vector<18x40xf32>
    %396 = arith.addf %362, %395 : vector<18x40xf32>
    %c25 = arith.constant 25 : index
    %397 = memref.load %arg2[%c25] : memref<144xf32, #tpu.memory_space<smem>>
    %398 = vector.broadcast %397 : f32 to vector<18x40xf32>
    %399 = arith.mulf %398, %392 : vector<18x40xf32>
    %400 = arith.addf %366, %399 : vector<18x40xf32>
    %c43 = arith.constant 43 : index
    %401 = memref.load %arg2[%c43] : memref<144xf32, #tpu.memory_space<smem>>
    %402 = vector.broadcast %401 : f32 to vector<18x40xf32>
    %403 = arith.mulf %402, %392 : vector<18x40xf32>
    %404 = arith.addf %370, %403 : vector<18x40xf32>
    %c61 = arith.constant 61 : index
    %405 = memref.load %arg2[%c61] : memref<144xf32, #tpu.memory_space<smem>>
    %406 = vector.broadcast %405 : f32 to vector<18x40xf32>
    %407 = arith.mulf %406, %392 : vector<18x40xf32>
    %408 = arith.addf %374, %407 : vector<18x40xf32>
    %c79 = arith.constant 79 : index
    %409 = memref.load %arg2[%c79] : memref<144xf32, #tpu.memory_space<smem>>
    %410 = vector.broadcast %409 : f32 to vector<18x40xf32>
    %411 = arith.mulf %410, %392 : vector<18x40xf32>
    %412 = arith.addf %378, %411 : vector<18x40xf32>
    %c97 = arith.constant 97 : index
    %413 = memref.load %arg2[%c97] : memref<144xf32, #tpu.memory_space<smem>>
    %414 = vector.broadcast %413 : f32 to vector<18x40xf32>
    %415 = arith.mulf %414, %392 : vector<18x40xf32>
    %416 = arith.addf %382, %415 : vector<18x40xf32>
    %c115 = arith.constant 115 : index
    %417 = memref.load %arg2[%c115] : memref<144xf32, #tpu.memory_space<smem>>
    %418 = vector.broadcast %417 : f32 to vector<18x40xf32>
    %419 = arith.mulf %418, %392 : vector<18x40xf32>
    %420 = arith.addf %386, %419 : vector<18x40xf32>
    %c133 = arith.constant 133 : index
    %421 = memref.load %arg2[%c133] : memref<144xf32, #tpu.memory_space<smem>>
    %422 = vector.broadcast %421 : f32 to vector<18x40xf32>
    %423 = arith.mulf %422, %392 : vector<18x40xf32>
    %424 = arith.addf %390, %423 : vector<18x40xf32>
    %c0_152 = arith.constant 0 : index
    %c2_153 = arith.constant 2 : index
    %c2_154 = arith.constant 2 : index
    %425 = vector.load %arg7[%c0_152, %c2_153, %c2_154] : memref<2x20x44xf32, #tpu.memory_space<vmem>>, vector<1x18x40xf32>
    %426 = vector.shape_cast %425 : vector<1x18x40xf32> to vector<18x40xf32>
    %c8 = arith.constant 8 : index
    %427 = memref.load %arg2[%c8] : memref<144xf32, #tpu.memory_space<smem>>
    %428 = vector.broadcast %427 : f32 to vector<18x40xf32>
    %429 = arith.mulf %428, %426 : vector<18x40xf32>
    %430 = arith.addf %396, %429 : vector<18x40xf32>
    %c26 = arith.constant 26 : index
    %431 = memref.load %arg2[%c26] : memref<144xf32, #tpu.memory_space<smem>>
    %432 = vector.broadcast %431 : f32 to vector<18x40xf32>
    %433 = arith.mulf %432, %426 : vector<18x40xf32>
    %434 = arith.addf %400, %433 : vector<18x40xf32>
    %c44 = arith.constant 44 : index
    %435 = memref.load %arg2[%c44] : memref<144xf32, #tpu.memory_space<smem>>
    %436 = vector.broadcast %435 : f32 to vector<18x40xf32>
    %437 = arith.mulf %436, %426 : vector<18x40xf32>
    %438 = arith.addf %404, %437 : vector<18x40xf32>
    %c62 = arith.constant 62 : index
    %439 = memref.load %arg2[%c62] : memref<144xf32, #tpu.memory_space<smem>>
    %440 = vector.broadcast %439 : f32 to vector<18x40xf32>
    %441 = arith.mulf %440, %426 : vector<18x40xf32>
    %442 = arith.addf %408, %441 : vector<18x40xf32>
    %c80 = arith.constant 80 : index
    %443 = memref.load %arg2[%c80] : memref<144xf32, #tpu.memory_space<smem>>
    %444 = vector.broadcast %443 : f32 to vector<18x40xf32>
    %445 = arith.mulf %444, %426 : vector<18x40xf32>
    %446 = arith.addf %412, %445 : vector<18x40xf32>
    %c98 = arith.constant 98 : index
    %447 = memref.load %arg2[%c98] : memref<144xf32, #tpu.memory_space<smem>>
    %448 = vector.broadcast %447 : f32 to vector<18x40xf32>
    %449 = arith.mulf %448, %426 : vector<18x40xf32>
    %450 = arith.addf %416, %449 : vector<18x40xf32>
    %c116 = arith.constant 116 : index
    %451 = memref.load %arg2[%c116] : memref<144xf32, #tpu.memory_space<smem>>
    %452 = vector.broadcast %451 : f32 to vector<18x40xf32>
    %453 = arith.mulf %452, %426 : vector<18x40xf32>
    %454 = arith.addf %420, %453 : vector<18x40xf32>
    %c134 = arith.constant 134 : index
    %455 = memref.load %arg2[%c134] : memref<144xf32, #tpu.memory_space<smem>>
    %456 = vector.broadcast %455 : f32 to vector<18x40xf32>
    %457 = arith.mulf %456, %426 : vector<18x40xf32>
    %458 = arith.addf %424, %457 : vector<18x40xf32>
    %c1_155 = arith.constant 1 : index
    %c0_156 = arith.constant 0 : index
    %c0_157 = arith.constant 0 : index
    %459 = vector.load %arg7[%c1_155, %c0_156, %c0_157] : memref<2x20x44xf32, #tpu.memory_space<vmem>>, vector<1x18x40xf32>
    %460 = vector.shape_cast %459 : vector<1x18x40xf32> to vector<18x40xf32>
    %c9 = arith.constant 9 : index
    %461 = memref.load %arg2[%c9] : memref<144xf32, #tpu.memory_space<smem>>
    %462 = vector.broadcast %461 : f32 to vector<18x40xf32>
    %463 = arith.mulf %462, %460 : vector<18x40xf32>
    %464 = arith.addf %430, %463 : vector<18x40xf32>
    %c27 = arith.constant 27 : index
    %465 = memref.load %arg2[%c27] : memref<144xf32, #tpu.memory_space<smem>>
    %466 = vector.broadcast %465 : f32 to vector<18x40xf32>
    %467 = arith.mulf %466, %460 : vector<18x40xf32>
    %468 = arith.addf %434, %467 : vector<18x40xf32>
    %c45 = arith.constant 45 : index
    %469 = memref.load %arg2[%c45] : memref<144xf32, #tpu.memory_space<smem>>
    %470 = vector.broadcast %469 : f32 to vector<18x40xf32>
    %471 = arith.mulf %470, %460 : vector<18x40xf32>
    %472 = arith.addf %438, %471 : vector<18x40xf32>
    %c63 = arith.constant 63 : index
    %473 = memref.load %arg2[%c63] : memref<144xf32, #tpu.memory_space<smem>>
    %474 = vector.broadcast %473 : f32 to vector<18x40xf32>
    %475 = arith.mulf %474, %460 : vector<18x40xf32>
    %476 = arith.addf %442, %475 : vector<18x40xf32>
    %c81 = arith.constant 81 : index
    %477 = memref.load %arg2[%c81] : memref<144xf32, #tpu.memory_space<smem>>
    %478 = vector.broadcast %477 : f32 to vector<18x40xf32>
    %479 = arith.mulf %478, %460 : vector<18x40xf32>
    %480 = arith.addf %446, %479 : vector<18x40xf32>
    %c99 = arith.constant 99 : index
    %481 = memref.load %arg2[%c99] : memref<144xf32, #tpu.memory_space<smem>>
    %482 = vector.broadcast %481 : f32 to vector<18x40xf32>
    %483 = arith.mulf %482, %460 : vector<18x40xf32>
    %484 = arith.addf %450, %483 : vector<18x40xf32>
    %c117 = arith.constant 117 : index
    %485 = memref.load %arg2[%c117] : memref<144xf32, #tpu.memory_space<smem>>
    %486 = vector.broadcast %485 : f32 to vector<18x40xf32>
    %487 = arith.mulf %486, %460 : vector<18x40xf32>
    %488 = arith.addf %454, %487 : vector<18x40xf32>
    %c135 = arith.constant 135 : index
    %489 = memref.load %arg2[%c135] : memref<144xf32, #tpu.memory_space<smem>>
    %490 = vector.broadcast %489 : f32 to vector<18x40xf32>
    %491 = arith.mulf %490, %460 : vector<18x40xf32>
    %492 = arith.addf %458, %491 : vector<18x40xf32>
    %c1_158 = arith.constant 1 : index
    %c0_159 = arith.constant 0 : index
    %c1_160 = arith.constant 1 : index
    %493 = vector.load %arg7[%c1_158, %c0_159, %c1_160] : memref<2x20x44xf32, #tpu.memory_space<vmem>>, vector<1x18x40xf32>
    %494 = vector.shape_cast %493 : vector<1x18x40xf32> to vector<18x40xf32>
    %c10 = arith.constant 10 : index
    %495 = memref.load %arg2[%c10] : memref<144xf32, #tpu.memory_space<smem>>
    %496 = vector.broadcast %495 : f32 to vector<18x40xf32>
    %497 = arith.mulf %496, %494 : vector<18x40xf32>
    %498 = arith.addf %464, %497 : vector<18x40xf32>
    %c28 = arith.constant 28 : index
    %499 = memref.load %arg2[%c28] : memref<144xf32, #tpu.memory_space<smem>>
    %500 = vector.broadcast %499 : f32 to vector<18x40xf32>
    %501 = arith.mulf %500, %494 : vector<18x40xf32>
    %502 = arith.addf %468, %501 : vector<18x40xf32>
    %c46 = arith.constant 46 : index
    %503 = memref.load %arg2[%c46] : memref<144xf32, #tpu.memory_space<smem>>
    %504 = vector.broadcast %503 : f32 to vector<18x40xf32>
    %505 = arith.mulf %504, %494 : vector<18x40xf32>
    %506 = arith.addf %472, %505 : vector<18x40xf32>
    %c64 = arith.constant 64 : index
    %507 = memref.load %arg2[%c64] : memref<144xf32, #tpu.memory_space<smem>>
    %508 = vector.broadcast %507 : f32 to vector<18x40xf32>
    %509 = arith.mulf %508, %494 : vector<18x40xf32>
    %510 = arith.addf %476, %509 : vector<18x40xf32>
    %c82 = arith.constant 82 : index
    %511 = memref.load %arg2[%c82] : memref<144xf32, #tpu.memory_space<smem>>
    %512 = vector.broadcast %511 : f32 to vector<18x40xf32>
    %513 = arith.mulf %512, %494 : vector<18x40xf32>
    %514 = arith.addf %480, %513 : vector<18x40xf32>
    %c100 = arith.constant 100 : index
    %515 = memref.load %arg2[%c100] : memref<144xf32, #tpu.memory_space<smem>>
    %516 = vector.broadcast %515 : f32 to vector<18x40xf32>
    %517 = arith.mulf %516, %494 : vector<18x40xf32>
    %518 = arith.addf %484, %517 : vector<18x40xf32>
    %c118 = arith.constant 118 : index
    %519 = memref.load %arg2[%c118] : memref<144xf32, #tpu.memory_space<smem>>
    %520 = vector.broadcast %519 : f32 to vector<18x40xf32>
    %521 = arith.mulf %520, %494 : vector<18x40xf32>
    %522 = arith.addf %488, %521 : vector<18x40xf32>
    %c136 = arith.constant 136 : index
    %523 = memref.load %arg2[%c136] : memref<144xf32, #tpu.memory_space<smem>>
    %524 = vector.broadcast %523 : f32 to vector<18x40xf32>
    %525 = arith.mulf %524, %494 : vector<18x40xf32>
    %526 = arith.addf %492, %525 : vector<18x40xf32>
    %c1_161 = arith.constant 1 : index
    %c0_162 = arith.constant 0 : index
    %c2_163 = arith.constant 2 : index
    %527 = vector.load %arg7[%c1_161, %c0_162, %c2_163] : memref<2x20x44xf32, #tpu.memory_space<vmem>>, vector<1x18x40xf32>
    %528 = vector.shape_cast %527 : vector<1x18x40xf32> to vector<18x40xf32>
    %c11 = arith.constant 11 : index
    %529 = memref.load %arg2[%c11] : memref<144xf32, #tpu.memory_space<smem>>
    %530 = vector.broadcast %529 : f32 to vector<18x40xf32>
    %531 = arith.mulf %530, %528 : vector<18x40xf32>
    %532 = arith.addf %498, %531 : vector<18x40xf32>
    %c29 = arith.constant 29 : index
    %533 = memref.load %arg2[%c29] : memref<144xf32, #tpu.memory_space<smem>>
    %534 = vector.broadcast %533 : f32 to vector<18x40xf32>
    %535 = arith.mulf %534, %528 : vector<18x40xf32>
    %536 = arith.addf %502, %535 : vector<18x40xf32>
    %c47 = arith.constant 47 : index
    %537 = memref.load %arg2[%c47] : memref<144xf32, #tpu.memory_space<smem>>
    %538 = vector.broadcast %537 : f32 to vector<18x40xf32>
    %539 = arith.mulf %538, %528 : vector<18x40xf32>
    %540 = arith.addf %506, %539 : vector<18x40xf32>
    %c65 = arith.constant 65 : index
    %541 = memref.load %arg2[%c65] : memref<144xf32, #tpu.memory_space<smem>>
    %542 = vector.broadcast %541 : f32 to vector<18x40xf32>
    %543 = arith.mulf %542, %528 : vector<18x40xf32>
    %544 = arith.addf %510, %543 : vector<18x40xf32>
    %c83 = arith.constant 83 : index
    %545 = memref.load %arg2[%c83] : memref<144xf32, #tpu.memory_space<smem>>
    %546 = vector.broadcast %545 : f32 to vector<18x40xf32>
    %547 = arith.mulf %546, %528 : vector<18x40xf32>
    %548 = arith.addf %514, %547 : vector<18x40xf32>
    %c101 = arith.constant 101 : index
    %549 = memref.load %arg2[%c101] : memref<144xf32, #tpu.memory_space<smem>>
    %550 = vector.broadcast %549 : f32 to vector<18x40xf32>
    %551 = arith.mulf %550, %528 : vector<18x40xf32>
    %552 = arith.addf %518, %551 : vector<18x40xf32>
    %c119 = arith.constant 119 : index
    %553 = memref.load %arg2[%c119] : memref<144xf32, #tpu.memory_space<smem>>
    %554 = vector.broadcast %553 : f32 to vector<18x40xf32>
    %555 = arith.mulf %554, %528 : vector<18x40xf32>
    %556 = arith.addf %522, %555 : vector<18x40xf32>
    %c137 = arith.constant 137 : index
    %557 = memref.load %arg2[%c137] : memref<144xf32, #tpu.memory_space<smem>>
    %558 = vector.broadcast %557 : f32 to vector<18x40xf32>
    %559 = arith.mulf %558, %528 : vector<18x40xf32>
    %560 = arith.addf %526, %559 : vector<18x40xf32>
    %c1_164 = arith.constant 1 : index
    %c1_165 = arith.constant 1 : index
    %c0_166 = arith.constant 0 : index
    %561 = vector.load %arg7[%c1_164, %c1_165, %c0_166] : memref<2x20x44xf32, #tpu.memory_space<vmem>>, vector<1x18x40xf32>
    %562 = vector.shape_cast %561 : vector<1x18x40xf32> to vector<18x40xf32>
    %c12 = arith.constant 12 : index
    %563 = memref.load %arg2[%c12] : memref<144xf32, #tpu.memory_space<smem>>
    %564 = vector.broadcast %563 : f32 to vector<18x40xf32>
    %565 = arith.mulf %564, %562 : vector<18x40xf32>
    %566 = arith.addf %532, %565 : vector<18x40xf32>
    %c30 = arith.constant 30 : index
    %567 = memref.load %arg2[%c30] : memref<144xf32, #tpu.memory_space<smem>>
    %568 = vector.broadcast %567 : f32 to vector<18x40xf32>
    %569 = arith.mulf %568, %562 : vector<18x40xf32>
    %570 = arith.addf %536, %569 : vector<18x40xf32>
    %c48 = arith.constant 48 : index
    %571 = memref.load %arg2[%c48] : memref<144xf32, #tpu.memory_space<smem>>
    %572 = vector.broadcast %571 : f32 to vector<18x40xf32>
    %573 = arith.mulf %572, %562 : vector<18x40xf32>
    %574 = arith.addf %540, %573 : vector<18x40xf32>
    %c66 = arith.constant 66 : index
    %575 = memref.load %arg2[%c66] : memref<144xf32, #tpu.memory_space<smem>>
    %576 = vector.broadcast %575 : f32 to vector<18x40xf32>
    %577 = arith.mulf %576, %562 : vector<18x40xf32>
    %578 = arith.addf %544, %577 : vector<18x40xf32>
    %c84 = arith.constant 84 : index
    %579 = memref.load %arg2[%c84] : memref<144xf32, #tpu.memory_space<smem>>
    %580 = vector.broadcast %579 : f32 to vector<18x40xf32>
    %581 = arith.mulf %580, %562 : vector<18x40xf32>
    %582 = arith.addf %548, %581 : vector<18x40xf32>
    %c102 = arith.constant 102 : index
    %583 = memref.load %arg2[%c102] : memref<144xf32, #tpu.memory_space<smem>>
    %584 = vector.broadcast %583 : f32 to vector<18x40xf32>
    %585 = arith.mulf %584, %562 : vector<18x40xf32>
    %586 = arith.addf %552, %585 : vector<18x40xf32>
    %c120 = arith.constant 120 : index
    %587 = memref.load %arg2[%c120] : memref<144xf32, #tpu.memory_space<smem>>
    %588 = vector.broadcast %587 : f32 to vector<18x40xf32>
    %589 = arith.mulf %588, %562 : vector<18x40xf32>
    %590 = arith.addf %556, %589 : vector<18x40xf32>
    %c138 = arith.constant 138 : index
    %591 = memref.load %arg2[%c138] : memref<144xf32, #tpu.memory_space<smem>>
    %592 = vector.broadcast %591 : f32 to vector<18x40xf32>
    %593 = arith.mulf %592, %562 : vector<18x40xf32>
    %594 = arith.addf %560, %593 : vector<18x40xf32>
    %c1_167 = arith.constant 1 : index
    %c1_168 = arith.constant 1 : index
    %c1_169 = arith.constant 1 : index
    %595 = vector.load %arg7[%c1_167, %c1_168, %c1_169] : memref<2x20x44xf32, #tpu.memory_space<vmem>>, vector<1x18x40xf32>
    %596 = vector.shape_cast %595 : vector<1x18x40xf32> to vector<18x40xf32>
    %c13 = arith.constant 13 : index
    %597 = memref.load %arg2[%c13] : memref<144xf32, #tpu.memory_space<smem>>
    %598 = vector.broadcast %597 : f32 to vector<18x40xf32>
    %599 = arith.mulf %598, %596 : vector<18x40xf32>
    %600 = arith.addf %566, %599 : vector<18x40xf32>
    %c31 = arith.constant 31 : index
    %601 = memref.load %arg2[%c31] : memref<144xf32, #tpu.memory_space<smem>>
    %602 = vector.broadcast %601 : f32 to vector<18x40xf32>
    %603 = arith.mulf %602, %596 : vector<18x40xf32>
    %604 = arith.addf %570, %603 : vector<18x40xf32>
    %c49 = arith.constant 49 : index
    %605 = memref.load %arg2[%c49] : memref<144xf32, #tpu.memory_space<smem>>
    %606 = vector.broadcast %605 : f32 to vector<18x40xf32>
    %607 = arith.mulf %606, %596 : vector<18x40xf32>
    %608 = arith.addf %574, %607 : vector<18x40xf32>
    %c67 = arith.constant 67 : index
    %609 = memref.load %arg2[%c67] : memref<144xf32, #tpu.memory_space<smem>>
    %610 = vector.broadcast %609 : f32 to vector<18x40xf32>
    %611 = arith.mulf %610, %596 : vector<18x40xf32>
    %612 = arith.addf %578, %611 : vector<18x40xf32>
    %c85 = arith.constant 85 : index
    %613 = memref.load %arg2[%c85] : memref<144xf32, #tpu.memory_space<smem>>
    %614 = vector.broadcast %613 : f32 to vector<18x40xf32>
    %615 = arith.mulf %614, %596 : vector<18x40xf32>
    %616 = arith.addf %582, %615 : vector<18x40xf32>
    %c103 = arith.constant 103 : index
    %617 = memref.load %arg2[%c103] : memref<144xf32, #tpu.memory_space<smem>>
    %618 = vector.broadcast %617 : f32 to vector<18x40xf32>
    %619 = arith.mulf %618, %596 : vector<18x40xf32>
    %620 = arith.addf %586, %619 : vector<18x40xf32>
    %c121 = arith.constant 121 : index
    %621 = memref.load %arg2[%c121] : memref<144xf32, #tpu.memory_space<smem>>
    %622 = vector.broadcast %621 : f32 to vector<18x40xf32>
    %623 = arith.mulf %622, %596 : vector<18x40xf32>
    %624 = arith.addf %590, %623 : vector<18x40xf32>
    %c139 = arith.constant 139 : index
    %625 = memref.load %arg2[%c139] : memref<144xf32, #tpu.memory_space<smem>>
    %626 = vector.broadcast %625 : f32 to vector<18x40xf32>
    %627 = arith.mulf %626, %596 : vector<18x40xf32>
    %628 = arith.addf %594, %627 : vector<18x40xf32>
    %c1_170 = arith.constant 1 : index
    %c1_171 = arith.constant 1 : index
    %c2_172 = arith.constant 2 : index
    %629 = vector.load %arg7[%c1_170, %c1_171, %c2_172] : memref<2x20x44xf32, #tpu.memory_space<vmem>>, vector<1x18x40xf32>
    %630 = vector.shape_cast %629 : vector<1x18x40xf32> to vector<18x40xf32>
    %c14 = arith.constant 14 : index
    %631 = memref.load %arg2[%c14] : memref<144xf32, #tpu.memory_space<smem>>
    %632 = vector.broadcast %631 : f32 to vector<18x40xf32>
    %633 = arith.mulf %632, %630 : vector<18x40xf32>
    %634 = arith.addf %600, %633 : vector<18x40xf32>
    %c32 = arith.constant 32 : index
    %635 = memref.load %arg2[%c32] : memref<144xf32, #tpu.memory_space<smem>>
    %636 = vector.broadcast %635 : f32 to vector<18x40xf32>
    %637 = arith.mulf %636, %630 : vector<18x40xf32>
    %638 = arith.addf %604, %637 : vector<18x40xf32>
    %c50 = arith.constant 50 : index
    %639 = memref.load %arg2[%c50] : memref<144xf32, #tpu.memory_space<smem>>
    %640 = vector.broadcast %639 : f32 to vector<18x40xf32>
    %641 = arith.mulf %640, %630 : vector<18x40xf32>
    %642 = arith.addf %608, %641 : vector<18x40xf32>
    %c68 = arith.constant 68 : index
    %643 = memref.load %arg2[%c68] : memref<144xf32, #tpu.memory_space<smem>>
    %644 = vector.broadcast %643 : f32 to vector<18x40xf32>
    %645 = arith.mulf %644, %630 : vector<18x40xf32>
    %646 = arith.addf %612, %645 : vector<18x40xf32>
    %c86 = arith.constant 86 : index
    %647 = memref.load %arg2[%c86] : memref<144xf32, #tpu.memory_space<smem>>
    %648 = vector.broadcast %647 : f32 to vector<18x40xf32>
    %649 = arith.mulf %648, %630 : vector<18x40xf32>
    %650 = arith.addf %616, %649 : vector<18x40xf32>
    %c104 = arith.constant 104 : index
    %651 = memref.load %arg2[%c104] : memref<144xf32, #tpu.memory_space<smem>>
    %652 = vector.broadcast %651 : f32 to vector<18x40xf32>
    %653 = arith.mulf %652, %630 : vector<18x40xf32>
    %654 = arith.addf %620, %653 : vector<18x40xf32>
    %c122 = arith.constant 122 : index
    %655 = memref.load %arg2[%c122] : memref<144xf32, #tpu.memory_space<smem>>
    %656 = vector.broadcast %655 : f32 to vector<18x40xf32>
    %657 = arith.mulf %656, %630 : vector<18x40xf32>
    %658 = arith.addf %624, %657 : vector<18x40xf32>
    %c140 = arith.constant 140 : index
    %659 = memref.load %arg2[%c140] : memref<144xf32, #tpu.memory_space<smem>>
    %660 = vector.broadcast %659 : f32 to vector<18x40xf32>
    %661 = arith.mulf %660, %630 : vector<18x40xf32>
    %662 = arith.addf %628, %661 : vector<18x40xf32>
    %c1_173 = arith.constant 1 : index
    %c2_174 = arith.constant 2 : index
    %c0_175 = arith.constant 0 : index
    %663 = vector.load %arg7[%c1_173, %c2_174, %c0_175] : memref<2x20x44xf32, #tpu.memory_space<vmem>>, vector<1x18x40xf32>
    %664 = vector.shape_cast %663 : vector<1x18x40xf32> to vector<18x40xf32>
    %c15 = arith.constant 15 : index
    %665 = memref.load %arg2[%c15] : memref<144xf32, #tpu.memory_space<smem>>
    %666 = vector.broadcast %665 : f32 to vector<18x40xf32>
    %667 = arith.mulf %666, %664 : vector<18x40xf32>
    %668 = arith.addf %634, %667 : vector<18x40xf32>
    %c33 = arith.constant 33 : index
    %669 = memref.load %arg2[%c33] : memref<144xf32, #tpu.memory_space<smem>>
    %670 = vector.broadcast %669 : f32 to vector<18x40xf32>
    %671 = arith.mulf %670, %664 : vector<18x40xf32>
    %672 = arith.addf %638, %671 : vector<18x40xf32>
    %c51 = arith.constant 51 : index
    %673 = memref.load %arg2[%c51] : memref<144xf32, #tpu.memory_space<smem>>
    %674 = vector.broadcast %673 : f32 to vector<18x40xf32>
    %675 = arith.mulf %674, %664 : vector<18x40xf32>
    %676 = arith.addf %642, %675 : vector<18x40xf32>
    %c69 = arith.constant 69 : index
    %677 = memref.load %arg2[%c69] : memref<144xf32, #tpu.memory_space<smem>>
    %678 = vector.broadcast %677 : f32 to vector<18x40xf32>
    %679 = arith.mulf %678, %664 : vector<18x40xf32>
    %680 = arith.addf %646, %679 : vector<18x40xf32>
    %c87 = arith.constant 87 : index
    %681 = memref.load %arg2[%c87] : memref<144xf32, #tpu.memory_space<smem>>
    %682 = vector.broadcast %681 : f32 to vector<18x40xf32>
    %683 = arith.mulf %682, %664 : vector<18x40xf32>
    %684 = arith.addf %650, %683 : vector<18x40xf32>
    %c105 = arith.constant 105 : index
    %685 = memref.load %arg2[%c105] : memref<144xf32, #tpu.memory_space<smem>>
    %686 = vector.broadcast %685 : f32 to vector<18x40xf32>
    %687 = arith.mulf %686, %664 : vector<18x40xf32>
    %688 = arith.addf %654, %687 : vector<18x40xf32>
    %c123 = arith.constant 123 : index
    %689 = memref.load %arg2[%c123] : memref<144xf32, #tpu.memory_space<smem>>
    %690 = vector.broadcast %689 : f32 to vector<18x40xf32>
    %691 = arith.mulf %690, %664 : vector<18x40xf32>
    %692 = arith.addf %658, %691 : vector<18x40xf32>
    %c141 = arith.constant 141 : index
    %693 = memref.load %arg2[%c141] : memref<144xf32, #tpu.memory_space<smem>>
    %694 = vector.broadcast %693 : f32 to vector<18x40xf32>
    %695 = arith.mulf %694, %664 : vector<18x40xf32>
    %696 = arith.addf %662, %695 : vector<18x40xf32>
    %c1_176 = arith.constant 1 : index
    %c2_177 = arith.constant 2 : index
    %c1_178 = arith.constant 1 : index
    %697 = vector.load %arg7[%c1_176, %c2_177, %c1_178] : memref<2x20x44xf32, #tpu.memory_space<vmem>>, vector<1x18x40xf32>
    %698 = vector.shape_cast %697 : vector<1x18x40xf32> to vector<18x40xf32>
    %c16_179 = arith.constant 16 : index
    %699 = memref.load %arg2[%c16_179] : memref<144xf32, #tpu.memory_space<smem>>
    %700 = vector.broadcast %699 : f32 to vector<18x40xf32>
    %701 = arith.mulf %700, %698 : vector<18x40xf32>
    %702 = arith.addf %668, %701 : vector<18x40xf32>
    %c34 = arith.constant 34 : index
    %703 = memref.load %arg2[%c34] : memref<144xf32, #tpu.memory_space<smem>>
    %704 = vector.broadcast %703 : f32 to vector<18x40xf32>
    %705 = arith.mulf %704, %698 : vector<18x40xf32>
    %706 = arith.addf %672, %705 : vector<18x40xf32>
    %c52 = arith.constant 52 : index
    %707 = memref.load %arg2[%c52] : memref<144xf32, #tpu.memory_space<smem>>
    %708 = vector.broadcast %707 : f32 to vector<18x40xf32>
    %709 = arith.mulf %708, %698 : vector<18x40xf32>
    %710 = arith.addf %676, %709 : vector<18x40xf32>
    %c70 = arith.constant 70 : index
    %711 = memref.load %arg2[%c70] : memref<144xf32, #tpu.memory_space<smem>>
    %712 = vector.broadcast %711 : f32 to vector<18x40xf32>
    %713 = arith.mulf %712, %698 : vector<18x40xf32>
    %714 = arith.addf %680, %713 : vector<18x40xf32>
    %c88 = arith.constant 88 : index
    %715 = memref.load %arg2[%c88] : memref<144xf32, #tpu.memory_space<smem>>
    %716 = vector.broadcast %715 : f32 to vector<18x40xf32>
    %717 = arith.mulf %716, %698 : vector<18x40xf32>
    %718 = arith.addf %684, %717 : vector<18x40xf32>
    %c106 = arith.constant 106 : index
    %719 = memref.load %arg2[%c106] : memref<144xf32, #tpu.memory_space<smem>>
    %720 = vector.broadcast %719 : f32 to vector<18x40xf32>
    %721 = arith.mulf %720, %698 : vector<18x40xf32>
    %722 = arith.addf %688, %721 : vector<18x40xf32>
    %c124 = arith.constant 124 : index
    %723 = memref.load %arg2[%c124] : memref<144xf32, #tpu.memory_space<smem>>
    %724 = vector.broadcast %723 : f32 to vector<18x40xf32>
    %725 = arith.mulf %724, %698 : vector<18x40xf32>
    %726 = arith.addf %692, %725 : vector<18x40xf32>
    %c142 = arith.constant 142 : index
    %727 = memref.load %arg2[%c142] : memref<144xf32, #tpu.memory_space<smem>>
    %728 = vector.broadcast %727 : f32 to vector<18x40xf32>
    %729 = arith.mulf %728, %698 : vector<18x40xf32>
    %730 = arith.addf %696, %729 : vector<18x40xf32>
    %c1_180 = arith.constant 1 : index
    %c2_181 = arith.constant 2 : index
    %c2_182 = arith.constant 2 : index
    %731 = vector.load %arg7[%c1_180, %c2_181, %c2_182] : memref<2x20x44xf32, #tpu.memory_space<vmem>>, vector<1x18x40xf32>
    %732 = vector.shape_cast %731 : vector<1x18x40xf32> to vector<18x40xf32>
    %c17 = arith.constant 17 : index
    %733 = memref.load %arg2[%c17] : memref<144xf32, #tpu.memory_space<smem>>
    %734 = vector.broadcast %733 : f32 to vector<18x40xf32>
    %735 = arith.mulf %734, %732 : vector<18x40xf32>
    %736 = arith.addf %702, %735 : vector<18x40xf32>
    %c35 = arith.constant 35 : index
    %737 = memref.load %arg2[%c35] : memref<144xf32, #tpu.memory_space<smem>>
    %738 = vector.broadcast %737 : f32 to vector<18x40xf32>
    %739 = arith.mulf %738, %732 : vector<18x40xf32>
    %740 = arith.addf %706, %739 : vector<18x40xf32>
    %c53 = arith.constant 53 : index
    %741 = memref.load %arg2[%c53] : memref<144xf32, #tpu.memory_space<smem>>
    %742 = vector.broadcast %741 : f32 to vector<18x40xf32>
    %743 = arith.mulf %742, %732 : vector<18x40xf32>
    %744 = arith.addf %710, %743 : vector<18x40xf32>
    %c71 = arith.constant 71 : index
    %745 = memref.load %arg2[%c71] : memref<144xf32, #tpu.memory_space<smem>>
    %746 = vector.broadcast %745 : f32 to vector<18x40xf32>
    %747 = arith.mulf %746, %732 : vector<18x40xf32>
    %748 = arith.addf %714, %747 : vector<18x40xf32>
    %c89 = arith.constant 89 : index
    %749 = memref.load %arg2[%c89] : memref<144xf32, #tpu.memory_space<smem>>
    %750 = vector.broadcast %749 : f32 to vector<18x40xf32>
    %751 = arith.mulf %750, %732 : vector<18x40xf32>
    %752 = arith.addf %718, %751 : vector<18x40xf32>
    %c107 = arith.constant 107 : index
    %753 = memref.load %arg2[%c107] : memref<144xf32, #tpu.memory_space<smem>>
    %754 = vector.broadcast %753 : f32 to vector<18x40xf32>
    %755 = arith.mulf %754, %732 : vector<18x40xf32>
    %756 = arith.addf %722, %755 : vector<18x40xf32>
    %c125 = arith.constant 125 : index
    %757 = memref.load %arg2[%c125] : memref<144xf32, #tpu.memory_space<smem>>
    %758 = vector.broadcast %757 : f32 to vector<18x40xf32>
    %759 = arith.mulf %758, %732 : vector<18x40xf32>
    %760 = arith.addf %726, %759 : vector<18x40xf32>
    %c143 = arith.constant 143 : index
    %761 = memref.load %arg2[%c143] : memref<144xf32, #tpu.memory_space<smem>>
    %762 = vector.broadcast %761 : f32 to vector<18x40xf32>
    %763 = arith.mulf %762, %732 : vector<18x40xf32>
    %764 = arith.addf %730, %763 : vector<18x40xf32>
    %cst_183 = arith.constant 0.000000e+00 : f32
    %765 = vector.broadcast %cst_183 : f32 to vector<18x40xf32>
    %766 = arith.subf %765, %736 : vector<18x40xf32>
    %767 = math.exp %766 : vector<18x40xf32>
    %cst_184 = arith.constant 1.000000e+00 : f32
    %768 = vector.broadcast %cst_184 : f32 to vector<18x40xf32>
    %769 = arith.addf %768, %767 : vector<18x40xf32>
    %cst_185 = arith.constant 1.000000e+00 : f32
    %770 = vector.broadcast %cst_185 : f32 to vector<18x40xf32>
    %771 = arith.divf %770, %769 : vector<18x40xf32>
    %772 = arith.mulf %736, %771 : vector<18x40xf32>
    %c0_186 = arith.constant 0 : index
    %c0_187 = arith.constant 0 : index
    %773 = vector.load %arg8[%c0_186, %c0_187] : memref<18x44xf32, #tpu.memory_space<vmem>>, vector<18x40xf32>
    tpu.vector_store %arg8[%c0_186, %c0_187], %772 {strides = array<i32>} : memref<18x44xf32, #tpu.memory_space<vmem>>, vector<18x40xf32>,
    %c0_188 = arith.constant 0 : index
    %774 = memref.load %arg3[%c0_188] : memref<144xf32, #tpu.memory_space<smem>>
    %c0_189 = arith.constant 0 : index
    %c0_190 = arith.constant 0 : index
    %775 = vector.load %arg8[%c0_189, %c0_190] : memref<18x44xf32, #tpu.memory_space<vmem>>, vector<16x40xf32>
    %776 = vector.broadcast %774 : f32 to vector<16x40xf32>
    %777 = arith.mulf %776, %775 : vector<16x40xf32>
    %778 = arith.addf %96, %777 : vector<16x40xf32>
    %c1_191 = arith.constant 1 : index
    %779 = memref.load %arg3[%c1_191] : memref<144xf32, #tpu.memory_space<smem>>
    %c0_192 = arith.constant 0 : index
    %c1_193 = arith.constant 1 : index
    %780 = vector.load %arg8[%c0_192, %c1_193] : memref<18x44xf32, #tpu.memory_space<vmem>>, vector<16x40xf32>
    %781 = vector.broadcast %779 : f32 to vector<16x40xf32>
    %782 = arith.mulf %781, %780 : vector<16x40xf32>
    %783 = arith.addf %778, %782 : vector<16x40xf32>
    %c2_194 = arith.constant 2 : index
    %784 = memref.load %arg3[%c2_194] : memref<144xf32, #tpu.memory_space<smem>>
    %c0_195 = arith.constant 0 : index
    %c2_196 = arith.constant 2 : index
    %785 = vector.load %arg8[%c0_195, %c2_196] : memref<18x44xf32, #tpu.memory_space<vmem>>, vector<16x40xf32>
    %786 = vector.broadcast %784 : f32 to vector<16x40xf32>
    %787 = arith.mulf %786, %785 : vector<16x40xf32>
    %788 = arith.addf %783, %787 : vector<16x40xf32>
    %c3_197 = arith.constant 3 : index
    %789 = memref.load %arg3[%c3_197] : memref<144xf32, #tpu.memory_space<smem>>
    %c1_198 = arith.constant 1 : index
    %c0_199 = arith.constant 0 : index
    %790 = vector.load %arg8[%c1_198, %c0_199] : memref<18x44xf32, #tpu.memory_space<vmem>>, vector<16x40xf32>
    %791 = vector.broadcast %789 : f32 to vector<16x40xf32>
    %792 = arith.mulf %791, %790 : vector<16x40xf32>
    %793 = arith.addf %788, %792 : vector<16x40xf32>
    %c4_200 = arith.constant 4 : index
    %794 = memref.load %arg3[%c4_200] : memref<144xf32, #tpu.memory_space<smem>>
    %c1_201 = arith.constant 1 : index
    %c1_202 = arith.constant 1 : index
    %795 = vector.load %arg8[%c1_201, %c1_202] : memref<18x44xf32, #tpu.memory_space<vmem>>, vector<16x40xf32>
    %796 = vector.broadcast %794 : f32 to vector<16x40xf32>
    %797 = arith.mulf %796, %795 : vector<16x40xf32>
    %798 = arith.addf %793, %797 : vector<16x40xf32>
    %c5_203 = arith.constant 5 : index
    %799 = memref.load %arg3[%c5_203] : memref<144xf32, #tpu.memory_space<smem>>
    %c1_204 = arith.constant 1 : index
    %c2_205 = arith.constant 2 : index
    %800 = vector.load %arg8[%c1_204, %c2_205] : memref<18x44xf32, #tpu.memory_space<vmem>>, vector<16x40xf32>
    %801 = vector.broadcast %799 : f32 to vector<16x40xf32>
    %802 = arith.mulf %801, %800 : vector<16x40xf32>
    %803 = arith.addf %798, %802 : vector<16x40xf32>
    %c6_206 = arith.constant 6 : index
    %804 = memref.load %arg3[%c6_206] : memref<144xf32, #tpu.memory_space<smem>>
    %c2_207 = arith.constant 2 : index
    %c0_208 = arith.constant 0 : index
    %805 = vector.load %arg8[%c2_207, %c0_208] : memref<18x44xf32, #tpu.memory_space<vmem>>, vector<16x40xf32>
    %806 = vector.broadcast %804 : f32 to vector<16x40xf32>
    %807 = arith.mulf %806, %805 : vector<16x40xf32>
    %808 = arith.addf %803, %807 : vector<16x40xf32>
    %c7_209 = arith.constant 7 : index
    %809 = memref.load %arg3[%c7_209] : memref<144xf32, #tpu.memory_space<smem>>
    %c2_210 = arith.constant 2 : index
    %c1_211 = arith.constant 1 : index
    %810 = vector.load %arg8[%c2_210, %c1_211] : memref<18x44xf32, #tpu.memory_space<vmem>>, vector<16x40xf32>
    %811 = vector.broadcast %809 : f32 to vector<16x40xf32>
    %812 = arith.mulf %811, %810 : vector<16x40xf32>
    %813 = arith.addf %808, %812 : vector<16x40xf32>
    %c8_212 = arith.constant 8 : index
    %814 = memref.load %arg3[%c8_212] : memref<144xf32, #tpu.memory_space<smem>>
    %c2_213 = arith.constant 2 : index
    %c2_214 = arith.constant 2 : index
    %815 = vector.load %arg8[%c2_213, %c2_214] : memref<18x44xf32, #tpu.memory_space<vmem>>, vector<16x40xf32>
    %816 = vector.broadcast %814 : f32 to vector<16x40xf32>
    %817 = arith.mulf %816, %815 : vector<16x40xf32>
    %818 = arith.addf %813, %817 : vector<16x40xf32>
    %c72_215 = arith.constant 72 : index
    %819 = memref.load %arg3[%c72_215] : memref<144xf32, #tpu.memory_space<smem>>
    %c0_216 = arith.constant 0 : index
    %c0_217 = arith.constant 0 : index
    %820 = vector.load %arg8[%c0_216, %c0_217] : memref<18x44xf32, #tpu.memory_space<vmem>>, vector<16x40xf32>
    %821 = vector.broadcast %819 : f32 to vector<16x40xf32>
    %822 = arith.mulf %821, %820 : vector<16x40xf32>
    %823 = arith.addf %120, %822 : vector<16x40xf32>
    %c73_218 = arith.constant 73 : index
    %824 = memref.load %arg3[%c73_218] : memref<144xf32, #tpu.memory_space<smem>>
    %c0_219 = arith.constant 0 : index
    %c1_220 = arith.constant 1 : index
    %825 = vector.load %arg8[%c0_219, %c1_220] : memref<18x44xf32, #tpu.memory_space<vmem>>, vector<16x40xf32>
    %826 = vector.broadcast %824 : f32 to vector<16x40xf32>
    %827 = arith.mulf %826, %825 : vector<16x40xf32>
    %828 = arith.addf %823, %827 : vector<16x40xf32>
    %c74_221 = arith.constant 74 : index
    %829 = memref.load %arg3[%c74_221] : memref<144xf32, #tpu.memory_space<smem>>
    %c0_222 = arith.constant 0 : index
    %c2_223 = arith.constant 2 : index
    %830 = vector.load %arg8[%c0_222, %c2_223] : memref<18x44xf32, #tpu.memory_space<vmem>>, vector<16x40xf32>
    %831 = vector.broadcast %829 : f32 to vector<16x40xf32>
    %832 = arith.mulf %831, %830 : vector<16x40xf32>
    %833 = arith.addf %828, %832 : vector<16x40xf32>
    %c75_224 = arith.constant 75 : index
    %834 = memref.load %arg3[%c75_224] : memref<144xf32, #tpu.memory_space<smem>>
    %c1_225 = arith.constant 1 : index
    %c0_226 = arith.constant 0 : index
    %835 = vector.load %arg8[%c1_225, %c0_226] : memref<18x44xf32, #tpu.memory_space<vmem>>, vector<16x40xf32>
    %836 = vector.broadcast %834 : f32 to vector<16x40xf32>
    %837 = arith.mulf %836, %835 : vector<16x40xf32>
    %838 = arith.addf %833, %837 : vector<16x40xf32>
    %c76_227 = arith.constant 76 : index
    %839 = memref.load %arg3[%c76_227] : memref<144xf32, #tpu.memory_space<smem>>
    %c1_228 = arith.constant 1 : index
    %c1_229 = arith.constant 1 : index
    %840 = vector.load %arg8[%c1_228, %c1_229] : memref<18x44xf32, #tpu.memory_space<vmem>>, vector<16x40xf32>
    %841 = vector.broadcast %839 : f32 to vector<16x40xf32>
    %842 = arith.mulf %841, %840 : vector<16x40xf32>
    %843 = arith.addf %838, %842 : vector<16x40xf32>
    %c77_230 = arith.constant 77 : index
    %844 = memref.load %arg3[%c77_230] : memref<144xf32, #tpu.memory_space<smem>>
    %c1_231 = arith.constant 1 : index
    %c2_232 = arith.constant 2 : index
    %845 = vector.load %arg8[%c1_231, %c2_232] : memref<18x44xf32, #tpu.memory_space<vmem>>, vector<16x40xf32>
    %846 = vector.broadcast %844 : f32 to vector<16x40xf32>
    %847 = arith.mulf %846, %845 : vector<16x40xf32>
    %848 = arith.addf %843, %847 : vector<16x40xf32>
    %c78_233 = arith.constant 78 : index
    %849 = memref.load %arg3[%c78_233] : memref<144xf32, #tpu.memory_space<smem>>
    %c2_234 = arith.constant 2 : index
    %c0_235 = arith.constant 0 : index
    %850 = vector.load %arg8[%c2_234, %c0_235] : memref<18x44xf32, #tpu.memory_space<vmem>>, vector<16x40xf32>
    %851 = vector.broadcast %849 : f32 to vector<16x40xf32>
    %852 = arith.mulf %851, %850 : vector<16x40xf32>
    %853 = arith.addf %848, %852 : vector<16x40xf32>
    %c79_236 = arith.constant 79 : index
    %854 = memref.load %arg3[%c79_236] : memref<144xf32, #tpu.memory_space<smem>>
    %c2_237 = arith.constant 2 : index
    %c1_238 = arith.constant 1 : index
    %855 = vector.load %arg8[%c2_237, %c1_238] : memref<18x44xf32, #tpu.memory_space<vmem>>, vector<16x40xf32>
    %856 = vector.broadcast %854 : f32 to vector<16x40xf32>
    %857 = arith.mulf %856, %855 : vector<16x40xf32>
    %858 = arith.addf %853, %857 : vector<16x40xf32>
    %c80_239 = arith.constant 80 : index
    %859 = memref.load %arg3[%c80_239] : memref<144xf32, #tpu.memory_space<smem>>
    %c2_240 = arith.constant 2 : index
    %c2_241 = arith.constant 2 : index
    %860 = vector.load %arg8[%c2_240, %c2_241] : memref<18x44xf32, #tpu.memory_space<vmem>>, vector<16x40xf32>
    %861 = vector.broadcast %859 : f32 to vector<16x40xf32>
    %862 = arith.mulf %861, %860 : vector<16x40xf32>
    %863 = arith.addf %858, %862 : vector<16x40xf32>
    %cst_242 = arith.constant 0.000000e+00 : f32
    %864 = vector.broadcast %cst_242 : f32 to vector<18x40xf32>
    %865 = arith.subf %864, %740 : vector<18x40xf32>
    %866 = math.exp %865 : vector<18x40xf32>
    %cst_243 = arith.constant 1.000000e+00 : f32
    %867 = vector.broadcast %cst_243 : f32 to vector<18x40xf32>
    %868 = arith.addf %867, %866 : vector<18x40xf32>
    %cst_244 = arith.constant 1.000000e+00 : f32
    %869 = vector.broadcast %cst_244 : f32 to vector<18x40xf32>
    %870 = arith.divf %869, %868 : vector<18x40xf32>
    %871 = arith.mulf %740, %870 : vector<18x40xf32>
    %c0_245 = arith.constant 0 : index
    %c0_246 = arith.constant 0 : index
    %872 = vector.load %arg8[%c0_245, %c0_246] : memref<18x44xf32, #tpu.memory_space<vmem>>, vector<18x40xf32>
    tpu.vector_store %arg8[%c0_245, %c0_246], %871 {strides = array<i32>} : memref<18x44xf32, #tpu.memory_space<vmem>>, vector<18x40xf32>,
    %c9_247 = arith.constant 9 : index
    %873 = memref.load %arg3[%c9_247] : memref<144xf32, #tpu.memory_space<smem>>
    %c0_248 = arith.constant 0 : index
    %c0_249 = arith.constant 0 : index
    %874 = vector.load %arg8[%c0_248, %c0_249] : memref<18x44xf32, #tpu.memory_space<vmem>>, vector<16x40xf32>
    %875 = vector.broadcast %873 : f32 to vector<16x40xf32>
    %876 = arith.mulf %875, %874 : vector<16x40xf32>
    %877 = arith.addf %818, %876 : vector<16x40xf32>
    %c10_250 = arith.constant 10 : index
    %878 = memref.load %arg3[%c10_250] : memref<144xf32, #tpu.memory_space<smem>>
    %c0_251 = arith.constant 0 : index
    %c1_252 = arith.constant 1 : index
    %879 = vector.load %arg8[%c0_251, %c1_252] : memref<18x44xf32, #tpu.memory_space<vmem>>, vector<16x40xf32>
    %880 = vector.broadcast %878 : f32 to vector<16x40xf32>
    %881 = arith.mulf %880, %879 : vector<16x40xf32>
    %882 = arith.addf %877, %881 : vector<16x40xf32>
    %c11_253 = arith.constant 11 : index
    %883 = memref.load %arg3[%c11_253] : memref<144xf32, #tpu.memory_space<smem>>
    %c0_254 = arith.constant 0 : index
    %c2_255 = arith.constant 2 : index
    %884 = vector.load %arg8[%c0_254, %c2_255] : memref<18x44xf32, #tpu.memory_space<vmem>>, vector<16x40xf32>
    %885 = vector.broadcast %883 : f32 to vector<16x40xf32>
    %886 = arith.mulf %885, %884 : vector<16x40xf32>
    %887 = arith.addf %882, %886 : vector<16x40xf32>
    %c12_256 = arith.constant 12 : index
    %888 = memref.load %arg3[%c12_256] : memref<144xf32, #tpu.memory_space<smem>>
    %c1_257 = arith.constant 1 : index
    %c0_258 = arith.constant 0 : index
    %889 = vector.load %arg8[%c1_257, %c0_258] : memref<18x44xf32, #tpu.memory_space<vmem>>, vector<16x40xf32>
    %890 = vector.broadcast %888 : f32 to vector<16x40xf32>
    %891 = arith.mulf %890, %889 : vector<16x40xf32>
    %892 = arith.addf %887, %891 : vector<16x40xf32>
    %c13_259 = arith.constant 13 : index
    %893 = memref.load %arg3[%c13_259] : memref<144xf32, #tpu.memory_space<smem>>
    %c1_260 = arith.constant 1 : index
    %c1_261 = arith.constant 1 : index
    %894 = vector.load %arg8[%c1_260, %c1_261] : memref<18x44xf32, #tpu.memory_space<vmem>>, vector<16x40xf32>
    %895 = vector.broadcast %893 : f32 to vector<16x40xf32>
    %896 = arith.mulf %895, %894 : vector<16x40xf32>
    %897 = arith.addf %892, %896 : vector<16x40xf32>
    %c14_262 = arith.constant 14 : index
    %898 = memref.load %arg3[%c14_262] : memref<144xf32, #tpu.memory_space<smem>>
    %c1_263 = arith.constant 1 : index
    %c2_264 = arith.constant 2 : index
    %899 = vector.load %arg8[%c1_263, %c2_264] : memref<18x44xf32, #tpu.memory_space<vmem>>, vector<16x40xf32>
    %900 = vector.broadcast %898 : f32 to vector<16x40xf32>
    %901 = arith.mulf %900, %899 : vector<16x40xf32>
    %902 = arith.addf %897, %901 : vector<16x40xf32>
    %c15_265 = arith.constant 15 : index
    %903 = memref.load %arg3[%c15_265] : memref<144xf32, #tpu.memory_space<smem>>
    %c2_266 = arith.constant 2 : index
    %c0_267 = arith.constant 0 : index
    %904 = vector.load %arg8[%c2_266, %c0_267] : memref<18x44xf32, #tpu.memory_space<vmem>>, vector<16x40xf32>
    %905 = vector.broadcast %903 : f32 to vector<16x40xf32>
    %906 = arith.mulf %905, %904 : vector<16x40xf32>
    %907 = arith.addf %902, %906 : vector<16x40xf32>
    %c16_268 = arith.constant 16 : index
    %908 = memref.load %arg3[%c16_268] : memref<144xf32, #tpu.memory_space<smem>>
    %c2_269 = arith.constant 2 : index
    %c1_270 = arith.constant 1 : index
    %909 = vector.load %arg8[%c2_269, %c1_270] : memref<18x44xf32, #tpu.memory_space<vmem>>, vector<16x40xf32>
    %910 = vector.broadcast %908 : f32 to vector<16x40xf32>
    %911 = arith.mulf %910, %909 : vector<16x40xf32>
    %912 = arith.addf %907, %911 : vector<16x40xf32>
    %c17_271 = arith.constant 17 : index
    %913 = memref.load %arg3[%c17_271] : memref<144xf32, #tpu.memory_space<smem>>
    %c2_272 = arith.constant 2 : index
    %c2_273 = arith.constant 2 : index
    %914 = vector.load %arg8[%c2_272, %c2_273] : memref<18x44xf32, #tpu.memory_space<vmem>>, vector<16x40xf32>
    %915 = vector.broadcast %913 : f32 to vector<16x40xf32>
    %916 = arith.mulf %915, %914 : vector<16x40xf32>
    %917 = arith.addf %912, %916 : vector<16x40xf32>
    %c81_274 = arith.constant 81 : index
    %918 = memref.load %arg3[%c81_274] : memref<144xf32, #tpu.memory_space<smem>>
    %c0_275 = arith.constant 0 : index
    %c0_276 = arith.constant 0 : index
    %919 = vector.load %arg8[%c0_275, %c0_276] : memref<18x44xf32, #tpu.memory_space<vmem>>, vector<16x40xf32>
    %920 = vector.broadcast %918 : f32 to vector<16x40xf32>
    %921 = arith.mulf %920, %919 : vector<16x40xf32>
    %922 = arith.addf %863, %921 : vector<16x40xf32>
    %c82_277 = arith.constant 82 : index
    %923 = memref.load %arg3[%c82_277] : memref<144xf32, #tpu.memory_space<smem>>
    %c0_278 = arith.constant 0 : index
    %c1_279 = arith.constant 1 : index
    %924 = vector.load %arg8[%c0_278, %c1_279] : memref<18x44xf32, #tpu.memory_space<vmem>>, vector<16x40xf32>
    %925 = vector.broadcast %923 : f32 to vector<16x40xf32>
    %926 = arith.mulf %925, %924 : vector<16x40xf32>
    %927 = arith.addf %922, %926 : vector<16x40xf32>
    %c83_280 = arith.constant 83 : index
    %928 = memref.load %arg3[%c83_280] : memref<144xf32, #tpu.memory_space<smem>>
    %c0_281 = arith.constant 0 : index
    %c2_282 = arith.constant 2 : index
    %929 = vector.load %arg8[%c0_281, %c2_282] : memref<18x44xf32, #tpu.memory_space<vmem>>, vector<16x40xf32>
    %930 = vector.broadcast %928 : f32 to vector<16x40xf32>
    %931 = arith.mulf %930, %929 : vector<16x40xf32>
    %932 = arith.addf %927, %931 : vector<16x40xf32>
    %c84_283 = arith.constant 84 : index
    %933 = memref.load %arg3[%c84_283] : memref<144xf32, #tpu.memory_space<smem>>
    %c1_284 = arith.constant 1 : index
    %c0_285 = arith.constant 0 : index
    %934 = vector.load %arg8[%c1_284, %c0_285] : memref<18x44xf32, #tpu.memory_space<vmem>>, vector<16x40xf32>
    %935 = vector.broadcast %933 : f32 to vector<16x40xf32>
    %936 = arith.mulf %935, %934 : vector<16x40xf32>
    %937 = arith.addf %932, %936 : vector<16x40xf32>
    %c85_286 = arith.constant 85 : index
    %938 = memref.load %arg3[%c85_286] : memref<144xf32, #tpu.memory_space<smem>>
    %c1_287 = arith.constant 1 : index
    %c1_288 = arith.constant 1 : index
    %939 = vector.load %arg8[%c1_287, %c1_288] : memref<18x44xf32, #tpu.memory_space<vmem>>, vector<16x40xf32>
    %940 = vector.broadcast %938 : f32 to vector<16x40xf32>
    %941 = arith.mulf %940, %939 : vector<16x40xf32>
    %942 = arith.addf %937, %941 : vector<16x40xf32>
    %c86_289 = arith.constant 86 : index
    %943 = memref.load %arg3[%c86_289] : memref<144xf32, #tpu.memory_space<smem>>
    %c1_290 = arith.constant 1 : index
    %c2_291 = arith.constant 2 : index
    %944 = vector.load %arg8[%c1_290, %c2_291] : memref<18x44xf32, #tpu.memory_space<vmem>>, vector<16x40xf32>
    %945 = vector.broadcast %943 : f32 to vector<16x40xf32>
    %946 = arith.mulf %945, %944 : vector<16x40xf32>
    %947 = arith.addf %942, %946 : vector<16x40xf32>
    %c87_292 = arith.constant 87 : index
    %948 = memref.load %arg3[%c87_292] : memref<144xf32, #tpu.memory_space<smem>>
    %c2_293 = arith.constant 2 : index
    %c0_294 = arith.constant 0 : index
    %949 = vector.load %arg8[%c2_293, %c0_294] : memref<18x44xf32, #tpu.memory_space<vmem>>, vector<16x40xf32>
    %950 = vector.broadcast %948 : f32 to vector<16x40xf32>
    %951 = arith.mulf %950, %949 : vector<16x40xf32>
    %952 = arith.addf %947, %951 : vector<16x40xf32>
    %c88_295 = arith.constant 88 : index
    %953 = memref.load %arg3[%c88_295] : memref<144xf32, #tpu.memory_space<smem>>
    %c2_296 = arith.constant 2 : index
    %c1_297 = arith.constant 1 : index
    %954 = vector.load %arg8[%c2_296, %c1_297] : memref<18x44xf32, #tpu.memory_space<vmem>>, vector<16x40xf32>
    %955 = vector.broadcast %953 : f32 to vector<16x40xf32>
    %956 = arith.mulf %955, %954 : vector<16x40xf32>
    %957 = arith.addf %952, %956 : vector<16x40xf32>
    %c89_298 = arith.constant 89 : index
    %958 = memref.load %arg3[%c89_298] : memref<144xf32, #tpu.memory_space<smem>>
    %c2_299 = arith.constant 2 : index
    %c2_300 = arith.constant 2 : index
    %959 = vector.load %arg8[%c2_299, %c2_300] : memref<18x44xf32, #tpu.memory_space<vmem>>, vector<16x40xf32>
    %960 = vector.broadcast %958 : f32 to vector<16x40xf32>
    %961 = arith.mulf %960, %959 : vector<16x40xf32>
    %962 = arith.addf %957, %961 : vector<16x40xf32>
    %cst_301 = arith.constant 0.000000e+00 : f32
    %963 = vector.broadcast %cst_301 : f32 to vector<18x40xf32>
    %964 = arith.subf %963, %744 : vector<18x40xf32>
    %965 = math.exp %964 : vector<18x40xf32>
    %cst_302 = arith.constant 1.000000e+00 : f32
    %966 = vector.broadcast %cst_302 : f32 to vector<18x40xf32>
    %967 = arith.addf %966, %965 : vector<18x40xf32>
    %cst_303 = arith.constant 1.000000e+00 : f32
    %968 = vector.broadcast %cst_303 : f32 to vector<18x40xf32>
    %969 = arith.divf %968, %967 : vector<18x40xf32>
    %970 = arith.mulf %744, %969 : vector<18x40xf32>
    %c0_304 = arith.constant 0 : index
    %c0_305 = arith.constant 0 : index
    %971 = vector.load %arg8[%c0_304, %c0_305] : memref<18x44xf32, #tpu.memory_space<vmem>>, vector<18x40xf32>
    tpu.vector_store %arg8[%c0_304, %c0_305], %970 {strides = array<i32>} : memref<18x44xf32, #tpu.memory_space<vmem>>, vector<18x40xf32>,
    %c18_306 = arith.constant 18 : index
    %972 = memref.load %arg3[%c18_306] : memref<144xf32, #tpu.memory_space<smem>>
    %c0_307 = arith.constant 0 : index
    %c0_308 = arith.constant 0 : index
    %973 = vector.load %arg8[%c0_307, %c0_308] : memref<18x44xf32, #tpu.memory_space<vmem>>, vector<16x40xf32>
    %974 = vector.broadcast %972 : f32 to vector<16x40xf32>
    %975 = arith.mulf %974, %973 : vector<16x40xf32>
    %976 = arith.addf %917, %975 : vector<16x40xf32>
    %c19_309 = arith.constant 19 : index
    %977 = memref.load %arg3[%c19_309] : memref<144xf32, #tpu.memory_space<smem>>
    %c0_310 = arith.constant 0 : index
    %c1_311 = arith.constant 1 : index
    %978 = vector.load %arg8[%c0_310, %c1_311] : memref<18x44xf32, #tpu.memory_space<vmem>>, vector<16x40xf32>
    %979 = vector.broadcast %977 : f32 to vector<16x40xf32>
    %980 = arith.mulf %979, %978 : vector<16x40xf32>
    %981 = arith.addf %976, %980 : vector<16x40xf32>
    %c20_312 = arith.constant 20 : index
    %982 = memref.load %arg3[%c20_312] : memref<144xf32, #tpu.memory_space<smem>>
    %c0_313 = arith.constant 0 : index
    %c2_314 = arith.constant 2 : index
    %983 = vector.load %arg8[%c0_313, %c2_314] : memref<18x44xf32, #tpu.memory_space<vmem>>, vector<16x40xf32>
    %984 = vector.broadcast %982 : f32 to vector<16x40xf32>
    %985 = arith.mulf %984, %983 : vector<16x40xf32>
    %986 = arith.addf %981, %985 : vector<16x40xf32>
    %c21_315 = arith.constant 21 : index
    %987 = memref.load %arg3[%c21_315] : memref<144xf32, #tpu.memory_space<smem>>
    %c1_316 = arith.constant 1 : index
    %c0_317 = arith.constant 0 : index
    %988 = vector.load %arg8[%c1_316, %c0_317] : memref<18x44xf32, #tpu.memory_space<vmem>>, vector<16x40xf32>
    %989 = vector.broadcast %987 : f32 to vector<16x40xf32>
    %990 = arith.mulf %989, %988 : vector<16x40xf32>
    %991 = arith.addf %986, %990 : vector<16x40xf32>
    %c22_318 = arith.constant 22 : index
    %992 = memref.load %arg3[%c22_318] : memref<144xf32, #tpu.memory_space<smem>>
    %c1_319 = arith.constant 1 : index
    %c1_320 = arith.constant 1 : index
    %993 = vector.load %arg8[%c1_319, %c1_320] : memref<18x44xf32, #tpu.memory_space<vmem>>, vector<16x40xf32>
    %994 = vector.broadcast %992 : f32 to vector<16x40xf32>
    %995 = arith.mulf %994, %993 : vector<16x40xf32>
    %996 = arith.addf %991, %995 : vector<16x40xf32>
    %c23_321 = arith.constant 23 : index
    %997 = memref.load %arg3[%c23_321] : memref<144xf32, #tpu.memory_space<smem>>
    %c1_322 = arith.constant 1 : index
    %c2_323 = arith.constant 2 : index
    %998 = vector.load %arg8[%c1_322, %c2_323] : memref<18x44xf32, #tpu.memory_space<vmem>>, vector<16x40xf32>
    %999 = vector.broadcast %997 : f32 to vector<16x40xf32>
    %1000 = arith.mulf %999, %998 : vector<16x40xf32>
    %1001 = arith.addf %996, %1000 : vector<16x40xf32>
    %c24_324 = arith.constant 24 : index
    %1002 = memref.load %arg3[%c24_324] : memref<144xf32, #tpu.memory_space<smem>>
    %c2_325 = arith.constant 2 : index
    %c0_326 = arith.constant 0 : index
    %1003 = vector.load %arg8[%c2_325, %c0_326] : memref<18x44xf32, #tpu.memory_space<vmem>>, vector<16x40xf32>
    %1004 = vector.broadcast %1002 : f32 to vector<16x40xf32>
    %1005 = arith.mulf %1004, %1003 : vector<16x40xf32>
    %1006 = arith.addf %1001, %1005 : vector<16x40xf32>
    %c25_327 = arith.constant 25 : index
    %1007 = memref.load %arg3[%c25_327] : memref<144xf32, #tpu.memory_space<smem>>
    %c2_328 = arith.constant 2 : index
    %c1_329 = arith.constant 1 : index
    %1008 = vector.load %arg8[%c2_328, %c1_329] : memref<18x44xf32, #tpu.memory_space<vmem>>, vector<16x40xf32>
    %1009 = vector.broadcast %1007 : f32 to vector<16x40xf32>
    %1010 = arith.mulf %1009, %1008 : vector<16x40xf32>
    %1011 = arith.addf %1006, %1010 : vector<16x40xf32>
    %c26_330 = arith.constant 26 : index
    %1012 = memref.load %arg3[%c26_330] : memref<144xf32, #tpu.memory_space<smem>>
    %c2_331 = arith.constant 2 : index
    %c2_332 = arith.constant 2 : index
    %1013 = vector.load %arg8[%c2_331, %c2_332] : memref<18x44xf32, #tpu.memory_space<vmem>>, vector<16x40xf32>
    %1014 = vector.broadcast %1012 : f32 to vector<16x40xf32>
    %1015 = arith.mulf %1014, %1013 : vector<16x40xf32>
    %1016 = arith.addf %1011, %1015 : vector<16x40xf32>
    %c90_333 = arith.constant 90 : index
    %1017 = memref.load %arg3[%c90_333] : memref<144xf32, #tpu.memory_space<smem>>
    %c0_334 = arith.constant 0 : index
    %c0_335 = arith.constant 0 : index
    %1018 = vector.load %arg8[%c0_334, %c0_335] : memref<18x44xf32, #tpu.memory_space<vmem>>, vector<16x40xf32>
    %1019 = vector.broadcast %1017 : f32 to vector<16x40xf32>
    %1020 = arith.mulf %1019, %1018 : vector<16x40xf32>
    %1021 = arith.addf %962, %1020 : vector<16x40xf32>
    %c91_336 = arith.constant 91 : index
    %1022 = memref.load %arg3[%c91_336] : memref<144xf32, #tpu.memory_space<smem>>
    %c0_337 = arith.constant 0 : index
    %c1_338 = arith.constant 1 : index
    %1023 = vector.load %arg8[%c0_337, %c1_338] : memref<18x44xf32, #tpu.memory_space<vmem>>, vector<16x40xf32>
    %1024 = vector.broadcast %1022 : f32 to vector<16x40xf32>
    %1025 = arith.mulf %1024, %1023 : vector<16x40xf32>
    %1026 = arith.addf %1021, %1025 : vector<16x40xf32>
    %c92_339 = arith.constant 92 : index
    %1027 = memref.load %arg3[%c92_339] : memref<144xf32, #tpu.memory_space<smem>>
    %c0_340 = arith.constant 0 : index
    %c2_341 = arith.constant 2 : index
    %1028 = vector.load %arg8[%c0_340, %c2_341] : memref<18x44xf32, #tpu.memory_space<vmem>>, vector<16x40xf32>
    %1029 = vector.broadcast %1027 : f32 to vector<16x40xf32>
    %1030 = arith.mulf %1029, %1028 : vector<16x40xf32>
    %1031 = arith.addf %1026, %1030 : vector<16x40xf32>
    %c93_342 = arith.constant 93 : index
    %1032 = memref.load %arg3[%c93_342] : memref<144xf32, #tpu.memory_space<smem>>
    %c1_343 = arith.constant 1 : index
    %c0_344 = arith.constant 0 : index
    %1033 = vector.load %arg8[%c1_343, %c0_344] : memref<18x44xf32, #tpu.memory_space<vmem>>, vector<16x40xf32>
    %1034 = vector.broadcast %1032 : f32 to vector<16x40xf32>
    %1035 = arith.mulf %1034, %1033 : vector<16x40xf32>
    %1036 = arith.addf %1031, %1035 : vector<16x40xf32>
    %c94_345 = arith.constant 94 : index
    %1037 = memref.load %arg3[%c94_345] : memref<144xf32, #tpu.memory_space<smem>>
    %c1_346 = arith.constant 1 : index
    %c1_347 = arith.constant 1 : index
    %1038 = vector.load %arg8[%c1_346, %c1_347] : memref<18x44xf32, #tpu.memory_space<vmem>>, vector<16x40xf32>
    %1039 = vector.broadcast %1037 : f32 to vector<16x40xf32>
    %1040 = arith.mulf %1039, %1038 : vector<16x40xf32>
    %1041 = arith.addf %1036, %1040 : vector<16x40xf32>
    %c95_348 = arith.constant 95 : index
    %1042 = memref.load %arg3[%c95_348] : memref<144xf32, #tpu.memory_space<smem>>
    %c1_349 = arith.constant 1 : index
    %c2_350 = arith.constant 2 : index
    %1043 = vector.load %arg8[%c1_349, %c2_350] : memref<18x44xf32, #tpu.memory_space<vmem>>, vector<16x40xf32>
    %1044 = vector.broadcast %1042 : f32 to vector<16x40xf32>
    %1045 = arith.mulf %1044, %1043 : vector<16x40xf32>
    %1046 = arith.addf %1041, %1045 : vector<16x40xf32>
    %c96_351 = arith.constant 96 : index
    %1047 = memref.load %arg3[%c96_351] : memref<144xf32, #tpu.memory_space<smem>>
    %c2_352 = arith.constant 2 : index
    %c0_353 = arith.constant 0 : index
    %1048 = vector.load %arg8[%c2_352, %c0_353] : memref<18x44xf32, #tpu.memory_space<vmem>>, vector<16x40xf32>
    %1049 = vector.broadcast %1047 : f32 to vector<16x40xf32>
    %1050 = arith.mulf %1049, %1048 : vector<16x40xf32>
    %1051 = arith.addf %1046, %1050 : vector<16x40xf32>
    %c97_354 = arith.constant 97 : index
    %1052 = memref.load %arg3[%c97_354] : memref<144xf32, #tpu.memory_space<smem>>
    %c2_355 = arith.constant 2 : index
    %c1_356 = arith.constant 1 : index
    %1053 = vector.load %arg8[%c2_355, %c1_356] : memref<18x44xf32, #tpu.memory_space<vmem>>, vector<16x40xf32>
    %1054 = vector.broadcast %1052 : f32 to vector<16x40xf32>
    %1055 = arith.mulf %1054, %1053 : vector<16x40xf32>
    %1056 = arith.addf %1051, %1055 : vector<16x40xf32>
    %c98_357 = arith.constant 98 : index
    %1057 = memref.load %arg3[%c98_357] : memref<144xf32, #tpu.memory_space<smem>>
    %c2_358 = arith.constant 2 : index
    %c2_359 = arith.constant 2 : index
    %1058 = vector.load %arg8[%c2_358, %c2_359] : memref<18x44xf32, #tpu.memory_space<vmem>>, vector<16x40xf32>
    %1059 = vector.broadcast %1057 : f32 to vector<16x40xf32>
    %1060 = arith.mulf %1059, %1058 : vector<16x40xf32>
    %1061 = arith.addf %1056, %1060 : vector<16x40xf32>
    %cst_360 = arith.constant 0.000000e+00 : f32
    %1062 = vector.broadcast %cst_360 : f32 to vector<18x40xf32>
    %1063 = arith.subf %1062, %748 : vector<18x40xf32>
    %1064 = math.exp %1063 : vector<18x40xf32>
    %cst_361 = arith.constant 1.000000e+00 : f32
    %1065 = vector.broadcast %cst_361 : f32 to vector<18x40xf32>
    %1066 = arith.addf %1065, %1064 : vector<18x40xf32>
    %cst_362 = arith.constant 1.000000e+00 : f32
    %1067 = vector.broadcast %cst_362 : f32 to vector<18x40xf32>
    %1068 = arith.divf %1067, %1066 : vector<18x40xf32>
    %1069 = arith.mulf %748, %1068 : vector<18x40xf32>
    %c0_363 = arith.constant 0 : index
    %c0_364 = arith.constant 0 : index
    %1070 = vector.load %arg8[%c0_363, %c0_364] : memref<18x44xf32, #tpu.memory_space<vmem>>, vector<18x40xf32>
    tpu.vector_store %arg8[%c0_363, %c0_364], %1069 {strides = array<i32>} : memref<18x44xf32, #tpu.memory_space<vmem>>, vector<18x40xf32>,
    %c27_365 = arith.constant 27 : index
    %1071 = memref.load %arg3[%c27_365] : memref<144xf32, #tpu.memory_space<smem>>
    %c0_366 = arith.constant 0 : index
    %c0_367 = arith.constant 0 : index
    %1072 = vector.load %arg8[%c0_366, %c0_367] : memref<18x44xf32, #tpu.memory_space<vmem>>, vector<16x40xf32>
    %1073 = vector.broadcast %1071 : f32 to vector<16x40xf32>
    %1074 = arith.mulf %1073, %1072 : vector<16x40xf32>
    %1075 = arith.addf %1016, %1074 : vector<16x40xf32>
    %c28_368 = arith.constant 28 : index
    %1076 = memref.load %arg3[%c28_368] : memref<144xf32, #tpu.memory_space<smem>>
    %c0_369 = arith.constant 0 : index
    %c1_370 = arith.constant 1 : index
    %1077 = vector.load %arg8[%c0_369, %c1_370] : memref<18x44xf32, #tpu.memory_space<vmem>>, vector<16x40xf32>
    %1078 = vector.broadcast %1076 : f32 to vector<16x40xf32>
    %1079 = arith.mulf %1078, %1077 : vector<16x40xf32>
    %1080 = arith.addf %1075, %1079 : vector<16x40xf32>
    %c29_371 = arith.constant 29 : index
    %1081 = memref.load %arg3[%c29_371] : memref<144xf32, #tpu.memory_space<smem>>
    %c0_372 = arith.constant 0 : index
    %c2_373 = arith.constant 2 : index
    %1082 = vector.load %arg8[%c0_372, %c2_373] : memref<18x44xf32, #tpu.memory_space<vmem>>, vector<16x40xf32>
    %1083 = vector.broadcast %1081 : f32 to vector<16x40xf32>
    %1084 = arith.mulf %1083, %1082 : vector<16x40xf32>
    %1085 = arith.addf %1080, %1084 : vector<16x40xf32>
    %c30_374 = arith.constant 30 : index
    %1086 = memref.load %arg3[%c30_374] : memref<144xf32, #tpu.memory_space<smem>>
    %c1_375 = arith.constant 1 : index
    %c0_376 = arith.constant 0 : index
    %1087 = vector.load %arg8[%c1_375, %c0_376] : memref<18x44xf32, #tpu.memory_space<vmem>>, vector<16x40xf32>
    %1088 = vector.broadcast %1086 : f32 to vector<16x40xf32>
    %1089 = arith.mulf %1088, %1087 : vector<16x40xf32>
    %1090 = arith.addf %1085, %1089 : vector<16x40xf32>
    %c31_377 = arith.constant 31 : index
    %1091 = memref.load %arg3[%c31_377] : memref<144xf32, #tpu.memory_space<smem>>
    %c1_378 = arith.constant 1 : index
    %c1_379 = arith.constant 1 : index
    %1092 = vector.load %arg8[%c1_378, %c1_379] : memref<18x44xf32, #tpu.memory_space<vmem>>, vector<16x40xf32>
    %1093 = vector.broadcast %1091 : f32 to vector<16x40xf32>
    %1094 = arith.mulf %1093, %1092 : vector<16x40xf32>
    %1095 = arith.addf %1090, %1094 : vector<16x40xf32>
    %c32_380 = arith.constant 32 : index
    %1096 = memref.load %arg3[%c32_380] : memref<144xf32, #tpu.memory_space<smem>>
    %c1_381 = arith.constant 1 : index
    %c2_382 = arith.constant 2 : index
    %1097 = vector.load %arg8[%c1_381, %c2_382] : memref<18x44xf32, #tpu.memory_space<vmem>>, vector<16x40xf32>
    %1098 = vector.broadcast %1096 : f32 to vector<16x40xf32>
    %1099 = arith.mulf %1098, %1097 : vector<16x40xf32>
    %1100 = arith.addf %1095, %1099 : vector<16x40xf32>
    %c33_383 = arith.constant 33 : index
    %1101 = memref.load %arg3[%c33_383] : memref<144xf32, #tpu.memory_space<smem>>
    %c2_384 = arith.constant 2 : index
    %c0_385 = arith.constant 0 : index
    %1102 = vector.load %arg8[%c2_384, %c0_385] : memref<18x44xf32, #tpu.memory_space<vmem>>, vector<16x40xf32>
    %1103 = vector.broadcast %1101 : f32 to vector<16x40xf32>
    %1104 = arith.mulf %1103, %1102 : vector<16x40xf32>
    %1105 = arith.addf %1100, %1104 : vector<16x40xf32>
    %c34_386 = arith.constant 34 : index
    %1106 = memref.load %arg3[%c34_386] : memref<144xf32, #tpu.memory_space<smem>>
    %c2_387 = arith.constant 2 : index
    %c1_388 = arith.constant 1 : index
    %1107 = vector.load %arg8[%c2_387, %c1_388] : memref<18x44xf32, #tpu.memory_space<vmem>>, vector<16x40xf32>
    %1108 = vector.broadcast %1106 : f32 to vector<16x40xf32>
    %1109 = arith.mulf %1108, %1107 : vector<16x40xf32>
    %1110 = arith.addf %1105, %1109 : vector<16x40xf32>
    %c35_389 = arith.constant 35 : index
    %1111 = memref.load %arg3[%c35_389] : memref<144xf32, #tpu.memory_space<smem>>
    %c2_390 = arith.constant 2 : index
    %c2_391 = arith.constant 2 : index
    %1112 = vector.load %arg8[%c2_390, %c2_391] : memref<18x44xf32, #tpu.memory_space<vmem>>, vector<16x40xf32>
    %1113 = vector.broadcast %1111 : f32 to vector<16x40xf32>
    %1114 = arith.mulf %1113, %1112 : vector<16x40xf32>
    %1115 = arith.addf %1110, %1114 : vector<16x40xf32>
    %c99_392 = arith.constant 99 : index
    %1116 = memref.load %arg3[%c99_392] : memref<144xf32, #tpu.memory_space<smem>>
    %c0_393 = arith.constant 0 : index
    %c0_394 = arith.constant 0 : index
    %1117 = vector.load %arg8[%c0_393, %c0_394] : memref<18x44xf32, #tpu.memory_space<vmem>>, vector<16x40xf32>
    %1118 = vector.broadcast %1116 : f32 to vector<16x40xf32>
    %1119 = arith.mulf %1118, %1117 : vector<16x40xf32>
    %1120 = arith.addf %1061, %1119 : vector<16x40xf32>
    %c100_395 = arith.constant 100 : index
    %1121 = memref.load %arg3[%c100_395] : memref<144xf32, #tpu.memory_space<smem>>
    %c0_396 = arith.constant 0 : index
    %c1_397 = arith.constant 1 : index
    %1122 = vector.load %arg8[%c0_396, %c1_397] : memref<18x44xf32, #tpu.memory_space<vmem>>, vector<16x40xf32>
    %1123 = vector.broadcast %1121 : f32 to vector<16x40xf32>
    %1124 = arith.mulf %1123, %1122 : vector<16x40xf32>
    %1125 = arith.addf %1120, %1124 : vector<16x40xf32>
    %c101_398 = arith.constant 101 : index
    %1126 = memref.load %arg3[%c101_398] : memref<144xf32, #tpu.memory_space<smem>>
    %c0_399 = arith.constant 0 : index
    %c2_400 = arith.constant 2 : index
    %1127 = vector.load %arg8[%c0_399, %c2_400] : memref<18x44xf32, #tpu.memory_space<vmem>>, vector<16x40xf32>
    %1128 = vector.broadcast %1126 : f32 to vector<16x40xf32>
    %1129 = arith.mulf %1128, %1127 : vector<16x40xf32>
    %1130 = arith.addf %1125, %1129 : vector<16x40xf32>
    %c102_401 = arith.constant 102 : index
    %1131 = memref.load %arg3[%c102_401] : memref<144xf32, #tpu.memory_space<smem>>
    %c1_402 = arith.constant 1 : index
    %c0_403 = arith.constant 0 : index
    %1132 = vector.load %arg8[%c1_402, %c0_403] : memref<18x44xf32, #tpu.memory_space<vmem>>, vector<16x40xf32>
    %1133 = vector.broadcast %1131 : f32 to vector<16x40xf32>
    %1134 = arith.mulf %1133, %1132 : vector<16x40xf32>
    %1135 = arith.addf %1130, %1134 : vector<16x40xf32>
    %c103_404 = arith.constant 103 : index
    %1136 = memref.load %arg3[%c103_404] : memref<144xf32, #tpu.memory_space<smem>>
    %c1_405 = arith.constant 1 : index
    %c1_406 = arith.constant 1 : index
    %1137 = vector.load %arg8[%c1_405, %c1_406] : memref<18x44xf32, #tpu.memory_space<vmem>>, vector<16x40xf32>
    %1138 = vector.broadcast %1136 : f32 to vector<16x40xf32>
    %1139 = arith.mulf %1138, %1137 : vector<16x40xf32>
    %1140 = arith.addf %1135, %1139 : vector<16x40xf32>
    %c104_407 = arith.constant 104 : index
    %1141 = memref.load %arg3[%c104_407] : memref<144xf32, #tpu.memory_space<smem>>
    %c1_408 = arith.constant 1 : index
    %c2_409 = arith.constant 2 : index
    %1142 = vector.load %arg8[%c1_408, %c2_409] : memref<18x44xf32, #tpu.memory_space<vmem>>, vector<16x40xf32>
    %1143 = vector.broadcast %1141 : f32 to vector<16x40xf32>
    %1144 = arith.mulf %1143, %1142 : vector<16x40xf32>
    %1145 = arith.addf %1140, %1144 : vector<16x40xf32>
    %c105_410 = arith.constant 105 : index
    %1146 = memref.load %arg3[%c105_410] : memref<144xf32, #tpu.memory_space<smem>>
    %c2_411 = arith.constant 2 : index
    %c0_412 = arith.constant 0 : index
    %1147 = vector.load %arg8[%c2_411, %c0_412] : memref<18x44xf32, #tpu.memory_space<vmem>>, vector<16x40xf32>
    %1148 = vector.broadcast %1146 : f32 to vector<16x40xf32>
    %1149 = arith.mulf %1148, %1147 : vector<16x40xf32>
    %1150 = arith.addf %1145, %1149 : vector<16x40xf32>
    %c106_413 = arith.constant 106 : index
    %1151 = memref.load %arg3[%c106_413] : memref<144xf32, #tpu.memory_space<smem>>
    %c2_414 = arith.constant 2 : index
    %c1_415 = arith.constant 1 : index
    %1152 = vector.load %arg8[%c2_414, %c1_415] : memref<18x44xf32, #tpu.memory_space<vmem>>, vector<16x40xf32>
    %1153 = vector.broadcast %1151 : f32 to vector<16x40xf32>
    %1154 = arith.mulf %1153, %1152 : vector<16x40xf32>
    %1155 = arith.addf %1150, %1154 : vector<16x40xf32>
    %c107_416 = arith.constant 107 : index
    %1156 = memref.load %arg3[%c107_416] : memref<144xf32, #tpu.memory_space<smem>>
    %c2_417 = arith.constant 2 : index
    %c2_418 = arith.constant 2 : index
    %1157 = vector.load %arg8[%c2_417, %c2_418] : memref<18x44xf32, #tpu.memory_space<vmem>>, vector<16x40xf32>
    %1158 = vector.broadcast %1156 : f32 to vector<16x40xf32>
    %1159 = arith.mulf %1158, %1157 : vector<16x40xf32>
    %1160 = arith.addf %1155, %1159 : vector<16x40xf32>
    %cst_419 = arith.constant 0.000000e+00 : f32
    %1161 = vector.broadcast %cst_419 : f32 to vector<18x40xf32>
    %1162 = arith.subf %1161, %752 : vector<18x40xf32>
    %1163 = math.exp %1162 : vector<18x40xf32>
    %cst_420 = arith.constant 1.000000e+00 : f32
    %1164 = vector.broadcast %cst_420 : f32 to vector<18x40xf32>
    %1165 = arith.addf %1164, %1163 : vector<18x40xf32>
    %cst_421 = arith.constant 1.000000e+00 : f32
    %1166 = vector.broadcast %cst_421 : f32 to vector<18x40xf32>
    %1167 = arith.divf %1166, %1165 : vector<18x40xf32>
    %1168 = arith.mulf %752, %1167 : vector<18x40xf32>
    %c0_422 = arith.constant 0 : index
    %c0_423 = arith.constant 0 : index
    %1169 = vector.load %arg8[%c0_422, %c0_423] : memref<18x44xf32, #tpu.memory_space<vmem>>, vector<18x40xf32>
    tpu.vector_store %arg8[%c0_422, %c0_423], %1168 {strides = array<i32>} : memref<18x44xf32, #tpu.memory_space<vmem>>, vector<18x40xf32>,
    %c36_424 = arith.constant 36 : index
    %1170 = memref.load %arg3[%c36_424] : memref<144xf32, #tpu.memory_space<smem>>
    %c0_425 = arith.constant 0 : index
    %c0_426 = arith.constant 0 : index
    %1171 = vector.load %arg8[%c0_425, %c0_426] : memref<18x44xf32, #tpu.memory_space<vmem>>, vector<16x40xf32>
    %1172 = vector.broadcast %1170 : f32 to vector<16x40xf32>
    %1173 = arith.mulf %1172, %1171 : vector<16x40xf32>
    %1174 = arith.addf %1115, %1173 : vector<16x40xf32>
    %c37_427 = arith.constant 37 : index
    %1175 = memref.load %arg3[%c37_427] : memref<144xf32, #tpu.memory_space<smem>>
    %c0_428 = arith.constant 0 : index
    %c1_429 = arith.constant 1 : index
    %1176 = vector.load %arg8[%c0_428, %c1_429] : memref<18x44xf32, #tpu.memory_space<vmem>>, vector<16x40xf32>
    %1177 = vector.broadcast %1175 : f32 to vector<16x40xf32>
    %1178 = arith.mulf %1177, %1176 : vector<16x40xf32>
    %1179 = arith.addf %1174, %1178 : vector<16x40xf32>
    %c38_430 = arith.constant 38 : index
    %1180 = memref.load %arg3[%c38_430] : memref<144xf32, #tpu.memory_space<smem>>
    %c0_431 = arith.constant 0 : index
    %c2_432 = arith.constant 2 : index
    %1181 = vector.load %arg8[%c0_431, %c2_432] : memref<18x44xf32, #tpu.memory_space<vmem>>, vector<16x40xf32>
    %1182 = vector.broadcast %1180 : f32 to vector<16x40xf32>
    %1183 = arith.mulf %1182, %1181 : vector<16x40xf32>
    %1184 = arith.addf %1179, %1183 : vector<16x40xf32>
    %c39_433 = arith.constant 39 : index
    %1185 = memref.load %arg3[%c39_433] : memref<144xf32, #tpu.memory_space<smem>>
    %c1_434 = arith.constant 1 : index
    %c0_435 = arith.constant 0 : index
    %1186 = vector.load %arg8[%c1_434, %c0_435] : memref<18x44xf32, #tpu.memory_space<vmem>>, vector<16x40xf32>
    %1187 = vector.broadcast %1185 : f32 to vector<16x40xf32>
    %1188 = arith.mulf %1187, %1186 : vector<16x40xf32>
    %1189 = arith.addf %1184, %1188 : vector<16x40xf32>
    %c40_436 = arith.constant 40 : index
    %1190 = memref.load %arg3[%c40_436] : memref<144xf32, #tpu.memory_space<smem>>
    %c1_437 = arith.constant 1 : index
    %c1_438 = arith.constant 1 : index
    %1191 = vector.load %arg8[%c1_437, %c1_438] : memref<18x44xf32, #tpu.memory_space<vmem>>, vector<16x40xf32>
    %1192 = vector.broadcast %1190 : f32 to vector<16x40xf32>
    %1193 = arith.mulf %1192, %1191 : vector<16x40xf32>
    %1194 = arith.addf %1189, %1193 : vector<16x40xf32>
    %c41_439 = arith.constant 41 : index
    %1195 = memref.load %arg3[%c41_439] : memref<144xf32, #tpu.memory_space<smem>>
    %c1_440 = arith.constant 1 : index
    %c2_441 = arith.constant 2 : index
    %1196 = vector.load %arg8[%c1_440, %c2_441] : memref<18x44xf32, #tpu.memory_space<vmem>>, vector<16x40xf32>
    %1197 = vector.broadcast %1195 : f32 to vector<16x40xf32>
    %1198 = arith.mulf %1197, %1196 : vector<16x40xf32>
    %1199 = arith.addf %1194, %1198 : vector<16x40xf32>
    %c42_442 = arith.constant 42 : index
    %1200 = memref.load %arg3[%c42_442] : memref<144xf32, #tpu.memory_space<smem>>
    %c2_443 = arith.constant 2 : index
    %c0_444 = arith.constant 0 : index
    %1201 = vector.load %arg8[%c2_443, %c0_444] : memref<18x44xf32, #tpu.memory_space<vmem>>, vector<16x40xf32>
    %1202 = vector.broadcast %1200 : f32 to vector<16x40xf32>
    %1203 = arith.mulf %1202, %1201 : vector<16x40xf32>
    %1204 = arith.addf %1199, %1203 : vector<16x40xf32>
    %c43_445 = arith.constant 43 : index
    %1205 = memref.load %arg3[%c43_445] : memref<144xf32, #tpu.memory_space<smem>>
    %c2_446 = arith.constant 2 : index
    %c1_447 = arith.constant 1 : index
    %1206 = vector.load %arg8[%c2_446, %c1_447] : memref<18x44xf32, #tpu.memory_space<vmem>>, vector<16x40xf32>
    %1207 = vector.broadcast %1205 : f32 to vector<16x40xf32>
    %1208 = arith.mulf %1207, %1206 : vector<16x40xf32>
    %1209 = arith.addf %1204, %1208 : vector<16x40xf32>
    %c44_448 = arith.constant 44 : index
    %1210 = memref.load %arg3[%c44_448] : memref<144xf32, #tpu.memory_space<smem>>
    %c2_449 = arith.constant 2 : index
    %c2_450 = arith.constant 2 : index
    %1211 = vector.load %arg8[%c2_449, %c2_450] : memref<18x44xf32, #tpu.memory_space<vmem>>, vector<16x40xf32>
    %1212 = vector.broadcast %1210 : f32 to vector<16x40xf32>
    %1213 = arith.mulf %1212, %1211 : vector<16x40xf32>
    %1214 = arith.addf %1209, %1213 : vector<16x40xf32>
    %c108_451 = arith.constant 108 : index
    %1215 = memref.load %arg3[%c108_451] : memref<144xf32, #tpu.memory_space<smem>>
    %c0_452 = arith.constant 0 : index
    %c0_453 = arith.constant 0 : index
    %1216 = vector.load %arg8[%c0_452, %c0_453] : memref<18x44xf32, #tpu.memory_space<vmem>>, vector<16x40xf32>
    %1217 = vector.broadcast %1215 : f32 to vector<16x40xf32>
    %1218 = arith.mulf %1217, %1216 : vector<16x40xf32>
    %1219 = arith.addf %1160, %1218 : vector<16x40xf32>
    %c109_454 = arith.constant 109 : index
    %1220 = memref.load %arg3[%c109_454] : memref<144xf32, #tpu.memory_space<smem>>
    %c0_455 = arith.constant 0 : index
    %c1_456 = arith.constant 1 : index
    %1221 = vector.load %arg8[%c0_455, %c1_456] : memref<18x44xf32, #tpu.memory_space<vmem>>, vector<16x40xf32>
    %1222 = vector.broadcast %1220 : f32 to vector<16x40xf32>
    %1223 = arith.mulf %1222, %1221 : vector<16x40xf32>
    %1224 = arith.addf %1219, %1223 : vector<16x40xf32>
    %c110_457 = arith.constant 110 : index
    %1225 = memref.load %arg3[%c110_457] : memref<144xf32, #tpu.memory_space<smem>>
    %c0_458 = arith.constant 0 : index
    %c2_459 = arith.constant 2 : index
    %1226 = vector.load %arg8[%c0_458, %c2_459] : memref<18x44xf32, #tpu.memory_space<vmem>>, vector<16x40xf32>
    %1227 = vector.broadcast %1225 : f32 to vector<16x40xf32>
    %1228 = arith.mulf %1227, %1226 : vector<16x40xf32>
    %1229 = arith.addf %1224, %1228 : vector<16x40xf32>
    %c111_460 = arith.constant 111 : index
    %1230 = memref.load %arg3[%c111_460] : memref<144xf32, #tpu.memory_space<smem>>
    %c1_461 = arith.constant 1 : index
    %c0_462 = arith.constant 0 : index
    %1231 = vector.load %arg8[%c1_461, %c0_462] : memref<18x44xf32, #tpu.memory_space<vmem>>, vector<16x40xf32>
    %1232 = vector.broadcast %1230 : f32 to vector<16x40xf32>
    %1233 = arith.mulf %1232, %1231 : vector<16x40xf32>
    %1234 = arith.addf %1229, %1233 : vector<16x40xf32>
    %c112_463 = arith.constant 112 : index
    %1235 = memref.load %arg3[%c112_463] : memref<144xf32, #tpu.memory_space<smem>>
    %c1_464 = arith.constant 1 : index
    %c1_465 = arith.constant 1 : index
    %1236 = vector.load %arg8[%c1_464, %c1_465] : memref<18x44xf32, #tpu.memory_space<vmem>>, vector<16x40xf32>
    %1237 = vector.broadcast %1235 : f32 to vector<16x40xf32>
    %1238 = arith.mulf %1237, %1236 : vector<16x40xf32>
    %1239 = arith.addf %1234, %1238 : vector<16x40xf32>
    %c113_466 = arith.constant 113 : index
    %1240 = memref.load %arg3[%c113_466] : memref<144xf32, #tpu.memory_space<smem>>
    %c1_467 = arith.constant 1 : index
    %c2_468 = arith.constant 2 : index
    %1241 = vector.load %arg8[%c1_467, %c2_468] : memref<18x44xf32, #tpu.memory_space<vmem>>, vector<16x40xf32>
    %1242 = vector.broadcast %1240 : f32 to vector<16x40xf32>
    %1243 = arith.mulf %1242, %1241 : vector<16x40xf32>
    %1244 = arith.addf %1239, %1243 : vector<16x40xf32>
    %c114_469 = arith.constant 114 : index
    %1245 = memref.load %arg3[%c114_469] : memref<144xf32, #tpu.memory_space<smem>>
    %c2_470 = arith.constant 2 : index
    %c0_471 = arith.constant 0 : index
    %1246 = vector.load %arg8[%c2_470, %c0_471] : memref<18x44xf32, #tpu.memory_space<vmem>>, vector<16x40xf32>
    %1247 = vector.broadcast %1245 : f32 to vector<16x40xf32>
    %1248 = arith.mulf %1247, %1246 : vector<16x40xf32>
    %1249 = arith.addf %1244, %1248 : vector<16x40xf32>
    %c115_472 = arith.constant 115 : index
    %1250 = memref.load %arg3[%c115_472] : memref<144xf32, #tpu.memory_space<smem>>
    %c2_473 = arith.constant 2 : index
    %c1_474 = arith.constant 1 : index
    %1251 = vector.load %arg8[%c2_473, %c1_474] : memref<18x44xf32, #tpu.memory_space<vmem>>, vector<16x40xf32>
    %1252 = vector.broadcast %1250 : f32 to vector<16x40xf32>
    %1253 = arith.mulf %1252, %1251 : vector<16x40xf32>
    %1254 = arith.addf %1249, %1253 : vector<16x40xf32>
    %c116_475 = arith.constant 116 : index
    %1255 = memref.load %arg3[%c116_475] : memref<144xf32, #tpu.memory_space<smem>>
    %c2_476 = arith.constant 2 : index
    %c2_477 = arith.constant 2 : index
    %1256 = vector.load %arg8[%c2_476, %c2_477] : memref<18x44xf32, #tpu.memory_space<vmem>>, vector<16x40xf32>
    %1257 = vector.broadcast %1255 : f32 to vector<16x40xf32>
    %1258 = arith.mulf %1257, %1256 : vector<16x40xf32>
    %1259 = arith.addf %1254, %1258 : vector<16x40xf32>
    %cst_478 = arith.constant 0.000000e+00 : f32
    %1260 = vector.broadcast %cst_478 : f32 to vector<18x40xf32>
    %1261 = arith.subf %1260, %756 : vector<18x40xf32>
    %1262 = math.exp %1261 : vector<18x40xf32>
    %cst_479 = arith.constant 1.000000e+00 : f32
    %1263 = vector.broadcast %cst_479 : f32 to vector<18x40xf32>
    %1264 = arith.addf %1263, %1262 : vector<18x40xf32>
    %cst_480 = arith.constant 1.000000e+00 : f32
    %1265 = vector.broadcast %cst_480 : f32 to vector<18x40xf32>
    %1266 = arith.divf %1265, %1264 : vector<18x40xf32>
    %1267 = arith.mulf %756, %1266 : vector<18x40xf32>
    %c0_481 = arith.constant 0 : index
    %c0_482 = arith.constant 0 : index
    %1268 = vector.load %arg8[%c0_481, %c0_482] : memref<18x44xf32, #tpu.memory_space<vmem>>, vector<18x40xf32>
    tpu.vector_store %arg8[%c0_481, %c0_482], %1267 {strides = array<i32>} : memref<18x44xf32, #tpu.memory_space<vmem>>, vector<18x40xf32>,
    %c45_483 = arith.constant 45 : index
    %1269 = memref.load %arg3[%c45_483] : memref<144xf32, #tpu.memory_space<smem>>
    %c0_484 = arith.constant 0 : index
    %c0_485 = arith.constant 0 : index
    %1270 = vector.load %arg8[%c0_484, %c0_485] : memref<18x44xf32, #tpu.memory_space<vmem>>, vector<16x40xf32>
    %1271 = vector.broadcast %1269 : f32 to vector<16x40xf32>
    %1272 = arith.mulf %1271, %1270 : vector<16x40xf32>
    %1273 = arith.addf %1214, %1272 : vector<16x40xf32>
    %c46_486 = arith.constant 46 : index
    %1274 = memref.load %arg3[%c46_486] : memref<144xf32, #tpu.memory_space<smem>>
    %c0_487 = arith.constant 0 : index
    %c1_488 = arith.constant 1 : index
    %1275 = vector.load %arg8[%c0_487, %c1_488] : memref<18x44xf32, #tpu.memory_space<vmem>>, vector<16x40xf32>
    %1276 = vector.broadcast %1274 : f32 to vector<16x40xf32>
    %1277 = arith.mulf %1276, %1275 : vector<16x40xf32>
    %1278 = arith.addf %1273, %1277 : vector<16x40xf32>
    %c47_489 = arith.constant 47 : index
    %1279 = memref.load %arg3[%c47_489] : memref<144xf32, #tpu.memory_space<smem>>
    %c0_490 = arith.constant 0 : index
    %c2_491 = arith.constant 2 : index
    %1280 = vector.load %arg8[%c0_490, %c2_491] : memref<18x44xf32, #tpu.memory_space<vmem>>, vector<16x40xf32>
    %1281 = vector.broadcast %1279 : f32 to vector<16x40xf32>
    %1282 = arith.mulf %1281, %1280 : vector<16x40xf32>
    %1283 = arith.addf %1278, %1282 : vector<16x40xf32>
    %c48_492 = arith.constant 48 : index
    %1284 = memref.load %arg3[%c48_492] : memref<144xf32, #tpu.memory_space<smem>>
    %c1_493 = arith.constant 1 : index
    %c0_494 = arith.constant 0 : index
    %1285 = vector.load %arg8[%c1_493, %c0_494] : memref<18x44xf32, #tpu.memory_space<vmem>>, vector<16x40xf32>
    %1286 = vector.broadcast %1284 : f32 to vector<16x40xf32>
    %1287 = arith.mulf %1286, %1285 : vector<16x40xf32>
    %1288 = arith.addf %1283, %1287 : vector<16x40xf32>
    %c49_495 = arith.constant 49 : index
    %1289 = memref.load %arg3[%c49_495] : memref<144xf32, #tpu.memory_space<smem>>
    %c1_496 = arith.constant 1 : index
    %c1_497 = arith.constant 1 : index
    %1290 = vector.load %arg8[%c1_496, %c1_497] : memref<18x44xf32, #tpu.memory_space<vmem>>, vector<16x40xf32>
    %1291 = vector.broadcast %1289 : f32 to vector<16x40xf32>
    %1292 = arith.mulf %1291, %1290 : vector<16x40xf32>
    %1293 = arith.addf %1288, %1292 : vector<16x40xf32>
    %c50_498 = arith.constant 50 : index
    %1294 = memref.load %arg3[%c50_498] : memref<144xf32, #tpu.memory_space<smem>>
    %c1_499 = arith.constant 1 : index
    %c2_500 = arith.constant 2 : index
    %1295 = vector.load %arg8[%c1_499, %c2_500] : memref<18x44xf32, #tpu.memory_space<vmem>>, vector<16x40xf32>
    %1296 = vector.broadcast %1294 : f32 to vector<16x40xf32>
    %1297 = arith.mulf %1296, %1295 : vector<16x40xf32>
    %1298 = arith.addf %1293, %1297 : vector<16x40xf32>
    %c51_501 = arith.constant 51 : index
    %1299 = memref.load %arg3[%c51_501] : memref<144xf32, #tpu.memory_space<smem>>
    %c2_502 = arith.constant 2 : index
    %c0_503 = arith.constant 0 : index
    %1300 = vector.load %arg8[%c2_502, %c0_503] : memref<18x44xf32, #tpu.memory_space<vmem>>, vector<16x40xf32>
    %1301 = vector.broadcast %1299 : f32 to vector<16x40xf32>
    %1302 = arith.mulf %1301, %1300 : vector<16x40xf32>
    %1303 = arith.addf %1298, %1302 : vector<16x40xf32>
    %c52_504 = arith.constant 52 : index
    %1304 = memref.load %arg3[%c52_504] : memref<144xf32, #tpu.memory_space<smem>>
    %c2_505 = arith.constant 2 : index
    %c1_506 = arith.constant 1 : index
    %1305 = vector.load %arg8[%c2_505, %c1_506] : memref<18x44xf32, #tpu.memory_space<vmem>>, vector<16x40xf32>
    %1306 = vector.broadcast %1304 : f32 to vector<16x40xf32>
    %1307 = arith.mulf %1306, %1305 : vector<16x40xf32>
    %1308 = arith.addf %1303, %1307 : vector<16x40xf32>
    %c53_507 = arith.constant 53 : index
    %1309 = memref.load %arg3[%c53_507] : memref<144xf32, #tpu.memory_space<smem>>
    %c2_508 = arith.constant 2 : index
    %c2_509 = arith.constant 2 : index
    %1310 = vector.load %arg8[%c2_508, %c2_509] : memref<18x44xf32, #tpu.memory_space<vmem>>, vector<16x40xf32>
    %1311 = vector.broadcast %1309 : f32 to vector<16x40xf32>
    %1312 = arith.mulf %1311, %1310 : vector<16x40xf32>
    %1313 = arith.addf %1308, %1312 : vector<16x40xf32>
    %c117_510 = arith.constant 117 : index
    %1314 = memref.load %arg3[%c117_510] : memref<144xf32, #tpu.memory_space<smem>>
    %c0_511 = arith.constant 0 : index
    %c0_512 = arith.constant 0 : index
    %1315 = vector.load %arg8[%c0_511, %c0_512] : memref<18x44xf32, #tpu.memory_space<vmem>>, vector<16x40xf32>
    %1316 = vector.broadcast %1314 : f32 to vector<16x40xf32>
    %1317 = arith.mulf %1316, %1315 : vector<16x40xf32>
    %1318 = arith.addf %1259, %1317 : vector<16x40xf32>
    %c118_513 = arith.constant 118 : index
    %1319 = memref.load %arg3[%c118_513] : memref<144xf32, #tpu.memory_space<smem>>
    %c0_514 = arith.constant 0 : index
    %c1_515 = arith.constant 1 : index
    %1320 = vector.load %arg8[%c0_514, %c1_515] : memref<18x44xf32, #tpu.memory_space<vmem>>, vector<16x40xf32>
    %1321 = vector.broadcast %1319 : f32 to vector<16x40xf32>
    %1322 = arith.mulf %1321, %1320 : vector<16x40xf32>
    %1323 = arith.addf %1318, %1322 : vector<16x40xf32>
    %c119_516 = arith.constant 119 : index
    %1324 = memref.load %arg3[%c119_516] : memref<144xf32, #tpu.memory_space<smem>>
    %c0_517 = arith.constant 0 : index
    %c2_518 = arith.constant 2 : index
    %1325 = vector.load %arg8[%c0_517, %c2_518] : memref<18x44xf32, #tpu.memory_space<vmem>>, vector<16x40xf32>
    %1326 = vector.broadcast %1324 : f32 to vector<16x40xf32>
    %1327 = arith.mulf %1326, %1325 : vector<16x40xf32>
    %1328 = arith.addf %1323, %1327 : vector<16x40xf32>
    %c120_519 = arith.constant 120 : index
    %1329 = memref.load %arg3[%c120_519] : memref<144xf32, #tpu.memory_space<smem>>
    %c1_520 = arith.constant 1 : index
    %c0_521 = arith.constant 0 : index
    %1330 = vector.load %arg8[%c1_520, %c0_521] : memref<18x44xf32, #tpu.memory_space<vmem>>, vector<16x40xf32>
    %1331 = vector.broadcast %1329 : f32 to vector<16x40xf32>
    %1332 = arith.mulf %1331, %1330 : vector<16x40xf32>
    %1333 = arith.addf %1328, %1332 : vector<16x40xf32>
    %c121_522 = arith.constant 121 : index
    %1334 = memref.load %arg3[%c121_522] : memref<144xf32, #tpu.memory_space<smem>>
    %c1_523 = arith.constant 1 : index
    %c1_524 = arith.constant 1 : index
    %1335 = vector.load %arg8[%c1_523, %c1_524] : memref<18x44xf32, #tpu.memory_space<vmem>>, vector<16x40xf32>
    %1336 = vector.broadcast %1334 : f32 to vector<16x40xf32>
    %1337 = arith.mulf %1336, %1335 : vector<16x40xf32>
    %1338 = arith.addf %1333, %1337 : vector<16x40xf32>
    %c122_525 = arith.constant 122 : index
    %1339 = memref.load %arg3[%c122_525] : memref<144xf32, #tpu.memory_space<smem>>
    %c1_526 = arith.constant 1 : index
    %c2_527 = arith.constant 2 : index
    %1340 = vector.load %arg8[%c1_526, %c2_527] : memref<18x44xf32, #tpu.memory_space<vmem>>, vector<16x40xf32>
    %1341 = vector.broadcast %1339 : f32 to vector<16x40xf32>
    %1342 = arith.mulf %1341, %1340 : vector<16x40xf32>
    %1343 = arith.addf %1338, %1342 : vector<16x40xf32>
    %c123_528 = arith.constant 123 : index
    %1344 = memref.load %arg3[%c123_528] : memref<144xf32, #tpu.memory_space<smem>>
    %c2_529 = arith.constant 2 : index
    %c0_530 = arith.constant 0 : index
    %1345 = vector.load %arg8[%c2_529, %c0_530] : memref<18x44xf32, #tpu.memory_space<vmem>>, vector<16x40xf32>
    %1346 = vector.broadcast %1344 : f32 to vector<16x40xf32>
    %1347 = arith.mulf %1346, %1345 : vector<16x40xf32>
    %1348 = arith.addf %1343, %1347 : vector<16x40xf32>
    %c124_531 = arith.constant 124 : index
    %1349 = memref.load %arg3[%c124_531] : memref<144xf32, #tpu.memory_space<smem>>
    %c2_532 = arith.constant 2 : index
    %c1_533 = arith.constant 1 : index
    %1350 = vector.load %arg8[%c2_532, %c1_533] : memref<18x44xf32, #tpu.memory_space<vmem>>, vector<16x40xf32>
    %1351 = vector.broadcast %1349 : f32 to vector<16x40xf32>
    %1352 = arith.mulf %1351, %1350 : vector<16x40xf32>
    %1353 = arith.addf %1348, %1352 : vector<16x40xf32>
    %c125_534 = arith.constant 125 : index
    %1354 = memref.load %arg3[%c125_534] : memref<144xf32, #tpu.memory_space<smem>>
    %c2_535 = arith.constant 2 : index
    %c2_536 = arith.constant 2 : index
    %1355 = vector.load %arg8[%c2_535, %c2_536] : memref<18x44xf32, #tpu.memory_space<vmem>>, vector<16x40xf32>
    %1356 = vector.broadcast %1354 : f32 to vector<16x40xf32>
    %1357 = arith.mulf %1356, %1355 : vector<16x40xf32>
    %1358 = arith.addf %1353, %1357 : vector<16x40xf32>
    %cst_537 = arith.constant 0.000000e+00 : f32
    %1359 = vector.broadcast %cst_537 : f32 to vector<18x40xf32>
    %1360 = arith.subf %1359, %760 : vector<18x40xf32>
    %1361 = math.exp %1360 : vector<18x40xf32>
    %cst_538 = arith.constant 1.000000e+00 : f32
    %1362 = vector.broadcast %cst_538 : f32 to vector<18x40xf32>
    %1363 = arith.addf %1362, %1361 : vector<18x40xf32>
    %cst_539 = arith.constant 1.000000e+00 : f32
    %1364 = vector.broadcast %cst_539 : f32 to vector<18x40xf32>
    %1365 = arith.divf %1364, %1363 : vector<18x40xf32>
    %1366 = arith.mulf %760, %1365 : vector<18x40xf32>
    %c0_540 = arith.constant 0 : index
    %c0_541 = arith.constant 0 : index
    %1367 = vector.load %arg8[%c0_540, %c0_541] : memref<18x44xf32, #tpu.memory_space<vmem>>, vector<18x40xf32>
    tpu.vector_store %arg8[%c0_540, %c0_541], %1366 {strides = array<i32>} : memref<18x44xf32, #tpu.memory_space<vmem>>, vector<18x40xf32>,
    %c54_542 = arith.constant 54 : index
    %1368 = memref.load %arg3[%c54_542] : memref<144xf32, #tpu.memory_space<smem>>
    %c0_543 = arith.constant 0 : index
    %c0_544 = arith.constant 0 : index
    %1369 = vector.load %arg8[%c0_543, %c0_544] : memref<18x44xf32, #tpu.memory_space<vmem>>, vector<16x40xf32>
    %1370 = vector.broadcast %1368 : f32 to vector<16x40xf32>
    %1371 = arith.mulf %1370, %1369 : vector<16x40xf32>
    %1372 = arith.addf %1313, %1371 : vector<16x40xf32>
    %c55_545 = arith.constant 55 : index
    %1373 = memref.load %arg3[%c55_545] : memref<144xf32, #tpu.memory_space<smem>>
    %c0_546 = arith.constant 0 : index
    %c1_547 = arith.constant 1 : index
    %1374 = vector.load %arg8[%c0_546, %c1_547] : memref<18x44xf32, #tpu.memory_space<vmem>>, vector<16x40xf32>
    %1375 = vector.broadcast %1373 : f32 to vector<16x40xf32>
    %1376 = arith.mulf %1375, %1374 : vector<16x40xf32>
    %1377 = arith.addf %1372, %1376 : vector<16x40xf32>
    %c56_548 = arith.constant 56 : index
    %1378 = memref.load %arg3[%c56_548] : memref<144xf32, #tpu.memory_space<smem>>
    %c0_549 = arith.constant 0 : index
    %c2_550 = arith.constant 2 : index
    %1379 = vector.load %arg8[%c0_549, %c2_550] : memref<18x44xf32, #tpu.memory_space<vmem>>, vector<16x40xf32>
    %1380 = vector.broadcast %1378 : f32 to vector<16x40xf32>
    %1381 = arith.mulf %1380, %1379 : vector<16x40xf32>
    %1382 = arith.addf %1377, %1381 : vector<16x40xf32>
    %c57_551 = arith.constant 57 : index
    %1383 = memref.load %arg3[%c57_551] : memref<144xf32, #tpu.memory_space<smem>>
    %c1_552 = arith.constant 1 : index
    %c0_553 = arith.constant 0 : index
    %1384 = vector.load %arg8[%c1_552, %c0_553] : memref<18x44xf32, #tpu.memory_space<vmem>>, vector<16x40xf32>
    %1385 = vector.broadcast %1383 : f32 to vector<16x40xf32>
    %1386 = arith.mulf %1385, %1384 : vector<16x40xf32>
    %1387 = arith.addf %1382, %1386 : vector<16x40xf32>
    %c58_554 = arith.constant 58 : index
    %1388 = memref.load %arg3[%c58_554] : memref<144xf32, #tpu.memory_space<smem>>
    %c1_555 = arith.constant 1 : index
    %c1_556 = arith.constant 1 : index
    %1389 = vector.load %arg8[%c1_555, %c1_556] : memref<18x44xf32, #tpu.memory_space<vmem>>, vector<16x40xf32>
    %1390 = vector.broadcast %1388 : f32 to vector<16x40xf32>
    %1391 = arith.mulf %1390, %1389 : vector<16x40xf32>
    %1392 = arith.addf %1387, %1391 : vector<16x40xf32>
    %c59_557 = arith.constant 59 : index
    %1393 = memref.load %arg3[%c59_557] : memref<144xf32, #tpu.memory_space<smem>>
    %c1_558 = arith.constant 1 : index
    %c2_559 = arith.constant 2 : index
    %1394 = vector.load %arg8[%c1_558, %c2_559] : memref<18x44xf32, #tpu.memory_space<vmem>>, vector<16x40xf32>
    %1395 = vector.broadcast %1393 : f32 to vector<16x40xf32>
    %1396 = arith.mulf %1395, %1394 : vector<16x40xf32>
    %1397 = arith.addf %1392, %1396 : vector<16x40xf32>
    %c60_560 = arith.constant 60 : index
    %1398 = memref.load %arg3[%c60_560] : memref<144xf32, #tpu.memory_space<smem>>
    %c2_561 = arith.constant 2 : index
    %c0_562 = arith.constant 0 : index
    %1399 = vector.load %arg8[%c2_561, %c0_562] : memref<18x44xf32, #tpu.memory_space<vmem>>, vector<16x40xf32>
    %1400 = vector.broadcast %1398 : f32 to vector<16x40xf32>
    %1401 = arith.mulf %1400, %1399 : vector<16x40xf32>
    %1402 = arith.addf %1397, %1401 : vector<16x40xf32>
    %c61_563 = arith.constant 61 : index
    %1403 = memref.load %arg3[%c61_563] : memref<144xf32, #tpu.memory_space<smem>>
    %c2_564 = arith.constant 2 : index
    %c1_565 = arith.constant 1 : index
    %1404 = vector.load %arg8[%c2_564, %c1_565] : memref<18x44xf32, #tpu.memory_space<vmem>>, vector<16x40xf32>
    %1405 = vector.broadcast %1403 : f32 to vector<16x40xf32>
    %1406 = arith.mulf %1405, %1404 : vector<16x40xf32>
    %1407 = arith.addf %1402, %1406 : vector<16x40xf32>
    %c62_566 = arith.constant 62 : index
    %1408 = memref.load %arg3[%c62_566] : memref<144xf32, #tpu.memory_space<smem>>
    %c2_567 = arith.constant 2 : index
    %c2_568 = arith.constant 2 : index
    %1409 = vector.load %arg8[%c2_567, %c2_568] : memref<18x44xf32, #tpu.memory_space<vmem>>, vector<16x40xf32>
    %1410 = vector.broadcast %1408 : f32 to vector<16x40xf32>
    %1411 = arith.mulf %1410, %1409 : vector<16x40xf32>
    %1412 = arith.addf %1407, %1411 : vector<16x40xf32>
    %c126_569 = arith.constant 126 : index
    %1413 = memref.load %arg3[%c126_569] : memref<144xf32, #tpu.memory_space<smem>>
    %c0_570 = arith.constant 0 : index
    %c0_571 = arith.constant 0 : index
    %1414 = vector.load %arg8[%c0_570, %c0_571] : memref<18x44xf32, #tpu.memory_space<vmem>>, vector<16x40xf32>
    %1415 = vector.broadcast %1413 : f32 to vector<16x40xf32>
    %1416 = arith.mulf %1415, %1414 : vector<16x40xf32>
    %1417 = arith.addf %1358, %1416 : vector<16x40xf32>
    %c127_572 = arith.constant 127 : index
    %1418 = memref.load %arg3[%c127_572] : memref<144xf32, #tpu.memory_space<smem>>
    %c0_573 = arith.constant 0 : index
    %c1_574 = arith.constant 1 : index
    %1419 = vector.load %arg8[%c0_573, %c1_574] : memref<18x44xf32, #tpu.memory_space<vmem>>, vector<16x40xf32>
    %1420 = vector.broadcast %1418 : f32 to vector<16x40xf32>
    %1421 = arith.mulf %1420, %1419 : vector<16x40xf32>
    %1422 = arith.addf %1417, %1421 : vector<16x40xf32>
    %c128_575 = arith.constant 128 : index
    %1423 = memref.load %arg3[%c128_575] : memref<144xf32, #tpu.memory_space<smem>>
    %c0_576 = arith.constant 0 : index
    %c2_577 = arith.constant 2 : index
    %1424 = vector.load %arg8[%c0_576, %c2_577] : memref<18x44xf32, #tpu.memory_space<vmem>>, vector<16x40xf32>
    %1425 = vector.broadcast %1423 : f32 to vector<16x40xf32>
    %1426 = arith.mulf %1425, %1424 : vector<16x40xf32>
    %1427 = arith.addf %1422, %1426 : vector<16x40xf32>
    %c129_578 = arith.constant 129 : index
    %1428 = memref.load %arg3[%c129_578] : memref<144xf32, #tpu.memory_space<smem>>
    %c1_579 = arith.constant 1 : index
    %c0_580 = arith.constant 0 : index
    %1429 = vector.load %arg8[%c1_579, %c0_580] : memref<18x44xf32, #tpu.memory_space<vmem>>, vector<16x40xf32>
    %1430 = vector.broadcast %1428 : f32 to vector<16x40xf32>
    %1431 = arith.mulf %1430, %1429 : vector<16x40xf32>
    %1432 = arith.addf %1427, %1431 : vector<16x40xf32>
    %c130_581 = arith.constant 130 : index
    %1433 = memref.load %arg3[%c130_581] : memref<144xf32, #tpu.memory_space<smem>>
    %c1_582 = arith.constant 1 : index
    %c1_583 = arith.constant 1 : index
    %1434 = vector.load %arg8[%c1_582, %c1_583] : memref<18x44xf32, #tpu.memory_space<vmem>>, vector<16x40xf32>
    %1435 = vector.broadcast %1433 : f32 to vector<16x40xf32>
    %1436 = arith.mulf %1435, %1434 : vector<16x40xf32>
    %1437 = arith.addf %1432, %1436 : vector<16x40xf32>
    %c131_584 = arith.constant 131 : index
    %1438 = memref.load %arg3[%c131_584] : memref<144xf32, #tpu.memory_space<smem>>
    %c1_585 = arith.constant 1 : index
    %c2_586 = arith.constant 2 : index
    %1439 = vector.load %arg8[%c1_585, %c2_586] : memref<18x44xf32, #tpu.memory_space<vmem>>, vector<16x40xf32>
    %1440 = vector.broadcast %1438 : f32 to vector<16x40xf32>
    %1441 = arith.mulf %1440, %1439 : vector<16x40xf32>
    %1442 = arith.addf %1437, %1441 : vector<16x40xf32>
    %c132_587 = arith.constant 132 : index
    %1443 = memref.load %arg3[%c132_587] : memref<144xf32, #tpu.memory_space<smem>>
    %c2_588 = arith.constant 2 : index
    %c0_589 = arith.constant 0 : index
    %1444 = vector.load %arg8[%c2_588, %c0_589] : memref<18x44xf32, #tpu.memory_space<vmem>>, vector<16x40xf32>
    %1445 = vector.broadcast %1443 : f32 to vector<16x40xf32>
    %1446 = arith.mulf %1445, %1444 : vector<16x40xf32>
    %1447 = arith.addf %1442, %1446 : vector<16x40xf32>
    %c133_590 = arith.constant 133 : index
    %1448 = memref.load %arg3[%c133_590] : memref<144xf32, #tpu.memory_space<smem>>
    %c2_591 = arith.constant 2 : index
    %c1_592 = arith.constant 1 : index
    %1449 = vector.load %arg8[%c2_591, %c1_592] : memref<18x44xf32, #tpu.memory_space<vmem>>, vector<16x40xf32>
    %1450 = vector.broadcast %1448 : f32 to vector<16x40xf32>
    %1451 = arith.mulf %1450, %1449 : vector<16x40xf32>
    %1452 = arith.addf %1447, %1451 : vector<16x40xf32>
    %c134_593 = arith.constant 134 : index
    %1453 = memref.load %arg3[%c134_593] : memref<144xf32, #tpu.memory_space<smem>>
    %c2_594 = arith.constant 2 : index
    %c2_595 = arith.constant 2 : index
    %1454 = vector.load %arg8[%c2_594, %c2_595] : memref<18x44xf32, #tpu.memory_space<vmem>>, vector<16x40xf32>
    %1455 = vector.broadcast %1453 : f32 to vector<16x40xf32>
    %1456 = arith.mulf %1455, %1454 : vector<16x40xf32>
    %1457 = arith.addf %1452, %1456 : vector<16x40xf32>
    %cst_596 = arith.constant 0.000000e+00 : f32
    %1458 = vector.broadcast %cst_596 : f32 to vector<18x40xf32>
    %1459 = arith.subf %1458, %764 : vector<18x40xf32>
    %1460 = math.exp %1459 : vector<18x40xf32>
    %cst_597 = arith.constant 1.000000e+00 : f32
    %1461 = vector.broadcast %cst_597 : f32 to vector<18x40xf32>
    %1462 = arith.addf %1461, %1460 : vector<18x40xf32>
    %cst_598 = arith.constant 1.000000e+00 : f32
    %1463 = vector.broadcast %cst_598 : f32 to vector<18x40xf32>
    %1464 = arith.divf %1463, %1462 : vector<18x40xf32>
    %1465 = arith.mulf %764, %1464 : vector<18x40xf32>
    %c0_599 = arith.constant 0 : index
    %c0_600 = arith.constant 0 : index
    %1466 = vector.load %arg8[%c0_599, %c0_600] : memref<18x44xf32, #tpu.memory_space<vmem>>, vector<18x40xf32>
    tpu.vector_store %arg8[%c0_599, %c0_600], %1465 {strides = array<i32>} : memref<18x44xf32, #tpu.memory_space<vmem>>, vector<18x40xf32>,
    %c63_601 = arith.constant 63 : index
    %1467 = memref.load %arg3[%c63_601] : memref<144xf32, #tpu.memory_space<smem>>
    %c0_602 = arith.constant 0 : index
    %c0_603 = arith.constant 0 : index
    %1468 = vector.load %arg8[%c0_602, %c0_603] : memref<18x44xf32, #tpu.memory_space<vmem>>, vector<16x40xf32>
    %1469 = vector.broadcast %1467 : f32 to vector<16x40xf32>
    %1470 = arith.mulf %1469, %1468 : vector<16x40xf32>
    %1471 = arith.addf %1412, %1470 : vector<16x40xf32>
    %c64_604 = arith.constant 64 : index
    %1472 = memref.load %arg3[%c64_604] : memref<144xf32, #tpu.memory_space<smem>>
    %c0_605 = arith.constant 0 : index
    %c1_606 = arith.constant 1 : index
    %1473 = vector.load %arg8[%c0_605, %c1_606] : memref<18x44xf32, #tpu.memory_space<vmem>>, vector<16x40xf32>
    %1474 = vector.broadcast %1472 : f32 to vector<16x40xf32>
    %1475 = arith.mulf %1474, %1473 : vector<16x40xf32>
    %1476 = arith.addf %1471, %1475 : vector<16x40xf32>
    %c65_607 = arith.constant 65 : index
    %1477 = memref.load %arg3[%c65_607] : memref<144xf32, #tpu.memory_space<smem>>
    %c0_608 = arith.constant 0 : index
    %c2_609 = arith.constant 2 : index
    %1478 = vector.load %arg8[%c0_608, %c2_609] : memref<18x44xf32, #tpu.memory_space<vmem>>, vector<16x40xf32>
    %1479 = vector.broadcast %1477 : f32 to vector<16x40xf32>
    %1480 = arith.mulf %1479, %1478 : vector<16x40xf32>
    %1481 = arith.addf %1476, %1480 : vector<16x40xf32>
    %c66_610 = arith.constant 66 : index
    %1482 = memref.load %arg3[%c66_610] : memref<144xf32, #tpu.memory_space<smem>>
    %c1_611 = arith.constant 1 : index
    %c0_612 = arith.constant 0 : index
    %1483 = vector.load %arg8[%c1_611, %c0_612] : memref<18x44xf32, #tpu.memory_space<vmem>>, vector<16x40xf32>
    %1484 = vector.broadcast %1482 : f32 to vector<16x40xf32>
    %1485 = arith.mulf %1484, %1483 : vector<16x40xf32>
    %1486 = arith.addf %1481, %1485 : vector<16x40xf32>
    %c67_613 = arith.constant 67 : index
    %1487 = memref.load %arg3[%c67_613] : memref<144xf32, #tpu.memory_space<smem>>
    %c1_614 = arith.constant 1 : index
    %c1_615 = arith.constant 1 : index
    %1488 = vector.load %arg8[%c1_614, %c1_615] : memref<18x44xf32, #tpu.memory_space<vmem>>, vector<16x40xf32>
    %1489 = vector.broadcast %1487 : f32 to vector<16x40xf32>
    %1490 = arith.mulf %1489, %1488 : vector<16x40xf32>
    %1491 = arith.addf %1486, %1490 : vector<16x40xf32>
    %c68_616 = arith.constant 68 : index
    %1492 = memref.load %arg3[%c68_616] : memref<144xf32, #tpu.memory_space<smem>>
    %c1_617 = arith.constant 1 : index
    %c2_618 = arith.constant 2 : index
    %1493 = vector.load %arg8[%c1_617, %c2_618] : memref<18x44xf32, #tpu.memory_space<vmem>>, vector<16x40xf32>
    %1494 = vector.broadcast %1492 : f32 to vector<16x40xf32>
    %1495 = arith.mulf %1494, %1493 : vector<16x40xf32>
    %1496 = arith.addf %1491, %1495 : vector<16x40xf32>
    %c69_619 = arith.constant 69 : index
    %1497 = memref.load %arg3[%c69_619] : memref<144xf32, #tpu.memory_space<smem>>
    %c2_620 = arith.constant 2 : index
    %c0_621 = arith.constant 0 : index
    %1498 = vector.load %arg8[%c2_620, %c0_621] : memref<18x44xf32, #tpu.memory_space<vmem>>, vector<16x40xf32>
    %1499 = vector.broadcast %1497 : f32 to vector<16x40xf32>
    %1500 = arith.mulf %1499, %1498 : vector<16x40xf32>
    %1501 = arith.addf %1496, %1500 : vector<16x40xf32>
    %c70_622 = arith.constant 70 : index
    %1502 = memref.load %arg3[%c70_622] : memref<144xf32, #tpu.memory_space<smem>>
    %c2_623 = arith.constant 2 : index
    %c1_624 = arith.constant 1 : index
    %1503 = vector.load %arg8[%c2_623, %c1_624] : memref<18x44xf32, #tpu.memory_space<vmem>>, vector<16x40xf32>
    %1504 = vector.broadcast %1502 : f32 to vector<16x40xf32>
    %1505 = arith.mulf %1504, %1503 : vector<16x40xf32>
    %1506 = arith.addf %1501, %1505 : vector<16x40xf32>
    %c71_625 = arith.constant 71 : index
    %1507 = memref.load %arg3[%c71_625] : memref<144xf32, #tpu.memory_space<smem>>
    %c2_626 = arith.constant 2 : index
    %c2_627 = arith.constant 2 : index
    %1508 = vector.load %arg8[%c2_626, %c2_627] : memref<18x44xf32, #tpu.memory_space<vmem>>, vector<16x40xf32>
    %1509 = vector.broadcast %1507 : f32 to vector<16x40xf32>
    %1510 = arith.mulf %1509, %1508 : vector<16x40xf32>
    %1511 = arith.addf %1506, %1510 : vector<16x40xf32>
    %c135_628 = arith.constant 135 : index
    %1512 = memref.load %arg3[%c135_628] : memref<144xf32, #tpu.memory_space<smem>>
    %c0_629 = arith.constant 0 : index
    %c0_630 = arith.constant 0 : index
    %1513 = vector.load %arg8[%c0_629, %c0_630] : memref<18x44xf32, #tpu.memory_space<vmem>>, vector<16x40xf32>
    %1514 = vector.broadcast %1512 : f32 to vector<16x40xf32>
    %1515 = arith.mulf %1514, %1513 : vector<16x40xf32>
    %1516 = arith.addf %1457, %1515 : vector<16x40xf32>
    %c136_631 = arith.constant 136 : index
    %1517 = memref.load %arg3[%c136_631] : memref<144xf32, #tpu.memory_space<smem>>
    %c0_632 = arith.constant 0 : index
    %c1_633 = arith.constant 1 : index
    %1518 = vector.load %arg8[%c0_632, %c1_633] : memref<18x44xf32, #tpu.memory_space<vmem>>, vector<16x40xf32>
    %1519 = vector.broadcast %1517 : f32 to vector<16x40xf32>
    %1520 = arith.mulf %1519, %1518 : vector<16x40xf32>
    %1521 = arith.addf %1516, %1520 : vector<16x40xf32>
    %c137_634 = arith.constant 137 : index
    %1522 = memref.load %arg3[%c137_634] : memref<144xf32, #tpu.memory_space<smem>>
    %c0_635 = arith.constant 0 : index
    %c2_636 = arith.constant 2 : index
    %1523 = vector.load %arg8[%c0_635, %c2_636] : memref<18x44xf32, #tpu.memory_space<vmem>>, vector<16x40xf32>
    %1524 = vector.broadcast %1522 : f32 to vector<16x40xf32>
    %1525 = arith.mulf %1524, %1523 : vector<16x40xf32>
    %1526 = arith.addf %1521, %1525 : vector<16x40xf32>
    %c138_637 = arith.constant 138 : index
    %1527 = memref.load %arg3[%c138_637] : memref<144xf32, #tpu.memory_space<smem>>
    %c1_638 = arith.constant 1 : index
    %c0_639 = arith.constant 0 : index
    %1528 = vector.load %arg8[%c1_638, %c0_639] : memref<18x44xf32, #tpu.memory_space<vmem>>, vector<16x40xf32>
    %1529 = vector.broadcast %1527 : f32 to vector<16x40xf32>
    %1530 = arith.mulf %1529, %1528 : vector<16x40xf32>
    %1531 = arith.addf %1526, %1530 : vector<16x40xf32>
    %c139_640 = arith.constant 139 : index
    %1532 = memref.load %arg3[%c139_640] : memref<144xf32, #tpu.memory_space<smem>>
    %c1_641 = arith.constant 1 : index
    %c1_642 = arith.constant 1 : index
    %1533 = vector.load %arg8[%c1_641, %c1_642] : memref<18x44xf32, #tpu.memory_space<vmem>>, vector<16x40xf32>
    %1534 = vector.broadcast %1532 : f32 to vector<16x40xf32>
    %1535 = arith.mulf %1534, %1533 : vector<16x40xf32>
    %1536 = arith.addf %1531, %1535 : vector<16x40xf32>
    %c140_643 = arith.constant 140 : index
    %1537 = memref.load %arg3[%c140_643] : memref<144xf32, #tpu.memory_space<smem>>
    %c1_644 = arith.constant 1 : index
    %c2_645 = arith.constant 2 : index
    %1538 = vector.load %arg8[%c1_644, %c2_645] : memref<18x44xf32, #tpu.memory_space<vmem>>, vector<16x40xf32>
    %1539 = vector.broadcast %1537 : f32 to vector<16x40xf32>
    %1540 = arith.mulf %1539, %1538 : vector<16x40xf32>
    %1541 = arith.addf %1536, %1540 : vector<16x40xf32>
    %c141_646 = arith.constant 141 : index
    %1542 = memref.load %arg3[%c141_646] : memref<144xf32, #tpu.memory_space<smem>>
    %c2_647 = arith.constant 2 : index
    %c0_648 = arith.constant 0 : index
    %1543 = vector.load %arg8[%c2_647, %c0_648] : memref<18x44xf32, #tpu.memory_space<vmem>>, vector<16x40xf32>
    %1544 = vector.broadcast %1542 : f32 to vector<16x40xf32>
    %1545 = arith.mulf %1544, %1543 : vector<16x40xf32>
    %1546 = arith.addf %1541, %1545 : vector<16x40xf32>
    %c142_649 = arith.constant 142 : index
    %1547 = memref.load %arg3[%c142_649] : memref<144xf32, #tpu.memory_space<smem>>
    %c2_650 = arith.constant 2 : index
    %c1_651 = arith.constant 1 : index
    %1548 = vector.load %arg8[%c2_650, %c1_651] : memref<18x44xf32, #tpu.memory_space<vmem>>, vector<16x40xf32>
    %1549 = vector.broadcast %1547 : f32 to vector<16x40xf32>
    %1550 = arith.mulf %1549, %1548 : vector<16x40xf32>
    %1551 = arith.addf %1546, %1550 : vector<16x40xf32>
    %c143_652 = arith.constant 143 : index
    %1552 = memref.load %arg3[%c143_652] : memref<144xf32, #tpu.memory_space<smem>>
    %c2_653 = arith.constant 2 : index
    %c2_654 = arith.constant 2 : index
    %1553 = vector.load %arg8[%c2_653, %c2_654] : memref<18x44xf32, #tpu.memory_space<vmem>>, vector<16x40xf32>
    %1554 = vector.broadcast %1552 : f32 to vector<16x40xf32>
    %1555 = arith.mulf %1554, %1553 : vector<16x40xf32>
    %1556 = arith.addf %1551, %1555 : vector<16x40xf32>
    %1557 = vector.extract_strided_slice %1511 {offsets = [0, 0], sizes = [16, 16], strides = [1, 1]} : vector<16x40xf32> to vector<16x16xf32>
    %c0_655 = arith.constant 0 : index
    %c0_656 = arith.constant 0 : index
    %c0_657 = arith.constant 0 : index
    %c0_658 = arith.constant 0 : index
    %1558 = vector.load %arg6[%c0_655, %c0_656, %c0_657, %c0_658] : memref<2x2x16x16xf32, #tpu.memory_space<vmem>>, vector<1x1x16x16xf32>
    %1559 = vector.shape_cast %1558 : vector<1x1x16x16xf32> to vector<16x16xf32>
    %1560 = vector.shape_cast %1557 : vector<16x16xf32> to vector<1x1x16x16xf32>
    tpu.vector_store %arg6[%c0_655, %c0_656, %c0_657, %c0_658], %1560 {strides = array<i32>} : memref<2x2x16x16xf32, #tpu.memory_space<vmem>>, vector<1x1x16x16xf32>,
    %1561 = vector.extract_strided_slice %1511 {offsets = [0, 20], sizes = [16, 16], strides = [1, 1]} : vector<16x40xf32> to vector<16x16xf32>
    %c1_659 = arith.constant 1 : index
    %c0_660 = arith.constant 0 : index
    %c0_661 = arith.constant 0 : index
    %c0_662 = arith.constant 0 : index
    %1562 = vector.load %arg6[%c1_659, %c0_660, %c0_661, %c0_662] : memref<2x2x16x16xf32, #tpu.memory_space<vmem>>, vector<1x1x16x16xf32>
    %1563 = vector.shape_cast %1562 : vector<1x1x16x16xf32> to vector<16x16xf32>
    %1564 = vector.shape_cast %1561 : vector<16x16xf32> to vector<1x1x16x16xf32>
    tpu.vector_store %arg6[%c1_659, %c0_660, %c0_661, %c0_662], %1564 {strides = array<i32>} : memref<2x2x16x16xf32, #tpu.memory_space<vmem>>, vector<1x1x16x16xf32>,
    %1565 = vector.extract_strided_slice %1556 {offsets = [0, 0], sizes = [16, 16], strides = [1, 1]} : vector<16x40xf32> to vector<16x16xf32>
    %c0_663 = arith.constant 0 : index
    %c1_664 = arith.constant 1 : index
    %c0_665 = arith.constant 0 : index
    %c0_666 = arith.constant 0 : index
    %1566 = vector.load %arg6[%c0_663, %c1_664, %c0_665, %c0_666] : memref<2x2x16x16xf32, #tpu.memory_space<vmem>>, vector<1x1x16x16xf32>
    %1567 = vector.shape_cast %1566 : vector<1x1x16x16xf32> to vector<16x16xf32>
    %1568 = vector.shape_cast %1565 : vector<16x16xf32> to vector<1x1x16x16xf32>
    tpu.vector_store %arg6[%c0_663, %c1_664, %c0_665, %c0_666], %1568 {strides = array<i32>} : memref<2x2x16x16xf32, #tpu.memory_space<vmem>>, vector<1x1x16x16xf32>,
    %1569 = vector.extract_strided_slice %1556 {offsets = [0, 20], sizes = [16, 16], strides = [1, 1]} : vector<16x40xf32> to vector<16x16xf32>
    %c1_667 = arith.constant 1 : index
    %c1_668 = arith.constant 1 : index
    %c0_669 = arith.constant 0 : index
    %c0_670 = arith.constant 0 : index
    %1570 = vector.load %arg6[%c1_667, %c1_668, %c0_669, %c0_670] : memref<2x2x16x16xf32, #tpu.memory_space<vmem>>, vector<1x1x16x16xf32>
    %1571 = vector.shape_cast %1570 : vector<1x1x16x16xf32> to vector<16x16xf32>
    %1572 = vector.shape_cast %1569 : vector<16x16xf32> to vector<1x1x16x16xf32>
    tpu.vector_store %arg6[%c1_667, %c1_668, %c0_669, %c0_670], %1572 {strides = array<i32>} : memref<2x2x16x16xf32, #tpu.memory_space<vmem>>, vector<1x1x16x16xf32>,
    return
  }
}

</mosaic_0001>

<llo_original>
// kernel: tpu_custom_call.1
$region0: #{tpu_custom_call.1}
  #allocation0 [shape = 'u32[]', space=smem, size = 0x4, offset = 0x4, fixed_abs, tag = 'smem constant byte address 0x4 - core index']
  #allocation1 [shape = 'u32[144,128]{1,0:T(1,128)}', space=vmem, size = 0x12000, scoped, tag = 'internal scratch']
  #allocation2 [shape = 'f32[2,20,44]{2,1,0:T(8,128)}', space=vmem, size = 0x6000, scoped, tag = 'scratch operand']
  #allocation3 [shape = 'f32[18,44]{1,0:T(8,128)}', space=vmem, size = 0x3000, scoped, tag = 'scratch operand']
  %s0 = inlined_call_operand.hbm [shape: f32[4,40], index: 0, kind: input, shape index: {}]
  %s1 = inlined_call_operand.hbm [shape: f32[8,40], index: 1, kind: input, shape index: {}]
  %s2 = inlined_call_operand.vmem [shape: f32[144], index: 2, kind: input, shape index: {}]
  %s3 = inlined_call_operand.vmem [shape: f32[144], index: 3, kind: input, shape index: {}]
  %s4 = inlined_call_operand.vmem [shape: f32[2], index: 4, kind: input, shape index: {}]
  %s5 = inlined_call_operand.hbm [shape: f32[2,2,16,16], index: 5, kind: input, shape index: {}]
  %s6 = inlined_call_operand.hbm [shape: f32[2,2,16,16], index: 6, kind: output, shape index: {}]
  %s7 = sld [smem:[#allocation0]]
  $region58: #{tpu_custom_call.1} parent=0
    _
  %s9 = ssub.s32 1, %s7
  %s10 = scalar_select 0, %s9, %s7
  $region1: #{tpu_custom_call.1} parent=0
    #allocation4 [shape = 'u8[2048]{0}', space=vmem, size = 0x800, scoped, tag = 'input window, operand 0, single buffered']
    #allocation5 [shape = 's32[1]{0}', space=sflag, size = 0x4, scoped, tag = 'scoped memory for tpu_custom_call.1']
    #allocation6 [shape = 's32[1]{0}', space=sflag, size = 0x4, scoped, tag = 'scoped memory for tpu_custom_call.1']
    #allocation7 [shape = 's32[1]{0}', space=sflag, size = 0x4, scoped, tag = 'scoped memory for tpu_custom_call.1']
    #allocation8 [shape = 'u8[4096]{0}', space=vmem, size = 0x1000, scoped, tag = 'input window, operand 1, single buffered']
    #allocation9 [shape = 's32[1]{0}', space=sflag, size = 0x4, scoped, tag = 'scoped memory for tpu_custom_call.1']
    #allocation10 [shape = 'u8[1024]{0}', space=smem, size = 0x400, scoped, tag = 'input window, operand 2, single buffered']
    #allocation11 [shape = 'u8[1024]{0}', space=smem, size = 0x400, scoped, tag = 'input window, operand 3, single buffered']
    #allocation12 [shape = 's32[1]{0}', space=sflag, size = 0x4, scoped, tag = 'scoped memory for tpu_custom_call.1']
    #allocation13 [shape = 'u8[512]{0}', space=smem, size = 0x200, scoped, tag = 'input window, operand 4, single buffered']
    #allocation14 [shape = 'u8[32768]{0}', space=vmem, size = 0x8000, scoped, tag = 'input window, operand 5, single buffered']
    #allocation15 [shape = 'u8[32768]{0}', space=vmem, size = 0x8000, scoped, tag = 'output window, operand 0, single buffered']
    %11 = vsyncpa [#allocation5], 0
    %12 = vsyncpa [#allocation9], 0
    %13 = vsyncpa [#allocation7], 0
    %14 = vsyncpa [#allocation12], 0
    %15 = vsyncpa [#allocation6], 0
    // Predicated region
    $region2: #{tpu_custom_call.1} parent=1 // pred_check
      _
    $region3: #{tpu_custom_call.1} parent=1 // pred_check_branch
      %17 = sbr.rel (0) target = $region5
    $region4: #{tpu_custom_call.1} parent=1 // pred_region
      %s19 = ssub.s32 64, 64
      %20 = vsyncadd [#allocation5], %s19
      %s22 = sshll.u32 [#allocation4], 4
      %s23 = int_to_ptr.vmem [resolvable:$true] %s22
      %25 = dma.hbm_to_vmem [thread:$0]  %s0, 64, %s23, [#allocation5]
    $region5: #{tpu_custom_call.1} parent=1 // pred_fallthru
      _
    // Predicated region
    $region6: #{tpu_custom_call.1} parent=1 // pred_check
      _
    $region7: #{tpu_custom_call.1} parent=1 // pred_check_branch
      %27 = sbr.rel (0) target = $region9
    $region8: #{tpu_custom_call.1} parent=1 // pred_region
      %s29 = ssub.s32 128, 128
      %30 = vsyncadd [#allocation9], %s29
      %s32 = sshll.u32 [#allocation8], 4
      %s33 = int_to_ptr.vmem [resolvable:$true] %s32
      %35 = dma.hbm_to_vmem [thread:$0]  %s1, 128, %s33, [#allocation9]
    $region9: #{tpu_custom_call.1} parent=1 // pred_fallthru
      _
    // Predicated region
    $region10: #{tpu_custom_call.1} parent=1 // pred_check
      _
    $region11: #{tpu_custom_call.1} parent=1 // pred_check_branch
      %37 = sbr.rel (0) target = $region13
    $region12: #{tpu_custom_call.1} parent=1 // pred_region
      %s39 = ssub.s32 32, 32
      %40 = vsyncadd [#allocation7], %s39
      %s42 = sshll.u32 %s2, 4
      %s43 = int_to_ptr.vmem [resolvable:$true] %s42
      %45 = dma.vmem_to_smem %s43, 32, [#allocation10], [#allocation7]
    $region13: #{tpu_custom_call.1} parent=1 // pred_fallthru
      _
    // Predicated region
    $region14: #{tpu_custom_call.1} parent=1 // pred_check
      _
    $region15: #{tpu_custom_call.1} parent=1 // pred_check_branch
      %47 = sbr.rel (0) target = $region17
    $region16: #{tpu_custom_call.1} parent=1 // pred_region
      %s49 = ssub.s32 32, 32
      %50 = vsyncadd [#allocation12], %s49
      %s52 = sshll.u32 %s3, 4
      %s53 = int_to_ptr.vmem [resolvable:$true] %s52
      %55 = dma.vmem_to_smem %s53, 32, [#allocation11], [#allocation12]
    $region17: #{tpu_custom_call.1} parent=1 // pred_fallthru
      _
    // Predicated region
    $region18: #{tpu_custom_call.1} parent=1 // pred_check
      _
    $region19: #{tpu_custom_call.1} parent=1 // pred_check_branch
      %57 = sbr.rel (0) target = $region21
    $region20: #{tpu_custom_call.1} parent=1 // pred_region
      %s59 = ssub.s32 16, 16
      %60 = vsyncadd [#allocation12], %s59
      %s62 = sshll.u32 %s4, 4
      %s63 = int_to_ptr.vmem [resolvable:$true] %s62
      %65 = dma.vmem_to_smem %s63, 16, [#allocation13], [#allocation12]
    $region21: #{tpu_custom_call.1} parent=1 // pred_fallthru
      _
    // Predicated region
    $region22: #{tpu_custom_call.1} parent=1 // pred_check
      _
    $region23: #{tpu_custom_call.1} parent=1 // pred_check_branch
      %67 = sbr.rel (0) target = $region25
    $region24: #{tpu_custom_call.1} parent=1 // pred_region
      %s69 = ssub.s32 1024, 1024
      %70 = vsyncadd [#allocation9], %s69
      %s71 = sshll.u32 [#allocation14], 4
      %s72 = int_to_ptr.vmem [resolvable:$true] %s71
      %77 = dma.hbm_to_vmem [thread:$0]  %s5, 1024, %s72, [#allocation9], 128, 128, 8
    $region25: #{tpu_custom_call.1} parent=1 // pred_fallthru
      _
    // Predicated region
    $region26: #{tpu_custom_call.1} parent=1 // pred_check
      _
    $region27: #{tpu_custom_call.1} parent=1 // pred_check_branch
      %79 = sbr.rel (0) target = $region29
    $region28: #{tpu_custom_call.1} parent=1 // pred_region
      %80 = dma.done [#allocation5], 64
    $region29: #{tpu_custom_call.1} parent=1 // pred_fallthru
      _
    // Predicated region
    $region30: #{tpu_custom_call.1} parent=1 // pred_check
      _
    $region31: #{tpu_custom_call.1} parent=1 // pred_check_branch
      %82 = sbr.rel (0) target = $region33
    $region32: #{tpu_custom_call.1} parent=1 // pred_region
      %83 = dma.done [#allocation9], 128
    $region33: #{tpu_custom_call.1} parent=1 // pred_fallthru
      _
    // Predicated region
    $region34: #{tpu_custom_call.1} parent=1 // pred_check
      _
    $region35: #{tpu_custom_call.1} parent=1 // pred_check_branch
      %85 = sbr.rel (0) target = $region37
    $region36: #{tpu_custom_call.1} parent=1 // pred_region
      %86 = dma.done [#allocation7], 32
    $region37: #{tpu_custom_call.1} parent=1 // pred_fallthru
      _
    // Predicated region
    $region38: #{tpu_custom_call.1} parent=1 // pred_check
      _
    $region39: #{tpu_custom_call.1} parent=1 // pred_check_branch
      %88 = sbr.rel (0) target = $region41
    $region40: #{tpu_custom_call.1} parent=1 // pred_region
      %89 = dma.done [#allocation12], 32
    $region41: #{tpu_custom_call.1} parent=1 // pred_fallthru
      _
    // Predicated region
    $region42: #{tpu_custom_call.1} parent=1 // pred_check
      _
    $region43: #{tpu_custom_call.1} parent=1 // pred_check_branch
      %91 = sbr.rel (0) target = $region45
    $region44: #{tpu_custom_call.1} parent=1 // pred_region
      %92 = dma.done [#allocation12], 16
    $region45: #{tpu_custom_call.1} parent=1 // pred_fallthru
      _
    // Predicated region
    $region46: #{tpu_custom_call.1} parent=1 // pred_check
      _
    $region47: #{tpu_custom_call.1} parent=1 // pred_check_branch
      %94 = sbr.rel (0) target = $region49
    $region48: #{tpu_custom_call.1} parent=1 // pred_region
      %95 = dma.done [#allocation9], 1024
    $region49: #{tpu_custom_call.1} parent=1 // pred_fallthru
      _
    %96 = sfence
    %v97 = vld [vmem:[#allocation14] sm:$0xff]
    %v98 = vld [vmem:[#allocation14 + $0x8] sm:$0xff]
    %101 = vrot.lane.b32.xlu0 %v97, 114
    %v102 = vpop.permute.xlu0 %101
    %103 = vrot.lane.b32.xlu0 %v98, 114
    %v104 = vpop.permute.xlu0 %103
    %107 = vrot.lane.b32.xlu0 %v97, 2
    %v108 = vpop.permute.xlu0 %107
    %109 = vrot.lane.b32.xlu0 %v98, 2
    %v110 = vpop.permute.xlu0 %109
    %113 = vrot.lane.b32.xlu0 %v97, 18
    %v114 = vpop.permute.xlu0 %113
    %115 = vrot.lane.b32.xlu0 %v98, 18
    %v116 = vpop.permute.xlu0 %115
    %vm119 = vcmask 15360
    %v120 = vsel %vm119, %v102, %v108
    %v121 = vsel %vm119, %v104, %v110
    %vm122 = vcmask 146432
    %v123 = vsel %vm122, %v120, %v114
    %v124 = vsel %vm122, %v121, %v116
    %vm125 = vcmask 162816
    %126 = vst.msk [vmem:[#allocation2 + $0x2] sm:$0xff] %vm125, %v123
    %127 = vst.msk [vmem:[#allocation2 + $0xa] sm:$0xff] %vm125, %v124
    %s128 = scalar_lea.vmem [#allocation14], 32
    %v129 = vld [vmem:[%s128] sm:$0xff]
    %v130 = vld [vmem:[%s128 + $0x8] sm:$0xff]
    %133 = vrot.lane.b32.xlu0 %v129, 114
    %v134 = vpop.permute.xlu0 %133
    %135 = vrot.lane.b32.xlu0 %v130, 114
    %v136 = vpop.permute.xlu0 %135
    %139 = vrot.lane.b32.xlu0 %v129, 2
    %v140 = vpop.permute.xlu0 %139
    %141 = vrot.lane.b32.xlu0 %v130, 2
    %v142 = vpop.permute.xlu0 %141
    %145 = vrot.lane.b32.xlu0 %v129, 18
    %v146 = vpop.permute.xlu0 %145
    %147 = vrot.lane.b32.xlu0 %v130, 18
    %v148 = vpop.permute.xlu0 %147
    %v151 = vsel %vm119, %v134, %v140
    %v152 = vsel %vm119, %v136, %v142
    %v153 = vsel %vm122, %v151, %v146
    %v154 = vsel %vm122, %v152, %v148
    %157 = vrot.lane.b32.xlu0 %v153, 20
    %v158 = vpop.permute.xlu0 %157
    %159 = vrot.lane.b32.xlu0 %v154, 20
    %v160 = vpop.permute.xlu0 %159
    %vm163 = vcmask 326816
    %164 = vst.msk [vmem:[#allocation2 + $0x2] sm:$0xff] %vm163, %v158
    %165 = vst.msk [vmem:[#allocation2 + $0xa] sm:$0xff] %vm163, %v160
    %vm166 = vcmask 359744
    %167 = vst.msk [vmem:[#allocation2 + $0x2] sm:$0xff] %vm166, 0.0
    %168 = vst.msk [vmem:[#allocation2 + $0xa] sm:$0xff] %vm166, 0.0
    %v169 = vld [vmem:[#allocation2 + $0x10] sm:$0x3]
    %vm170 = vcmask 353280
    %171 = vst.msk [vmem:[#allocation2] sm:$0x3] %vm170, %v169
    %v172 = vld [vmem:[#allocation2 + $0x2] sm:$0x3]
    %173 = vst.msk [vmem:[#allocation2 + $0x12] sm:$0x3] %vm170, %v172
    %s174 = scalar_lea.vmem [#allocation14], 16
    %v175 = vld [vmem:[%s174] sm:$0xff]
    %v176 = vld [vmem:[%s174 + $0x8] sm:$0xff]
    %179 = vrot.lane.b32.xlu0 %v175, 114
    %v180 = vpop.permute.xlu0 %179
    %181 = vrot.lane.b32.xlu0 %v176, 114
    %v182 = vpop.permute.xlu0 %181
    %185 = vrot.lane.b32.xlu0 %v175, 2
    %v186 = vpop.permute.xlu0 %185
    %187 = vrot.lane.b32.xlu0 %v176, 2
    %v188 = vpop.permute.xlu0 %187
    %191 = vrot.lane.b32.xlu0 %v175, 18
    %v192 = vpop.permute.xlu0 %191
    %193 = vrot.lane.b32.xlu0 %v176, 18
    %v194 = vpop.permute.xlu0 %193
    %v197 = vsel %vm119, %v180, %v186
    %v198 = vsel %vm119, %v182, %v188
    %v199 = vsel %vm122, %v197, %v192
    %v200 = vsel %vm122, %v198, %v194
    %s201 = scalar_lea.vmem [#allocation2], 24
    %202 = vst.msk [vmem:[%s201 + $0x2] sm:$0xff] %vm125, %v199
    %203 = vst.msk [vmem:[%s201 + $0xa] sm:$0xff] %vm125, %v200
    %s204 = scalar_lea.vmem [#allocation14], 48
    %v205 = vld [vmem:[%s204] sm:$0xff]
    %v206 = vld [vmem:[%s204 + $0x8] sm:$0xff]
    %209 = vrot.lane.b32.xlu0 %v205, 114
    %v210 = vpop.permute.xlu0 %209
    %211 = vrot.lane.b32.xlu0 %v206, 114
    %v212 = vpop.permute.xlu0 %211
    %215 = vrot.lane.b32.xlu0 %v205, 2
    %v216 = vpop.permute.xlu0 %215
    %217 = vrot.lane.b32.xlu0 %v206, 2
    %v218 = vpop.permute.xlu0 %217
    %221 = vrot.lane.b32.xlu0 %v205, 18
    %v222 = vpop.permute.xlu0 %221
    %223 = vrot.lane.b32.xlu0 %v206, 18
    %v224 = vpop.permute.xlu0 %223
    %v227 = vsel %vm119, %v210, %v216
    %v228 = vsel %vm119, %v212, %v218
    %v229 = vsel %vm122, %v227, %v222
    %v230 = vsel %vm122, %v228, %v224
    %233 = vrot.lane.b32.xlu0 %v229, 20
    %v234 = vpop.permute.xlu0 %233
    %235 = vrot.lane.b32.xlu0 %v230, 20
    %v236 = vpop.permute.xlu0 %235
    %239 = vst.msk [vmem:[%s201 + $0x2] sm:$0xff] %vm163, %v234
    %240 = vst.msk [vmem:[%s201 + $0xa] sm:$0xff] %vm163, %v236
    %241 = vst.msk [vmem:[%s201 + $0x2] sm:$0xff] %vm166, 0.0
    %242 = vst.msk [vmem:[%s201 + $0xa] sm:$0xff] %vm166, 0.0
    %v243 = vld [vmem:[%s201 + $0x10] sm:$0x3]
    %244 = vst.msk [vmem:[%s201] sm:$0x3] %vm170, %v243
    %v245 = vld [vmem:[%s201 + $0x2] sm:$0x3]
    %246 = vst.msk [vmem:[%s201 + $0x12] sm:$0x3] %vm170, %v245
    %247 = vst.msk [vmem:[#allocation3] sm:$0xff] %vm166, 0.0
    %248 = vst.msk [vmem:[#allocation3 + $0x8] sm:$0xff] %vm166, 0.0
    %vm249 = vcmask 353600
    %250 = vst.msk [vmem:[#allocation3 + $0x10] sm:$0x3] %vm249, 0.0
    %v251 = vld [vmem:[#allocation2 + $0x2] sm:$0xff]
    %v252 = vld [vmem:[#allocation2 + $0xa] sm:$0xff]
    %v253 = vld [vmem:[%s201 + $0x2] sm:$0xff]
    %v254 = vld [vmem:[%s201 + $0xa] sm:$0xff]
    %v255 = vld [vmem:[#allocation4] sm:$0x1]
    %v256 = vld [vmem:[#allocation4 + $0x1] sm:$0x1]
    %v257 = vld [vmem:[#allocation4 + $0x2] sm:$0x1]
    %v258 = vld [vmem:[#allocation4 + $0x3] sm:$0x1]
    %v259 = vmul.f32 %v251, %v253
    %v260 = vmul.f32 %v252, %v254
    %v261 = vmul.f32 %v259, %v253
    %v262 = vmul.f32 %v260, %v254
    %v263 = vld [vmem:[#allocation2 + $0x1] sm:$0xff]
    %v264 = vld [vmem:[#allocation2 + $0x9] sm:$0xff]
    %v265 = vld [vmem:[#allocation2 + $0x3] sm:$0xff]
    %v266 = vld [vmem:[#allocation2 + $0xb] sm:$0xff]
    %v267 = vadd.f32 %v263, %v265
    %v268 = vadd.f32 %v264, %v266
    %271 = vrot.lane.b32.xlu0 %v251, 1
    %v272 = vpop.permute.xlu0 %271
    %273 = vrot.lane.b32.xlu0 %v252, 1
    %v274 = vpop.permute.xlu0 %273
    %v277 = vadd.f32 %v267, %v272
    %v278 = vadd.f32 %v268, %v274
    %279 = vrot.lane.b32.xlu0 %v251, 127
    %v280 = vpop.permute.xlu0 %279
    %281 = vrot.lane.b32.xlu0 %v252, 127
    %v282 = vpop.permute.xlu0 %281
    %v285 = vadd.f32 %v277, %v280
    %v286 = vadd.f32 %v278, %v282
    %v287 = vmul.f32 %v251, 4.0
    %v288 = vmul.f32 %v252, 4.0
    %v289 = vsub.f32 %v285, %v287
    %v290 = vsub.f32 %v286, %v288
    %v291 = vlaneseq
    %v292 = vshrl.u32 %v291, 7
    %v293 = vsub.s32 0, %v292
    %v294 = vrot.slane %v255, %v293
    %297 = vrot.lane.b32.xlu0 %v289, 126
    %v298 = vpop.permute.xlu0 %297
    %299 = vrot.lane.b32.xlu0 %v290, 126
    %v300 = vpop.permute.xlu0 %299
    %v303 = vmul.f32 %v294, %v298
    %v304 = vmul.f32 %v294, %v300
    %307 = vrot.lane.b32.xlu0 %v261, 126
    %v308 = vpop.permute.xlu0 %307
    %309 = vrot.lane.b32.xlu0 %v262, 126
    %v310 = vpop.permute.xlu0 %309
    %v313 = vsub.f32 %v303, %v308
    %v314 = vsub.f32 %v304, %v310
    %v315 = vsub.f32 1.0, %v251
    %v316 = vsub.f32 1.0, %v252
    %v317 = vlaneseq
    %v318 = vshrl.u32 %v317, 7
    %v319 = vsub.s32 0, %v318
    %v320 = vrot.slane %v257, %v319
    %323 = vrot.lane.b32.xlu0 %v315, 126
    %v324 = vpop.permute.xlu0 %323
    %325 = vrot.lane.b32.xlu0 %v316, 126
    %v326 = vpop.permute.xlu0 %325
    %v329 = vmul.f32 %v320, %v324
    %v330 = vmul.f32 %v320, %v326
    %v331 = vadd.f32 %v313, %v329
    %v332 = vadd.f32 %v314, %v330
    %s333 = sld [smem:[#allocation13]]
    %v334 = vstv %s333
    %v335 = vadd.f32 %v331, %v334
    %v336 = vadd.f32 %v332, %v334
    %v337 = vld [vmem:[%s201 + $0x1] sm:$0xff]
    %v338 = vld [vmem:[%s201 + $0x9] sm:$0xff]
    %v339 = vld [vmem:[%s201 + $0x3] sm:$0xff]
    %v340 = vld [vmem:[%s201 + $0xb] sm:$0xff]
    %v341 = vadd.f32 %v337, %v339
    %v342 = vadd.f32 %v338, %v340
    %345 = vrot.lane.b32.xlu0 %v253, 1
    %v346 = vpop.permute.xlu0 %345
    %347 = vrot.lane.b32.xlu0 %v254, 1
    %v348 = vpop.permute.xlu0 %347
    %v351 = vadd.f32 %v341, %v346
    %v352 = vadd.f32 %v342, %v348
    %353 = vrot.lane.b32.xlu0 %v253, 127
    %v354 = vpop.permute.xlu0 %353
    %355 = vrot.lane.b32.xlu0 %v254, 127
    %v356 = vpop.permute.xlu0 %355
    %v359 = vadd.f32 %v351, %v354
    %v360 = vadd.f32 %v352, %v356
    %v361 = vmul.f32 %v253, 4.0
    %v362 = vmul.f32 %v254, 4.0
    %v363 = vsub.f32 %v359, %v361
    %v364 = vsub.f32 %v360, %v362
    %v365 = vlaneseq
    %v366 = vshrl.u32 %v365, 7
    %v367 = vsub.s32 0, %v366
    %v368 = vrot.slane %v256, %v367
    %371 = vrot.lane.b32.xlu0 %v363, 126
    %v372 = vpop.permute.xlu0 %371
    %373 = vrot.lane.b32.xlu0 %v364, 126
    %v374 = vpop.permute.xlu0 %373
    %v377 = vmul.f32 %v368, %v372
    %v378 = vmul.f32 %v368, %v374
    %v379 = vadd.f32 %v377, %v308
    %v380 = vadd.f32 %v378, %v310
    %v381 = vadd.f32 %v257, %v258
    %v382 = vlaneseq
    %v383 = vshrl.u32 %v382, 7
    %v384 = vsub.s32 0, %v383
    %v385 = vrot.slane %v381, %v384
    %386 = vrot.lane.b32.xlu0 %v253, 126
    %v387 = vpop.permute.xlu0 %386
    %388 = vrot.lane.b32.xlu0 %v254, 126
    %v389 = vpop.permute.xlu0 %388
    %v392 = vmul.f32 %v385, %v387
    %v393 = vmul.f32 %v385, %v389
    %v394 = vsub.f32 %v379, %v392
    %v395 = vsub.f32 %v380, %v393
    %s396 = sld [smem:[#allocation13 + $0x1]]
    %v397 = vstv %s396
    %v398 = vadd.f32 %v394, %v397
    %v399 = vadd.f32 %v395, %v397
    %v400 = vld [vmem:[#allocation8] sm:$0x1]
    %v401 = vlaneseq
    %v402 = vshrl.u32 %v401, 7
    %v403 = vsub.s32 0, %v402
    %v404 = vrot.slane %v400, %v403
    %v405 = vadd.f32 %v404, 0.0
    %v406 = vld [vmem:[#allocation8 + $0x1] sm:$0x1]
    %v407 = vlaneseq
    %v408 = vshrl.u32 %v407, 7
    %v409 = vsub.s32 0, %v408
    %v410 = vrot.slane %v406, %v409
    %v411 = vadd.f32 %v410, 0.0
    %v412 = vld [vmem:[#allocation8 + $0x2] sm:$0x1]
    %v413 = vlaneseq
    %v414 = vshrl.u32 %v413, 7
    %v415 = vsub.s32 0, %v414
    %v416 = vrot.slane %v412, %v415
    %v417 = vadd.f32 %v416, 0.0
    %v418 = vld [vmem:[#allocation8 + $0x3] sm:$0x1]
    %v419 = vlaneseq
    %v420 = vshrl.u32 %v419, 7
    %v421 = vsub.s32 0, %v420
    %v422 = vrot.slane %v418, %v421
    %v423 = vadd.f32 %v422, 0.0
    %v424 = vld [vmem:[#allocation8 + $0x4] sm:$0x1]
    %v425 = vlaneseq
    %v426 = vshrl.u32 %v425, 7
    %v427 = vsub.s32 0, %v426
    %v428 = vrot.slane %v424, %v427
    %v429 = vadd.f32 %v428, 0.0
    %v430 = vld [vmem:[#allocation8 + $0x5] sm:$0x1]
    %v431 = vlaneseq
    %v432 = vshrl.u32 %v431, 7
    %v433 = vsub.s32 0, %v432
    %v434 = vrot.slane %v430, %v433
    %v435 = vadd.f32 %v434, 0.0
    %v436 = vld [vmem:[#allocation8 + $0x6] sm:$0x1]
    %v437 = vlaneseq
    %v438 = vshrl.u32 %v437, 7
    %v439 = vsub.s32 0, %v438
    %v440 = vrot.slane %v436, %v439
    %v441 = vadd.f32 %v440, 0.0
    %v442 = vld [vmem:[#allocation8 + $0x7] sm:$0x1]
    %v443 = vlaneseq
    %v444 = vshrl.u32 %v443, 7
    %v445 = vsub.s32 0, %v444
    %v446 = vrot.slane %v442, %v445
    %v447 = vadd.f32 %v446, 0.0
    %v448 = vld [vmem:[#allocation2] sm:$0xff]
    %v449 = vld [vmem:[#allocation2 + $0x8] sm:$0xff]
    %v450 = vld [vmem:[#allocation2 + $0x10] sm:$0x3]
    %s451 = sld [smem:[#allocation10]]
    %v452 = vstv %s451
    %v453 = vmul.f32 %v452, %v448
    %v454 = vmul.f32 %v452, %v449
    %v455 = vmul.f32 %v452, %v450
    %v456 = vadd.f32 %v405, %v453
    %v457 = vadd.f32 %v405, %v454
    %v458 = vadd.f32 %v405, %v455
    %s459 = sld [smem:[#allocation10 + $0x12]]
    %v460 = vstv %s459
    %v461 = vmul.f32 %v460, %v448
    %v462 = vmul.f32 %v460, %v449
    %v463 = vmul.f32 %v460, %v450
    %v464 = vadd.f32 %v411, %v461
    %v465 = vadd.f32 %v411, %v462
    %v466 = vadd.f32 %v411, %v463
    %s467 = sld [smem:[#allocation10 + $0x24]]
    %v468 = vstv %s467
    %v469 = vmul.f32 %v468, %v448
    %v470 = vmul.f32 %v468, %v449
    %v471 = vmul.f32 %v468, %v450
    %v472 = vadd.f32 %v417, %v469
    %v473 = vadd.f32 %v417, %v470
    %v474 = vadd.f32 %v417, %v471
    %s475 = sld [smem:[#allocation10 + $0x36]]
    %v476 = vstv %s475
    %v477 = vmul.f32 %v476, %v448
    %v478 = vmul.f32 %v476, %v449
    %v479 = vmul.f32 %v476, %v450
    %v480 = vadd.f32 %v423, %v477
    %v481 = vadd.f32 %v423, %v478
    %v482 = vadd.f32 %v423, %v479
    %s483 = sld [smem:[#allocation10 + $0x48]]
    %v484 = vstv %s483
    %v485 = vmul.f32 %v484, %v448
    %v486 = vmul.f32 %v484, %v449
    %v487 = vmul.f32 %v484, %v450
    %v488 = vadd.f32 %v429, %v485
    %v489 = vadd.f32 %v429, %v486
    %v490 = vadd.f32 %v429, %v487
    %s491 = sld [smem:[#allocation10 + $0x5a]]
    %v492 = vstv %s491
    %v493 = vmul.f32 %v492, %v448
    %v494 = vmul.f32 %v492, %v449
    %v495 = vmul.f32 %v492, %v450
    %v496 = vadd.f32 %v435, %v493
    %v497 = vadd.f32 %v435, %v494
    %v498 = vadd.f32 %v435, %v495
    %s499 = sld [smem:[#allocation10 + $0x6c]]
    %v500 = vstv %s499
    %v501 = vmul.f32 %v500, %v448
    %v502 = vmul.f32 %v500, %v449
    %v503 = vmul.f32 %v500, %v450
    %v504 = vadd.f32 %v441, %v501
    %v505 = vadd.f32 %v441, %v502
    %v506 = vadd.f32 %v441, %v503
    %s507 = sld [smem:[#allocation10 + $0x7e]]
    %v508 = vstv %s507
    %v509 = vmul.f32 %v508, %v448
    %v510 = vmul.f32 %v508, %v449
    %v511 = vmul.f32 %v508, %v450
    %v512 = vadd.f32 %v447, %v509
    %v513 = vadd.f32 %v447, %v510
    %v514 = vadd.f32 %v447, %v511
    %s515 = sld [smem:[#allocation10 + $0x1]]
    %v516 = vstv %s515
    %v517 = vmul.f32 %v516, %v448
    %v518 = vmul.f32 %v516, %v449
    %v519 = vmul.f32 %v516, %v450
    %523 = vrot.lane.b32.xlu0 %v517, 127
    %v524 = vpop.permute.xlu0 %523
    %525 = vrot.lane.b32.xlu0 %v518, 127
    %v526 = vpop.permute.xlu0 %525
    %527 = vrot.lane.b32.xlu0 %v519, 127
    %v528 = vpop.permute.xlu0 %527
    %v532 = vadd.f32 %v456, %v524
    %v533 = vadd.f32 %v457, %v526
    %v534 = vadd.f32 %v458, %v528
    %s535 = sld [smem:[#allocation10 + $0x13]]
    %v536 = vstv %s535
    %v537 = vmul.f32 %v536, %v448
    %v538 = vmul.f32 %v536, %v449
    %v539 = vmul.f32 %v536, %v450
    %543 = vrot.lane.b32.xlu0 %v537, 127
    %v544 = vpop.permute.xlu0 %543
    %545 = vrot.lane.b32.xlu0 %v538, 127
    %v546 = vpop.permute.xlu0 %545
    %547 = vrot.lane.b32.xlu0 %v539, 127
    %v548 = vpop.permute.xlu0 %547
    %v552 = vadd.f32 %v464, %v544
    %v553 = vadd.f32 %v465, %v546
    %v554 = vadd.f32 %v466, %v548
    %s555 = sld [smem:[#allocation10 + $0x25]]
    %v556 = vstv %s555
    %v557 = vmul.f32 %v556, %v448
    %v558 = vmul.f32 %v556, %v449
    %v559 = vmul.f32 %v556, %v450
    %563 = vrot.lane.b32.xlu0 %v557, 127
    %v564 = vpop.permute.xlu0 %563
    %565 = vrot.lane.b32.xlu0 %v558, 127
    %v566 = vpop.permute.xlu0 %565
    %567 = vrot.lane.b32.xlu0 %v559, 127
    %v568 = vpop.permute.xlu0 %567
    %v572 = vadd.f32 %v472, %v564
    %v573 = vadd.f32 %v473, %v566
    %v574 = vadd.f32 %v474, %v568
    %s575 = sld [smem:[#allocation10 + $0x37]]
    %v576 = vstv %s575
    %v577 = vmul.f32 %v576, %v448
    %v578 = vmul.f32 %v576, %v449
    %v579 = vmul.f32 %v576, %v450
    %583 = vrot.lane.b32.xlu0 %v577, 127
    %v584 = vpop.permute.xlu0 %583
    %585 = vrot.lane.b32.xlu0 %v578, 127
    %v586 = vpop.permute.xlu0 %585
    %587 = vrot.lane.b32.xlu0 %v579, 127
    %v588 = vpop.permute.xlu0 %587
    %v592 = vadd.f32 %v480, %v584
    %v593 = vadd.f32 %v481, %v586
    %v594 = vadd.f32 %v482, %v588
    %s595 = sld [smem:[#allocation10 + $0x49]]
    %v596 = vstv %s595
    %v597 = vmul.f32 %v596, %v448
    %v598 = vmul.f32 %v596, %v449
    %v599 = vmul.f32 %v596, %v450
    %603 = vrot.lane.b32.xlu0 %v597, 127
    %v604 = vpop.permute.xlu0 %603
    %605 = vrot.lane.b32.xlu0 %v598, 127
    %v606 = vpop.permute.xlu0 %605
    %607 = vrot.lane.b32.xlu0 %v599, 127
    %v608 = vpop.permute.xlu0 %607
    %v612 = vadd.f32 %v488, %v604
    %v613 = vadd.f32 %v489, %v606
    %v614 = vadd.f32 %v490, %v608
    %s615 = sld [smem:[#allocation10 + $0x5b]]
    %v616 = vstv %s615
    %v617 = vmul.f32 %v616, %v448
    %v618 = vmul.f32 %v616, %v449
    %v619 = vmul.f32 %v616, %v450
    %623 = vrot.lane.b32.xlu0 %v617, 127
    %v624 = vpop.permute.xlu0 %623
    %625 = vrot.lane.b32.xlu0 %v618, 127
    %v626 = vpop.permute.xlu0 %625
    %627 = vrot.lane.b32.xlu0 %v619, 127
    %v628 = vpop.permute.xlu0 %627
    %v632 = vadd.f32 %v496, %v624
    %v633 = vadd.f32 %v497, %v626
    %v634 = vadd.f32 %v498, %v628
    %s635 = sld [smem:[#allocation10 + $0x6d]]
    %v636 = vstv %s635
    %v637 = vmul.f32 %v636, %v448
    %v638 = vmul.f32 %v636, %v449
    %v639 = vmul.f32 %v636, %v450
    %643 = vrot.lane.b32.xlu0 %v637, 127
    %v644 = vpop.permute.xlu0 %643
    %645 = vrot.lane.b32.xlu0 %v638, 127
    %v646 = vpop.permute.xlu0 %645
    %647 = vrot.lane.b32.xlu0 %v639, 127
    %v648 = vpop.permute.xlu0 %647
    %v652 = vadd.f32 %v504, %v644
    %v653 = vadd.f32 %v505, %v646
    %v654 = vadd.f32 %v506, %v648
    %s655 = sld [smem:[#allocation10 + $0x7f]]
    %v656 = vstv %s655
    %v657 = vmul.f32 %v656, %v448
    %v658 = vmul.f32 %v656, %v449
    %v659 = vmul.f32 %v656, %v450
    %663 = vrot.lane.b32.xlu0 %v657, 127
    %v664 = vpop.permute.xlu0 %663
    %665 = vrot.lane.b32.xlu0 %v658, 127
    %v666 = vpop.permute.xlu0 %665
    %667 = vrot.lane.b32.xlu0 %v659, 127
    %v668 = vpop.permute.xlu0 %667
    %v672 = vadd.f32 %v512, %v664
    %v673 = vadd.f32 %v513, %v666
    %v674 = vadd.f32 %v514, %v668
    %s675 = sld [smem:[#allocation10 + $0x2]]
    %v676 = vstv %s675
    %v677 = vmul.f32 %v676, %v448
    %v678 = vmul.f32 %v676, %v449
    %v679 = vmul.f32 %v676, %v450
    %683 = vrot.lane.b32.xlu0 %v677, 126
    %v684 = vpop.permute.xlu0 %683
    %685 = vrot.lane.b32.xlu0 %v678, 126
    %v686 = vpop.permute.xlu0 %685
    %687 = vrot.lane.b32.xlu0 %v679, 126
    %v688 = vpop.permute.xlu0 %687
    %v692 = vadd.f32 %v532, %v684
    %v693 = vadd.f32 %v533, %v686
    %v694 = vadd.f32 %v534, %v688
    %s695 = sld [smem:[#allocation10 + $0x14]]
    %v696 = vstv %s695
    %v697 = vmul.f32 %v696, %v448
    %v698 = vmul.f32 %v696, %v449
    %v699 = vmul.f32 %v696, %v450
    %703 = vrot.lane.b32.xlu0 %v697, 126
    %v704 = vpop.permute.xlu0 %703
    %705 = vrot.lane.b32.xlu0 %v698, 126
    %v706 = vpop.permute.xlu0 %705
    %707 = vrot.lane.b32.xlu0 %v699, 126
    %v708 = vpop.permute.xlu0 %707
    %v712 = vadd.f32 %v552, %v704
    %v713 = vadd.f32 %v553, %v706
    %v714 = vadd.f32 %v554, %v708
    %s715 = sld [smem:[#allocation10 + $0x26]]
    %v716 = vstv %s715
    %v717 = vmul.f32 %v716, %v448
    %v718 = vmul.f32 %v716, %v449
    %v719 = vmul.f32 %v716, %v450
    %723 = vrot.lane.b32.xlu0 %v717, 126
    %v724 = vpop.permute.xlu0 %723
    %725 = vrot.lane.b32.xlu0 %v718, 126
    %v726 = vpop.permute.xlu0 %725
    %727 = vrot.lane.b32.xlu0 %v719, 126
    %v728 = vpop.permute.xlu0 %727
    %v732 = vadd.f32 %v572, %v724
    %v733 = vadd.f32 %v573, %v726
    %v734 = vadd.f32 %v574, %v728
    %s735 = sld [smem:[#allocation10 + $0x38]]
    %v736 = vstv %s735
    %v737 = vmul.f32 %v736, %v448
    %v738 = vmul.f32 %v736, %v449
    %v739 = vmul.f32 %v736, %v450
    %743 = vrot.lane.b32.xlu0 %v737, 126
    %v744 = vpop.permute.xlu0 %743
    %745 = vrot.lane.b32.xlu0 %v738, 126
    %v746 = vpop.permute.xlu0 %745
    %747 = vrot.lane.b32.xlu0 %v739, 126
    %v748 = vpop.permute.xlu0 %747
    %v752 = vadd.f32 %v592, %v744
    %v753 = vadd.f32 %v593, %v746
    %v754 = vadd.f32 %v594, %v748
    %s755 = sld [smem:[#allocation10 + $0x4a]]
    %v756 = vstv %s755
    %v757 = vmul.f32 %v756, %v448
    %v758 = vmul.f32 %v756, %v449
    %v759 = vmul.f32 %v756, %v450
    %763 = vrot.lane.b32.xlu0 %v757, 126
    %v764 = vpop.permute.xlu0 %763
    %765 = vrot.lane.b32.xlu0 %v758, 126
    %v766 = vpop.permute.xlu0 %765
    %767 = vrot.lane.b32.xlu0 %v759, 126
    %v768 = vpop.permute.xlu0 %767
    %v772 = vadd.f32 %v612, %v764
    %v773 = vadd.f32 %v613, %v766
    %v774 = vadd.f32 %v614, %v768
    %s775 = sld [smem:[#allocation10 + $0x5c]]
    %v776 = vstv %s775
    %v777 = vmul.f32 %v776, %v448
    %v778 = vmul.f32 %v776, %v449
    %v779 = vmul.f32 %v776, %v450
    %783 = vrot.lane.b32.xlu0 %v777, 126
    %v784 = vpop.permute.xlu0 %783
    %785 = vrot.lane.b32.xlu0 %v778, 126
    %v786 = vpop.permute.xlu0 %785
    %787 = vrot.lane.b32.xlu0 %v779, 126
    %v788 = vpop.permute.xlu0 %787
    %v792 = vadd.f32 %v632, %v784
    %v793 = vadd.f32 %v633, %v786
    %v794 = vadd.f32 %v634, %v788
    %s795 = sld [smem:[#allocation10 + $0x6e]]
    %v796 = vstv %s795
    %v797 = vmul.f32 %v796, %v448
    %v798 = vmul.f32 %v796, %v449
    %v799 = vmul.f32 %v796, %v450
    %803 = vrot.lane.b32.xlu0 %v797, 126
    %v804 = vpop.permute.xlu0 %803
    %805 = vrot.lane.b32.xlu0 %v798, 126
    %v806 = vpop.permute.xlu0 %805
    %807 = vrot.lane.b32.xlu0 %v799, 126
    %v808 = vpop.permute.xlu0 %807
    %v812 = vadd.f32 %v652, %v804
    %v813 = vadd.f32 %v653, %v806
    %v814 = vadd.f32 %v654, %v808
    %s815 = sld [smem:[#allocation10 + $0x80]]
    %v816 = vstv %s815
    %v817 = vmul.f32 %v816, %v448
    %v818 = vmul.f32 %v816, %v449
    %v819 = vmul.f32 %v816, %v450
    %823 = vrot.lane.b32.xlu0 %v817, 126
    %v824 = vpop.permute.xlu0 %823
    %825 = vrot.lane.b32.xlu0 %v818, 126
    %v826 = vpop.permute.xlu0 %825
    %827 = vrot.lane.b32.xlu0 %v819, 126
    %v828 = vpop.permute.xlu0 %827
    %v832 = vadd.f32 %v672, %v824
    %v833 = vadd.f32 %v673, %v826
    %v834 = vadd.f32 %v674, %v828
    %v835 = vld [vmem:[#allocation2 + $0x1] sm:$0xff]
    %v836 = vld [vmem:[#allocation2 + $0x9] sm:$0xff]
    %v837 = vld [vmem:[#allocation2 + $0x11] sm:$0x3]
    %s838 = sld [smem:[#allocation10 + $0x3]]
    %v839 = vstv %s838
    %v840 = vmul.f32 %v839, %v835
    %v841 = vmul.f32 %v839, %v836
    %v842 = vmul.f32 %v839, %v837
    %v843 = vadd.f32 %v692, %v840
    %v844 = vadd.f32 %v693, %v841
    %v845 = vadd.f32 %v694, %v842
    %s846 = sld [smem:[#allocation10 + $0x15]]
    %v847 = vstv %s846
    %v848 = vmul.f32 %v847, %v835
    %v849 = vmul.f32 %v847, %v836
    %v850 = vmul.f32 %v847, %v837
    %v851 = vadd.f32 %v712, %v848
    %v852 = vadd.f32 %v713, %v849
    %v853 = vadd.f32 %v714, %v850
    %s854 = sld [smem:[#allocation10 + $0x27]]
    %v855 = vstv %s854
    %v856 = vmul.f32 %v855, %v835
    %v857 = vmul.f32 %v855, %v836
    %v858 = vmul.f32 %v855, %v837
    %v859 = vadd.f32 %v732, %v856
    %v860 = vadd.f32 %v733, %v857
    %v861 = vadd.f32 %v734, %v858
    %s862 = sld [smem:[#allocation10 + $0x39]]
    %v863 = vstv %s862
    %v864 = vmul.f32 %v863, %v835
    %v865 = vmul.f32 %v863, %v836
    %v866 = vmul.f32 %v863, %v837
    %v867 = vadd.f32 %v752, %v864
    %v868 = vadd.f32 %v753, %v865
    %v869 = vadd.f32 %v754, %v866
    %s870 = sld [smem:[#allocation10 + $0x4b]]
    %v871 = vstv %s870
    %v872 = vmul.f32 %v871, %v835
    %v873 = vmul.f32 %v871, %v836
    %v874 = vmul.f32 %v871, %v837
    %v875 = vadd.f32 %v772, %v872
    %v876 = vadd.f32 %v773, %v873
    %v877 = vadd.f32 %v774, %v874
    %s878 = sld [smem:[#allocation10 + $0x5d]]
    %v879 = vstv %s878
    %v880 = vmul.f32 %v879, %v835
    %v881 = vmul.f32 %v879, %v836
    %v882 = vmul.f32 %v879, %v837
    %v883 = vadd.f32 %v792, %v880
    %v884 = vadd.f32 %v793, %v881
    %v885 = vadd.f32 %v794, %v882
    %s886 = sld [smem:[#allocation10 + $0x6f]]
    %v887 = vstv %s886
    %v888 = vmul.f32 %v887, %v835
    %v889 = vmul.f32 %v887, %v836
    %v890 = vmul.f32 %v887, %v837
    %v891 = vadd.f32 %v812, %v888
    %v892 = vadd.f32 %v813, %v889
    %v893 = vadd.f32 %v814, %v890
    %s894 = sld [smem:[#allocation10 + $0x81]]
    %v895 = vstv %s894
    %v896 = vmul.f32 %v895, %v835
    %v897 = vmul.f32 %v895, %v836
    %v898 = vmul.f32 %v895, %v837
    %v899 = vadd.f32 %v832, %v896
    %v900 = vadd.f32 %v833, %v897
    %v901 = vadd.f32 %v834, %v898
    %s902 = sld [smem:[#allocation10 + $0x4]]
    %v903 = vstv %s902
    %v904 = vmul.f32 %v903, %v835
    %v905 = vmul.f32 %v903, %v836
    %v906 = vmul.f32 %v903, %v837
    %910 = vrot.lane.b32.xlu0 %v904, 127
    %v911 = vpop.permute.xlu0 %910
    %912 = vrot.lane.b32.xlu0 %v905, 127
    %v913 = vpop.permute.xlu0 %912
    %914 = vrot.lane.b32.xlu0 %v906, 127
    %v915 = vpop.permute.xlu0 %914
    %v919 = vadd.f32 %v843, %v911
    %v920 = vadd.f32 %v844, %v913
    %v921 = vadd.f32 %v845, %v915
    %s922 = sld [smem:[#allocation10 + $0x16]]
    %v923 = vstv %s922
    %v924 = vmul.f32 %v923, %v835
    %v925 = vmul.f32 %v923, %v836
    %v926 = vmul.f32 %v923, %v837
    %930 = vrot.lane.b32.xlu0 %v924, 127
    %v931 = vpop.permute.xlu0 %930
    %932 = vrot.lane.b32.xlu0 %v925, 127
    %v933 = vpop.permute.xlu0 %932
    %934 = vrot.lane.b32.xlu0 %v926, 127
    %v935 = vpop.permute.xlu0 %934
    %v939 = vadd.f32 %v851, %v931
    %v940 = vadd.f32 %v852, %v933
    %v941 = vadd.f32 %v853, %v935
    %s942 = sld [smem:[#allocation10 + $0x28]]
    %v943 = vstv %s942
    %v944 = vmul.f32 %v943, %v835
    %v945 = vmul.f32 %v943, %v836
    %v946 = vmul.f32 %v943, %v837
    %950 = vrot.lane.b32.xlu0 %v944, 127
    %v951 = vpop.permute.xlu0 %950
    %952 = vrot.lane.b32.xlu0 %v945, 127
    %v953 = vpop.permute.xlu0 %952
    %954 = vrot.lane.b32.xlu0 %v946, 127
    %v955 = vpop.permute.xlu0 %954
    %v959 = vadd.f32 %v859, %v951
    %v960 = vadd.f32 %v860, %v953
    %v961 = vadd.f32 %v861, %v955
    %s962 = sld [smem:[#allocation10 + $0x3a]]
    %v963 = vstv %s962
    %v964 = vmul.f32 %v963, %v835
    %v965 = vmul.f32 %v963, %v836
    %v966 = vmul.f32 %v963, %v837
    %970 = vrot.lane.b32.xlu0 %v964, 127
    %v971 = vpop.permute.xlu0 %970
    %972 = vrot.lane.b32.xlu0 %v965, 127
    %v973 = vpop.permute.xlu0 %972
    %974 = vrot.lane.b32.xlu0 %v966, 127
    %v975 = vpop.permute.xlu0 %974
    %v979 = vadd.f32 %v867, %v971
    %v980 = vadd.f32 %v868, %v973
    %v981 = vadd.f32 %v869, %v975
    %s982 = sld [smem:[#allocation10 + $0x4c]]
    %v983 = vstv %s982
    %v984 = vmul.f32 %v983, %v835
    %v985 = vmul.f32 %v983, %v836
    %v986 = vmul.f32 %v983, %v837
    %990 = vrot.lane.b32.xlu0 %v984, 127
    %v991 = vpop.permute.xlu0 %990
    %992 = vrot.lane.b32.xlu0 %v985, 127
    %v993 = vpop.permute.xlu0 %992
    %994 = vrot.lane.b32.xlu0 %v986, 127
    %v995 = vpop.permute.xlu0 %994
    %v999 = vadd.f32 %v875, %v991
    %v1000 = vadd.f32 %v876, %v993
    %v1001 = vadd.f32 %v877, %v995
    %s1002 = sld [smem:[#allocation10 + $0x5e]]
    %v1003 = vstv %s1002
    %v1004 = vmul.f32 %v1003, %v835
    %v1005 = vmul.f32 %v1003, %v836
    %v1006 = vmul.f32 %v1003, %v837
    %1010 = vrot.lane.b32.xlu0 %v1004, 127
    %v1011 = vpop.permute.xlu0 %1010
    %1012 = vrot.lane.b32.xlu0 %v1005, 127
    %v1013 = vpop.permute.xlu0 %1012
    %1014 = vrot.lane.b32.xlu0 %v1006, 127
    %v1015 = vpop.permute.xlu0 %1014
    %v1019 = vadd.f32 %v883, %v1011
    %v1020 = vadd.f32 %v884, %v1013
    %v1021 = vadd.f32 %v885, %v1015
    %s1022 = sld [smem:[#allocation10 + $0x70]]
    %v1023 = vstv %s1022
    %v1024 = vmul.f32 %v1023, %v835
    %v1025 = vmul.f32 %v1023, %v836
    %v1026 = vmul.f32 %v1023, %v837
    %1030 = vrot.lane.b32.xlu0 %v1024, 127
    %v1031 = vpop.permute.xlu0 %1030
    %1032 = vrot.lane.b32.xlu0 %v1025, 127
    %v1033 = vpop.permute.xlu0 %1032
    %1034 = vrot.lane.b32.xlu0 %v1026, 127
    %v1035 = vpop.permute.xlu0 %1034
    %v1039 = vadd.f32 %v891, %v1031
    %v1040 = vadd.f32 %v892, %v1033
    %v1041 = vadd.f32 %v893, %v1035
    %s1042 = sld [smem:[#allocation10 + $0x82]]
    %v1043 = vstv %s1042
    %v1044 = vmul.f32 %v1043, %v835
    %v1045 = vmul.f32 %v1043, %v836
    %v1046 = vmul.f32 %v1043, %v837
    %1050 = vrot.lane.b32.xlu0 %v1044, 127
    %v1051 = vpop.permute.xlu0 %1050
    %1052 = vrot.lane.b32.xlu0 %v1045, 127
    %v1053 = vpop.permute.xlu0 %1052
    %1054 = vrot.lane.b32.xlu0 %v1046, 127
    %v1055 = vpop.permute.xlu0 %1054
    %v1059 = vadd.f32 %v899, %v1051
    %v1060 = vadd.f32 %v900, %v1053
    %v1061 = vadd.f32 %v901, %v1055
    %s1062 = sld [smem:[#allocation10 + $0x5]]
    %v1063 = vstv %s1062
    %v1064 = vmul.f32 %v1063, %v835
    %v1065 = vmul.f32 %v1063, %v836
    %v1066 = vmul.f32 %v1063, %v837
    %1070 = vrot.lane.b32.xlu0 %v1064, 126
    %v1071 = vpop.permute.xlu0 %1070
    %1072 = vrot.lane.b32.xlu0 %v1065, 126
    %v1073 = vpop.permute.xlu0 %1072
    %1074 = vrot.lane.b32.xlu0 %v1066, 126
    %v1075 = vpop.permute.xlu0 %1074
    %v1079 = vadd.f32 %v919, %v1071
    %v1080 = vadd.f32 %v920, %v1073
    %v1081 = vadd.f32 %v921, %v1075
    %s1082 = sld [smem:[#allocation10 + $0x17]]
    %v1083 = vstv %s1082
    %v1084 = vmul.f32 %v1083, %v835
    %v1085 = vmul.f32 %v1083, %v836
    %v1086 = vmul.f32 %v1083, %v837
    %1090 = vrot.lane.b32.xlu0 %v1084, 126
    %v1091 = vpop.permute.xlu0 %1090
    %1092 = vrot.lane.b32.xlu0 %v1085, 126
    %v1093 = vpop.permute.xlu0 %1092
    %1094 = vrot.lane.b32.xlu0 %v1086, 126
    %v1095 = vpop.permute.xlu0 %1094
    %v1099 = vadd.f32 %v939, %v1091
    %v1100 = vadd.f32 %v940, %v1093
    %v1101 = vadd.f32 %v941, %v1095
    %s1102 = sld [smem:[#allocation10 + $0x29]]
    %v1103 = vstv %s1102
    %v1104 = vmul.f32 %v1103, %v835
    %v1105 = vmul.f32 %v1103, %v836
    %v1106 = vmul.f32 %v1103, %v837
    %1110 = vrot.lane.b32.xlu0 %v1104, 126
    %v1111 = vpop.permute.xlu0 %1110
    %1112 = vrot.lane.b32.xlu0 %v1105, 126
    %v1113 = vpop.permute.xlu0 %1112
    %1114 = vrot.lane.b32.xlu0 %v1106, 126
    %v1115 = vpop.permute.xlu0 %1114
    %v1119 = vadd.f32 %v959, %v1111
    %v1120 = vadd.f32 %v960, %v1113
    %v1121 = vadd.f32 %v961, %v1115
    %s1122 = sld [smem:[#allocation10 + $0x3b]]
    %v1123 = vstv %s1122
    %v1124 = vmul.f32 %v1123, %v835
    %v1125 = vmul.f32 %v1123, %v836
    %v1126 = vmul.f32 %v1123, %v837
    %1130 = vrot.lane.b32.xlu0 %v1124, 126
    %v1131 = vpop.permute.xlu0 %1130
    %1132 = vrot.lane.b32.xlu0 %v1125, 126
    %v1133 = vpop.permute.xlu0 %1132
    %1134 = vrot.lane.b32.xlu0 %v1126, 126
    %v1135 = vpop.permute.xlu0 %1134
    %v1139 = vadd.f32 %v979, %v1131
    %v1140 = vadd.f32 %v980, %v1133
    %v1141 = vadd.f32 %v981, %v1135
    %s1142 = sld [smem:[#allocation10 + $0x4d]]
    %v1143 = vstv %s1142
    %v1144 = vmul.f32 %v1143, %v835
    %v1145 = vmul.f32 %v1143, %v836
    %v1146 = vmul.f32 %v1143, %v837
    %1150 = vrot.lane.b32.xlu0 %v1144, 126
    %v1151 = vpop.permute.xlu0 %1150
    %1152 = vrot.lane.b32.xlu0 %v1145, 126
    %v1153 = vpop.permute.xlu0 %1152
    %1154 = vrot.lane.b32.xlu0 %v1146, 126
    %v1155 = vpop.permute.xlu0 %1154
    %v1159 = vadd.f32 %v999, %v1151
    %v1160 = vadd.f32 %v1000, %v1153
    %v1161 = vadd.f32 %v1001, %v1155
    %s1162 = sld [smem:[#allocation10 + $0x5f]]
    %v1163 = vstv %s1162
    %v1164 = vmul.f32 %v1163, %v835
    %v1165 = vmul.f32 %v1163, %v836
    %v1166 = vmul.f32 %v1163, %v837
    %1170 = vrot.lane.b32.xlu0 %v1164, 126
    %v1171 = vpop.permute.xlu0 %1170
    %1172 = vrot.lane.b32.xlu0 %v1165, 126
    %v1173 = vpop.permute.xlu0 %1172
    %1174 = vrot.lane.b32.xlu0 %v1166, 126
    %v1175 = vpop.permute.xlu0 %1174
    %v1179 = vadd.f32 %v1019, %v1171
    %v1180 = vadd.f32 %v1020, %v1173
    %v1181 = vadd.f32 %v1021, %v1175
    %s1182 = sld [smem:[#allocation10 + $0x71]]
    %v1183 = vstv %s1182
    %v1184 = vmul.f32 %v1183, %v835
    %v1185 = vmul.f32 %v1183, %v836
    %v1186 = vmul.f32 %v1183, %v837
    %1190 = vrot.lane.b32.xlu0 %v1184, 126
    %v1191 = vpop.permute.xlu0 %1190
    %1192 = vrot.lane.b32.xlu0 %v1185, 126
    %v1193 = vpop.permute.xlu0 %1192
    %1194 = vrot.lane.b32.xlu0 %v1186, 126
    %v1195 = vpop.permute.xlu0 %1194
    %v1199 = vadd.f32 %v1039, %v1191
    %v1200 = vadd.f32 %v1040, %v1193
    %v1201 = vadd.f32 %v1041, %v1195
    %s1202 = sld [smem:[#allocation10 + $0x83]]
    %v1203 = vstv %s1202
    %v1204 = vmul.f32 %v1203, %v835
    %v1205 = vmul.f32 %v1203, %v836
    %v1206 = vmul.f32 %v1203, %v837
    %1210 = vrot.lane.b32.xlu0 %v1204, 126
    %v1211 = vpop.permute.xlu0 %1210
    %1212 = vrot.lane.b32.xlu0 %v1205, 126
    %v1213 = vpop.permute.xlu0 %1212
    %1214 = vrot.lane.b32.xlu0 %v1206, 126
    %v1215 = vpop.permute.xlu0 %1214
    %v1219 = vadd.f32 %v1059, %v1211
    %v1220 = vadd.f32 %v1060, %v1213
    %v1221 = vadd.f32 %v1061, %v1215
    %v1222 = vld [vmem:[#allocation2 + $0x2] sm:$0xff]
    %v1223 = vld [vmem:[#allocation2 + $0xa] sm:$0xff]
    %v1224 = vld [vmem:[#allocation2 + $0x12] sm:$0x3]
    %s1225 = sld [smem:[#allocation10 + $0x6]]
    %v1226 = vstv %s1225
    %v1227 = vmul.f32 %v1226, %v1222
    %v1228 = vmul.f32 %v1226, %v1223
    %v1229 = vmul.f32 %v1226, %v1224
    %v1230 = vadd.f32 %v1079, %v1227
    %v1231 = vadd.f32 %v1080, %v1228
    %v1232 = vadd.f32 %v1081, %v1229
    %s1233 = sld [smem:[#allocation10 + $0x18]]
    %v1234 = vstv %s1233
    %v1235 = vmul.f32 %v1234, %v1222
    %v1236 = vmul.f32 %v1234, %v1223
    %v1237 = vmul.f32 %v1234, %v1224
    %v1238 = vadd.f32 %v1099, %v1235
    %v1239 = vadd.f32 %v1100, %v1236
    %v1240 = vadd.f32 %v1101, %v1237
    %s1241 = sld [smem:[#allocation10 + $0x2a]]
    %v1242 = vstv %s1241
    %v1243 = vmul.f32 %v1242, %v1222
    %v1244 = vmul.f32 %v1242, %v1223
    %v1245 = vmul.f32 %v1242, %v1224
    %v1246 = vadd.f32 %v1119, %v1243
    %v1247 = vadd.f32 %v1120, %v1244
    %v1248 = vadd.f32 %v1121, %v1245
    %s1249 = sld [smem:[#allocation10 + $0x3c]]
    %v1250 = vstv %s1249
    %v1251 = vmul.f32 %v1250, %v1222
    %v1252 = vmul.f32 %v1250, %v1223
    %v1253 = vmul.f32 %v1250, %v1224
    %v1254 = vadd.f32 %v1139, %v1251
    %v1255 = vadd.f32 %v1140, %v1252
    %v1256 = vadd.f32 %v1141, %v1253
    %s1257 = sld [smem:[#allocation10 + $0x4e]]
    %v1258 = vstv %s1257
    %v1259 = vmul.f32 %v1258, %v1222
    %v1260 = vmul.f32 %v1258, %v1223
    %v1261 = vmul.f32 %v1258, %v1224
    %v1262 = vadd.f32 %v1159, %v1259
    %v1263 = vadd.f32 %v1160, %v1260
    %v1264 = vadd.f32 %v1161, %v1261
    %s1265 = sld [smem:[#allocation10 + $0x60]]
    %v1266 = vstv %s1265
    %v1267 = vmul.f32 %v1266, %v1222
    %v1268 = vmul.f32 %v1266, %v1223
    %v1269 = vmul.f32 %v1266, %v1224
    %v1270 = vadd.f32 %v1179, %v1267
    %v1271 = vadd.f32 %v1180, %v1268
    %v1272 = vadd.f32 %v1181, %v1269
    %s1273 = sld [smem:[#allocation10 + $0x72]]
    %v1274 = vstv %s1273
    %v1275 = vmul.f32 %v1274, %v1222
    %v1276 = vmul.f32 %v1274, %v1223
    %v1277 = vmul.f32 %v1274, %v1224
    %v1278 = vadd.f32 %v1199, %v1275
    %v1279 = vadd.f32 %v1200, %v1276
    %v1280 = vadd.f32 %v1201, %v1277
    %s1281 = sld [smem:[#allocation10 + $0x84]]
    %v1282 = vstv %s1281
    %v1283 = vmul.f32 %v1282, %v1222
    %v1284 = vmul.f32 %v1282, %v1223
    %v1285 = vmul.f32 %v1282, %v1224
    %v1286 = vadd.f32 %v1219, %v1283
    %v1287 = vadd.f32 %v1220, %v1284
    %v1288 = vadd.f32 %v1221, %v1285
    %s1289 = sld [smem:[#allocation10 + $0x7]]
    %v1290 = vstv %s1289
    %v1291 = vmul.f32 %v1290, %v1222
    %v1292 = vmul.f32 %v1290, %v1223
    %v1293 = vmul.f32 %v1290, %v1224
    %1297 = vrot.lane.b32.xlu0 %v1291, 127
    %v1298 = vpop.permute.xlu0 %1297
    %1299 = vrot.lane.b32.xlu0 %v1292, 127
    %v1300 = vpop.permute.xlu0 %1299
    %1301 = vrot.lane.b32.xlu0 %v1293, 127
    %v1302 = vpop.permute.xlu0 %1301
    %v1306 = vadd.f32 %v1230, %v1298
    %v1307 = vadd.f32 %v1231, %v1300
    %v1308 = vadd.f32 %v1232, %v1302
    %s1309 = sld [smem:[#allocation10 + $0x19]]
    %v1310 = vstv %s1309
    %v1311 = vmul.f32 %v1310, %v1222
    %v1312 = vmul.f32 %v1310, %v1223
    %v1313 = vmul.f32 %v1310, %v1224
    %1317 = vrot.lane.b32.xlu0 %v1311, 127
    %v1318 = vpop.permute.xlu0 %1317
    %1319 = vrot.lane.b32.xlu0 %v1312, 127
    %v1320 = vpop.permute.xlu0 %1319
    %1321 = vrot.lane.b32.xlu0 %v1313, 127
    %v1322 = vpop.permute.xlu0 %1321
    %v1326 = vadd.f32 %v1238, %v1318
    %v1327 = vadd.f32 %v1239, %v1320
    %v1328 = vadd.f32 %v1240, %v1322
    %s1329 = sld [smem:[#allocation10 + $0x2b]]
    %v1330 = vstv %s1329
    %v1331 = vmul.f32 %v1330, %v1222
    %v1332 = vmul.f32 %v1330, %v1223
    %v1333 = vmul.f32 %v1330, %v1224
    %1337 = vrot.lane.b32.xlu0 %v1331, 127
    %v1338 = vpop.permute.xlu0 %1337
    %1339 = vrot.lane.b32.xlu0 %v1332, 127
    %v1340 = vpop.permute.xlu0 %1339
    %1341 = vrot.lane.b32.xlu0 %v1333, 127
    %v1342 = vpop.permute.xlu0 %1341
    %v1346 = vadd.f32 %v1246, %v1338
    %v1347 = vadd.f32 %v1247, %v1340
    %v1348 = vadd.f32 %v1248, %v1342
    %s1349 = sld [smem:[#allocation10 + $0x3d]]
    %v1350 = vstv %s1349
    %v1351 = vmul.f32 %v1350, %v1222
    %v1352 = vmul.f32 %v1350, %v1223
    %v1353 = vmul.f32 %v1350, %v1224
    %1357 = vrot.lane.b32.xlu0 %v1351, 127
    %v1358 = vpop.permute.xlu0 %1357
    %1359 = vrot.lane.b32.xlu0 %v1352, 127
    %v1360 = vpop.permute.xlu0 %1359
    %1361 = vrot.lane.b32.xlu0 %v1353, 127
    %v1362 = vpop.permute.xlu0 %1361
    %v1366 = vadd.f32 %v1254, %v1358
    %v1367 = vadd.f32 %v1255, %v1360
    %v1368 = vadd.f32 %v1256, %v1362
    %s1369 = sld [smem:[#allocation10 + $0x4f]]
    %v1370 = vstv %s1369
    %v1371 = vmul.f32 %v1370, %v1222
    %v1372 = vmul.f32 %v1370, %v1223
    %v1373 = vmul.f32 %v1370, %v1224
    %1377 = vrot.lane.b32.xlu0 %v1371, 127
    %v1378 = vpop.permute.xlu0 %1377
    %1379 = vrot.lane.b32.xlu0 %v1372, 127
    %v1380 = vpop.permute.xlu0 %1379
    %1381 = vrot.lane.b32.xlu0 %v1373, 127
    %v1382 = vpop.permute.xlu0 %1381
    %v1386 = vadd.f32 %v1262, %v1378
    %v1387 = vadd.f32 %v1263, %v1380
    %v1388 = vadd.f32 %v1264, %v1382
    %s1389 = sld [smem:[#allocation10 + $0x61]]
    %v1390 = vstv %s1389
    %v1391 = vmul.f32 %v1390, %v1222
    %v1392 = vmul.f32 %v1390, %v1223
    %v1393 = vmul.f32 %v1390, %v1224
    %1397 = vrot.lane.b32.xlu0 %v1391, 127
    %v1398 = vpop.permute.xlu0 %1397
    %1399 = vrot.lane.b32.xlu0 %v1392, 127
    %v1400 = vpop.permute.xlu0 %1399
    %1401 = vrot.lane.b32.xlu0 %v1393, 127
    %v1402 = vpop.permute.xlu0 %1401
    %v1406 = vadd.f32 %v1270, %v1398
    %v1407 = vadd.f32 %v1271, %v1400
    %v1408 = vadd.f32 %v1272, %v1402
    %s1409 = sld [smem:[#allocation10 + $0x73]]
    %v1410 = vstv %s1409
    %v1411 = vmul.f32 %v1410, %v1222
    %v1412 = vmul.f32 %v1410, %v1223
    %v1413 = vmul.f32 %v1410, %v1224
    %1417 = vrot.lane.b32.xlu0 %v1411, 127
    %v1418 = vpop.permute.xlu0 %1417
    %1419 = vrot.lane.b32.xlu0 %v1412, 127
    %v1420 = vpop.permute.xlu0 %1419
    %1421 = vrot.lane.b32.xlu0 %v1413, 127
    %v1422 = vpop.permute.xlu0 %1421
    %v1426 = vadd.f32 %v1278, %v1418
    %v1427 = vadd.f32 %v1279, %v1420
    %v1428 = vadd.f32 %v1280, %v1422
    %s1429 = sld [smem:[#allocation10 + $0x85]]
    %v1430 = vstv %s1429
    %v1431 = vmul.f32 %v1430, %v1222
    %v1432 = vmul.f32 %v1430, %v1223
    %v1433 = vmul.f32 %v1430, %v1224
    %1437 = vrot.lane.b32.xlu0 %v1431, 127
    %v1438 = vpop.permute.xlu0 %1437
    %1439 = vrot.lane.b32.xlu0 %v1432, 127
    %v1440 = vpop.permute.xlu0 %1439
    %1441 = vrot.lane.b32.xlu0 %v1433, 127
    %v1442 = vpop.permute.xlu0 %1441
    %v1446 = vadd.f32 %v1286, %v1438
    %v1447 = vadd.f32 %v1287, %v1440
    %v1448 = vadd.f32 %v1288, %v1442
    %s1449 = sld [smem:[#allocation10 + $0x8]]
    %v1450 = vstv %s1449
    %v1451 = vmul.f32 %v1450, %v1222
    %v1452 = vmul.f32 %v1450, %v1223
    %v1453 = vmul.f32 %v1450, %v1224
    %1457 = vrot.lane.b32.xlu0 %v1451, 126
    %v1458 = vpop.permute.xlu0 %1457
    %1459 = vrot.lane.b32.xlu0 %v1452, 126
    %v1460 = vpop.permute.xlu0 %1459
    %1461 = vrot.lane.b32.xlu0 %v1453, 126
    %v1462 = vpop.permute.xlu0 %1461
    %v1466 = vadd.f32 %v1306, %v1458
    %v1467 = vadd.f32 %v1307, %v1460
    %v1468 = vadd.f32 %v1308, %v1462
    %s1469 = sld [smem:[#allocation10 + $0x1a]]
    %v1470 = vstv %s1469
    %v1471 = vmul.f32 %v1470, %v1222
    %v1472 = vmul.f32 %v1470, %v1223
    %v1473 = vmul.f32 %v1470, %v1224
    %1477 = vrot.lane.b32.xlu0 %v1471, 126
    %v1478 = vpop.permute.xlu0 %1477
    %1479 = vrot.lane.b32.xlu0 %v1472, 126
    %v1480 = vpop.permute.xlu0 %1479
    %1481 = vrot.lane.b32.xlu0 %v1473, 126
    %v1482 = vpop.permute.xlu0 %1481
    %v1486 = vadd.f32 %v1326, %v1478
    %v1487 = vadd.f32 %v1327, %v1480
    %v1488 = vadd.f32 %v1328, %v1482
    %s1489 = sld [smem:[#allocation10 + $0x2c]]
    %v1490 = vstv %s1489
    %v1491 = vmul.f32 %v1490, %v1222
    %v1492 = vmul.f32 %v1490, %v1223
    %v1493 = vmul.f32 %v1490, %v1224
    %1497 = vrot.lane.b32.xlu0 %v1491, 126
    %v1498 = vpop.permute.xlu0 %1497
    %1499 = vrot.lane.b32.xlu0 %v1492, 126
    %v1500 = vpop.permute.xlu0 %1499
    %1501 = vrot.lane.b32.xlu0 %v1493, 126
    %v1502 = vpop.permute.xlu0 %1501
    %v1506 = vadd.f32 %v1346, %v1498
    %v1507 = vadd.f32 %v1347, %v1500
    %v1508 = vadd.f32 %v1348, %v1502
    %s1509 = sld [smem:[#allocation10 + $0x3e]]
    %v1510 = vstv %s1509
    %v1511 = vmul.f32 %v1510, %v1222
    %v1512 = vmul.f32 %v1510, %v1223
    %v1513 = vmul.f32 %v1510, %v1224
    %1517 = vrot.lane.b32.xlu0 %v1511, 126
    %v1518 = vpop.permute.xlu0 %1517
    %1519 = vrot.lane.b32.xlu0 %v1512, 126
    %v1520 = vpop.permute.xlu0 %1519
    %1521 = vrot.lane.b32.xlu0 %v1513, 126
    %v1522 = vpop.permute.xlu0 %1521
    %v1526 = vadd.f32 %v1366, %v1518
    %v1527 = vadd.f32 %v1367, %v1520
    %v1528 = vadd.f32 %v1368, %v1522
    %s1529 = sld [smem:[#allocation10 + $0x50]]
    %v1530 = vstv %s1529
    %v1531 = vmul.f32 %v1530, %v1222
    %v1532 = vmul.f32 %v1530, %v1223
    %v1533 = vmul.f32 %v1530, %v1224
    %1537 = vrot.lane.b32.xlu0 %v1531, 126
    %v1538 = vpop.permute.xlu0 %1537
    %1539 = vrot.lane.b32.xlu0 %v1532, 126
    %v1540 = vpop.permute.xlu0 %1539
    %1541 = vrot.lane.b32.xlu0 %v1533, 126
    %v1542 = vpop.permute.xlu0 %1541
    %v1546 = vadd.f32 %v1386, %v1538
    %v1547 = vadd.f32 %v1387, %v1540
    %v1548 = vadd.f32 %v1388, %v1542
    %s1549 = sld [smem:[#allocation10 + $0x62]]
    %v1550 = vstv %s1549
    %v1551 = vmul.f32 %v1550, %v1222
    %v1552 = vmul.f32 %v1550, %v1223
    %v1553 = vmul.f32 %v1550, %v1224
    %1557 = vrot.lane.b32.xlu0 %v1551, 126
    %v1558 = vpop.permute.xlu0 %1557
    %1559 = vrot.lane.b32.xlu0 %v1552, 126
    %v1560 = vpop.permute.xlu0 %1559
    %1561 = vrot.lane.b32.xlu0 %v1553, 126
    %v1562 = vpop.permute.xlu0 %1561
    %v1566 = vadd.f32 %v1406, %v1558
    %v1567 = vadd.f32 %v1407, %v1560
    %v1568 = vadd.f32 %v1408, %v1562
    %s1569 = sld [smem:[#allocation10 + $0x74]]
    %v1570 = vstv %s1569
    %v1571 = vmul.f32 %v1570, %v1222
    %v1572 = vmul.f32 %v1570, %v1223
    %v1573 = vmul.f32 %v1570, %v1224
    %1577 = vrot.lane.b32.xlu0 %v1571, 126
    %v1578 = vpop.permute.xlu0 %1577
    %1579 = vrot.lane.b32.xlu0 %v1572, 126
    %v1580 = vpop.permute.xlu0 %1579
    %1581 = vrot.lane.b32.xlu0 %v1573, 126
    %v1582 = vpop.permute.xlu0 %1581
    %v1586 = vadd.f32 %v1426, %v1578
    %v1587 = vadd.f32 %v1427, %v1580
    %v1588 = vadd.f32 %v1428, %v1582
    %s1589 = sld [smem:[#allocation10 + $0x86]]
    %v1590 = vstv %s1589
    %v1591 = vmul.f32 %v1590, %v1222
    %v1592 = vmul.f32 %v1590, %v1223
    %v1593 = vmul.f32 %v1590, %v1224
    %1597 = vrot.lane.b32.xlu0 %v1591, 126
    %v1598 = vpop.permute.xlu0 %1597
    %1599 = vrot.lane.b32.xlu0 %v1592, 126
    %v1600 = vpop.permute.xlu0 %1599
    %1601 = vrot.lane.b32.xlu0 %v1593, 126
    %v1602 = vpop.permute.xlu0 %1601
    %v1606 = vadd.f32 %v1446, %v1598
    %v1607 = vadd.f32 %v1447, %v1600
    %v1608 = vadd.f32 %v1448, %v1602
    %v1609 = vld [vmem:[%s201] sm:$0xff]
    %v1610 = vld [vmem:[%s201 + $0x8] sm:$0xff]
    %v1611 = vld [vmem:[%s201 + $0x10] sm:$0x3]
    %s1612 = sld [smem:[#allocation10 + $0x9]]
    %v1613 = vstv %s1612
    %v1614 = vmul.f32 %v1613, %v1609
    %v1615 = vmul.f32 %v1613, %v1610
    %v1616 = vmul.f32 %v1613, %v1611
    %v1617 = vadd.f32 %v1466, %v1614
    %v1618 = vadd.f32 %v1467, %v1615
    %v1619 = vadd.f32 %v1468, %v1616
    %s1620 = sld [smem:[#allocation10 + $0x1b]]
    %v1621 = vstv %s1620
    %v1622 = vmul.f32 %v1621, %v1609
    %v1623 = vmul.f32 %v1621, %v1610
    %v1624 = vmul.f32 %v1621, %v1611
    %v1625 = vadd.f32 %v1486, %v1622
    %v1626 = vadd.f32 %v1487, %v1623
    %v1627 = vadd.f32 %v1488, %v1624
    %s1628 = sld [smem:[#allocation10 + $0x2d]]
    %v1629 = vstv %s1628
    %v1630 = vmul.f32 %v1629, %v1609
    %v1631 = vmul.f32 %v1629, %v1610
    %v1632 = vmul.f32 %v1629, %v1611
    %v1633 = vadd.f32 %v1506, %v1630
    %v1634 = vadd.f32 %v1507, %v1631
    %v1635 = vadd.f32 %v1508, %v1632
    %s1636 = sld [smem:[#allocation10 + $0x3f]]
    %v1637 = vstv %s1636
    %v1638 = vmul.f32 %v1637, %v1609
    %v1639 = vmul.f32 %v1637, %v1610
    %v1640 = vmul.f32 %v1637, %v1611
    %v1641 = vadd.f32 %v1526, %v1638
    %v1642 = vadd.f32 %v1527, %v1639
    %v1643 = vadd.f32 %v1528, %v1640
    %s1644 = sld [smem:[#allocation10 + $0x51]]
    %v1645 = vstv %s1644
    %v1646 = vmul.f32 %v1645, %v1609
    %v1647 = vmul.f32 %v1645, %v1610
    %v1648 = vmul.f32 %v1645, %v1611
    %v1649 = vadd.f32 %v1546, %v1646
    %v1650 = vadd.f32 %v1547, %v1647
    %v1651 = vadd.f32 %v1548, %v1648
    %s1652 = sld [smem:[#allocation10 + $0x63]]
    %v1653 = vstv %s1652
    %v1654 = vmul.f32 %v1653, %v1609
    %v1655 = vmul.f32 %v1653, %v1610
    %v1656 = vmul.f32 %v1653, %v1611
    %v1657 = vadd.f32 %v1566, %v1654
    %v1658 = vadd.f32 %v1567, %v1655
    %v1659 = vadd.f32 %v1568, %v1656
    %s1660 = sld [smem:[#allocation10 + $0x75]]
    %v1661 = vstv %s1660
    %v1662 = vmul.f32 %v1661, %v1609
    %v1663 = vmul.f32 %v1661, %v1610
    %v1664 = vmul.f32 %v1661, %v1611
    %v1665 = vadd.f32 %v1586, %v1662
    %v1666 = vadd.f32 %v1587, %v1663
    %v1667 = vadd.f32 %v1588, %v1664
    %s1668 = sld [smem:[#allocation10 + $0x87]]
    %v1669 = vstv %s1668
    %v1670 = vmul.f32 %v1669, %v1609
    %v1671 = vmul.f32 %v1669, %v1610
    %v1672 = vmul.f32 %v1669, %v1611
    %v1673 = vadd.f32 %v1606, %v1670
    %v1674 = vadd.f32 %v1607, %v1671
    %v1675 = vadd.f32 %v1608, %v1672
    %s1676 = sld [smem:[#allocation10 + $0xa]]
    %v1677 = vstv %s1676
    %v1678 = vmul.f32 %v1677, %v1609
    %v1679 = vmul.f32 %v1677, %v1610
    %v1680 = vmul.f32 %v1677, %v1611
    %1684 = vrot.lane.b32.xlu0 %v1678, 127
    %v1685 = vpop.permute.xlu0 %1684
    %1686 = vrot.lane.b32.xlu0 %v1679, 127
    %v1687 = vpop.permute.xlu0 %1686
    %1688 = vrot.lane.b32.xlu0 %v1680, 127
    %v1689 = vpop.permute.xlu0 %1688
    %v1693 = vadd.f32 %v1617, %v1685
    %v1694 = vadd.f32 %v1618, %v1687
    %v1695 = vadd.f32 %v1619, %v1689
    %s1696 = sld [smem:[#allocation10 + $0x1c]]
    %v1697 = vstv %s1696
    %v1698 = vmul.f32 %v1697, %v1609
    %v1699 = vmul.f32 %v1697, %v1610
    %v1700 = vmul.f32 %v1697, %v1611
    %1704 = vrot.lane.b32.xlu0 %v1698, 127
    %v1705 = vpop.permute.xlu0 %1704
    %1706 = vrot.lane.b32.xlu0 %v1699, 127
    %v1707 = vpop.permute.xlu0 %1706
    %1708 = vrot.lane.b32.xlu0 %v1700, 127
    %v1709 = vpop.permute.xlu0 %1708
    %v1713 = vadd.f32 %v1625, %v1705
    %v1714 = vadd.f32 %v1626, %v1707
    %v1715 = vadd.f32 %v1627, %v1709
    %s1716 = sld [smem:[#allocation10 + $0x2e]]
    %v1717 = vstv %s1716
    %v1718 = vmul.f32 %v1717, %v1609
    %v1719 = vmul.f32 %v1717, %v1610
    %v1720 = vmul.f32 %v1717, %v1611
    %1724 = vrot.lane.b32.xlu0 %v1718, 127
    %v1725 = vpop.permute.xlu0 %1724
    %1726 = vrot.lane.b32.xlu0 %v1719, 127
    %v1727 = vpop.permute.xlu0 %1726
    %1728 = vrot.lane.b32.xlu0 %v1720, 127
    %v1729 = vpop.permute.xlu0 %1728
    %v1733 = vadd.f32 %v1633, %v1725
    %v1734 = vadd.f32 %v1634, %v1727
    %v1735 = vadd.f32 %v1635, %v1729
    %s1736 = sld [smem:[#allocation10 + $0x40]]
    %v1737 = vstv %s1736
    %v1738 = vmul.f32 %v1737, %v1609
    %v1739 = vmul.f32 %v1737, %v1610
    %v1740 = vmul.f32 %v1737, %v1611
    %1744 = vrot.lane.b32.xlu0 %v1738, 127
    %v1745 = vpop.permute.xlu0 %1744
    %1746 = vrot.lane.b32.xlu0 %v1739, 127
    %v1747 = vpop.permute.xlu0 %1746
    %1748 = vrot.lane.b32.xlu0 %v1740, 127
    %v1749 = vpop.permute.xlu0 %1748
    %v1753 = vadd.f32 %v1641, %v1745
    %v1754 = vadd.f32 %v1642, %v1747
    %v1755 = vadd.f32 %v1643, %v1749
    %s1756 = sld [smem:[#allocation10 + $0x52]]
    %v1757 = vstv %s1756
    %v1758 = vmul.f32 %v1757, %v1609
    %v1759 = vmul.f32 %v1757, %v1610
    %v1760 = vmul.f32 %v1757, %v1611
    %1764 = vrot.lane.b32.xlu0 %v1758, 127
    %v1765 = vpop.permute.xlu0 %1764
    %1766 = vrot.lane.b32.xlu0 %v1759, 127
    %v1767 = vpop.permute.xlu0 %1766
    %1768 = vrot.lane.b32.xlu0 %v1760, 127
    %v1769 = vpop.permute.xlu0 %1768
    %v1773 = vadd.f32 %v1649, %v1765
    %v1774 = vadd.f32 %v1650, %v1767
    %v1775 = vadd.f32 %v1651, %v1769
    %s1776 = sld [smem:[#allocation10 + $0x64]]
    %v1777 = vstv %s1776
    %v1778 = vmul.f32 %v1777, %v1609
    %v1779 = vmul.f32 %v1777, %v1610
    %v1780 = vmul.f32 %v1777, %v1611
    %1784 = vrot.lane.b32.xlu0 %v1778, 127
    %v1785 = vpop.permute.xlu0 %1784
    %1786 = vrot.lane.b32.xlu0 %v1779, 127
    %v1787 = vpop.permute.xlu0 %1786
    %1788 = vrot.lane.b32.xlu0 %v1780, 127
    %v1789 = vpop.permute.xlu0 %1788
    %v1793 = vadd.f32 %v1657, %v1785
    %v1794 = vadd.f32 %v1658, %v1787
    %v1795 = vadd.f32 %v1659, %v1789
    %s1796 = sld [smem:[#allocation10 + $0x76]]
    %v1797 = vstv %s1796
    %v1798 = vmul.f32 %v1797, %v1609
    %v1799 = vmul.f32 %v1797, %v1610
    %v1800 = vmul.f32 %v1797, %v1611
    %1804 = vrot.lane.b32.xlu0 %v1798, 127
    %v1805 = vpop.permute.xlu0 %1804
    %1806 = vrot.lane.b32.xlu0 %v1799, 127
    %v1807 = vpop.permute.xlu0 %1806
    %1808 = vrot.lane.b32.xlu0 %v1800, 127
    %v1809 = vpop.permute.xlu0 %1808
    %v1813 = vadd.f32 %v1665, %v1805
    %v1814 = vadd.f32 %v1666, %v1807
    %v1815 = vadd.f32 %v1667, %v1809
    %s1816 = sld [smem:[#allocation10 + $0x88]]
    %v1817 = vstv %s1816
    %v1818 = vmul.f32 %v1817, %v1609
    %v1819 = vmul.f32 %v1817, %v1610
    %v1820 = vmul.f32 %v1817, %v1611
    %1824 = vrot.lane.b32.xlu0 %v1818, 127
    %v1825 = vpop.permute.xlu0 %1824
    %1826 = vrot.lane.b32.xlu0 %v1819, 127
    %v1827 = vpop.permute.xlu0 %1826
    %1828 = vrot.lane.b32.xlu0 %v1820, 127
    %v1829 = vpop.permute.xlu0 %1828
    %v1833 = vadd.f32 %v1673, %v1825
    %v1834 = vadd.f32 %v1674, %v1827
    %v1835 = vadd.f32 %v1675, %v1829
    %s1836 = sld [smem:[#allocation10 + $0xb]]
    %v1837 = vstv %s1836
    %v1838 = vmul.f32 %v1837, %v1609
    %v1839 = vmul.f32 %v1837, %v1610
    %v1840 = vmul.f32 %v1837, %v1611
    %1844 = vrot.lane.b32.xlu0 %v1838, 126
    %v1845 = vpop.permute.xlu0 %1844
    %1846 = vrot.lane.b32.xlu0 %v1839, 126
    %v1847 = vpop.permute.xlu0 %1846
    %1848 = vrot.lane.b32.xlu0 %v1840, 126
    %v1849 = vpop.permute.xlu0 %1848
    %v1853 = vadd.f32 %v1693, %v1845
    %v1854 = vadd.f32 %v1694, %v1847
    %v1855 = vadd.f32 %v1695, %v1849
    %s1856 = sld [smem:[#allocation10 + $0x1d]]
    %v1857 = vstv %s1856
    %v1858 = vmul.f32 %v1857, %v1609
    %v1859 = vmul.f32 %v1857, %v1610
    %v1860 = vmul.f32 %v1857, %v1611
    %1864 = vrot.lane.b32.xlu0 %v1858, 126
    %v1865 = vpop.permute.xlu0 %1864
    %1866 = vrot.lane.b32.xlu0 %v1859, 126
    %v1867 = vpop.permute.xlu0 %1866
    %1868 = vrot.lane.b32.xlu0 %v1860, 126
    %v1869 = vpop.permute.xlu0 %1868
    %v1873 = vadd.f32 %v1713, %v1865
    %v1874 = vadd.f32 %v1714, %v1867
    %v1875 = vadd.f32 %v1715, %v1869
    %s1876 = sld [smem:[#allocation10 + $0x2f]]
    %v1877 = vstv %s1876
    %v1878 = vmul.f32 %v1877, %v1609
    %v1879 = vmul.f32 %v1877, %v1610
    %v1880 = vmul.f32 %v1877, %v1611
    %1884 = vrot.lane.b32.xlu0 %v1878, 126
    %v1885 = vpop.permute.xlu0 %1884
    %1886 = vrot.lane.b32.xlu0 %v1879, 126
    %v1887 = vpop.permute.xlu0 %1886
    %1888 = vrot.lane.b32.xlu0 %v1880, 126
    %v1889 = vpop.permute.xlu0 %1888
    %v1893 = vadd.f32 %v1733, %v1885
    %v1894 = vadd.f32 %v1734, %v1887
    %v1895 = vadd.f32 %v1735, %v1889
    %s1896 = sld [smem:[#allocation10 + $0x41]]
    %v1897 = vstv %s1896
    %v1898 = vmul.f32 %v1897, %v1609
    %v1899 = vmul.f32 %v1897, %v1610
    %v1900 = vmul.f32 %v1897, %v1611
    %1904 = vrot.lane.b32.xlu0 %v1898, 126
    %v1905 = vpop.permute.xlu0 %1904
    %1906 = vrot.lane.b32.xlu0 %v1899, 126
    %v1907 = vpop.permute.xlu0 %1906
    %1908 = vrot.lane.b32.xlu0 %v1900, 126
    %v1909 = vpop.permute.xlu0 %1908
    %v1913 = vadd.f32 %v1753, %v1905
    %v1914 = vadd.f32 %v1754, %v1907
    %v1915 = vadd.f32 %v1755, %v1909
    %s1916 = sld [smem:[#allocation10 + $0x53]]
    %v1917 = vstv %s1916
    %v1918 = vmul.f32 %v1917, %v1609
    %v1919 = vmul.f32 %v1917, %v1610
    %v1920 = vmul.f32 %v1917, %v1611
    %1924 = vrot.lane.b32.xlu0 %v1918, 126
    %v1925 = vpop.permute.xlu0 %1924
    %1926 = vrot.lane.b32.xlu0 %v1919, 126
    %v1927 = vpop.permute.xlu0 %1926
    %1928 = vrot.lane.b32.xlu0 %v1920, 126
    %v1929 = vpop.permute.xlu0 %1928
    %v1933 = vadd.f32 %v1773, %v1925
    %v1934 = vadd.f32 %v1774, %v1927
    %v1935 = vadd.f32 %v1775, %v1929
    %s1936 = sld [smem:[#allocation10 + $0x65]]
    %v1937 = vstv %s1936
    %v1938 = vmul.f32 %v1937, %v1609
    %v1939 = vmul.f32 %v1937, %v1610
    %v1940 = vmul.f32 %v1937, %v1611
    %1944 = vrot.lane.b32.xlu0 %v1938, 126
    %v1945 = vpop.permute.xlu0 %1944
    %1946 = vrot.lane.b32.xlu0 %v1939, 126
    %v1947 = vpop.permute.xlu0 %1946
    %1948 = vrot.lane.b32.xlu0 %v1940, 126
    %v1949 = vpop.permute.xlu0 %1948
    %v1953 = vadd.f32 %v1793, %v1945
    %v1954 = vadd.f32 %v1794, %v1947
    %v1955 = vadd.f32 %v1795, %v1949
    %s1956 = sld [smem:[#allocation10 + $0x77]]
    %v1957 = vstv %s1956
    %v1958 = vmul.f32 %v1957, %v1609
    %v1959 = vmul.f32 %v1957, %v1610
    %v1960 = vmul.f32 %v1957, %v1611
    %1964 = vrot.lane.b32.xlu0 %v1958, 126
    %v1965 = vpop.permute.xlu0 %1964
    %1966 = vrot.lane.b32.xlu0 %v1959, 126
    %v1967 = vpop.permute.xlu0 %1966
    %1968 = vrot.lane.b32.xlu0 %v1960, 126
    %v1969 = vpop.permute.xlu0 %1968
    %v1973 = vadd.f32 %v1813, %v1965
    %v1974 = vadd.f32 %v1814, %v1967
    %v1975 = vadd.f32 %v1815, %v1969
    %s1976 = sld [smem:[#allocation10 + $0x89]]
    %v1977 = vstv %s1976
    %v1978 = vmul.f32 %v1977, %v1609
    %v1979 = vmul.f32 %v1977, %v1610
    %v1980 = vmul.f32 %v1977, %v1611
    %1984 = vrot.lane.b32.xlu0 %v1978, 126
    %v1985 = vpop.permute.xlu0 %1984
    %1986 = vrot.lane.b32.xlu0 %v1979, 126
    %v1987 = vpop.permute.xlu0 %1986
    %1988 = vrot.lane.b32.xlu0 %v1980, 126
    %v1989 = vpop.permute.xlu0 %1988
    %v1993 = vadd.f32 %v1833, %v1985
    %v1994 = vadd.f32 %v1834, %v1987
    %v1995 = vadd.f32 %v1835, %v1989
    %v1996 = vld [vmem:[%s201 + $0x1] sm:$0xff]
    %v1997 = vld [vmem:[%s201 + $0x9] sm:$0xff]
    %v1998 = vld [vmem:[%s201 + $0x11] sm:$0x3]
    %s1999 = sld [smem:[#allocation10 + $0xc]]
    %v2000 = vstv %s1999
    %v2001 = vmul.f32 %v2000, %v1996
    %v2002 = vmul.f32 %v2000, %v1997
    %v2003 = vmul.f32 %v2000, %v1998
    %v2004 = vadd.f32 %v1853, %v2001
    %v2005 = vadd.f32 %v1854, %v2002
    %v2006 = vadd.f32 %v1855, %v2003
    %s2007 = sld [smem:[#allocation10 + $0x1e]]
    %v2008 = vstv %s2007
    %v2009 = vmul.f32 %v2008, %v1996
    %v2010 = vmul.f32 %v2008, %v1997
    %v2011 = vmul.f32 %v2008, %v1998
    %v2012 = vadd.f32 %v1873, %v2009
    %v2013 = vadd.f32 %v1874, %v2010
    %v2014 = vadd.f32 %v1875, %v2011
    %s2015 = sld [smem:[#allocation10 + $0x30]]
    %v2016 = vstv %s2015
    %v2017 = vmul.f32 %v2016, %v1996
    %v2018 = vmul.f32 %v2016, %v1997
    %v2019 = vmul.f32 %v2016, %v1998
    %v2020 = vadd.f32 %v1893, %v2017
    %v2021 = vadd.f32 %v1894, %v2018
    %v2022 = vadd.f32 %v1895, %v2019
    %s2023 = sld [smem:[#allocation10 + $0x42]]
    %v2024 = vstv %s2023
    %v2025 = vmul.f32 %v2024, %v1996
    %v2026 = vmul.f32 %v2024, %v1997
    %v2027 = vmul.f32 %v2024, %v1998
    %v2028 = vadd.f32 %v1913, %v2025
    %v2029 = vadd.f32 %v1914, %v2026
    %v2030 = vadd.f32 %v1915, %v2027
    %s2031 = sld [smem:[#allocation10 + $0x54]]
    %v2032 = vstv %s2031
    %v2033 = vmul.f32 %v2032, %v1996
    %v2034 = vmul.f32 %v2032, %v1997
    %v2035 = vmul.f32 %v2032, %v1998
    %v2036 = vadd.f32 %v1933, %v2033
    %v2037 = vadd.f32 %v1934, %v2034
    %v2038 = vadd.f32 %v1935, %v2035
    %s2039 = sld [smem:[#allocation10 + $0x66]]
    %v2040 = vstv %s2039
    %v2041 = vmul.f32 %v2040, %v1996
    %v2042 = vmul.f32 %v2040, %v1997
    %v2043 = vmul.f32 %v2040, %v1998
    %v2044 = vadd.f32 %v1953, %v2041
    %v2045 = vadd.f32 %v1954, %v2042
    %v2046 = vadd.f32 %v1955, %v2043
    %s2047 = sld [smem:[#allocation10 + $0x78]]
    %v2048 = vstv %s2047
    %v2049 = vmul.f32 %v2048, %v1996
    %v2050 = vmul.f32 %v2048, %v1997
    %v2051 = vmul.f32 %v2048, %v1998
    %v2052 = vadd.f32 %v1973, %v2049
    %v2053 = vadd.f32 %v1974, %v2050
    %v2054 = vadd.f32 %v1975, %v2051
    %s2055 = sld [smem:[#allocation10 + $0x8a]]
    %v2056 = vstv %s2055
    %v2057 = vmul.f32 %v2056, %v1996
    %v2058 = vmul.f32 %v2056, %v1997
    %v2059 = vmul.f32 %v2056, %v1998
    %v2060 = vadd.f32 %v1993, %v2057
    %v2061 = vadd.f32 %v1994, %v2058
    %v2062 = vadd.f32 %v1995, %v2059
    %s2063 = sld [smem:[#allocation10 + $0xd]]
    %v2064 = vstv %s2063
    %v2065 = vmul.f32 %v2064, %v1996
    %v2066 = vmul.f32 %v2064, %v1997
    %v2067 = vmul.f32 %v2064, %v1998
    %2071 = vrot.lane.b32.xlu0 %v2065, 127
    %v2072 = vpop.permute.xlu0 %2071
    %2073 = vrot.lane.b32.xlu0 %v2066, 127
    %v2074 = vpop.permute.xlu0 %2073
    %2075 = vrot.lane.b32.xlu0 %v2067, 127
    %v2076 = vpop.permute.xlu0 %2075
    %v2080 = vadd.f32 %v2004, %v2072
    %v2081 = vadd.f32 %v2005, %v2074
    %v2082 = vadd.f32 %v2006, %v2076
    %s2083 = sld [smem:[#allocation10 + $0x1f]]
    %v2084 = vstv %s2083
    %v2085 = vmul.f32 %v2084, %v1996
    %v2086 = vmul.f32 %v2084, %v1997
    %v2087 = vmul.f32 %v2084, %v1998
    %2091 = vrot.lane.b32.xlu0 %v2085, 127
    %v2092 = vpop.permute.xlu0 %2091
    %2093 = vrot.lane.b32.xlu0 %v2086, 127
    %v2094 = vpop.permute.xlu0 %2093
    %2095 = vrot.lane.b32.xlu0 %v2087, 127
    %v2096 = vpop.permute.xlu0 %2095
    %v2100 = vadd.f32 %v2012, %v2092
    %v2101 = vadd.f32 %v2013, %v2094
    %v2102 = vadd.f32 %v2014, %v2096
    %s2103 = sld [smem:[#allocation10 + $0x31]]
    %v2104 = vstv %s2103
    %v2105 = vmul.f32 %v2104, %v1996
    %v2106 = vmul.f32 %v2104, %v1997
    %v2107 = vmul.f32 %v2104, %v1998
    %2111 = vrot.lane.b32.xlu0 %v2105, 127
    %v2112 = vpop.permute.xlu0 %2111
    %2113 = vrot.lane.b32.xlu0 %v2106, 127
    %v2114 = vpop.permute.xlu0 %2113
    %2115 = vrot.lane.b32.xlu0 %v2107, 127
    %v2116 = vpop.permute.xlu0 %2115
    %v2120 = vadd.f32 %v2020, %v2112
    %v2121 = vadd.f32 %v2021, %v2114
    %v2122 = vadd.f32 %v2022, %v2116
    %s2123 = sld [smem:[#allocation10 + $0x43]]
    %v2124 = vstv %s2123
    %v2125 = vmul.f32 %v2124, %v1996
    %v2126 = vmul.f32 %v2124, %v1997
    %v2127 = vmul.f32 %v2124, %v1998
    %2131 = vrot.lane.b32.xlu0 %v2125, 127
    %v2132 = vpop.permute.xlu0 %2131
    %2133 = vrot.lane.b32.xlu0 %v2126, 127
    %v2134 = vpop.permute.xlu0 %2133
    %2135 = vrot.lane.b32.xlu0 %v2127, 127
    %v2136 = vpop.permute.xlu0 %2135
    %v2140 = vadd.f32 %v2028, %v2132
    %v2141 = vadd.f32 %v2029, %v2134
    %v2142 = vadd.f32 %v2030, %v2136
    %s2143 = sld [smem:[#allocation10 + $0x55]]
    %v2144 = vstv %s2143
    %v2145 = vmul.f32 %v2144, %v1996
    %v2146 = vmul.f32 %v2144, %v1997
    %v2147 = vmul.f32 %v2144, %v1998
    %2151 = vrot.lane.b32.xlu0 %v2145, 127
    %v2152 = vpop.permute.xlu0 %2151
    %2153 = vrot.lane.b32.xlu0 %v2146, 127
    %v2154 = vpop.permute.xlu0 %2153
    %2155 = vrot.lane.b32.xlu0 %v2147, 127
    %v2156 = vpop.permute.xlu0 %2155
    %v2160 = vadd.f32 %v2036, %v2152
    %v2161 = vadd.f32 %v2037, %v2154
    %v2162 = vadd.f32 %v2038, %v2156
    %s2163 = sld [smem:[#allocation10 + $0x67]]
    %v2164 = vstv %s2163
    %v2165 = vmul.f32 %v2164, %v1996
    %v2166 = vmul.f32 %v2164, %v1997
    %v2167 = vmul.f32 %v2164, %v1998
    %2171 = vrot.lane.b32.xlu0 %v2165, 127
    %v2172 = vpop.permute.xlu0 %2171
    %2173 = vrot.lane.b32.xlu0 %v2166, 127
    %v2174 = vpop.permute.xlu0 %2173
    %2175 = vrot.lane.b32.xlu0 %v2167, 127
    %v2176 = vpop.permute.xlu0 %2175
    %v2180 = vadd.f32 %v2044, %v2172
    %v2181 = vadd.f32 %v2045, %v2174
    %v2182 = vadd.f32 %v2046, %v2176
    %s2183 = sld [smem:[#allocation10 + $0x79]]
    %v2184 = vstv %s2183
    %v2185 = vmul.f32 %v2184, %v1996
    %v2186 = vmul.f32 %v2184, %v1997
    %v2187 = vmul.f32 %v2184, %v1998
    %2191 = vrot.lane.b32.xlu0 %v2185, 127
    %v2192 = vpop.permute.xlu0 %2191
    %2193 = vrot.lane.b32.xlu0 %v2186, 127
    %v2194 = vpop.permute.xlu0 %2193
    %2195 = vrot.lane.b32.xlu0 %v2187, 127
    %v2196 = vpop.permute.xlu0 %2195
    %v2200 = vadd.f32 %v2052, %v2192
    %v2201 = vadd.f32 %v2053, %v2194
    %v2202 = vadd.f32 %v2054, %v2196
    %s2203 = sld [smem:[#allocation10 + $0x8b]]
    %v2204 = vstv %s2203
    %v2205 = vmul.f32 %v2204, %v1996
    %v2206 = vmul.f32 %v2204, %v1997
    %v2207 = vmul.f32 %v2204, %v1998
    %2211 = vrot.lane.b32.xlu0 %v2205, 127
    %v2212 = vpop.permute.xlu0 %2211
    %2213 = vrot.lane.b32.xlu0 %v2206, 127
    %v2214 = vpop.permute.xlu0 %2213
    %2215 = vrot.lane.b32.xlu0 %v2207, 127
    %v2216 = vpop.permute.xlu0 %2215
    %v2220 = vadd.f32 %v2060, %v2212
    %v2221 = vadd.f32 %v2061, %v2214
    %v2222 = vadd.f32 %v2062, %v2216
    %s2223 = sld [smem:[#allocation10 + $0xe]]
    %v2224 = vstv %s2223
    %v2225 = vmul.f32 %v2224, %v1996
    %v2226 = vmul.f32 %v2224, %v1997
    %v2227 = vmul.f32 %v2224, %v1998
    %2231 = vrot.lane.b32.xlu0 %v2225, 126
    %v2232 = vpop.permute.xlu0 %2231
    %2233 = vrot.lane.b32.xlu0 %v2226, 126
    %v2234 = vpop.permute.xlu0 %2233
    %2235 = vrot.lane.b32.xlu0 %v2227, 126
    %v2236 = vpop.permute.xlu0 %2235
    %v2240 = vadd.f32 %v2080, %v2232
    %v2241 = vadd.f32 %v2081, %v2234
    %v2242 = vadd.f32 %v2082, %v2236
    %s2243 = sld [smem:[#allocation10 + $0x20]]
    %v2244 = vstv %s2243
    %v2245 = vmul.f32 %v2244, %v1996
    %v2246 = vmul.f32 %v2244, %v1997
    %v2247 = vmul.f32 %v2244, %v1998
    %2251 = vrot.lane.b32.xlu0 %v2245, 126
    %v2252 = vpop.permute.xlu0 %2251
    %2253 = vrot.lane.b32.xlu0 %v2246, 126
    %v2254 = vpop.permute.xlu0 %2253
    %2255 = vrot.lane.b32.xlu0 %v2247, 126
    %v2256 = vpop.permute.xlu0 %2255
    %v2260 = vadd.f32 %v2100, %v2252
    %v2261 = vadd.f32 %v2101, %v2254
    %v2262 = vadd.f32 %v2102, %v2256
    %s2263 = sld [smem:[#allocation10 + $0x32]]
    %v2264 = vstv %s2263
    %v2265 = vmul.f32 %v2264, %v1996
    %v2266 = vmul.f32 %v2264, %v1997
    %v2267 = vmul.f32 %v2264, %v1998
    %2271 = vrot.lane.b32.xlu0 %v2265, 126
    %v2272 = vpop.permute.xlu0 %2271
    %2273 = vrot.lane.b32.xlu0 %v2266, 126
    %v2274 = vpop.permute.xlu0 %2273
    %2275 = vrot.lane.b32.xlu0 %v2267, 126
    %v2276 = vpop.permute.xlu0 %2275
    %v2280 = vadd.f32 %v2120, %v2272
    %v2281 = vadd.f32 %v2121, %v2274
    %v2282 = vadd.f32 %v2122, %v2276
    %s2283 = sld [smem:[#allocation10 + $0x44]]
    %v2284 = vstv %s2283
    %v2285 = vmul.f32 %v2284, %v1996
    %v2286 = vmul.f32 %v2284, %v1997
    %v2287 = vmul.f32 %v2284, %v1998
    %2291 = vrot.lane.b32.xlu0 %v2285, 126
    %v2292 = vpop.permute.xlu0 %2291
    %2293 = vrot.lane.b32.xlu0 %v2286, 126
    %v2294 = vpop.permute.xlu0 %2293
    %2295 = vrot.lane.b32.xlu0 %v2287, 126
    %v2296 = vpop.permute.xlu0 %2295
    %v2300 = vadd.f32 %v2140, %v2292
    %v2301 = vadd.f32 %v2141, %v2294
    %v2302 = vadd.f32 %v2142, %v2296
    %s2303 = sld [smem:[#allocation10 + $0x56]]
    %v2304 = vstv %s2303
    %v2305 = vmul.f32 %v2304, %v1996
    %v2306 = vmul.f32 %v2304, %v1997
    %v2307 = vmul.f32 %v2304, %v1998
    %2311 = vrot.lane.b32.xlu0 %v2305, 126
    %v2312 = vpop.permute.xlu0 %2311
    %2313 = vrot.lane.b32.xlu0 %v2306, 126
    %v2314 = vpop.permute.xlu0 %2313
    %2315 = vrot.lane.b32.xlu0 %v2307, 126
    %v2316 = vpop.permute.xlu0 %2315
    %v2320 = vadd.f32 %v2160, %v2312
    %v2321 = vadd.f32 %v2161, %v2314
    %v2322 = vadd.f32 %v2162, %v2316
    %s2323 = sld [smem:[#allocation10 + $0x68]]
    %v2324 = vstv %s2323
    %v2325 = vmul.f32 %v2324, %v1996
    %v2326 = vmul.f32 %v2324, %v1997
    %v2327 = vmul.f32 %v2324, %v1998
    %2331 = vrot.lane.b32.xlu0 %v2325, 126
    %v2332 = vpop.permute.xlu0 %2331
    %2333 = vrot.lane.b32.xlu0 %v2326, 126
    %v2334 = vpop.permute.xlu0 %2333
    %2335 = vrot.lane.b32.xlu0 %v2327, 126
    %v2336 = vpop.permute.xlu0 %2335
    %v2340 = vadd.f32 %v2180, %v2332
    %v2341 = vadd.f32 %v2181, %v2334
    %v2342 = vadd.f32 %v2182, %v2336
    %s2343 = sld [smem:[#allocation10 + $0x7a]]
    %v2344 = vstv %s2343
    %v2345 = vmul.f32 %v2344, %v1996
    %v2346 = vmul.f32 %v2344, %v1997
    %v2347 = vmul.f32 %v2344, %v1998
    %2351 = vrot.lane.b32.xlu0 %v2345, 126
    %v2352 = vpop.permute.xlu0 %2351
    %2353 = vrot.lane.b32.xlu0 %v2346, 126
    %v2354 = vpop.permute.xlu0 %2353
    %2355 = vrot.lane.b32.xlu0 %v2347, 126
    %v2356 = vpop.permute.xlu0 %2355
    %v2360 = vadd.f32 %v2200, %v2352
    %v2361 = vadd.f32 %v2201, %v2354
    %v2362 = vadd.f32 %v2202, %v2356
    %s2363 = sld [smem:[#allocation10 + $0x8c]]
    %v2364 = vstv %s2363
    %v2365 = vmul.f32 %v2364, %v1996
    %v2366 = vmul.f32 %v2364, %v1997
    %v2367 = vmul.f32 %v2364, %v1998
    %2371 = vrot.lane.b32.xlu0 %v2365, 126
    %v2372 = vpop.permute.xlu0 %2371
    %2373 = vrot.lane.b32.xlu0 %v2366, 126
    %v2374 = vpop.permute.xlu0 %2373
    %2375 = vrot.lane.b32.xlu0 %v2367, 126
    %v2376 = vpop.permute.xlu0 %2375
    %v2380 = vadd.f32 %v2220, %v2372
    %v2381 = vadd.f32 %v2221, %v2374
    %v2382 = vadd.f32 %v2222, %v2376
    %v2383 = vld [vmem:[%s201 + $0x2] sm:$0xff]
    %v2384 = vld [vmem:[%s201 + $0xa] sm:$0xff]
    %v2385 = vld [vmem:[%s201 + $0x12] sm:$0x3]
    %s2386 = sld [smem:[#allocation10 + $0xf]]
    %v2387 = vstv %s2386
    %v2388 = vmul.f32 %v2387, %v2383
    %v2389 = vmul.f32 %v2387, %v2384
    %v2390 = vmul.f32 %v2387, %v2385
    %v2391 = vadd.f32 %v2240, %v2388
    %v2392 = vadd.f32 %v2241, %v2389
    %v2393 = vadd.f32 %v2242, %v2390
    %s2394 = sld [smem:[#allocation10 + $0x21]]
    %v2395 = vstv %s2394
    %v2396 = vmul.f32 %v2395, %v2383
    %v2397 = vmul.f32 %v2395, %v2384
    %v2398 = vmul.f32 %v2395, %v2385
    %v2399 = vadd.f32 %v2260, %v2396
    %v2400 = vadd.f32 %v2261, %v2397
    %v2401 = vadd.f32 %v2262, %v2398
    %s2402 = sld [smem:[#allocation10 + $0x33]]
    %v2403 = vstv %s2402
    %v2404 = vmul.f32 %v2403, %v2383
    %v2405 = vmul.f32 %v2403, %v2384
    %v2406 = vmul.f32 %v2403, %v2385
    %v2407 = vadd.f32 %v2280, %v2404
    %v2408 = vadd.f32 %v2281, %v2405
    %v2409 = vadd.f32 %v2282, %v2406
    %s2410 = sld [smem:[#allocation10 + $0x45]]
    %v2411 = vstv %s2410
    %v2412 = vmul.f32 %v2411, %v2383
    %v2413 = vmul.f32 %v2411, %v2384
    %v2414 = vmul.f32 %v2411, %v2385
    %v2415 = vadd.f32 %v2300, %v2412
    %v2416 = vadd.f32 %v2301, %v2413
    %v2417 = vadd.f32 %v2302, %v2414
    %s2418 = sld [smem:[#allocation10 + $0x57]]
    %v2419 = vstv %s2418
    %v2420 = vmul.f32 %v2419, %v2383
    %v2421 = vmul.f32 %v2419, %v2384
    %v2422 = vmul.f32 %v2419, %v2385
    %v2423 = vadd.f32 %v2320, %v2420
    %v2424 = vadd.f32 %v2321, %v2421
    %v2425 = vadd.f32 %v2322, %v2422
    %s2426 = sld [smem:[#allocation10 + $0x69]]
    %v2427 = vstv %s2426
    %v2428 = vmul.f32 %v2427, %v2383
    %v2429 = vmul.f32 %v2427, %v2384
    %v2430 = vmul.f32 %v2427, %v2385
    %v2431 = vadd.f32 %v2340, %v2428
    %v2432 = vadd.f32 %v2341, %v2429
    %v2433 = vadd.f32 %v2342, %v2430
    %s2434 = sld [smem:[#allocation10 + $0x7b]]
    %v2435 = vstv %s2434
    %v2436 = vmul.f32 %v2435, %v2383
    %v2437 = vmul.f32 %v2435, %v2384
    %v2438 = vmul.f32 %v2435, %v2385
    %v2439 = vadd.f32 %v2360, %v2436
    %v2440 = vadd.f32 %v2361, %v2437
    %v2441 = vadd.f32 %v2362, %v2438
    %s2442 = sld [smem:[#allocation10 + $0x8d]]
    %v2443 = vstv %s2442
    %v2444 = vmul.f32 %v2443, %v2383
    %v2445 = vmul.f32 %v2443, %v2384
    %v2446 = vmul.f32 %v2443, %v2385
    %v2447 = vadd.f32 %v2380, %v2444
    %v2448 = vadd.f32 %v2381, %v2445
    %v2449 = vadd.f32 %v2382, %v2446
    %s2450 = sld [smem:[#allocation10 + $0x10]]
    %v2451 = vstv %s2450
    %v2452 = vmul.f32 %v2451, %v2383
    %v2453 = vmul.f32 %v2451, %v2384
    %v2454 = vmul.f32 %v2451, %v2385
    %2458 = vrot.lane.b32.xlu0 %v2452, 127
    %v2459 = vpop.permute.xlu0 %2458
    %2460 = vrot.lane.b32.xlu0 %v2453, 127
    %v2461 = vpop.permute.xlu0 %2460
    %2462 = vrot.lane.b32.xlu0 %v2454, 127
    %v2463 = vpop.permute.xlu0 %2462
    %v2467 = vadd.f32 %v2391, %v2459
    %v2468 = vadd.f32 %v2392, %v2461
    %v2469 = vadd.f32 %v2393, %v2463
    %s2470 = sld [smem:[#allocation10 + $0x22]]
    %v2471 = vstv %s2470
    %v2472 = vmul.f32 %v2471, %v2383
    %v2473 = vmul.f32 %v2471, %v2384
    %v2474 = vmul.f32 %v2471, %v2385
    %2478 = vrot.lane.b32.xlu0 %v2472, 127
    %v2479 = vpop.permute.xlu0 %2478
    %2480 = vrot.lane.b32.xlu0 %v2473, 127
    %v2481 = vpop.permute.xlu0 %2480
    %2482 = vrot.lane.b32.xlu0 %v2474, 127
    %v2483 = vpop.permute.xlu0 %2482
    %v2487 = vadd.f32 %v2399, %v2479
    %v2488 = vadd.f32 %v2400, %v2481
    %v2489 = vadd.f32 %v2401, %v2483
    %s2490 = sld [smem:[#allocation10 + $0x34]]
    %v2491 = vstv %s2490
    %v2492 = vmul.f32 %v2491, %v2383
    %v2493 = vmul.f32 %v2491, %v2384
    %v2494 = vmul.f32 %v2491, %v2385
    %2498 = vrot.lane.b32.xlu0 %v2492, 127
    %v2499 = vpop.permute.xlu0 %2498
    %2500 = vrot.lane.b32.xlu0 %v2493, 127
    %v2501 = vpop.permute.xlu0 %2500
    %2502 = vrot.lane.b32.xlu0 %v2494, 127
    %v2503 = vpop.permute.xlu0 %2502
    %v2507 = vadd.f32 %v2407, %v2499
    %v2508 = vadd.f32 %v2408, %v2501
    %v2509 = vadd.f32 %v2409, %v2503
    %s2510 = sld [smem:[#allocation10 + $0x46]]
    %v2511 = vstv %s2510
    %v2512 = vmul.f32 %v2511, %v2383
    %v2513 = vmul.f32 %v2511, %v2384
    %v2514 = vmul.f32 %v2511, %v2385
    %2518 = vrot.lane.b32.xlu0 %v2512, 127
    %v2519 = vpop.permute.xlu0 %2518
    %2520 = vrot.lane.b32.xlu0 %v2513, 127
    %v2521 = vpop.permute.xlu0 %2520
    %2522 = vrot.lane.b32.xlu0 %v2514, 127
    %v2523 = vpop.permute.xlu0 %2522
    %v2527 = vadd.f32 %v2415, %v2519
    %v2528 = vadd.f32 %v2416, %v2521
    %v2529 = vadd.f32 %v2417, %v2523
    %s2530 = sld [smem:[#allocation10 + $0x58]]
    %v2531 = vstv %s2530
    %v2532 = vmul.f32 %v2531, %v2383
    %v2533 = vmul.f32 %v2531, %v2384
    %v2534 = vmul.f32 %v2531, %v2385
    %2538 = vrot.lane.b32.xlu0 %v2532, 127
    %v2539 = vpop.permute.xlu0 %2538
    %2540 = vrot.lane.b32.xlu0 %v2533, 127
    %v2541 = vpop.permute.xlu0 %2540
    %2542 = vrot.lane.b32.xlu0 %v2534, 127
    %v2543 = vpop.permute.xlu0 %2542
    %v2547 = vadd.f32 %v2423, %v2539
    %v2548 = vadd.f32 %v2424, %v2541
    %v2549 = vadd.f32 %v2425, %v2543
    %s2550 = sld [smem:[#allocation10 + $0x6a]]
    %v2551 = vstv %s2550
    %v2552 = vmul.f32 %v2551, %v2383
    %v2553 = vmul.f32 %v2551, %v2384
    %v2554 = vmul.f32 %v2551, %v2385
    %2558 = vrot.lane.b32.xlu0 %v2552, 127
    %v2559 = vpop.permute.xlu0 %2558
    %2560 = vrot.lane.b32.xlu0 %v2553, 127
    %v2561 = vpop.permute.xlu0 %2560
    %2562 = vrot.lane.b32.xlu0 %v2554, 127
    %v2563 = vpop.permute.xlu0 %2562
    %v2567 = vadd.f32 %v2431, %v2559
    %v2568 = vadd.f32 %v2432, %v2561
    %v2569 = vadd.f32 %v2433, %v2563
    %s2570 = sld [smem:[#allocation10 + $0x7c]]
    %v2571 = vstv %s2570
    %v2572 = vmul.f32 %v2571, %v2383
    %v2573 = vmul.f32 %v2571, %v2384
    %v2574 = vmul.f32 %v2571, %v2385
    %2578 = vrot.lane.b32.xlu0 %v2572, 127
    %v2579 = vpop.permute.xlu0 %2578
    %2580 = vrot.lane.b32.xlu0 %v2573, 127
    %v2581 = vpop.permute.xlu0 %2580
    %2582 = vrot.lane.b32.xlu0 %v2574, 127
    %v2583 = vpop.permute.xlu0 %2582
    %v2587 = vadd.f32 %v2439, %v2579
    %v2588 = vadd.f32 %v2440, %v2581
    %v2589 = vadd.f32 %v2441, %v2583
    %s2590 = sld [smem:[#allocation10 + $0x8e]]
    %v2591 = vstv %s2590
    %v2592 = vmul.f32 %v2591, %v2383
    %v2593 = vmul.f32 %v2591, %v2384
    %v2594 = vmul.f32 %v2591, %v2385
    %2598 = vrot.lane.b32.xlu0 %v2592, 127
    %v2599 = vpop.permute.xlu0 %2598
    %2600 = vrot.lane.b32.xlu0 %v2593, 127
    %v2601 = vpop.permute.xlu0 %2600
    %2602 = vrot.lane.b32.xlu0 %v2594, 127
    %v2603 = vpop.permute.xlu0 %2602
    %v2607 = vadd.f32 %v2447, %v2599
    %v2608 = vadd.f32 %v2448, %v2601
    %v2609 = vadd.f32 %v2449, %v2603
    %s2610 = sld [smem:[#allocation10 + $0x11]]
    %v2611 = vstv %s2610
    %v2612 = vmul.f32 %v2611, %v2383
    %v2613 = vmul.f32 %v2611, %v2384
    %v2614 = vmul.f32 %v2611, %v2385
    %2618 = vrot.lane.b32.xlu0 %v2612, 126
    %v2619 = vpop.permute.xlu0 %2618
    %2620 = vrot.lane.b32.xlu0 %v2613, 126
    %v2621 = vpop.permute.xlu0 %2620
    %2622 = vrot.lane.b32.xlu0 %v2614, 126
    %v2623 = vpop.permute.xlu0 %2622
    %v2627 = vadd.f32 %v2467, %v2619
    %v2628 = vadd.f32 %v2468, %v2621
    %v2629 = vadd.f32 %v2469, %v2623
    %s2630 = sld [smem:[#allocation10 + $0x23]]
    %v2631 = vstv %s2630
    %v2632 = vmul.f32 %v2631, %v2383
    %v2633 = vmul.f32 %v2631, %v2384
    %v2634 = vmul.f32 %v2631, %v2385
    %2638 = vrot.lane.b32.xlu0 %v2632, 126
    %v2639 = vpop.permute.xlu0 %2638
    %2640 = vrot.lane.b32.xlu0 %v2633, 126
    %v2641 = vpop.permute.xlu0 %2640
    %2642 = vrot.lane.b32.xlu0 %v2634, 126
    %v2643 = vpop.permute.xlu0 %2642
    %v2647 = vadd.f32 %v2487, %v2639
    %v2648 = vadd.f32 %v2488, %v2641
    %v2649 = vadd.f32 %v2489, %v2643
    %s2650 = sld [smem:[#allocation10 + $0x35]]
    %v2651 = vstv %s2650
    %v2652 = vmul.f32 %v2651, %v2383
    %v2653 = vmul.f32 %v2651, %v2384
    %v2654 = vmul.f32 %v2651, %v2385
    %2658 = vrot.lane.b32.xlu0 %v2652, 126
    %v2659 = vpop.permute.xlu0 %2658
    %2660 = vrot.lane.b32.xlu0 %v2653, 126
    %v2661 = vpop.permute.xlu0 %2660
    %2662 = vrot.lane.b32.xlu0 %v2654, 126
    %v2663 = vpop.permute.xlu0 %2662
    %v2667 = vadd.f32 %v2507, %v2659
    %v2668 = vadd.f32 %v2508, %v2661
    %v2669 = vadd.f32 %v2509, %v2663
    %s2670 = sld [smem:[#allocation10 + $0x47]]
    %v2671 = vstv %s2670
    %v2672 = vmul.f32 %v2671, %v2383
    %v2673 = vmul.f32 %v2671, %v2384
    %v2674 = vmul.f32 %v2671, %v2385
    %2678 = vrot.lane.b32.xlu0 %v2672, 126
    %v2679 = vpop.permute.xlu0 %2678
    %2680 = vrot.lane.b32.xlu0 %v2673, 126
    %v2681 = vpop.permute.xlu0 %2680
    %2682 = vrot.lane.b32.xlu0 %v2674, 126
    %v2683 = vpop.permute.xlu0 %2682
    %v2687 = vadd.f32 %v2527, %v2679
    %v2688 = vadd.f32 %v2528, %v2681
    %v2689 = vadd.f32 %v2529, %v2683
    %s2690 = sld [smem:[#allocation10 + $0x59]]
    %v2691 = vstv %s2690
    %v2692 = vmul.f32 %v2691, %v2383
    %v2693 = vmul.f32 %v2691, %v2384
    %v2694 = vmul.f32 %v2691, %v2385
    %2698 = vrot.lane.b32.xlu0 %v2692, 126
    %v2699 = vpop.permute.xlu0 %2698
    %2700 = vrot.lane.b32.xlu0 %v2693, 126
    %v2701 = vpop.permute.xlu0 %2700
    %2702 = vrot.lane.b32.xlu0 %v2694, 126
    %v2703 = vpop.permute.xlu0 %2702
    %v2707 = vadd.f32 %v2547, %v2699
    %v2708 = vadd.f32 %v2548, %v2701
    %v2709 = vadd.f32 %v2549, %v2703
    %s2710 = sld [smem:[#allocation10 + $0x6b]]
    %v2711 = vstv %s2710
    %v2712 = vmul.f32 %v2711, %v2383
    %v2713 = vmul.f32 %v2711, %v2384
    %v2714 = vmul.f32 %v2711, %v2385
    %2718 = vrot.lane.b32.xlu0 %v2712, 126
    %v2719 = vpop.permute.xlu0 %2718
    %2720 = vrot.lane.b32.xlu0 %v2713, 126
    %v2721 = vpop.permute.xlu0 %2720
    %2722 = vrot.lane.b32.xlu0 %v2714, 126
    %v2723 = vpop.permute.xlu0 %2722
    %v2727 = vadd.f32 %v2567, %v2719
    %v2728 = vadd.f32 %v2568, %v2721
    %v2729 = vadd.f32 %v2569, %v2723
    %s2730 = sld [smem:[#allocation10 + $0x7d]]
    %v2731 = vstv %s2730
    %v2732 = vmul.f32 %v2731, %v2383
    %v2733 = vmul.f32 %v2731, %v2384
    %v2734 = vmul.f32 %v2731, %v2385
    %2738 = vrot.lane.b32.xlu0 %v2732, 126
    %v2739 = vpop.permute.xlu0 %2738
    %2740 = vrot.lane.b32.xlu0 %v2733, 126
    %v2741 = vpop.permute.xlu0 %2740
    %2742 = vrot.lane.b32.xlu0 %v2734, 126
    %v2743 = vpop.permute.xlu0 %2742
    %v2747 = vadd.f32 %v2587, %v2739
    %v2748 = vadd.f32 %v2588, %v2741
    %v2749 = vadd.f32 %v2589, %v2743
    %s2750 = sld [smem:[#allocation10 + $0x8f]]
    %v2751 = vstv %s2750
    %v2752 = vmul.f32 %v2751, %v2383
    %v2753 = vmul.f32 %v2751, %v2384
    %v2754 = vmul.f32 %v2751, %v2385
    %2758 = vrot.lane.b32.xlu0 %v2752, 126
    %v2759 = vpop.permute.xlu0 %2758
    %2760 = vrot.lane.b32.xlu0 %v2753, 126
    %v2761 = vpop.permute.xlu0 %2760
    %2762 = vrot.lane.b32.xlu0 %v2754, 126
    %v2763 = vpop.permute.xlu0 %2762
    %v2767 = vadd.f32 %v2607, %v2759
    %v2768 = vadd.f32 %v2608, %v2761
    %v2769 = vadd.f32 %v2609, %v2763
    %v2770 = vsub.f32 0.0, %v2627
    %v2771 = vsub.f32 0.0, %v2628
    %v2772 = vsub.f32 0.0, %v2629
    %v2773 = vmul.f32 %v2770, 1.442695
    %v2774 = vpow.pop %v2773
    %v2775 = vmul.f32 %v2771, 1.442695
    %v2776 = vpow.pop %v2775
    %v2777 = vmul.f32 %v2772, 1.442695
    %v2778 = vpow.pop %v2777
    %v2779 = vadd.f32 %v2774, 1.0
    %v2780 = vadd.f32 %v2776, 1.0
    %v2781 = vadd.f32 %v2778, 1.0
    %v2782 = vrcp.pop %v2779
    %v2783 = vmul.f32 1.0, %v2782
    %v2784 = vrcp.pop %v2780
    %v2785 = vmul.f32 1.0, %v2784
    %v2786 = vrcp.pop %v2781
    %v2787 = vmul.f32 1.0, %v2786
    %v2788 = vmul.f32 %v2627, %v2783
    %v2789 = vmul.f32 %v2628, %v2785
    %v2790 = vmul.f32 %v2629, %v2787
    %vm2791 = vcmask 326656
    %2792 = vst.msk [vmem:[#allocation3] sm:$0xff] %vm2791, %v2788
    %2793 = vst.msk [vmem:[#allocation3 + $0x8] sm:$0xff] %vm2791, %v2789
    %vm2794 = vcmask 320512
    %2795 = vst.msk [vmem:[#allocation3 + $0x10] sm:$0x3] %vm2794, %v2790
    %s2796 = sld [smem:[#allocation11]]
    %v2797 = vld [vmem:[#allocation3] sm:$0xff]
    %v2798 = vld [vmem:[#allocation3 + $0x8] sm:$0xff]
    %v2799 = vstv %s2796
    %v2800 = vmul.f32 %v2799, %v2797
    %v2801 = vmul.f32 %v2799, %v2798
    %v2802 = vadd.f32 %v335, %v2800
    %v2803 = vadd.f32 %v336, %v2801
    %s2804 = sld [smem:[#allocation11 + $0x1]]
    %v2805 = vstv %s2804
    %v2806 = vmul.f32 %v2805, %v2797
    %v2807 = vmul.f32 %v2805, %v2798
    %2810 = vrot.lane.b32.xlu0 %v2806, 127
    %v2811 = vpop.permute.xlu0 %2810
    %2812 = vrot.lane.b32.xlu0 %v2807, 127
    %v2813 = vpop.permute.xlu0 %2812
    %v2816 = vadd.f32 %v2802, %v2811
    %v2817 = vadd.f32 %v2803, %v2813
    %s2818 = sld [smem:[#allocation11 + $0x2]]
    %v2819 = vstv %s2818
    %v2820 = vmul.f32 %v2819, %v2797
    %v2821 = vmul.f32 %v2819, %v2798
    %2824 = vrot.lane.b32.xlu0 %v2820, 126
    %v2825 = vpop.permute.xlu0 %2824
    %2826 = vrot.lane.b32.xlu0 %v2821, 126
    %v2827 = vpop.permute.xlu0 %2826
    %v2830 = vadd.f32 %v2816, %v2825
    %v2831 = vadd.f32 %v2817, %v2827
    %s2832 = sld [smem:[#allocation11 + $0x3]]
    %v2833 = vld [vmem:[#allocation3 + $0x1] sm:$0xff]
    %v2834 = vld [vmem:[#allocation3 + $0x9] sm:$0xff]
    %v2835 = vstv %s2832
    %v2836 = vmul.f32 %v2835, %v2833
    %v2837 = vmul.f32 %v2835, %v2834
    %v2838 = vadd.f32 %v2830, %v2836
    %v2839 = vadd.f32 %v2831, %v2837
    %s2840 = sld [smem:[#allocation11 + $0x4]]
    %v2841 = vstv %s2840
    %v2842 = vmul.f32 %v2841, %v2833
    %v2843 = vmul.f32 %v2841, %v2834
    %2846 = vrot.lane.b32.xlu0 %v2842, 127
    %v2847 = vpop.permute.xlu0 %2846
    %2848 = vrot.lane.b32.xlu0 %v2843, 127
    %v2849 = vpop.permute.xlu0 %2848
    %v2852 = vadd.f32 %v2838, %v2847
    %v2853 = vadd.f32 %v2839, %v2849
    %s2854 = sld [smem:[#allocation11 + $0x5]]
    %v2855 = vstv %s2854
    %v2856 = vmul.f32 %v2855, %v2833
    %v2857 = vmul.f32 %v2855, %v2834
    %2860 = vrot.lane.b32.xlu0 %v2856, 126
    %v2861 = vpop.permute.xlu0 %2860
    %2862 = vrot.lane.b32.xlu0 %v2857, 126
    %v2863 = vpop.permute.xlu0 %2862
    %v2866 = vadd.f32 %v2852, %v2861
    %v2867 = vadd.f32 %v2853, %v2863
    %s2868 = sld [smem:[#allocation11 + $0x6]]
    %v2869 = vld [vmem:[#allocation3 + $0x2] sm:$0xff]
    %v2870 = vld [vmem:[#allocation3 + $0xa] sm:$0xff]
    %v2871 = vstv %s2868
    %v2872 = vmul.f32 %v2871, %v2869
    %v2873 = vmul.f32 %v2871, %v2870
    %v2874 = vadd.f32 %v2866, %v2872
    %v2875 = vadd.f32 %v2867, %v2873
    %s2876 = sld [smem:[#allocation11 + $0x7]]
    %v2877 = vstv %s2876
    %v2878 = vmul.f32 %v2877, %v2869
    %v2879 = vmul.f32 %v2877, %v2870
    %2882 = vrot.lane.b32.xlu0 %v2878, 127
    %v2883 = vpop.permute.xlu0 %2882
    %2884 = vrot.lane.b32.xlu0 %v2879, 127
    %v2885 = vpop.permute.xlu0 %2884
    %v2888 = vadd.f32 %v2874, %v2883
    %v2889 = vadd.f32 %v2875, %v2885
    %s2890 = sld [smem:[#allocation11 + $0x8]]
    %v2891 = vstv %s2890
    %v2892 = vmul.f32 %v2891, %v2869
    %v2893 = vmul.f32 %v2891, %v2870
    %2896 = vrot.lane.b32.xlu0 %v2892, 126
    %v2897 = vpop.permute.xlu0 %2896
    %2898 = vrot.lane.b32.xlu0 %v2893, 126
    %v2899 = vpop.permute.xlu0 %2898
    %v2902 = vadd.f32 %v2888, %v2897
    %v2903 = vadd.f32 %v2889, %v2899
    %s2904 = sld [smem:[#allocation11 + $0x48]]
    %v2905 = vstv %s2904
    %v2906 = vmul.f32 %v2905, %v2797
    %v2907 = vmul.f32 %v2905, %v2798
    %v2908 = vadd.f32 %v398, %v2906
    %v2909 = vadd.f32 %v399, %v2907
    %s2910 = sld [smem:[#allocation11 + $0x49]]
    %v2911 = vstv %s2910
    %v2912 = vmul.f32 %v2911, %v2797
    %v2913 = vmul.f32 %v2911, %v2798
    %2916 = vrot.lane.b32.xlu0 %v2912, 127
    %v2917 = vpop.permute.xlu0 %2916
    %2918 = vrot.lane.b32.xlu0 %v2913, 127
    %v2919 = vpop.permute.xlu0 %2918
    %v2922 = vadd.f32 %v2908, %v2917
    %v2923 = vadd.f32 %v2909, %v2919
    %s2924 = sld [smem:[#allocation11 + $0x4a]]
    %v2925 = vstv %s2924
    %v2926 = vmul.f32 %v2925, %v2797
    %v2927 = vmul.f32 %v2925, %v2798
    %2930 = vrot.lane.b32.xlu0 %v2926, 126
    %v2931 = vpop.permute.xlu0 %2930
    %2932 = vrot.lane.b32.xlu0 %v2927, 126
    %v2933 = vpop.permute.xlu0 %2932
    %v2936 = vadd.f32 %v2922, %v2931
    %v2937 = vadd.f32 %v2923, %v2933
    %s2938 = sld [smem:[#allocation11 + $0x4b]]
    %v2939 = vstv %s2938
    %v2940 = vmul.f32 %v2939, %v2833
    %v2941 = vmul.f32 %v2939, %v2834
    %v2942 = vadd.f32 %v2936, %v2940
    %v2943 = vadd.f32 %v2937, %v2941
    %s2944 = sld [smem:[#allocation11 + $0x4c]]
    %v2945 = vstv %s2944
    %v2946 = vmul.f32 %v2945, %v2833
    %v2947 = vmul.f32 %v2945, %v2834
    %2950 = vrot.lane.b32.xlu0 %v2946, 127
    %v2951 = vpop.permute.xlu0 %2950
    %2952 = vrot.lane.b32.xlu0 %v2947, 127
    %v2953 = vpop.permute.xlu0 %2952
    %v2956 = vadd.f32 %v2942, %v2951
    %v2957 = vadd.f32 %v2943, %v2953
    %s2958 = sld [smem:[#allocation11 + $0x4d]]
    %v2959 = vstv %s2958
    %v2960 = vmul.f32 %v2959, %v2833
    %v2961 = vmul.f32 %v2959, %v2834
    %2964 = vrot.lane.b32.xlu0 %v2960, 126
    %v2965 = vpop.permute.xlu0 %2964
    %2966 = vrot.lane.b32.xlu0 %v2961, 126
    %v2967 = vpop.permute.xlu0 %2966
    %v2970 = vadd.f32 %v2956, %v2965
    %v2971 = vadd.f32 %v2957, %v2967
    %s2972 = sld [smem:[#allocation11 + $0x4e]]
    %v2973 = vstv %s2972
    %v2974 = vmul.f32 %v2973, %v2869
    %v2975 = vmul.f32 %v2973, %v2870
    %v2976 = vadd.f32 %v2970, %v2974
    %v2977 = vadd.f32 %v2971, %v2975
    %s2978 = sld [smem:[#allocation11 + $0x4f]]
    %v2979 = vstv %s2978
    %v2980 = vmul.f32 %v2979, %v2869
    %v2981 = vmul.f32 %v2979, %v2870
    %2984 = vrot.lane.b32.xlu0 %v2980, 127
    %v2985 = vpop.permute.xlu0 %2984
    %2986 = vrot.lane.b32.xlu0 %v2981, 127
    %v2987 = vpop.permute.xlu0 %2986
    %v2990 = vadd.f32 %v2976, %v2985
    %v2991 = vadd.f32 %v2977, %v2987
    %s2992 = sld [smem:[#allocation11 + $0x50]]
    %v2993 = vstv %s2992
    %v2994 = vmul.f32 %v2993, %v2869
    %v2995 = vmul.f32 %v2993, %v2870
    %2998 = vrot.lane.b32.xlu0 %v2994, 126
    %v2999 = vpop.permute.xlu0 %2998
    %3000 = vrot.lane.b32.xlu0 %v2995, 126
    %v3001 = vpop.permute.xlu0 %3000
    %v3004 = vadd.f32 %v2990, %v2999
    %v3005 = vadd.f32 %v2991, %v3001
    %v3006 = vsub.f32 0.0, %v2647
    %v3007 = vsub.f32 0.0, %v2648
    %v3008 = vsub.f32 0.0, %v2649
    %v3009 = vmul.f32 %v3006, 1.442695
    %v3010 = vpow.pop %v3009
    %v3011 = vmul.f32 %v3007, 1.442695
    %v3012 = vpow.pop %v3011
    %v3013 = vmul.f32 %v3008, 1.442695
    %v3014 = vpow.pop %v3013
    %v3015 = vadd.f32 %v3010, 1.0
    %v3016 = vadd.f32 %v3012, 1.0
    %v3017 = vadd.f32 %v3014, 1.0
    %v3018 = vrcp.pop %v3015
    %v3019 = vmul.f32 1.0, %v3018
    %v3020 = vrcp.pop %v3016
    %v3021 = vmul.f32 1.0, %v3020
    %v3022 = vrcp.pop %v3017
    %v3023 = vmul.f32 1.0, %v3022
    %v3024 = vmul.f32 %v2647, %v3019
    %v3025 = vmul.f32 %v2648, %v3021
    %v3026 = vmul.f32 %v2649, %v3023
    %3027 = vst.msk [vmem:[#allocation3] sm:$0xff] %vm2791, %v3024
    %3028 = vst.msk [vmem:[#allocation3 + $0x8] sm:$0xff] %vm2791, %v3025
    %3029 = vst.msk [vmem:[#allocation3 + $0x10] sm:$0x3] %vm2794, %v3026
    %s3030 = sld [smem:[#allocation11 + $0x9]]
    %v3031 = vld [vmem:[#allocation3] sm:$0xff]
    %v3032 = vld [vmem:[#allocation3 + $0x8] sm:$0xff]
    %v3033 = vstv %s3030
    %v3034 = vmul.f32 %v3033, %v3031
    %v3035 = vmul.f32 %v3033, %v3032
    %v3036 = vadd.f32 %v2902, %v3034
    %v3037 = vadd.f32 %v2903, %v3035
    %s3038 = sld [smem:[#allocation11 + $0xa]]
    %v3039 = vstv %s3038
    %v3040 = vmul.f32 %v3039, %v3031
    %v3041 = vmul.f32 %v3039, %v3032
    %3044 = vrot.lane.b32.xlu0 %v3040, 127
    %v3045 = vpop.permute.xlu0 %3044
    %3046 = vrot.lane.b32.xlu0 %v3041, 127
    %v3047 = vpop.permute.xlu0 %3046
    %v3050 = vadd.f32 %v3036, %v3045
    %v3051 = vadd.f32 %v3037, %v3047
    %s3052 = sld [smem:[#allocation11 + $0xb]]
    %v3053 = vstv %s3052
    %v3054 = vmul.f32 %v3053, %v3031
    %v3055 = vmul.f32 %v3053, %v3032
    %3058 = vrot.lane.b32.xlu0 %v3054, 126
    %v3059 = vpop.permute.xlu0 %3058
    %3060 = vrot.lane.b32.xlu0 %v3055, 126
    %v3061 = vpop.permute.xlu0 %3060
    %v3064 = vadd.f32 %v3050, %v3059
    %v3065 = vadd.f32 %v3051, %v3061
    %s3066 = sld [smem:[#allocation11 + $0xc]]
    %v3067 = vld [vmem:[#allocation3 + $0x1] sm:$0xff]
    %v3068 = vld [vmem:[#allocation3 + $0x9] sm:$0xff]
    %v3069 = vstv %s3066
    %v3070 = vmul.f32 %v3069, %v3067
    %v3071 = vmul.f32 %v3069, %v3068
    %v3072 = vadd.f32 %v3064, %v3070
    %v3073 = vadd.f32 %v3065, %v3071
    %s3074 = sld [smem:[#allocation11 + $0xd]]
    %v3075 = vstv %s3074
    %v3076 = vmul.f32 %v3075, %v3067
    %v3077 = vmul.f32 %v3075, %v3068
    %3080 = vrot.lane.b32.xlu0 %v3076, 127
    %v3081 = vpop.permute.xlu0 %3080
    %3082 = vrot.lane.b32.xlu0 %v3077, 127
    %v3083 = vpop.permute.xlu0 %3082
    %v3086 = vadd.f32 %v3072, %v3081
    %v3087 = vadd.f32 %v3073, %v3083
    %s3088 = sld [smem:[#allocation11 + $0xe]]
    %v3089 = vstv %s3088
    %v3090 = vmul.f32 %v3089, %v3067
    %v3091 = vmul.f32 %v3089, %v3068
    %3094 = vrot.lane.b32.xlu0 %v3090, 126
    %v3095 = vpop.permute.xlu0 %3094
    %3096 = vrot.lane.b32.xlu0 %v3091, 126
    %v3097 = vpop.permute.xlu0 %3096
    %v3100 = vadd.f32 %v3086, %v3095
    %v3101 = vadd.f32 %v3087, %v3097
    %s3102 = sld [smem:[#allocation11 + $0xf]]
    %v3103 = vld [vmem:[#allocation3 + $0x2] sm:$0xff]
    %v3104 = vld [vmem:[#allocation3 + $0xa] sm:$0xff]
    %v3105 = vstv %s3102
    %v3106 = vmul.f32 %v3105, %v3103
    %v3107 = vmul.f32 %v3105, %v3104
    %v3108 = vadd.f32 %v3100, %v3106
    %v3109 = vadd.f32 %v3101, %v3107
    %s3110 = sld [smem:[#allocation11 + $0x10]]
    %v3111 = vstv %s3110
    %v3112 = vmul.f32 %v3111, %v3103
    %v3113 = vmul.f32 %v3111, %v3104
    %3116 = vrot.lane.b32.xlu0 %v3112, 127
    %v3117 = vpop.permute.xlu0 %3116
    %3118 = vrot.lane.b32.xlu0 %v3113, 127
    %v3119 = vpop.permute.xlu0 %3118
    %v3122 = vadd.f32 %v3108, %v3117
    %v3123 = vadd.f32 %v3109, %v3119
    %s3124 = sld [smem:[#allocation11 + $0x11]]
    %v3125 = vstv %s3124
    %v3126 = vmul.f32 %v3125, %v3103
    %v3127 = vmul.f32 %v3125, %v3104
    %3130 = vrot.lane.b32.xlu0 %v3126, 126
    %v3131 = vpop.permute.xlu0 %3130
    %3132 = vrot.lane.b32.xlu0 %v3127, 126
    %v3133 = vpop.permute.xlu0 %3132
    %v3136 = vadd.f32 %v3122, %v3131
    %v3137 = vadd.f32 %v3123, %v3133
    %s3138 = sld [smem:[#allocation11 + $0x51]]
    %v3139 = vstv %s3138
    %v3140 = vmul.f32 %v3139, %v3031
    %v3141 = vmul.f32 %v3139, %v3032
    %v3142 = vadd.f32 %v3004, %v3140
    %v3143 = vadd.f32 %v3005, %v3141
    %s3144 = sld [smem:[#allocation11 + $0x52]]
    %v3145 = vstv %s3144
    %v3146 = vmul.f32 %v3145, %v3031
    %v3147 = vmul.f32 %v3145, %v3032
    %3150 = vrot.lane.b32.xlu0 %v3146, 127
    %v3151 = vpop.permute.xlu0 %3150
    %3152 = vrot.lane.b32.xlu0 %v3147, 127
    %v3153 = vpop.permute.xlu0 %3152
    %v3156 = vadd.f32 %v3142, %v3151
    %v3157 = vadd.f32 %v3143, %v3153
    %s3158 = sld [smem:[#allocation11 + $0x53]]
    %v3159 = vstv %s3158
    %v3160 = vmul.f32 %v3159, %v3031
    %v3161 = vmul.f32 %v3159, %v3032
    %3164 = vrot.lane.b32.xlu0 %v3160, 126
    %v3165 = vpop.permute.xlu0 %3164
    %3166 = vrot.lane.b32.xlu0 %v3161, 126
    %v3167 = vpop.permute.xlu0 %3166
    %v3170 = vadd.f32 %v3156, %v3165
    %v3171 = vadd.f32 %v3157, %v3167
    %s3172 = sld [smem:[#allocation11 + $0x54]]
    %v3173 = vstv %s3172
    %v3174 = vmul.f32 %v3173, %v3067
    %v3175 = vmul.f32 %v3173, %v3068
    %v3176 = vadd.f32 %v3170, %v3174
    %v3177 = vadd.f32 %v3171, %v3175
    %s3178 = sld [smem:[#allocation11 + $0x55]]
    %v3179 = vstv %s3178
    %v3180 = vmul.f32 %v3179, %v3067
    %v3181 = vmul.f32 %v3179, %v3068
    %3184 = vrot.lane.b32.xlu0 %v3180, 127
    %v3185 = vpop.permute.xlu0 %3184
    %3186 = vrot.lane.b32.xlu0 %v3181, 127
    %v3187 = vpop.permute.xlu0 %3186
    %v3190 = vadd.f32 %v3176, %v3185
    %v3191 = vadd.f32 %v3177, %v3187
    %s3192 = sld [smem:[#allocation11 + $0x56]]
    %v3193 = vstv %s3192
    %v3194 = vmul.f32 %v3193, %v3067
    %v3195 = vmul.f32 %v3193, %v3068
    %3198 = vrot.lane.b32.xlu0 %v3194, 126
    %v3199 = vpop.permute.xlu0 %3198
    %3200 = vrot.lane.b32.xlu0 %v3195, 126
    %v3201 = vpop.permute.xlu0 %3200
    %v3204 = vadd.f32 %v3190, %v3199
    %v3205 = vadd.f32 %v3191, %v3201
    %s3206 = sld [smem:[#allocation11 + $0x57]]
    %v3207 = vstv %s3206
    %v3208 = vmul.f32 %v3207, %v3103
    %v3209 = vmul.f32 %v3207, %v3104
    %v3210 = vadd.f32 %v3204, %v3208
    %v3211 = vadd.f32 %v3205, %v3209
    %s3212 = sld [smem:[#allocation11 + $0x58]]
    %v3213 = vstv %s3212
    %v3214 = vmul.f32 %v3213, %v3103
    %v3215 = vmul.f32 %v3213, %v3104
    %3218 = vrot.lane.b32.xlu0 %v3214, 127
    %v3219 = vpop.permute.xlu0 %3218
    %3220 = vrot.lane.b32.xlu0 %v3215, 127
    %v3221 = vpop.permute.xlu0 %3220
    %v3224 = vadd.f32 %v3210, %v3219
    %v3225 = vadd.f32 %v3211, %v3221
    %s3226 = sld [smem:[#allocation11 + $0x59]]
    %v3227 = vstv %s3226
    %v3228 = vmul.f32 %v3227, %v3103
    %v3229 = vmul.f32 %v3227, %v3104
    %3232 = vrot.lane.b32.xlu0 %v3228, 126
    %v3233 = vpop.permute.xlu0 %3232
    %3234 = vrot.lane.b32.xlu0 %v3229, 126
    %v3235 = vpop.permute.xlu0 %3234
    %v3238 = vadd.f32 %v3224, %v3233
    %v3239 = vadd.f32 %v3225, %v3235
    %v3240 = vsub.f32 0.0, %v2667
    %v3241 = vsub.f32 0.0, %v2668
    %v3242 = vsub.f32 0.0, %v2669
    %v3243 = vmul.f32 %v3240, 1.442695
    %v3244 = vpow.pop %v3243
    %v3245 = vmul.f32 %v3241, 1.442695
    %v3246 = vpow.pop %v3245
    %v3247 = vmul.f32 %v3242, 1.442695
    %v3248 = vpow.pop %v3247
    %v3249 = vadd.f32 %v3244, 1.0
    %v3250 = vadd.f32 %v3246, 1.0
    %v3251 = vadd.f32 %v3248, 1.0
    %v3252 = vrcp.pop %v3249
    %v3253 = vmul.f32 1.0, %v3252
    %v3254 = vrcp.pop %v3250
    %v3255 = vmul.f32 1.0, %v3254
    %v3256 = vrcp.pop %v3251
    %v3257 = vmul.f32 1.0, %v3256
    %v3258 = vmul.f32 %v2667, %v3253
    %v3259 = vmul.f32 %v2668, %v3255
    %v3260 = vmul.f32 %v2669, %v3257
    %3261 = vst.msk [vmem:[#allocation3] sm:$0xff] %vm2791, %v3258
    %3262 = vst.msk [vmem:[#allocation3 + $0x8] sm:$0xff] %vm2791, %v3259
    %3263 = vst.msk [vmem:[#allocation3 + $0x10] sm:$0x3] %vm2794, %v3260
    %s3264 = sld [smem:[#allocation11 + $0x12]]
    %v3265 = vld [vmem:[#allocation3] sm:$0xff]
    %v3266 = vld [vmem:[#allocation3 + $0x8] sm:$0xff]
    %v3267 = vstv %s3264
    %v3268 = vmul.f32 %v3267, %v3265
    %v3269 = vmul.f32 %v3267, %v3266
    %v3270 = vadd.f32 %v3136, %v3268
    %v3271 = vadd.f32 %v3137, %v3269
    %s3272 = sld [smem:[#allocation11 + $0x13]]
    %v3273 = vstv %s3272
    %v3274 = vmul.f32 %v3273, %v3265
    %v3275 = vmul.f32 %v3273, %v3266
    %3278 = vrot.lane.b32.xlu0 %v3274, 127
    %v3279 = vpop.permute.xlu0 %3278
    %3280 = vrot.lane.b32.xlu0 %v3275, 127
    %v3281 = vpop.permute.xlu0 %3280
    %v3284 = vadd.f32 %v3270, %v3279
    %v3285 = vadd.f32 %v3271, %v3281
    %s3286 = sld [smem:[#allocation11 + $0x14]]
    %v3287 = vstv %s3286
    %v3288 = vmul.f32 %v3287, %v3265
    %v3289 = vmul.f32 %v3287, %v3266
    %3292 = vrot.lane.b32.xlu0 %v3288, 126
    %v3293 = vpop.permute.xlu0 %3292
    %3294 = vrot.lane.b32.xlu0 %v3289, 126
    %v3295 = vpop.permute.xlu0 %3294
    %v3298 = vadd.f32 %v3284, %v3293
    %v3299 = vadd.f32 %v3285, %v3295
    %s3300 = sld [smem:[#allocation11 + $0x15]]
    %v3301 = vld [vmem:[#allocation3 + $0x1] sm:$0xff]
    %v3302 = vld [vmem:[#allocation3 + $0x9] sm:$0xff]
    %v3303 = vstv %s3300
    %v3304 = vmul.f32 %v3303, %v3301
    %v3305 = vmul.f32 %v3303, %v3302
    %v3306 = vadd.f32 %v3298, %v3304
    %v3307 = vadd.f32 %v3299, %v3305
    %s3308 = sld [smem:[#allocation11 + $0x16]]
    %v3309 = vstv %s3308
    %v3310 = vmul.f32 %v3309, %v3301
    %v3311 = vmul.f32 %v3309, %v3302
    %3314 = vrot.lane.b32.xlu0 %v3310, 127
    %v3315 = vpop.permute.xlu0 %3314
    %3316 = vrot.lane.b32.xlu0 %v3311, 127
    %v3317 = vpop.permute.xlu0 %3316
    %v3320 = vadd.f32 %v3306, %v3315
    %v3321 = vadd.f32 %v3307, %v3317
    %s3322 = sld [smem:[#allocation11 + $0x17]]
    %v3323 = vstv %s3322
    %v3324 = vmul.f32 %v3323, %v3301
    %v3325 = vmul.f32 %v3323, %v3302
    %3328 = vrot.lane.b32.xlu0 %v3324, 126
    %v3329 = vpop.permute.xlu0 %3328
    %3330 = vrot.lane.b32.xlu0 %v3325, 126
    %v3331 = vpop.permute.xlu0 %3330
    %v3334 = vadd.f32 %v3320, %v3329
    %v3335 = vadd.f32 %v3321, %v3331
    %s3336 = sld [smem:[#allocation11 + $0x18]]
    %v3337 = vld [vmem:[#allocation3 + $0x2] sm:$0xff]
    %v3338 = vld [vmem:[#allocation3 + $0xa] sm:$0xff]
    %v3339 = vstv %s3336
    %v3340 = vmul.f32 %v3339, %v3337
    %v3341 = vmul.f32 %v3339, %v3338
    %v3342 = vadd.f32 %v3334, %v3340
    %v3343 = vadd.f32 %v3335, %v3341
    %s3344 = sld [smem:[#allocation11 + $0x19]]
    %v3345 = vstv %s3344
    %v3346 = vmul.f32 %v3345, %v3337
    %v3347 = vmul.f32 %v3345, %v3338
    %3350 = vrot.lane.b32.xlu0 %v3346, 127
    %v3351 = vpop.permute.xlu0 %3350
    %3352 = vrot.lane.b32.xlu0 %v3347, 127
    %v3353 = vpop.permute.xlu0 %3352
    %v3356 = vadd.f32 %v3342, %v3351
    %v3357 = vadd.f32 %v3343, %v3353
    %s3358 = sld [smem:[#allocation11 + $0x1a]]
    %v3359 = vstv %s3358
    %v3360 = vmul.f32 %v3359, %v3337
    %v3361 = vmul.f32 %v3359, %v3338
    %3364 = vrot.lane.b32.xlu0 %v3360, 126
    %v3365 = vpop.permute.xlu0 %3364
    %3366 = vrot.lane.b32.xlu0 %v3361, 126
    %v3367 = vpop.permute.xlu0 %3366
    %v3370 = vadd.f32 %v3356, %v3365
    %v3371 = vadd.f32 %v3357, %v3367
    %s3372 = sld [smem:[#allocation11 + $0x5a]]
    %v3373 = vstv %s3372
    %v3374 = vmul.f32 %v3373, %v3265
    %v3375 = vmul.f32 %v3373, %v3266
    %v3376 = vadd.f32 %v3238, %v3374
    %v3377 = vadd.f32 %v3239, %v3375
    %s3378 = sld [smem:[#allocation11 + $0x5b]]
    %v3379 = vstv %s3378
    %v3380 = vmul.f32 %v3379, %v3265
    %v3381 = vmul.f32 %v3379, %v3266
    %3384 = vrot.lane.b32.xlu0 %v3380, 127
    %v3385 = vpop.permute.xlu0 %3384
    %3386 = vrot.lane.b32.xlu0 %v3381, 127
    %v3387 = vpop.permute.xlu0 %3386
    %v3390 = vadd.f32 %v3376, %v3385
    %v3391 = vadd.f32 %v3377, %v3387
    %s3392 = sld [smem:[#allocation11 + $0x5c]]
    %v3393 = vstv %s3392
    %v3394 = vmul.f32 %v3393, %v3265
    %v3395 = vmul.f32 %v3393, %v3266
    %3398 = vrot.lane.b32.xlu0 %v3394, 126
    %v3399 = vpop.permute.xlu0 %3398
    %3400 = vrot.lane.b32.xlu0 %v3395, 126
    %v3401 = vpop.permute.xlu0 %3400
    %v3404 = vadd.f32 %v3390, %v3399
    %v3405 = vadd.f32 %v3391, %v3401
    %s3406 = sld [smem:[#allocation11 + $0x5d]]
    %v3407 = vstv %s3406
    %v3408 = vmul.f32 %v3407, %v3301
    %v3409 = vmul.f32 %v3407, %v3302
    %v3410 = vadd.f32 %v3404, %v3408
    %v3411 = vadd.f32 %v3405, %v3409
    %s3412 = sld [smem:[#allocation11 + $0x5e]]
    %v3413 = vstv %s3412
    %v3414 = vmul.f32 %v3413, %v3301
    %v3415 = vmul.f32 %v3413, %v3302
    %3418 = vrot.lane.b32.xlu0 %v3414, 127
    %v3419 = vpop.permute.xlu0 %3418
    %3420 = vrot.lane.b32.xlu0 %v3415, 127
    %v3421 = vpop.permute.xlu0 %3420
    %v3424 = vadd.f32 %v3410, %v3419
    %v3425 = vadd.f32 %v3411, %v3421
    %s3426 = sld [smem:[#allocation11 + $0x5f]]
    %v3427 = vstv %s3426
    %v3428 = vmul.f32 %v3427, %v3301
    %v3429 = vmul.f32 %v3427, %v3302
    %3432 = vrot.lane.b32.xlu0 %v3428, 126
    %v3433 = vpop.permute.xlu0 %3432
    %3434 = vrot.lane.b32.xlu0 %v3429, 126
    %v3435 = vpop.permute.xlu0 %3434
    %v3438 = vadd.f32 %v3424, %v3433
    %v3439 = vadd.f32 %v3425, %v3435
    %s3440 = sld [smem:[#allocation11 + $0x60]]
    %v3441 = vstv %s3440
    %v3442 = vmul.f32 %v3441, %v3337
    %v3443 = vmul.f32 %v3441, %v3338
    %v3444 = vadd.f32 %v3438, %v3442
    %v3445 = vadd.f32 %v3439, %v3443
    %s3446 = sld [smem:[#allocation11 + $0x61]]
    %v3447 = vstv %s3446
    %v3448 = vmul.f32 %v3447, %v3337
    %v3449 = vmul.f32 %v3447, %v3338
    %3452 = vrot.lane.b32.xlu0 %v3448, 127
    %v3453 = vpop.permute.xlu0 %3452
    %3454 = vrot.lane.b32.xlu0 %v3449, 127
    %v3455 = vpop.permute.xlu0 %3454
    %v3458 = vadd.f32 %v3444, %v3453
    %v3459 = vadd.f32 %v3445, %v3455
    %s3460 = sld [smem:[#allocation11 + $0x62]]
    %v3461 = vstv %s3460
    %v3462 = vmul.f32 %v3461, %v3337
    %v3463 = vmul.f32 %v3461, %v3338
    %3466 = vrot.lane.b32.xlu0 %v3462, 126
    %v3467 = vpop.permute.xlu0 %3466
    %3468 = vrot.lane.b32.xlu0 %v3463, 126
    %v3469 = vpop.permute.xlu0 %3468
    %v3472 = vadd.f32 %v3458, %v3467
    %v3473 = vadd.f32 %v3459, %v3469
    %v3474 = vsub.f32 0.0, %v2687
    %v3475 = vsub.f32 0.0, %v2688
    %v3476 = vsub.f32 0.0, %v2689
    %v3477 = vmul.f32 %v3474, 1.442695
    %v3478 = vpow.pop %v3477
    %v3479 = vmul.f32 %v3475, 1.442695
    %v3480 = vpow.pop %v3479
    %v3481 = vmul.f32 %v3476, 1.442695
    %v3482 = vpow.pop %v3481
    %v3483 = vadd.f32 %v3478, 1.0
    %v3484 = vadd.f32 %v3480, 1.0
    %v3485 = vadd.f32 %v3482, 1.0
    %v3486 = vrcp.pop %v3483
    %v3487 = vmul.f32 1.0, %v3486
    %v3488 = vrcp.pop %v3484
    %v3489 = vmul.f32 1.0, %v3488
    %v3490 = vrcp.pop %v3485
    %v3491 = vmul.f32 1.0, %v3490
    %v3492 = vmul.f32 %v2687, %v3487
    %v3493 = vmul.f32 %v2688, %v3489
    %v3494 = vmul.f32 %v2689, %v3491
    %3495 = vst.msk [vmem:[#allocation3] sm:$0xff] %vm2791, %v3492
    %3496 = vst.msk [vmem:[#allocation3 + $0x8] sm:$0xff] %vm2791, %v3493
    %3497 = vst.msk [vmem:[#allocation3 + $0x10] sm:$0x3] %vm2794, %v3494
    %s3498 = sld [smem:[#allocation11 + $0x1b]]
    %v3499 = vld [vmem:[#allocation3] sm:$0xff]
    %v3500 = vld [vmem:[#allocation3 + $0x8] sm:$0xff]
    %v3501 = vstv %s3498
    %v3502 = vmul.f32 %v3501, %v3499
    %v3503 = vmul.f32 %v3501, %v3500
    %v3504 = vadd.f32 %v3370, %v3502
    %v3505 = vadd.f32 %v3371, %v3503
    %s3506 = sld [smem:[#allocation11 + $0x1c]]
    %v3507 = vstv %s3506
    %v3508 = vmul.f32 %v3507, %v3499
    %v3509 = vmul.f32 %v3507, %v3500
    %3512 = vrot.lane.b32.xlu0 %v3508, 127
    %v3513 = vpop.permute.xlu0 %3512
    %3514 = vrot.lane.b32.xlu0 %v3509, 127
    %v3515 = vpop.permute.xlu0 %3514
    %v3518 = vadd.f32 %v3504, %v3513
    %v3519 = vadd.f32 %v3505, %v3515
    %s3520 = sld [smem:[#allocation11 + $0x1d]]
    %v3521 = vstv %s3520
    %v3522 = vmul.f32 %v3521, %v3499
    %v3523 = vmul.f32 %v3521, %v3500
    %3526 = vrot.lane.b32.xlu0 %v3522, 126
    %v3527 = vpop.permute.xlu0 %3526
    %3528 = vrot.lane.b32.xlu0 %v3523, 126
    %v3529 = vpop.permute.xlu0 %3528
    %v3532 = vadd.f32 %v3518, %v3527
    %v3533 = vadd.f32 %v3519, %v3529
    %s3534 = sld [smem:[#allocation11 + $0x1e]]
    %v3535 = vld [vmem:[#allocation3 + $0x1] sm:$0xff]
    %v3536 = vld [vmem:[#allocation3 + $0x9] sm:$0xff]
    %v3537 = vstv %s3534
    %v3538 = vmul.f32 %v3537, %v3535
    %v3539 = vmul.f32 %v3537, %v3536
    %v3540 = vadd.f32 %v3532, %v3538
    %v3541 = vadd.f32 %v3533, %v3539
    %s3542 = sld [smem:[#allocation11 + $0x1f]]
    %v3543 = vstv %s3542
    %v3544 = vmul.f32 %v3543, %v3535
    %v3545 = vmul.f32 %v3543, %v3536
    %3548 = vrot.lane.b32.xlu0 %v3544, 127
    %v3549 = vpop.permute.xlu0 %3548
    %3550 = vrot.lane.b32.xlu0 %v3545, 127
    %v3551 = vpop.permute.xlu0 %3550
    %v3554 = vadd.f32 %v3540, %v3549
    %v3555 = vadd.f32 %v3541, %v3551
    %s3556 = sld [smem:[#allocation11 + $0x20]]
    %v3557 = vstv %s3556
    %v3558 = vmul.f32 %v3557, %v3535
    %v3559 = vmul.f32 %v3557, %v3536
    %3562 = vrot.lane.b32.xlu0 %v3558, 126
    %v3563 = vpop.permute.xlu0 %3562
    %3564 = vrot.lane.b32.xlu0 %v3559, 126
    %v3565 = vpop.permute.xlu0 %3564
    %v3568 = vadd.f32 %v3554, %v3563
    %v3569 = vadd.f32 %v3555, %v3565
    %s3570 = sld [smem:[#allocation11 + $0x21]]
    %v3571 = vld [vmem:[#allocation3 + $0x2] sm:$0xff]
    %v3572 = vld [vmem:[#allocation3 + $0xa] sm:$0xff]
    %v3573 = vstv %s3570
    %v3574 = vmul.f32 %v3573, %v3571
    %v3575 = vmul.f32 %v3573, %v3572
    %v3576 = vadd.f32 %v3568, %v3574
    %v3577 = vadd.f32 %v3569, %v3575
    %s3578 = sld [smem:[#allocation11 + $0x22]]
    %v3579 = vstv %s3578
    %v3580 = vmul.f32 %v3579, %v3571
    %v3581 = vmul.f32 %v3579, %v3572
    %3584 = vrot.lane.b32.xlu0 %v3580, 127
    %v3585 = vpop.permute.xlu0 %3584
    %3586 = vrot.lane.b32.xlu0 %v3581, 127
    %v3587 = vpop.permute.xlu0 %3586
    %v3590 = vadd.f32 %v3576, %v3585
    %v3591 = vadd.f32 %v3577, %v3587
    %s3592 = sld [smem:[#allocation11 + $0x23]]
    %v3593 = vstv %s3592
    %v3594 = vmul.f32 %v3593, %v3571
    %v3595 = vmul.f32 %v3593, %v3572
    %3598 = vrot.lane.b32.xlu0 %v3594, 126
    %v3599 = vpop.permute.xlu0 %3598
    %3600 = vrot.lane.b32.xlu0 %v3595, 126
    %v3601 = vpop.permute.xlu0 %3600
    %v3604 = vadd.f32 %v3590, %v3599
    %v3605 = vadd.f32 %v3591, %v3601
    %s3606 = sld [smem:[#allocation11 + $0x63]]
    %v3607 = vstv %s3606
    %v3608 = vmul.f32 %v3607, %v3499
    %v3609 = vmul.f32 %v3607, %v3500
    %v3610 = vadd.f32 %v3472, %v3608
    %v3611 = vadd.f32 %v3473, %v3609
    %s3612 = sld [smem:[#allocation11 + $0x64]]
    %v3613 = vstv %s3612
    %v3614 = vmul.f32 %v3613, %v3499
    %v3615 = vmul.f32 %v3613, %v3500
    %3618 = vrot.lane.b32.xlu0 %v3614, 127
    %v3619 = vpop.permute.xlu0 %3618
    %3620 = vrot.lane.b32.xlu0 %v3615, 127
    %v3621 = vpop.permute.xlu0 %3620
    %v3624 = vadd.f32 %v3610, %v3619
    %v3625 = vadd.f32 %v3611, %v3621
    %s3626 = sld [smem:[#allocation11 + $0x65]]
    %v3627 = vstv %s3626
    %v3628 = vmul.f32 %v3627, %v3499
    %v3629 = vmul.f32 %v3627, %v3500
    %3632 = vrot.lane.b32.xlu0 %v3628, 126
    %v3633 = vpop.permute.xlu0 %3632
    %3634 = vrot.lane.b32.xlu0 %v3629, 126
    %v3635 = vpop.permute.xlu0 %3634
    %v3638 = vadd.f32 %v3624, %v3633
    %v3639 = vadd.f32 %v3625, %v3635
    %s3640 = sld [smem:[#allocation11 + $0x66]]
    %v3641 = vstv %s3640
    %v3642 = vmul.f32 %v3641, %v3535
    %v3643 = vmul.f32 %v3641, %v3536
    %v3644 = vadd.f32 %v3638, %v3642
    %v3645 = vadd.f32 %v3639, %v3643
    %s3646 = sld [smem:[#allocation11 + $0x67]]
    %v3647 = vstv %s3646
    %v3648 = vmul.f32 %v3647, %v3535
    %v3649 = vmul.f32 %v3647, %v3536
    %3652 = vrot.lane.b32.xlu0 %v3648, 127
    %v3653 = vpop.permute.xlu0 %3652
    %3654 = vrot.lane.b32.xlu0 %v3649, 127
    %v3655 = vpop.permute.xlu0 %3654
    %v3658 = vadd.f32 %v3644, %v3653
    %v3659 = vadd.f32 %v3645, %v3655
    %s3660 = sld [smem:[#allocation11 + $0x68]]
    %v3661 = vstv %s3660
    %v3662 = vmul.f32 %v3661, %v3535
    %v3663 = vmul.f32 %v3661, %v3536
    %3666 = vrot.lane.b32.xlu0 %v3662, 126
    %v3667 = vpop.permute.xlu0 %3666
    %3668 = vrot.lane.b32.xlu0 %v3663, 126
    %v3669 = vpop.permute.xlu0 %3668
    %v3672 = vadd.f32 %v3658, %v3667
    %v3673 = vadd.f32 %v3659, %v3669
    %s3674 = sld [smem:[#allocation11 + $0x69]]
    %v3675 = vstv %s3674
    %v3676 = vmul.f32 %v3675, %v3571
    %v3677 = vmul.f32 %v3675, %v3572
    %v3678 = vadd.f32 %v3672, %v3676
    %v3679 = vadd.f32 %v3673, %v3677
    %s3680 = sld [smem:[#allocation11 + $0x6a]]
    %v3681 = vstv %s3680
    %v3682 = vmul.f32 %v3681, %v3571
    %v3683 = vmul.f32 %v3681, %v3572
    %3686 = vrot.lane.b32.xlu0 %v3682, 127
    %v3687 = vpop.permute.xlu0 %3686
    %3688 = vrot.lane.b32.xlu0 %v3683, 127
    %v3689 = vpop.permute.xlu0 %3688
    %v3692 = vadd.f32 %v3678, %v3687
    %v3693 = vadd.f32 %v3679, %v3689
    %s3694 = sld [smem:[#allocation11 + $0x6b]]
    %v3695 = vstv %s3694
    %v3696 = vmul.f32 %v3695, %v3571
    %v3697 = vmul.f32 %v3695, %v3572
    %3700 = vrot.lane.b32.xlu0 %v3696, 126
    %v3701 = vpop.permute.xlu0 %3700
    %3702 = vrot.lane.b32.xlu0 %v3697, 126
    %v3703 = vpop.permute.xlu0 %3702
    %v3706 = vadd.f32 %v3692, %v3701
    %v3707 = vadd.f32 %v3693, %v3703
    %v3708 = vsub.f32 0.0, %v2707
    %v3709 = vsub.f32 0.0, %v2708
    %v3710 = vsub.f32 0.0, %v2709
    %v3711 = vmul.f32 %v3708, 1.442695
    %v3712 = vpow.pop %v3711
    %v3713 = vmul.f32 %v3709, 1.442695
    %v3714 = vpow.pop %v3713
    %v3715 = vmul.f32 %v3710, 1.442695
    %v3716 = vpow.pop %v3715
    %v3717 = vadd.f32 %v3712, 1.0
    %v3718 = vadd.f32 %v3714, 1.0
    %v3719 = vadd.f32 %v3716, 1.0
    %v3720 = vrcp.pop %v3717
    %v3721 = vmul.f32 1.0, %v3720
    %v3722 = vrcp.pop %v3718
    %v3723 = vmul.f32 1.0, %v3722
    %v3724 = vrcp.pop %v3719
    %v3725 = vmul.f32 1.0, %v3724
    %v3726 = vmul.f32 %v2707, %v3721
    %v3727 = vmul.f32 %v2708, %v3723
    %v3728 = vmul.f32 %v2709, %v3725
    %3729 = vst.msk [vmem:[#allocation3] sm:$0xff] %vm2791, %v3726
    %3730 = vst.msk [vmem:[#allocation3 + $0x8] sm:$0xff] %vm2791, %v3727
    %3731 = vst.msk [vmem:[#allocation3 + $0x10] sm:$0x3] %vm2794, %v3728
    %s3732 = sld [smem:[#allocation11 + $0x24]]
    %v3733 = vld [vmem:[#allocation3] sm:$0xff]
    %v3734 = vld [vmem:[#allocation3 + $0x8] sm:$0xff]
    %v3735 = vstv %s3732
    %v3736 = vmul.f32 %v3735, %v3733
    %v3737 = vmul.f32 %v3735, %v3734
    %v3738 = vadd.f32 %v3604, %v3736
    %v3739 = vadd.f32 %v3605, %v3737
    %s3740 = sld [smem:[#allocation11 + $0x25]]
    %v3741 = vstv %s3740
    %v3742 = vmul.f32 %v3741, %v3733
    %v3743 = vmul.f32 %v3741, %v3734
    %3746 = vrot.lane.b32.xlu0 %v3742, 127
    %v3747 = vpop.permute.xlu0 %3746
    %3748 = vrot.lane.b32.xlu0 %v3743, 127
    %v3749 = vpop.permute.xlu0 %3748
    %v3752 = vadd.f32 %v3738, %v3747
    %v3753 = vadd.f32 %v3739, %v3749
    %s3754 = sld [smem:[#allocation11 + $0x26]]
    %v3755 = vstv %s3754
    %v3756 = vmul.f32 %v3755, %v3733
    %v3757 = vmul.f32 %v3755, %v3734
    %3760 = vrot.lane.b32.xlu0 %v3756, 126
    %v3761 = vpop.permute.xlu0 %3760
    %3762 = vrot.lane.b32.xlu0 %v3757, 126
    %v3763 = vpop.permute.xlu0 %3762
    %v3766 = vadd.f32 %v3752, %v3761
    %v3767 = vadd.f32 %v3753, %v3763
    %s3768 = sld [smem:[#allocation11 + $0x27]]
    %v3769 = vld [vmem:[#allocation3 + $0x1] sm:$0xff]
    %v3770 = vld [vmem:[#allocation3 + $0x9] sm:$0xff]
    %v3771 = vstv %s3768
    %v3772 = vmul.f32 %v3771, %v3769
    %v3773 = vmul.f32 %v3771, %v3770
    %v3774 = vadd.f32 %v3766, %v3772
    %v3775 = vadd.f32 %v3767, %v3773
    %s3776 = sld [smem:[#allocation11 + $0x28]]
    %v3777 = vstv %s3776
    %v3778 = vmul.f32 %v3777, %v3769
    %v3779 = vmul.f32 %v3777, %v3770
    %3782 = vrot.lane.b32.xlu0 %v3778, 127
    %v3783 = vpop.permute.xlu0 %3782
    %3784 = vrot.lane.b32.xlu0 %v3779, 127
    %v3785 = vpop.permute.xlu0 %3784
    %v3788 = vadd.f32 %v3774, %v3783
    %v3789 = vadd.f32 %v3775, %v3785
    %s3790 = sld [smem:[#allocation11 + $0x29]]
    %v3791 = vstv %s3790
    %v3792 = vmul.f32 %v3791, %v3769
    %v3793 = vmul.f32 %v3791, %v3770
    %3796 = vrot.lane.b32.xlu0 %v3792, 126
    %v3797 = vpop.permute.xlu0 %3796
    %3798 = vrot.lane.b32.xlu0 %v3793, 126
    %v3799 = vpop.permute.xlu0 %3798
    %v3802 = vadd.f32 %v3788, %v3797
    %v3803 = vadd.f32 %v3789, %v3799
    %s3804 = sld [smem:[#allocation11 + $0x2a]]
    %v3805 = vld [vmem:[#allocation3 + $0x2] sm:$0xff]
    %v3806 = vld [vmem:[#allocation3 + $0xa] sm:$0xff]
    %v3807 = vstv %s3804
    %v3808 = vmul.f32 %v3807, %v3805
    %v3809 = vmul.f32 %v3807, %v3806
    %v3810 = vadd.f32 %v3802, %v3808
    %v3811 = vadd.f32 %v3803, %v3809
    %s3812 = sld [smem:[#allocation11 + $0x2b]]
    %v3813 = vstv %s3812
    %v3814 = vmul.f32 %v3813, %v3805
    %v3815 = vmul.f32 %v3813, %v3806
    %3818 = vrot.lane.b32.xlu0 %v3814, 127
    %v3819 = vpop.permute.xlu0 %3818
    %3820 = vrot.lane.b32.xlu0 %v3815, 127
    %v3821 = vpop.permute.xlu0 %3820
    %v3824 = vadd.f32 %v3810, %v3819
    %v3825 = vadd.f32 %v3811, %v3821
    %s3826 = sld [smem:[#allocation11 + $0x2c]]
    %v3827 = vstv %s3826
    %v3828 = vmul.f32 %v3827, %v3805
    %v3829 = vmul.f32 %v3827, %v3806
    %3832 = vrot.lane.b32.xlu0 %v3828, 126
    %v3833 = vpop.permute.xlu0 %3832
    %3834 = vrot.lane.b32.xlu0 %v3829, 126
    %v3835 = vpop.permute.xlu0 %3834
    %v3838 = vadd.f32 %v3824, %v3833
    %v3839 = vadd.f32 %v3825, %v3835
    %s3840 = sld [smem:[#allocation11 + $0x6c]]
    %v3841 = vstv %s3840
    %v3842 = vmul.f32 %v3841, %v3733
    %v3843 = vmul.f32 %v3841, %v3734
    %v3844 = vadd.f32 %v3706, %v3842
    %v3845 = vadd.f32 %v3707, %v3843
    %s3846 = sld [smem:[#allocation11 + $0x6d]]
    %v3847 = vstv %s3846
    %v3848 = vmul.f32 %v3847, %v3733
    %v3849 = vmul.f32 %v3847, %v3734
    %3852 = vrot.lane.b32.xlu0 %v3848, 127
    %v3853 = vpop.permute.xlu0 %3852
    %3854 = vrot.lane.b32.xlu0 %v3849, 127
    %v3855 = vpop.permute.xlu0 %3854
    %v3858 = vadd.f32 %v3844, %v3853
    %v3859 = vadd.f32 %v3845, %v3855
    %s3860 = sld [smem:[#allocation11 + $0x6e]]
    %v3861 = vstv %s3860
    %v3862 = vmul.f32 %v3861, %v3733
    %v3863 = vmul.f32 %v3861, %v3734
    %3866 = vrot.lane.b32.xlu0 %v3862, 126
    %v3867 = vpop.permute.xlu0 %3866
    %3868 = vrot.lane.b32.xlu0 %v3863, 126
    %v3869 = vpop.permute.xlu0 %3868
    %v3872 = vadd.f32 %v3858, %v3867
    %v3873 = vadd.f32 %v3859, %v3869
    %s3874 = sld [smem:[#allocation11 + $0x6f]]
    %v3875 = vstv %s3874
    %v3876 = vmul.f32 %v3875, %v3769
    %v3877 = vmul.f32 %v3875, %v3770
    %v3878 = vadd.f32 %v3872, %v3876
    %v3879 = vadd.f32 %v3873, %v3877
    %s3880 = sld [smem:[#allocation11 + $0x70]]
    %v3881 = vstv %s3880
    %v3882 = vmul.f32 %v3881, %v3769
    %v3883 = vmul.f32 %v3881, %v3770
    %3886 = vrot.lane.b32.xlu0 %v3882, 127
    %v3887 = vpop.permute.xlu0 %3886
    %3888 = vrot.lane.b32.xlu0 %v3883, 127
    %v3889 = vpop.permute.xlu0 %3888
    %v3892 = vadd.f32 %v3878, %v3887
    %v3893 = vadd.f32 %v3879, %v3889
    %s3894 = sld [smem:[#allocation11 + $0x71]]
    %v3895 = vstv %s3894
    %v3896 = vmul.f32 %v3895, %v3769
    %v3897 = vmul.f32 %v3895, %v3770
    %3900 = vrot.lane.b32.xlu0 %v3896, 126
    %v3901 = vpop.permute.xlu0 %3900
    %3902 = vrot.lane.b32.xlu0 %v3897, 126
    %v3903 = vpop.permute.xlu0 %3902
    %v3906 = vadd.f32 %v3892, %v3901
    %v3907 = vadd.f32 %v3893, %v3903
    %s3908 = sld [smem:[#allocation11 + $0x72]]
    %v3909 = vstv %s3908
    %v3910 = vmul.f32 %v3909, %v3805
    %v3911 = vmul.f32 %v3909, %v3806
    %v3912 = vadd.f32 %v3906, %v3910
    %v3913 = vadd.f32 %v3907, %v3911
    %s3914 = sld [smem:[#allocation11 + $0x73]]
    %v3915 = vstv %s3914
    %v3916 = vmul.f32 %v3915, %v3805
    %v3917 = vmul.f32 %v3915, %v3806
    %3920 = vrot.lane.b32.xlu0 %v3916, 127
    %v3921 = vpop.permute.xlu0 %3920
    %3922 = vrot.lane.b32.xlu0 %v3917, 127
    %v3923 = vpop.permute.xlu0 %3922
    %v3926 = vadd.f32 %v3912, %v3921
    %v3927 = vadd.f32 %v3913, %v3923
    %s3928 = sld [smem:[#allocation11 + $0x74]]
    %v3929 = vstv %s3928
    %v3930 = vmul.f32 %v3929, %v3805
    %v3931 = vmul.f32 %v3929, %v3806
    %3934 = vrot.lane.b32.xlu0 %v3930, 126
    %v3935 = vpop.permute.xlu0 %3934
    %3936 = vrot.lane.b32.xlu0 %v3931, 126
    %v3937 = vpop.permute.xlu0 %3936
    %v3940 = vadd.f32 %v3926, %v3935
    %v3941 = vadd.f32 %v3927, %v3937
    %v3942 = vsub.f32 0.0, %v2727
    %v3943 = vsub.f32 0.0, %v2728
    %v3944 = vsub.f32 0.0, %v2729
    %v3945 = vmul.f32 %v3942, 1.442695
    %v3946 = vpow.pop %v3945
    %v3947 = vmul.f32 %v3943, 1.442695
    %v3948 = vpow.pop %v3947
    %v3949 = vmul.f32 %v3944, 1.442695
    %v3950 = vpow.pop %v3949
    %v3951 = vadd.f32 %v3946, 1.0
    %v3952 = vadd.f32 %v3948, 1.0
    %v3953 = vadd.f32 %v3950, 1.0
    %v3954 = vrcp.pop %v3951
    %v3955 = vmul.f32 1.0, %v3954
    %v3956 = vrcp.pop %v3952
    %v3957 = vmul.f32 1.0, %v3956
    %v3958 = vrcp.pop %v3953
    %v3959 = vmul.f32 1.0, %v3958
    %v3960 = vmul.f32 %v2727, %v3955
    %v3961 = vmul.f32 %v2728, %v3957
    %v3962 = vmul.f32 %v2729, %v3959
    %3963 = vst.msk [vmem:[#allocation3] sm:$0xff] %vm2791, %v3960
    %3964 = vst.msk [vmem:[#allocation3 + $0x8] sm:$0xff] %vm2791, %v3961
    %3965 = vst.msk [vmem:[#allocation3 + $0x10] sm:$0x3] %vm2794, %v3962
    %s3966 = sld [smem:[#allocation11 + $0x2d]]
    %v3967 = vld [vmem:[#allocation3] sm:$0xff]
    %v3968 = vld [vmem:[#allocation3 + $0x8] sm:$0xff]
    %v3969 = vstv %s3966
    %v3970 = vmul.f32 %v3969, %v3967
    %v3971 = vmul.f32 %v3969, %v3968
    %v3972 = vadd.f32 %v3838, %v3970
    %v3973 = vadd.f32 %v3839, %v3971
    %s3974 = sld [smem:[#allocation11 + $0x2e]]
    %v3975 = vstv %s3974
    %v3976 = vmul.f32 %v3975, %v3967
    %v3977 = vmul.f32 %v3975, %v3968
    %3980 = vrot.lane.b32.xlu0 %v3976, 127
    %v3981 = vpop.permute.xlu0 %3980
    %3982 = vrot.lane.b32.xlu0 %v3977, 127
    %v3983 = vpop.permute.xlu0 %3982
    %v3986 = vadd.f32 %v3972, %v3981
    %v3987 = vadd.f32 %v3973, %v3983
    %s3988 = sld [smem:[#allocation11 + $0x2f]]
    %v3989 = vstv %s3988
    %v3990 = vmul.f32 %v3989, %v3967
    %v3991 = vmul.f32 %v3989, %v3968
    %3994 = vrot.lane.b32.xlu0 %v3990, 126
    %v3995 = vpop.permute.xlu0 %3994
    %3996 = vrot.lane.b32.xlu0 %v3991, 126
    %v3997 = vpop.permute.xlu0 %3996
    %v4000 = vadd.f32 %v3986, %v3995
    %v4001 = vadd.f32 %v3987, %v3997
    %s4002 = sld [smem:[#allocation11 + $0x30]]
    %v4003 = vld [vmem:[#allocation3 + $0x1] sm:$0xff]
    %v4004 = vld [vmem:[#allocation3 + $0x9] sm:$0xff]
    %v4005 = vstv %s4002
    %v4006 = vmul.f32 %v4005, %v4003
    %v4007 = vmul.f32 %v4005, %v4004
    %v4008 = vadd.f32 %v4000, %v4006
    %v4009 = vadd.f32 %v4001, %v4007
    %s4010 = sld [smem:[#allocation11 + $0x31]]
    %v4011 = vstv %s4010
    %v4012 = vmul.f32 %v4011, %v4003
    %v4013 = vmul.f32 %v4011, %v4004
    %4016 = vrot.lane.b32.xlu0 %v4012, 127
    %v4017 = vpop.permute.xlu0 %4016
    %4018 = vrot.lane.b32.xlu0 %v4013, 127
    %v4019 = vpop.permute.xlu0 %4018
    %v4022 = vadd.f32 %v4008, %v4017
    %v4023 = vadd.f32 %v4009, %v4019
    %s4024 = sld [smem:[#allocation11 + $0x32]]
    %v4025 = vstv %s4024
    %v4026 = vmul.f32 %v4025, %v4003
    %v4027 = vmul.f32 %v4025, %v4004
    %4030 = vrot.lane.b32.xlu0 %v4026, 126
    %v4031 = vpop.permute.xlu0 %4030
    %4032 = vrot.lane.b32.xlu0 %v4027, 126
    %v4033 = vpop.permute.xlu0 %4032
    %v4036 = vadd.f32 %v4022, %v4031
    %v4037 = vadd.f32 %v4023, %v4033
    %s4038 = sld [smem:[#allocation11 + $0x33]]
    %v4039 = vld [vmem:[#allocation3 + $0x2] sm:$0xff]
    %v4040 = vld [vmem:[#allocation3 + $0xa] sm:$0xff]
    %v4041 = vstv %s4038
    %v4042 = vmul.f32 %v4041, %v4039
    %v4043 = vmul.f32 %v4041, %v4040
    %v4044 = vadd.f32 %v4036, %v4042
    %v4045 = vadd.f32 %v4037, %v4043
    %s4046 = sld [smem:[#allocation11 + $0x34]]
    %v4047 = vstv %s4046
    %v4048 = vmul.f32 %v4047, %v4039
    %v4049 = vmul.f32 %v4047, %v4040
    %4052 = vrot.lane.b32.xlu0 %v4048, 127
    %v4053 = vpop.permute.xlu0 %4052
    %4054 = vrot.lane.b32.xlu0 %v4049, 127
    %v4055 = vpop.permute.xlu0 %4054
    %v4058 = vadd.f32 %v4044, %v4053
    %v4059 = vadd.f32 %v4045, %v4055
    %s4060 = sld [smem:[#allocation11 + $0x35]]
    %v4061 = vstv %s4060
    %v4062 = vmul.f32 %v4061, %v4039
    %v4063 = vmul.f32 %v4061, %v4040
    %4066 = vrot.lane.b32.xlu0 %v4062, 126
    %v4067 = vpop.permute.xlu0 %4066
    %4068 = vrot.lane.b32.xlu0 %v4063, 126
    %v4069 = vpop.permute.xlu0 %4068
    %v4072 = vadd.f32 %v4058, %v4067
    %v4073 = vadd.f32 %v4059, %v4069
    %s4074 = sld [smem:[#allocation11 + $0x75]]
    %v4075 = vstv %s4074
    %v4076 = vmul.f32 %v4075, %v3967
    %v4077 = vmul.f32 %v4075, %v3968
    %v4078 = vadd.f32 %v3940, %v4076
    %v4079 = vadd.f32 %v3941, %v4077
    %s4080 = sld [smem:[#allocation11 + $0x76]]
    %v4081 = vstv %s4080
    %v4082 = vmul.f32 %v4081, %v3967
    %v4083 = vmul.f32 %v4081, %v3968
    %4086 = vrot.lane.b32.xlu0 %v4082, 127
    %v4087 = vpop.permute.xlu0 %4086
    %4088 = vrot.lane.b32.xlu0 %v4083, 127
    %v4089 = vpop.permute.xlu0 %4088
    %v4092 = vadd.f32 %v4078, %v4087
    %v4093 = vadd.f32 %v4079, %v4089
    %s4094 = sld [smem:[#allocation11 + $0x77]]
    %v4095 = vstv %s4094
    %v4096 = vmul.f32 %v4095, %v3967
    %v4097 = vmul.f32 %v4095, %v3968
    %4100 = vrot.lane.b32.xlu0 %v4096, 126
    %v4101 = vpop.permute.xlu0 %4100
    %4102 = vrot.lane.b32.xlu0 %v4097, 126
    %v4103 = vpop.permute.xlu0 %4102
    %v4106 = vadd.f32 %v4092, %v4101
    %v4107 = vadd.f32 %v4093, %v4103
    %s4108 = sld [smem:[#allocation11 + $0x78]]
    %v4109 = vstv %s4108
    %v4110 = vmul.f32 %v4109, %v4003
    %v4111 = vmul.f32 %v4109, %v4004
    %v4112 = vadd.f32 %v4106, %v4110
    %v4113 = vadd.f32 %v4107, %v4111
    %s4114 = sld [smem:[#allocation11 + $0x79]]
    %v4115 = vstv %s4114
    %v4116 = vmul.f32 %v4115, %v4003
    %v4117 = vmul.f32 %v4115, %v4004
    %4120 = vrot.lane.b32.xlu0 %v4116, 127
    %v4121 = vpop.permute.xlu0 %4120
    %4122 = vrot.lane.b32.xlu0 %v4117, 127
    %v4123 = vpop.permute.xlu0 %4122
    %v4126 = vadd.f32 %v4112, %v4121
    %v4127 = vadd.f32 %v4113, %v4123
    %s4128 = sld [smem:[#allocation11 + $0x7a]]
    %v4129 = vstv %s4128
    %v4130 = vmul.f32 %v4129, %v4003
    %v4131 = vmul.f32 %v4129, %v4004
    %4134 = vrot.lane.b32.xlu0 %v4130, 126
    %v4135 = vpop.permute.xlu0 %4134
    %4136 = vrot.lane.b32.xlu0 %v4131, 126
    %v4137 = vpop.permute.xlu0 %4136
    %v4140 = vadd.f32 %v4126, %v4135
    %v4141 = vadd.f32 %v4127, %v4137
    %s4142 = sld [smem:[#allocation11 + $0x7b]]
    %v4143 = vstv %s4142
    %v4144 = vmul.f32 %v4143, %v4039
    %v4145 = vmul.f32 %v4143, %v4040
    %v4146 = vadd.f32 %v4140, %v4144
    %v4147 = vadd.f32 %v4141, %v4145
    %s4148 = sld [smem:[#allocation11 + $0x7c]]
    %v4149 = vstv %s4148
    %v4150 = vmul.f32 %v4149, %v4039
    %v4151 = vmul.f32 %v4149, %v4040
    %4154 = vrot.lane.b32.xlu0 %v4150, 127
    %v4155 = vpop.permute.xlu0 %4154
    %4156 = vrot.lane.b32.xlu0 %v4151, 127
    %v4157 = vpop.permute.xlu0 %4156
    %v4160 = vadd.f32 %v4146, %v4155
    %v4161 = vadd.f32 %v4147, %v4157
    %s4162 = sld [smem:[#allocation11 + $0x7d]]
    %v4163 = vstv %s4162
    %v4164 = vmul.f32 %v4163, %v4039
    %v4165 = vmul.f32 %v4163, %v4040
    %4168 = vrot.lane.b32.xlu0 %v4164, 126
    %v4169 = vpop.permute.xlu0 %4168
    %4170 = vrot.lane.b32.xlu0 %v4165, 126
    %v4171 = vpop.permute.xlu0 %4170
    %v4174 = vadd.f32 %v4160, %v4169
    %v4175 = vadd.f32 %v4161, %v4171
    %v4176 = vsub.f32 0.0, %v2747
    %v4177 = vsub.f32 0.0, %v2748
    %v4178 = vsub.f32 0.0, %v2749
    %v4179 = vmul.f32 %v4176, 1.442695
    %v4180 = vpow.pop %v4179
    %v4181 = vmul.f32 %v4177, 1.442695
    %v4182 = vpow.pop %v4181
    %v4183 = vmul.f32 %v4178, 1.442695
    %v4184 = vpow.pop %v4183
    %v4185 = vadd.f32 %v4180, 1.0
    %v4186 = vadd.f32 %v4182, 1.0
    %v4187 = vadd.f32 %v4184, 1.0
    %v4188 = vrcp.pop %v4185
    %v4189 = vmul.f32 1.0, %v4188
    %v4190 = vrcp.pop %v4186
    %v4191 = vmul.f32 1.0, %v4190
    %v4192 = vrcp.pop %v4187
    %v4193 = vmul.f32 1.0, %v4192
    %v4194 = vmul.f32 %v2747, %v4189
    %v4195 = vmul.f32 %v2748, %v4191
    %v4196 = vmul.f32 %v2749, %v4193
    %4197 = vst.msk [vmem:[#allocation3] sm:$0xff] %vm2791, %v4194
    %4198 = vst.msk [vmem:[#allocation3 + $0x8] sm:$0xff] %vm2791, %v4195
    %4199 = vst.msk [vmem:[#allocation3 + $0x10] sm:$0x3] %vm2794, %v4196
    %s4200 = sld [smem:[#allocation11 + $0x36]]
    %v4201 = vld [vmem:[#allocation3] sm:$0xff]
    %v4202 = vld [vmem:[#allocation3 + $0x8] sm:$0xff]
    %v4203 = vstv %s4200
    %v4204 = vmul.f32 %v4203, %v4201
    %v4205 = vmul.f32 %v4203, %v4202
    %v4206 = vadd.f32 %v4072, %v4204
    %v4207 = vadd.f32 %v4073, %v4205
    %s4208 = sld [smem:[#allocation11 + $0x37]]
    %v4209 = vstv %s4208
    %v4210 = vmul.f32 %v4209, %v4201
    %v4211 = vmul.f32 %v4209, %v4202
    %4214 = vrot.lane.b32.xlu0 %v4210, 127
    %v4215 = vpop.permute.xlu0 %4214
    %4216 = vrot.lane.b32.xlu0 %v4211, 127
    %v4217 = vpop.permute.xlu0 %4216
    %v4220 = vadd.f32 %v4206, %v4215
    %v4221 = vadd.f32 %v4207, %v4217
    %s4222 = sld [smem:[#allocation11 + $0x38]]
    %v4223 = vstv %s4222
    %v4224 = vmul.f32 %v4223, %v4201
    %v4225 = vmul.f32 %v4223, %v4202
    %4228 = vrot.lane.b32.xlu0 %v4224, 126
    %v4229 = vpop.permute.xlu0 %4228
    %4230 = vrot.lane.b32.xlu0 %v4225, 126
    %v4231 = vpop.permute.xlu0 %4230
    %v4234 = vadd.f32 %v4220, %v4229
    %v4235 = vadd.f32 %v4221, %v4231
    %s4236 = sld [smem:[#allocation11 + $0x39]]
    %v4237 = vld [vmem:[#allocation3 + $0x1] sm:$0xff]
    %v4238 = vld [vmem:[#allocation3 + $0x9] sm:$0xff]
    %v4239 = vstv %s4236
    %v4240 = vmul.f32 %v4239, %v4237
    %v4241 = vmul.f32 %v4239, %v4238
    %v4242 = vadd.f32 %v4234, %v4240
    %v4243 = vadd.f32 %v4235, %v4241
    %s4244 = sld [smem:[#allocation11 + $0x3a]]
    %v4245 = vstv %s4244
    %v4246 = vmul.f32 %v4245, %v4237
    %v4247 = vmul.f32 %v4245, %v4238
    %4250 = vrot.lane.b32.xlu0 %v4246, 127
    %v4251 = vpop.permute.xlu0 %4250
    %4252 = vrot.lane.b32.xlu0 %v4247, 127
    %v4253 = vpop.permute.xlu0 %4252
    %v4256 = vadd.f32 %v4242, %v4251
    %v4257 = vadd.f32 %v4243, %v4253
    %s4258 = sld [smem:[#allocation11 + $0x3b]]
    %v4259 = vstv %s4258
    %v4260 = vmul.f32 %v4259, %v4237
    %v4261 = vmul.f32 %v4259, %v4238
    %4264 = vrot.lane.b32.xlu0 %v4260, 126
    %v4265 = vpop.permute.xlu0 %4264
    %4266 = vrot.lane.b32.xlu0 %v4261, 126
    %v4267 = vpop.permute.xlu0 %4266
    %v4270 = vadd.f32 %v4256, %v4265
    %v4271 = vadd.f32 %v4257, %v4267
    %s4272 = sld [smem:[#allocation11 + $0x3c]]
    %v4273 = vld [vmem:[#allocation3 + $0x2] sm:$0xff]
    %v4274 = vld [vmem:[#allocation3 + $0xa] sm:$0xff]
    %v4275 = vstv %s4272
    %v4276 = vmul.f32 %v4275, %v4273
    %v4277 = vmul.f32 %v4275, %v4274
    %v4278 = vadd.f32 %v4270, %v4276
    %v4279 = vadd.f32 %v4271, %v4277
    %s4280 = sld [smem:[#allocation11 + $0x3d]]
    %v4281 = vstv %s4280
    %v4282 = vmul.f32 %v4281, %v4273
    %v4283 = vmul.f32 %v4281, %v4274
    %4286 = vrot.lane.b32.xlu0 %v4282, 127
    %v4287 = vpop.permute.xlu0 %4286
    %4288 = vrot.lane.b32.xlu0 %v4283, 127
    %v4289 = vpop.permute.xlu0 %4288
    %v4292 = vadd.f32 %v4278, %v4287
    %v4293 = vadd.f32 %v4279, %v4289
    %s4294 = sld [smem:[#allocation11 + $0x3e]]
    %v4295 = vstv %s4294
    %v4296 = vmul.f32 %v4295, %v4273
    %v4297 = vmul.f32 %v4295, %v4274
    %4300 = vrot.lane.b32.xlu0 %v4296, 126
    %v4301 = vpop.permute.xlu0 %4300
    %4302 = vrot.lane.b32.xlu0 %v4297, 126
    %v4303 = vpop.permute.xlu0 %4302
    %v4306 = vadd.f32 %v4292, %v4301
    %v4307 = vadd.f32 %v4293, %v4303
    %s4308 = sld [smem:[#allocation11 + $0x7e]]
    %v4309 = vstv %s4308
    %v4310 = vmul.f32 %v4309, %v4201
    %v4311 = vmul.f32 %v4309, %v4202
    %v4312 = vadd.f32 %v4174, %v4310
    %v4313 = vadd.f32 %v4175, %v4311
    %s4314 = sld [smem:[#allocation11 + $0x7f]]
    %v4315 = vstv %s4314
    %v4316 = vmul.f32 %v4315, %v4201
    %v4317 = vmul.f32 %v4315, %v4202
    %4320 = vrot.lane.b32.xlu0 %v4316, 127
    %v4321 = vpop.permute.xlu0 %4320
    %4322 = vrot.lane.b32.xlu0 %v4317, 127
    %v4323 = vpop.permute.xlu0 %4322
    %v4326 = vadd.f32 %v4312, %v4321
    %v4327 = vadd.f32 %v4313, %v4323
    %s4328 = sld [smem:[#allocation11 + $0x80]]
    %v4329 = vstv %s4328
    %v4330 = vmul.f32 %v4329, %v4201
    %v4331 = vmul.f32 %v4329, %v4202
    %4334 = vrot.lane.b32.xlu0 %v4330, 126
    %v4335 = vpop.permute.xlu0 %4334
    %4336 = vrot.lane.b32.xlu0 %v4331, 126
    %v4337 = vpop.permute.xlu0 %4336
    %v4340 = vadd.f32 %v4326, %v4335
    %v4341 = vadd.f32 %v4327, %v4337
    %s4342 = sld [smem:[#allocation11 + $0x81]]
    %v4343 = vstv %s4342
    %v4344 = vmul.f32 %v4343, %v4237
    %v4345 = vmul.f32 %v4343, %v4238
    %v4346 = vadd.f32 %v4340, %v4344
    %v4347 = vadd.f32 %v4341, %v4345
    %s4348 = sld [smem:[#allocation11 + $0x82]]
    %v4349 = vstv %s4348
    %v4350 = vmul.f32 %v4349, %v4237
    %v4351 = vmul.f32 %v4349, %v4238
    %4354 = vrot.lane.b32.xlu0 %v4350, 127
    %v4355 = vpop.permute.xlu0 %4354
    %4356 = vrot.lane.b32.xlu0 %v4351, 127
    %v4357 = vpop.permute.xlu0 %4356
    %v4360 = vadd.f32 %v4346, %v4355
    %v4361 = vadd.f32 %v4347, %v4357
    %s4362 = sld [smem:[#allocation11 + $0x83]]
    %v4363 = vstv %s4362
    %v4364 = vmul.f32 %v4363, %v4237
    %v4365 = vmul.f32 %v4363, %v4238
    %4368 = vrot.lane.b32.xlu0 %v4364, 126
    %v4369 = vpop.permute.xlu0 %4368
    %4370 = vrot.lane.b32.xlu0 %v4365, 126
    %v4371 = vpop.permute.xlu0 %4370
    %v4374 = vadd.f32 %v4360, %v4369
    %v4375 = vadd.f32 %v4361, %v4371
    %s4376 = sld [smem:[#allocation11 + $0x84]]
    %v4377 = vstv %s4376
    %v4378 = vmul.f32 %v4377, %v4273
    %v4379 = vmul.f32 %v4377, %v4274
    %v4380 = vadd.f32 %v4374, %v4378
    %v4381 = vadd.f32 %v4375, %v4379
    %s4382 = sld [smem:[#allocation11 + $0x85]]
    %v4383 = vstv %s4382
    %v4384 = vmul.f32 %v4383, %v4273
    %v4385 = vmul.f32 %v4383, %v4274
    %4388 = vrot.lane.b32.xlu0 %v4384, 127
    %v4389 = vpop.permute.xlu0 %4388
    %4390 = vrot.lane.b32.xlu0 %v4385, 127
    %v4391 = vpop.permute.xlu0 %4390
    %v4394 = vadd.f32 %v4380, %v4389
    %v4395 = vadd.f32 %v4381, %v4391
    %s4396 = sld [smem:[#allocation11 + $0x86]]
    %v4397 = vstv %s4396
    %v4398 = vmul.f32 %v4397, %v4273
    %v4399 = vmul.f32 %v4397, %v4274
    %4402 = vrot.lane.b32.xlu0 %v4398, 126
    %v4403 = vpop.permute.xlu0 %4402
    %4404 = vrot.lane.b32.xlu0 %v4399, 126
    %v4405 = vpop.permute.xlu0 %4404
    %v4408 = vadd.f32 %v4394, %v4403
    %v4409 = vadd.f32 %v4395, %v4405
    %v4410 = vsub.f32 0.0, %v2767
    %v4411 = vsub.f32 0.0, %v2768
    %v4412 = vsub.f32 0.0, %v2769
    %v4413 = vmul.f32 %v4410, 1.442695
    %v4414 = vpow.pop %v4413
    %v4415 = vmul.f32 %v4411, 1.442695
    %v4416 = vpow.pop %v4415
    %v4417 = vmul.f32 %v4412, 1.442695
    %v4418 = vpow.pop %v4417
    %v4419 = vadd.f32 %v4414, 1.0
    %v4420 = vadd.f32 %v4416, 1.0
    %v4421 = vadd.f32 %v4418, 1.0
    %v4422 = vrcp.pop %v4419
    %v4423 = vmul.f32 1.0, %v4422
    %v4424 = vrcp.pop %v4420
    %v4425 = vmul.f32 1.0, %v4424
    %v4426 = vrcp.pop %v4421
    %v4427 = vmul.f32 1.0, %v4426
    %v4428 = vmul.f32 %v2767, %v4423
    %v4429 = vmul.f32 %v2768, %v4425
    %v4430 = vmul.f32 %v2769, %v4427
    %4431 = vst.msk [vmem:[#allocation3] sm:$0xff] %vm2791, %v4428
    %4432 = vst.msk [vmem:[#allocation3 + $0x8] sm:$0xff] %vm2791, %v4429
    %4433 = vst.msk [vmem:[#allocation3 + $0x10] sm:$0x3] %vm2794, %v4430
    %s4434 = sld [smem:[#allocation11 + $0x3f]]
    %v4435 = vld [vmem:[#allocation3] sm:$0xff]
    %v4436 = vld [vmem:[#allocation3 + $0x8] sm:$0xff]
    %v4437 = vstv %s4434
    %v4438 = vmul.f32 %v4437, %v4435
    %v4439 = vmul.f32 %v4437, %v4436
    %v4440 = vadd.f32 %v4306, %v4438
    %v4441 = vadd.f32 %v4307, %v4439
    %s4442 = sld [smem:[#allocation11 + $0x40]]
    %v4443 = vstv %s4442
    %v4444 = vmul.f32 %v4443, %v4435
    %v4445 = vmul.f32 %v4443, %v4436
    %4448 = vrot.lane.b32.xlu0 %v4444, 127
    %v4449 = vpop.permute.xlu0 %4448
    %4450 = vrot.lane.b32.xlu0 %v4445, 127
    %v4451 = vpop.permute.xlu0 %4450
    %v4454 = vadd.f32 %v4440, %v4449
    %v4455 = vadd.f32 %v4441, %v4451
    %s4456 = sld [smem:[#allocation11 + $0x41]]
    %v4457 = vstv %s4456
    %v4458 = vmul.f32 %v4457, %v4435
    %v4459 = vmul.f32 %v4457, %v4436
    %4462 = vrot.lane.b32.xlu0 %v4458, 126
    %v4463 = vpop.permute.xlu0 %4462
    %4464 = vrot.lane.b32.xlu0 %v4459, 126
    %v4465 = vpop.permute.xlu0 %4464
    %v4468 = vadd.f32 %v4454, %v4463
    %v4469 = vadd.f32 %v4455, %v4465
    %s4470 = sld [smem:[#allocation11 + $0x42]]
    %v4471 = vld [vmem:[#allocation3 + $0x1] sm:$0xff]
    %v4472 = vld [vmem:[#allocation3 + $0x9] sm:$0xff]
    %v4473 = vstv %s4470
    %v4474 = vmul.f32 %v4473, %v4471
    %v4475 = vmul.f32 %v4473, %v4472
    %v4476 = vadd.f32 %v4468, %v4474
    %v4477 = vadd.f32 %v4469, %v4475
    %s4478 = sld [smem:[#allocation11 + $0x43]]
    %v4479 = vstv %s4478
    %v4480 = vmul.f32 %v4479, %v4471
    %v4481 = vmul.f32 %v4479, %v4472
    %4484 = vrot.lane.b32.xlu0 %v4480, 127
    %v4485 = vpop.permute.xlu0 %4484
    %4486 = vrot.lane.b32.xlu0 %v4481, 127
    %v4487 = vpop.permute.xlu0 %4486
    %v4490 = vadd.f32 %v4476, %v4485
    %v4491 = vadd.f32 %v4477, %v4487
    %s4492 = sld [smem:[#allocation11 + $0x44]]
    %v4493 = vstv %s4492
    %v4494 = vmul.f32 %v4493, %v4471
    %v4495 = vmul.f32 %v4493, %v4472
    %4498 = vrot.lane.b32.xlu0 %v4494, 126
    %v4499 = vpop.permute.xlu0 %4498
    %4500 = vrot.lane.b32.xlu0 %v4495, 126
    %v4501 = vpop.permute.xlu0 %4500
    %v4504 = vadd.f32 %v4490, %v4499
    %v4505 = vadd.f32 %v4491, %v4501
    %s4506 = sld [smem:[#allocation11 + $0x45]]
    %v4507 = vld [vmem:[#allocation3 + $0x2] sm:$0xff]
    %v4508 = vld [vmem:[#allocation3 + $0xa] sm:$0xff]
    %v4509 = vstv %s4506
    %v4510 = vmul.f32 %v4509, %v4507
    %v4511 = vmul.f32 %v4509, %v4508
    %v4512 = vadd.f32 %v4504, %v4510
    %v4513 = vadd.f32 %v4505, %v4511
    %s4514 = sld [smem:[#allocation11 + $0x46]]
    %v4515 = vstv %s4514
    %v4516 = vmul.f32 %v4515, %v4507
    %v4517 = vmul.f32 %v4515, %v4508
    %4520 = vrot.lane.b32.xlu0 %v4516, 127
    %v4521 = vpop.permute.xlu0 %4520
    %4522 = vrot.lane.b32.xlu0 %v4517, 127
    %v4523 = vpop.permute.xlu0 %4522
    %v4526 = vadd.f32 %v4512, %v4521
    %v4527 = vadd.f32 %v4513, %v4523
    %s4528 = sld [smem:[#allocation11 + $0x47]]
    %v4529 = vstv %s4528
    %v4530 = vmul.f32 %v4529, %v4507
    %v4531 = vmul.f32 %v4529, %v4508
    %4534 = vrot.lane.b32.xlu0 %v4530, 126
    %v4535 = vpop.permute.xlu0 %4534
    %4536 = vrot.lane.b32.xlu0 %v4531, 126
    %v4537 = vpop.permute.xlu0 %4536
    %v4540 = vadd.f32 %v4526, %v4535
    %v4541 = vadd.f32 %v4527, %v4537
    %s4542 = sld [smem:[#allocation11 + $0x87]]
    %v4543 = vstv %s4542
    %v4544 = vmul.f32 %v4543, %v4435
    %v4545 = vmul.f32 %v4543, %v4436
    %v4546 = vadd.f32 %v4408, %v4544
    %v4547 = vadd.f32 %v4409, %v4545
    %s4548 = sld [smem:[#allocation11 + $0x88]]
    %v4549 = vstv %s4548
    %v4550 = vmul.f32 %v4549, %v4435
    %v4551 = vmul.f32 %v4549, %v4436
    %4554 = vrot.lane.b32.xlu0 %v4550, 127
    %v4555 = vpop.permute.xlu0 %4554
    %4556 = vrot.lane.b32.xlu0 %v4551, 127
    %v4557 = vpop.permute.xlu0 %4556
    %v4560 = vadd.f32 %v4546, %v4555
    %v4561 = vadd.f32 %v4547, %v4557
    %s4562 = sld [smem:[#allocation11 + $0x89]]
    %v4563 = vstv %s4562
    %v4564 = vmul.f32 %v4563, %v4435
    %v4565 = vmul.f32 %v4563, %v4436
    %4568 = vrot.lane.b32.xlu0 %v4564, 126
    %v4569 = vpop.permute.xlu0 %4568
    %4570 = vrot.lane.b32.xlu0 %v4565, 126
    %v4571 = vpop.permute.xlu0 %4570
    %v4574 = vadd.f32 %v4560, %v4569
    %v4575 = vadd.f32 %v4561, %v4571
    %s4576 = sld [smem:[#allocation11 + $0x8a]]
    %v4577 = vstv %s4576
    %v4578 = vmul.f32 %v4577, %v4471
    %v4579 = vmul.f32 %v4577, %v4472
    %v4580 = vadd.f32 %v4574, %v4578
    %v4581 = vadd.f32 %v4575, %v4579
    %s4582 = sld [smem:[#allocation11 + $0x8b]]
    %v4583 = vstv %s4582
    %v4584 = vmul.f32 %v4583, %v4471
    %v4585 = vmul.f32 %v4583, %v4472
    %4588 = vrot.lane.b32.xlu0 %v4584, 127
    %v4589 = vpop.permute.xlu0 %4588
    %4590 = vrot.lane.b32.xlu0 %v4585, 127
    %v4591 = vpop.permute.xlu0 %4590
    %v4594 = vadd.f32 %v4580, %v4589
    %v4595 = vadd.f32 %v4581, %v4591
    %s4596 = sld [smem:[#allocation11 + $0x8c]]
    %v4597 = vstv %s4596
    %v4598 = vmul.f32 %v4597, %v4471
    %v4599 = vmul.f32 %v4597, %v4472
    %4602 = vrot.lane.b32.xlu0 %v4598, 126
    %v4603 = vpop.permute.xlu0 %4602
    %4604 = vrot.lane.b32.xlu0 %v4599, 126
    %v4605 = vpop.permute.xlu0 %4604
    %v4608 = vadd.f32 %v4594, %v4603
    %v4609 = vadd.f32 %v4595, %v4605
    %s4610 = sld [smem:[#allocation11 + $0x8d]]
    %v4611 = vstv %s4610
    %v4612 = vmul.f32 %v4611, %v4507
    %v4613 = vmul.f32 %v4611, %v4508
    %v4614 = vadd.f32 %v4608, %v4612
    %v4615 = vadd.f32 %v4609, %v4613
    %s4616 = sld [smem:[#allocation11 + $0x8e]]
    %v4617 = vstv %s4616
    %v4618 = vmul.f32 %v4617, %v4507
    %v4619 = vmul.f32 %v4617, %v4508
    %4622 = vrot.lane.b32.xlu0 %v4618, 127
    %v4623 = vpop.permute.xlu0 %4622
    %4624 = vrot.lane.b32.xlu0 %v4619, 127
    %v4625 = vpop.permute.xlu0 %4624
    %v4628 = vadd.f32 %v4614, %v4623
    %v4629 = vadd.f32 %v4615, %v4625
    %s4630 = sld [smem:[#allocation11 + $0x8f]]
    %v4631 = vstv %s4630
    %v4632 = vmul.f32 %v4631, %v4507
    %v4633 = vmul.f32 %v4631, %v4508
    %4636 = vrot.lane.b32.xlu0 %v4632, 126
    %v4637 = vpop.permute.xlu0 %4636
    %4638 = vrot.lane.b32.xlu0 %v4633, 126
    %v4639 = vpop.permute.xlu0 %4638
    %v4642 = vadd.f32 %v4628, %v4637
    %v4643 = vadd.f32 %v4629, %v4639
    %vm4644 = vcmask 130048
    %4645 = vst.msk [vmem:[#allocation15] sm:$0xff] %vm4644, %v4540
    %4646 = vst.msk [vmem:[#allocation15 + $0x8] sm:$0xff] %vm4644, %v4541
    %4649 = vrot.lane.b32.xlu0 %v4540, 108
    %v4650 = vpop.permute.xlu0 %4649
    %4651 = vrot.lane.b32.xlu0 %v4541, 108
    %v4652 = vpop.permute.xlu0 %4651
    %s4655 = scalar_lea.vmem [#allocation15], 32
    %4656 = vst.msk [vmem:[%s4655] sm:$0xff] %vm4644, %v4650
    %4657 = vst.msk [vmem:[%s4655 + $0x8] sm:$0xff] %vm4644, %v4652
    %s4658 = scalar_lea.vmem [#allocation15], 16
    %4659 = vst.msk [vmem:[%s4658] sm:$0xff] %vm4644, %v4642
    %4660 = vst.msk [vmem:[%s4658 + $0x8] sm:$0xff] %vm4644, %v4643
    %4663 = vrot.lane.b32.xlu0 %v4642, 108
    %v4664 = vpop.permute.xlu0 %4663
    %4665 = vrot.lane.b32.xlu0 %v4643, 108
    %v4666 = vpop.permute.xlu0 %4665
    %s4669 = scalar_lea.vmem [#allocation15], 48
    %4670 = vst.msk [vmem:[%s4669] sm:$0xff] %vm4644, %v4664
    %4671 = vst.msk [vmem:[%s4669 + $0x8] sm:$0xff] %vm4644, %v4666
    // Predicated region
    $region50: #{tpu_custom_call.1} parent=1 // pred_check
      _
    $region51: #{tpu_custom_call.1} parent=1 // pred_check_branch
      %4673 = sbr.rel (0) target = $region53
    $region52: #{tpu_custom_call.1} parent=1 // pred_region
      %s4675 = ssub.s32 1024, 1024
      %4676 = vsyncadd [#allocation6], %s4675
      %s4677 = sshll.u32 [#allocation15], 4
      %s4678 = int_to_ptr.vmem [resolvable:$true] %s4677
      %4683 = dma.vmem_to_hbm [thread:$0]  %s4678, 1024, %s6, [#allocation6], 128, 128, 8
    $region53: #{tpu_custom_call.1} parent=1 // pred_fallthru
      _
    // Predicated region
    $region54: #{tpu_custom_call.1} parent=1 // pred_check
      _
    $region55: #{tpu_custom_call.1} parent=1 // pred_check_branch
      %4685 = sbr.rel (0) target = $region57
    $region56: #{tpu_custom_call.1} parent=1 // pred_region
      %4686 = dma.done [#allocation6], 1024
    $region57: #{tpu_custom_call.1} parent=1 // pred_fallthru
      _
    %4687 = vsyncpa [#allocation5], 1
    %4688 = vsyncpa [#allocation9], 1
    %4689 = vsyncpa [#allocation6], 1
    %4690 = vsyncpa [#allocation7], 1
    %4691 = vsyncpa [#allocation12], 1

</llo_original>
